<compile_context>
chip_gen: v7x
topology: tpu7x:2x2x1
jax: 0.10.0
libtpu: 0.0.40
codegen_flags: <defaults>
</compile_context>

<pallas_src>
import functools
import math

import jax
import jax.numpy as jnp
from jax import lax
from jax.experimental import pallas as pl
from jax.experimental.pallas import tpu as pltpu

# ----- hyperparameters from the PyTorch script -----
D_MODEL = 64
DIM_FF = 128
MAX_SEQ_LEN = 64
NHEAD = 4
HEAD_DIM = D_MODEL // NHEAD
NUM_LAYERS = 1
SEQ_LEN = 8
VOCAB_SIZE = 50257
LN_EPS = 1e-5

# Vocab tiling: pad 50257 -> 50304 (= 3 * 16768, multiple of 128); 3 grid steps.
VOCAB_TILE = 16768
VOCAB_PAD = 3 * VOCAB_TILE
NEG_INF = -1e30   # finite "masked" value: exp underflows to exactly 0, no NaN risk


# =====================================================================
# In-kernel helpers (traced inside the fused kernel's prologue)
# =====================================================================
def _layer_norm(x, gamma, beta):
    mu = jnp.mean(x, axis=-1, keepdims=True)
    var = jnp.mean((x - mu) * (x - mu), axis=-1, keepdims=True)
    return (x - mu) * lax.rsqrt(var + LN_EPS) * gamma + beta


def _self_attention(qkv, wo, bo, causal, batch, seq):
    """Masked multi-head self-attention on flattened (batch*seq, 3*D) QKV.

    The QK^T / PV matmuls stay as tiny 2-D dots (static B=2 x H=4 loops), but
    the 8 per-(batch, head) softmaxes are batched into ONE masked softmax over
    a stacked (B*H, S, S) score tensor.
    """
    scale = 1.0 / math.sqrt(HEAD_DIM)
    q = qkv[:, 0:D_MODEL]
    k = qkv[:, D_MODEL:2 * D_MODEL]
    v = qkv[:, 2 * D_MODEL:3 * D_MODEL]

    s_list = []
    for b in range(batch):
        r = slice(b * seq, (b + 1) * seq)
        for h in range(NHEAD):
            c = slice(h * HEAD_DIM, (h + 1) * HEAD_DIM)
            s_list.append(lax.dot_general(
                q[r, c], k[r, c], (((1,), (1,)), ((), ())),
                preferred_element_type=jnp.float32))
    s = jnp.stack(s_list, axis=0) * scale                 # (B*H, S, S)
    s = jnp.where(causal[None, :, :], s, NEG_INF)
    m = jnp.max(s, axis=-1, keepdims=True)
    e = jnp.exp(s - m)
    p = e / jnp.sum(e, axis=-1, keepdims=True)            # one batched softmax

    rows = []
    for b in range(batch):
        r = slice(b * seq, (b + 1) * seq)
        heads = []
        for h in range(NHEAD):
            c = slice(h * HEAD_DIM, (h + 1) * HEAD_DIM)
            heads.append(jnp.dot(p[b * NHEAD + h], v[r, c],
                                 preferred_element_type=jnp.float32))
        rows.append(jnp.concatenate(heads, axis=-1))      # (S, D)
    o = jnp.concatenate(rows, axis=0)                     # (B*S, D)
    return jnp.dot(o, wo, preferred_element_type=jnp.float32) + bo


# =====================================================================
# Fused kernel: decoder layer (run-once prologue) + vocab projection tiles
# =====================================================================
def fused_decoder_kernel(
    x_ref, slab1_ref, slab2_ref, slab3_ref,     # layer inputs (constant blocks)
    wq_ref, wscale_ref, wbias_ref,              # per-tile projection inputs
    o_ref,                                      # (M, VOCAB_TILE) bf16 logits tile
    x_vmem,                                     # (M, D) bf16 persistent scratch
    *, batch, seq,
):
    # ------------- prologue: full TransformerDecoderLayer, step 0 only -------
    @pl.when(pl.program_id(0) == 0)
    def _layer():
        x = x_ref[...]                                       # (B*S, D) f32
        slab1 = slab1_ref[...]                               # (65, 3D)
        slab2 = slab2_ref[...]                               # (65, 3D)
        slab3 = slab3_ref[...]                               # (136, D)
        sa_w_in = slab1[0:D_MODEL, :]                        # (D, 3D)
        sa_b_in = slab1[D_MODEL:D_MODEL + 1, :]              # (1, 3D)
        sa_wo = slab2[0:D_MODEL, 0:D_MODEL]                  # (D, D)
        ff_w1 = slab2[0:D_MODEL, D_MODEL:]                   # (D, F)
        sa_bo = slab2[D_MODEL:D_MODEL + 1, 0:D_MODEL]        # (1, D)
        ff_b1 = slab2[D_MODEL:D_MODEL + 1, D_MODEL:]         # (1, F)
        ff_w2 = slab3[0:DIM_FF, :]                           # (F, D)
        ff_b2 = slab3[DIM_FF:DIM_FF + 1, :]                  # (1, D)
        ca_const = slab3[DIM_FF + 1:DIM_FF + 2, :]           # (1, D)
        ln = slab3[DIM_FF + 2:DIM_FF + 8, :]                 # (6, D)

        row = lax.broadcasted_iota(jnp.int32, (seq, seq), 0)
        col = lax.broadcasted_iota(jnp.int32, (seq, seq), 1)
        causal = col <= row

        # self-attention (fused QKV projection), residual, LN1
        qkv = jnp.dot(x, sa_w_in, preferred_element_type=jnp.float32) + sa_b_in
        sa = _self_attention(qkv, sa_wo, sa_bo, causal, batch, seq)
        x = _layer_norm(x + sa, ln[0:1, :], ln[1:2, :])

        # cross-attention over zero memory == input-independent constant
        x = _layer_norm(x + ca_const, ln[2:3, :], ln[3:4, :])

        # feed-forward (ReLU), residual, LN3
        h = jnp.maximum(
            jnp.dot(x, ff_w1, preferred_element_type=jnp.float32) + ff_b1, 0.0)
        ff = jnp.dot(h, ff_w2, preferred_element_type=jnp.float32) + ff_b2
        x = _layer_norm(x + ff, ln[4:5, :], ln[5:6, :])

        x_vmem[...] = x.astype(jnp.bfloat16)   # cast once; reused by all steps

    # ------------- every step: one lane-dense vocab tile of the logits -------
    # int8 weight -> bf16 (integers up to 127 are exact in bf16); the per-column
    # dequant scale is applied to the (M, tile) result, not the (D, tile) weight.
    w_bf = wq_ref[...].astype(jnp.bfloat16)
    acc = jnp.dot(x_vmem[...], w_bf, preferred_element_type=jnp.float32)
    o_ref[...] = (acc * wscale_ref[...] + wbias_ref[...]).astype(o_ref.dtype)


def fused_decoder_and_projection(x_flat, params, batch, seq):
    M, _ = x_flat.shape
    kernel = functools.partial(fused_decoder_kernel, batch=batch, seq=seq)
    return pl.pallas_call(
        kernel,
        grid=(VOCAB_PAD // VOCAB_TILE,),
        in_specs=[
            pl.BlockSpec((M, D_MODEL), lambda j: (0, 0)),
            pl.BlockSpec(params["slab1"].shape, lambda j: (0, 0)),
            pl.BlockSpec(params["slab2"].shape, lambda j: (0, 0)),
            pl.BlockSpec(params["slab3"].shape, lambda j: (0, 0)),
            pl.BlockSpec((D_MODEL, VOCAB_TILE), lambda j: (0, j)),
            pl.BlockSpec((1, VOCAB_TILE), lambda j: (0, j)),
            pl.BlockSpec((1, VOCAB_TILE), lambda j: (0, j)),
        ],
        out_specs=pl.BlockSpec((M, VOCAB_TILE), lambda j: (0, j)),
        # bf16 logits: halves the logits HBM store (cast downstream if f32 needed).
        out_shape=jax.ShapeDtypeStruct((M, VOCAB_SIZE), jnp.bfloat16),
        scratch_shapes=[pltpu.VMEM((M, D_MODEL), jnp.bfloat16)],
        # "arbitrary": the run-once prologue + persistent scratch require a
        # sequential grid on one core (on v5e/v6e there is only one TC anyway).
        compiler_params=pltpu.CompilerParams(
            dimension_semantics=("arbitrary",)),
    )(x_flat, params["slab1"], params["slab2"], params["slab3"],
      params["out_w_q"], params["out_w_scale"], params["out_b_pad"])


# =====================================================================
# Parameter init (deterministic, synthetic) + full forward
# =====================================================================
def init_params(key):
    keys = iter(jax.random.split(key, 32))

    def nrm(shape, scale=0.02):
        return (scale * jax.random.normal(next(keys), shape)).astype(jnp.float32)

    p = {}
    p["tok_emb"] = nrm((VOCAB_SIZE, D_MODEL))
    p["pos_emb"] = nrm((MAX_SEQ_LEN, D_MODEL))

    # --- decoder-layer params (pre-transposed so y = x @ W) ---
    sa_w_in = nrm((D_MODEL, 3 * D_MODEL))
    sa_b_in = nrm((1, 3 * D_MODEL))
    sa_wo = nrm((D_MODEL, D_MODEL))
    sa_bo = nrm((1, D_MODEL))
    # Cross-attention over torch.zeros_like memory: K == b_k and V == b_v for
    # every position, so the softmax is uniform and the cross-attn output is the
    # input-independent constant b_v @ W_o + b_o (exact w.r.t. the reference).
    _ca_w_in = nrm((D_MODEL, 3 * D_MODEL))        # unused given zero memory
    ca_b_in = nrm((1, 3 * D_MODEL))
    ca_wo = nrm((D_MODEL, D_MODEL))
    ca_bo = nrm((1, D_MODEL))
    ca_const = jnp.dot(ca_b_in[:, 2 * D_MODEL:], ca_wo) + ca_bo      # (1, D)
    ff_w1 = nrm((D_MODEL, DIM_FF))
    ff_b1 = nrm((1, DIM_FF))
    ff_w2 = nrm((DIM_FF, D_MODEL))
    ff_b2 = nrm((1, D_MODEL))
    ln_pack = jnp.zeros((6, D_MODEL), jnp.float32).at[0::2, :].set(1.0)

    # Pack the small layer params into 3 slabs (3 constant DMA descriptors).
    p["slab1"] = jnp.concatenate([sa_w_in, sa_b_in], axis=0)                 # (65, 192)
    p["slab2"] = jnp.concatenate(
        [jnp.concatenate([sa_wo, ff_w1], axis=1),
         jnp.concatenate([sa_bo, ff_b1], axis=1)], axis=0)                   # (65, 192)
    p["slab3"] = jnp.concatenate([ff_w2, ff_b2, ca_const, ln_pack], axis=0)  # (136, 64)

    # --- output projection: int8 weight + per-column f32 scale, padded vocab ---
    out_w = nrm((D_MODEL, VOCAB_SIZE))        # pre-transposed: logits = x @ W + b
    out_b = nrm((1, VOCAB_SIZE))
    w_pad = (jnp.zeros((D_MODEL, VOCAB_PAD), jnp.float32)
             .at[:, :VOCAB_SIZE].set(out_w))
    col_max = jnp.max(jnp.abs(w_pad), axis=0, keepdims=True)
    scale = jnp.where(col_max > 0, col_max / 127.0, 1.0)
    p["out_w_q"] = jnp.clip(jnp.round(w_pad / scale), -127, 127).astype(jnp.int8)
    p["out_w_scale"] = scale.astype(jnp.float32)                             # (1, VP)
    p["out_b_pad"] = (jnp.zeros((1, VOCAB_PAD), jnp.float32)
                      .at[:, :VOCAB_SIZE].set(out_b))
    return p


def decoder_only_forward(params, tokens):
    B, S = tokens.shape
    # TODO(synk): embedding gathers stay in plain JAX (a 16-row gather is not
    # worth a Pallas scalar-prefetch gather kernel).
    x = (jnp.take(params["tok_emb"], tokens, axis=0)
         + params["pos_emb"][None, :S, :])
    x_flat = x.reshape(B * S, D_MODEL)
    # NUM_LAYERS == 1: the single decoder layer runs as the fused kernel's
    # run-once prologue.
    logits = fused_decoder_and_projection(x_flat, params, B, S)
    return logits.reshape(B, S, VOCAB_SIZE)


if __name__ == "__main__":
    assert NUM_LAYERS == 1
    key = jax.random.PRNGKey(0)
    pkey, dkey = jax.random.split(key)
    params = init_params(pkey)

    B = 2
    tokens = jax.random.randint(dkey, (B, SEQ_LEN), 0, VOCAB_SIZE, dtype=jnp.int32)

    fwd = jax.jit(decoder_only_forward)     # params as a jit arg (not constants)
    logits = fwd(params, tokens)
    jax.block_until_ready(logits)

    assert logits.shape == (B, SEQ_LEN, VOCAB_SIZE), logits.shape
    assert bool(jnp.all(jnp.isfinite(logits.astype(jnp.float32))))
    print("KERNEL_OK")
</pallas_src>

<mosaic_0001>
module attributes {stable_mosaic.version = 11 : i64} {
  func.func @fused_decoder_kernel(%arg0: i32, %arg1: memref<16x64xf32, #tpu.memory_space<vmem>>, %arg2: memref<65x192xf32, #tpu.memory_space<vmem>>, %arg3: memref<65x192xf32, #tpu.memory_space<vmem>>, %arg4: memref<136x64xf32, #tpu.memory_space<vmem>>, %arg5: memref<64x16768xi8, #tpu.memory_space<vmem>>, %arg6: memref<1x16768xf32, #tpu.memory_space<vmem>>, %arg7: memref<1x16768xf32, #tpu.memory_space<vmem>>, %arg8: memref<16x16768xbf16, #tpu.memory_space<vmem>>, %arg9: memref<16x64xbf16, #tpu.memory_space<vmem>>) attributes {dimension_semantics = [#tpu.dimension_semantics<arbitrary>], iteration_bounds = array<i64: 3>, scalar_prefetch = 0 : i64, scratch_operands = 1 : i64, tpu.core_type = #tpu.core_type<tc>, window_params = [{pipeline_mode = #tpu.pipeline_mode<synchronous>, transform_indices = @transform_0, window_bounds = array<i64: 16, 64>}, {pipeline_mode = #tpu.pipeline_mode<synchronous>, transform_indices = @transform_1, window_bounds = array<i64: 65, 192>}, {pipeline_mode = #tpu.pipeline_mode<synchronous>, transform_indices = @transform_2, window_bounds = array<i64: 65, 192>}, {pipeline_mode = #tpu.pipeline_mode<synchronous>, transform_indices = @transform_3, window_bounds = array<i64: 136, 64>}, {transform_indices = @transform_4, window_bounds = array<i64: 64, 16768>}, {transform_indices = @transform_5, window_bounds = array<i64: 1, 16768>}, {transform_indices = @transform_6, window_bounds = array<i64: 1, 16768>}, {transform_indices = @transform_7, window_bounds = array<i64: 16, 16768>}]} {
    %c0_i32 = arith.constant 0 : i32
    %0 = arith.cmpi eq, %arg0, %c0_i32 : i32
    %1 = arith.extui %0 : i1 to i32
    %c0_i32_0 = arith.constant 0 : i32
    %2 = arith.cmpi ne, %1, %c0_i32_0 : i32
    scf.if %2 {
      %c0_10 = arith.constant 0 : index
      %c0_11 = arith.constant 0 : index
      %15 = vector.load %arg1[%c0_10, %c0_11] : memref<16x64xf32, #tpu.memory_space<vmem>>, vector<16x64xf32>
      %c0_12 = arith.constant 0 : index
      %c0_13 = arith.constant 0 : index
      %16 = vector.load %arg2[%c0_12, %c0_13] : memref<65x192xf32, #tpu.memory_space<vmem>>, vector<65x192xf32>
      %c0_14 = arith.constant 0 : index
      %c0_15 = arith.constant 0 : index
      %17 = vector.load %arg3[%c0_14, %c0_15] : memref<65x192xf32, #tpu.memory_space<vmem>>, vector<65x192xf32>
      %c0_16 = arith.constant 0 : index
      %c0_17 = arith.constant 0 : index
      %18 = vector.load %arg4[%c0_16, %c0_17] : memref<136x64xf32, #tpu.memory_space<vmem>>, vector<136x64xf32>
      %19 = vector.extract_strided_slice %16 {offsets = [0, 0], sizes = [64, 192], strides = [1, 1]} : vector<65x192xf32> to vector<64x192xf32>
      %20 = vector.extract_strided_slice %16 {offsets = [64, 0], sizes = [1, 192], strides = [1, 1]} : vector<65x192xf32> to vector<1x192xf32>
      %21 = vector.extract_strided_slice %17 {offsets = [0, 0], sizes = [64, 64], strides = [1, 1]} : vector<65x192xf32> to vector<64x64xf32>
      %22 = vector.extract_strided_slice %17 {offsets = [0, 64], sizes = [64, 128], strides = [1, 1]} : vector<65x192xf32> to vector<64x128xf32>
      %23 = vector.extract_strided_slice %17 {offsets = [64, 0], sizes = [1, 64], strides = [1, 1]} : vector<65x192xf32> to vector<1x64xf32>
      %24 = vector.extract_strided_slice %17 {offsets = [64, 64], sizes = [1, 128], strides = [1, 1]} : vector<65x192xf32> to vector<1x128xf32>
      %25 = vector.extract_strided_slice %18 {offsets = [0, 0], sizes = [128, 64], strides = [1, 1]} : vector<136x64xf32> to vector<128x64xf32>
      %26 = vector.extract_strided_slice %18 {offsets = [128, 0], sizes = [1, 64], strides = [1, 1]} : vector<136x64xf32> to vector<1x64xf32>
      %27 = vector.extract_strided_slice %18 {offsets = [129, 0], sizes = [1, 64], strides = [1, 1]} : vector<136x64xf32> to vector<1x64xf32>
      %28 = vector.extract_strided_slice %18 {offsets = [130, 0], sizes = [6, 64], strides = [1, 1]} : vector<136x64xf32> to vector<6x64xf32>
      %29 = tpu.iota {dimensions = array<i32: 0>} : vector<8x8xi32>
      %30 = tpu.iota {dimensions = array<i32: 1>} : vector<8x8xi32>
      %31 = arith.cmpi sle, %30, %29 : vector<8x8xi32>
      %cst_18 = arith.constant dense<0.000000e+00> : vector<16x192xf32>
      %32 = tpu.matmul %15, %19, %cst_18 {dimension_numbers = #tpu.dot_dimension_numbers<[1], [0], [0], [1], [0, 0, 1, 1], [], []>} : vector<16x64xf32>, vector<64x192xf32>, vector<16x192xf32> -> vector<16x192xf32>
      %33 = vector.broadcast %20 : vector<1x192xf32> to vector<16x192xf32>
      %34 = arith.addf %32, %33 : vector<16x192xf32>
      %35 = vector.extract_strided_slice %34 {offsets = [0, 0], sizes = [16, 64], strides = [1, 1]} : vector<16x192xf32> to vector<16x64xf32>
      %36 = vector.extract_strided_slice %34 {offsets = [0, 64], sizes = [16, 64], strides = [1, 1]} : vector<16x192xf32> to vector<16x64xf32>
      %37 = vector.extract_strided_slice %34 {offsets = [0, 128], sizes = [16, 64], strides = [1, 1]} : vector<16x192xf32> to vector<16x64xf32>
      %38 = vector.extract_strided_slice %35 {offsets = [0, 0], sizes = [8, 16], strides = [1, 1]} : vector<16x64xf32> to vector<8x16xf32>
      %39 = vector.extract_strided_slice %36 {offsets = [0, 0], sizes = [8, 16], strides = [1, 1]} : vector<16x64xf32> to vector<8x16xf32>
      %cst_19 = arith.constant dense<0.000000e+00> : vector<8x8xf32>
      %40 = tpu.matmul %38, %39, %cst_19 {dimension_numbers = #tpu.dot_dimension_numbers<[1], [1], [0], [0], [0, 0, 1, 0], [], []>} : vector<8x16xf32>, vector<8x16xf32>, vector<8x8xf32> -> vector<8x8xf32>
      %41 = vector.extract_strided_slice %35 {offsets = [0, 16], sizes = [8, 16], strides = [1, 1]} : vector<16x64xf32> to vector<8x16xf32>
      %42 = vector.extract_strided_slice %36 {offsets = [0, 16], sizes = [8, 16], strides = [1, 1]} : vector<16x64xf32> to vector<8x16xf32>
      %cst_20 = arith.constant dense<0.000000e+00> : vector<8x8xf32>
      %43 = tpu.matmul %41, %42, %cst_20 {dimension_numbers = #tpu.dot_dimension_numbers<[1], [1], [0], [0], [0, 0, 1, 0], [], []>} : vector<8x16xf32>, vector<8x16xf32>, vector<8x8xf32> -> vector<8x8xf32>
      %44 = vector.extract_strided_slice %35 {offsets = [0, 32], sizes = [8, 16], strides = [1, 1]} : vector<16x64xf32> to vector<8x16xf32>
      %45 = vector.extract_strided_slice %36 {offsets = [0, 32], sizes = [8, 16], strides = [1, 1]} : vector<16x64xf32> to vector<8x16xf32>
      %cst_21 = arith.constant dense<0.000000e+00> : vector<8x8xf32>
      %46 = tpu.matmul %44, %45, %cst_21 {dimension_numbers = #tpu.dot_dimension_numbers<[1], [1], [0], [0], [0, 0, 1, 0], [], []>} : vector<8x16xf32>, vector<8x16xf32>, vector<8x8xf32> -> vector<8x8xf32>
      %47 = vector.extract_strided_slice %35 {offsets = [0, 48], sizes = [8, 16], strides = [1, 1]} : vector<16x64xf32> to vector<8x16xf32>
      %48 = vector.extract_strided_slice %36 {offsets = [0, 48], sizes = [8, 16], strides = [1, 1]} : vector<16x64xf32> to vector<8x16xf32>
      %cst_22 = arith.constant dense<0.000000e+00> : vector<8x8xf32>
      %49 = tpu.matmul %47, %48, %cst_22 {dimension_numbers = #tpu.dot_dimension_numbers<[1], [1], [0], [0], [0, 0, 1, 0], [], []>} : vector<8x16xf32>, vector<8x16xf32>, vector<8x8xf32> -> vector<8x8xf32>
      %50 = vector.extract_strided_slice %35 {offsets = [8, 0], sizes = [8, 16], strides = [1, 1]} : vector<16x64xf32> to vector<8x16xf32>
      %51 = vector.extract_strided_slice %36 {offsets = [8, 0], sizes = [8, 16], strides = [1, 1]} : vector<16x64xf32> to vector<8x16xf32>
      %cst_23 = arith.constant dense<0.000000e+00> : vector<8x8xf32>
      %52 = tpu.matmul %50, %51, %cst_23 {dimension_numbers = #tpu.dot_dimension_numbers<[1], [1], [0], [0], [0, 0, 1, 0], [], []>} : vector<8x16xf32>, vector<8x16xf32>, vector<8x8xf32> -> vector<8x8xf32>
      %53 = vector.extract_strided_slice %35 {offsets = [8, 16], sizes = [8, 16], strides = [1, 1]} : vector<16x64xf32> to vector<8x16xf32>
      %54 = vector.extract_strided_slice %36 {offsets = [8, 16], sizes = [8, 16], strides = [1, 1]} : vector<16x64xf32> to vector<8x16xf32>
      %cst_24 = arith.constant dense<0.000000e+00> : vector<8x8xf32>
      %55 = tpu.matmul %53, %54, %cst_24 {dimension_numbers = #tpu.dot_dimension_numbers<[1], [1], [0], [0], [0, 0, 1, 0], [], []>} : vector<8x16xf32>, vector<8x16xf32>, vector<8x8xf32> -> vector<8x8xf32>
      %56 = vector.extract_strided_slice %35 {offsets = [8, 32], sizes = [8, 16], strides = [1, 1]} : vector<16x64xf32> to vector<8x16xf32>
      %57 = vector.extract_strided_slice %36 {offsets = [8, 32], sizes = [8, 16], strides = [1, 1]} : vector<16x64xf32> to vector<8x16xf32>
      %cst_25 = arith.constant dense<0.000000e+00> : vector<8x8xf32>
      %58 = tpu.matmul %56, %57, %cst_25 {dimension_numbers = #tpu.dot_dimension_numbers<[1], [1], [0], [0], [0, 0, 1, 0], [], []>} : vector<8x16xf32>, vector<8x16xf32>, vector<8x8xf32> -> vector<8x8xf32>
      %59 = vector.extract_strided_slice %35 {offsets = [8, 48], sizes = [8, 16], strides = [1, 1]} : vector<16x64xf32> to vector<8x16xf32>
      %60 = vector.extract_strided_slice %36 {offsets = [8, 48], sizes = [8, 16], strides = [1, 1]} : vector<16x64xf32> to vector<8x16xf32>
      %cst_26 = arith.constant dense<0.000000e+00> : vector<8x8xf32>
      %61 = tpu.matmul %59, %60, %cst_26 {dimension_numbers = #tpu.dot_dimension_numbers<[1], [1], [0], [0], [0, 0, 1, 0], [], []>} : vector<8x16xf32>, vector<8x16xf32>, vector<8x8xf32> -> vector<8x8xf32>
      %62 = vector.shape_cast %40 : vector<8x8xf32> to vector<1x8x8xf32>
      %63 = vector.shape_cast %43 : vector<8x8xf32> to vector<1x8x8xf32>
      %64 = vector.shape_cast %46 : vector<8x8xf32> to vector<1x8x8xf32>
      %65 = vector.shape_cast %49 : vector<8x8xf32> to vector<1x8x8xf32>
      %66 = vector.shape_cast %52 : vector<8x8xf32> to vector<1x8x8xf32>
      %67 = vector.shape_cast %55 : vector<8x8xf32> to vector<1x8x8xf32>
      %68 = vector.shape_cast %58 : vector<8x8xf32> to vector<1x8x8xf32>
      %69 = vector.shape_cast %61 : vector<8x8xf32> to vector<1x8x8xf32>
      %70 = tpu.concatenate %62, %63, %64, %65, %66, %67, %68, %69 in 0 : vector<1x8x8xf32>, vector<1x8x8xf32>, vector<1x8x8xf32>, vector<1x8x8xf32>, vector<1x8x8xf32>, vector<1x8x8xf32>, vector<1x8x8xf32>, vector<1x8x8xf32> -> vector<8x8x8xf32>
      %cst_27 = arith.constant 2.500000e-01 : f32
      %71 = vector.broadcast %cst_27 : f32 to vector<8x8x8xf32>
      %72 = arith.mulf %70, %71 : vector<8x8x8xf32>
      %73 = vector.shape_cast %31 : vector<8x8xi1> to vector<1x8x8xi1>
      %cst_28 = arith.constant -1.000000e+30 : f32
      %74 = vector.shape_cast %73 : vector<1x8x8xi1> to vector<1x8x8xi1>
      %75 = vector.broadcast %74 : vector<1x8x8xi1> to vector<8x8x8xi1>
      %76 = vector.broadcast %cst_28 : f32 to vector<8x8x8xf32>
      %77 = arith.select %75, %72, %76 : vector<8x8x8xi1>, vector<8x8x8xf32>
      %cst_29 = arith.constant dense<0xFF800000> : vector<8x8xf32>
      %78 = vector.multi_reduction <maximumf>, %77, %cst_29 [2] : vector<8x8x8xf32> to vector<8x8xf32>
      %79 = vector.shape_cast %78 : vector<8x8xf32> to vector<8x8x1xf32>
      %80 = vector.broadcast %79 : vector<8x8x1xf32> to vector<8x8x8xf32>
      %81 = arith.subf %77, %80 : vector<8x8x8xf32>
      %82 = math.exp %81 : vector<8x8x8xf32>
      %cst_30 = arith.constant dense<0.000000e+00> : vector<8x8xf32>
      %83 = vector.multi_reduction <add>, %82, %cst_30 [2] : vector<8x8x8xf32> to vector<8x8xf32>
      %84 = vector.shape_cast %83 : vector<8x8xf32> to vector<8x8x1xf32>
      %85 = vector.broadcast %84 : vector<8x8x1xf32> to vector<8x8x8xf32>
      %86 = arith.divf %82, %85 : vector<8x8x8xf32>
      %87 = vector.extract_strided_slice %86 {offsets = [0, 0, 0], sizes = [1, 8, 8], strides = [1, 1, 1]} : vector<8x8x8xf32> to vector<1x8x8xf32>
      %88 = vector.shape_cast %87 : vector<1x8x8xf32> to vector<8x8xf32>
      %89 = vector.extract_strided_slice %37 {offsets = [0, 0], sizes = [8, 16], strides = [1, 1]} : vector<16x64xf32> to vector<8x16xf32>
      %cst_31 = arith.constant dense<0.000000e+00> : vector<8x16xf32>
      %90 = tpu.matmul %88, %89, %cst_31 {dimension_numbers = #tpu.dot_dimension_numbers<[1], [0], [0], [1], [0, 0, 1, 1], [], []>} : vector<8x8xf32>, vector<8x16xf32>, vector<8x16xf32> -> vector<8x16xf32>
      %91 = vector.extract_strided_slice %86 {offsets = [1, 0, 0], sizes = [1, 8, 8], strides = [1, 1, 1]} : vector<8x8x8xf32> to vector<1x8x8xf32>
      %92 = vector.shape_cast %91 : vector<1x8x8xf32> to vector<8x8xf32>
      %93 = vector.extract_strided_slice %37 {offsets = [0, 16], sizes = [8, 16], strides = [1, 1]} : vector<16x64xf32> to vector<8x16xf32>
      %cst_32 = arith.constant dense<0.000000e+00> : vector<8x16xf32>
      %94 = tpu.matmul %92, %93, %cst_32 {dimension_numbers = #tpu.dot_dimension_numbers<[1], [0], [0], [1], [0, 0, 1, 1], [], []>} : vector<8x8xf32>, vector<8x16xf32>, vector<8x16xf32> -> vector<8x16xf32>
      %95 = vector.extract_strided_slice %86 {offsets = [2, 0, 0], sizes = [1, 8, 8], strides = [1, 1, 1]} : vector<8x8x8xf32> to vector<1x8x8xf32>
      %96 = vector.shape_cast %95 : vector<1x8x8xf32> to vector<8x8xf32>
      %97 = vector.extract_strided_slice %37 {offsets = [0, 32], sizes = [8, 16], strides = [1, 1]} : vector<16x64xf32> to vector<8x16xf32>
      %cst_33 = arith.constant dense<0.000000e+00> : vector<8x16xf32>
      %98 = tpu.matmul %96, %97, %cst_33 {dimension_numbers = #tpu.dot_dimension_numbers<[1], [0], [0], [1], [0, 0, 1, 1], [], []>} : vector<8x8xf32>, vector<8x16xf32>, vector<8x16xf32> -> vector<8x16xf32>
      %99 = vector.extract_strided_slice %86 {offsets = [3, 0, 0], sizes = [1, 8, 8], strides = [1, 1, 1]} : vector<8x8x8xf32> to vector<1x8x8xf32>
      %100 = vector.shape_cast %99 : vector<1x8x8xf32> to vector<8x8xf32>
      %101 = vector.extract_strided_slice %37 {offsets = [0, 48], sizes = [8, 16], strides = [1, 1]} : vector<16x64xf32> to vector<8x16xf32>
      %cst_34 = arith.constant dense<0.000000e+00> : vector<8x16xf32>
      %102 = tpu.matmul %100, %101, %cst_34 {dimension_numbers = #tpu.dot_dimension_numbers<[1], [0], [0], [1], [0, 0, 1, 1], [], []>} : vector<8x8xf32>, vector<8x16xf32>, vector<8x16xf32> -> vector<8x16xf32>
      %103 = tpu.concatenate %90, %94, %98, %102 in 1 : vector<8x16xf32>, vector<8x16xf32>, vector<8x16xf32>, vector<8x16xf32> -> vector<8x64xf32>
      %104 = vector.extract_strided_slice %86 {offsets = [4, 0, 0], sizes = [1, 8, 8], strides = [1, 1, 1]} : vector<8x8x8xf32> to vector<1x8x8xf32>
      %105 = vector.shape_cast %104 : vector<1x8x8xf32> to vector<8x8xf32>
      %106 = vector.extract_strided_slice %37 {offsets = [8, 0], sizes = [8, 16], strides = [1, 1]} : vector<16x64xf32> to vector<8x16xf32>
      %cst_35 = arith.constant dense<0.000000e+00> : vector<8x16xf32>
      %107 = tpu.matmul %105, %106, %cst_35 {dimension_numbers = #tpu.dot_dimension_numbers<[1], [0], [0], [1], [0, 0, 1, 1], [], []>} : vector<8x8xf32>, vector<8x16xf32>, vector<8x16xf32> -> vector<8x16xf32>
      %108 = vector.extract_strided_slice %86 {offsets = [5, 0, 0], sizes = [1, 8, 8], strides = [1, 1, 1]} : vector<8x8x8xf32> to vector<1x8x8xf32>
      %109 = vector.shape_cast %108 : vector<1x8x8xf32> to vector<8x8xf32>
      %110 = vector.extract_strided_slice %37 {offsets = [8, 16], sizes = [8, 16], strides = [1, 1]} : vector<16x64xf32> to vector<8x16xf32>
      %cst_36 = arith.constant dense<0.000000e+00> : vector<8x16xf32>
      %111 = tpu.matmul %109, %110, %cst_36 {dimension_numbers = #tpu.dot_dimension_numbers<[1], [0], [0], [1], [0, 0, 1, 1], [], []>} : vector<8x8xf32>, vector<8x16xf32>, vector<8x16xf32> -> vector<8x16xf32>
      %112 = vector.extract_strided_slice %86 {offsets = [6, 0, 0], sizes = [1, 8, 8], strides = [1, 1, 1]} : vector<8x8x8xf32> to vector<1x8x8xf32>
      %113 = vector.shape_cast %112 : vector<1x8x8xf32> to vector<8x8xf32>
      %114 = vector.extract_strided_slice %37 {offsets = [8, 32], sizes = [8, 16], strides = [1, 1]} : vector<16x64xf32> to vector<8x16xf32>
      %cst_37 = arith.constant dense<0.000000e+00> : vector<8x16xf32>
      %115 = tpu.matmul %113, %114, %cst_37 {dimension_numbers = #tpu.dot_dimension_numbers<[1], [0], [0], [1], [0, 0, 1, 1], [], []>} : vector<8x8xf32>, vector<8x16xf32>, vector<8x16xf32> -> vector<8x16xf32>
      %116 = vector.extract_strided_slice %86 {offsets = [7, 0, 0], sizes = [1, 8, 8], strides = [1, 1, 1]} : vector<8x8x8xf32> to vector<1x8x8xf32>
      %117 = vector.shape_cast %116 : vector<1x8x8xf32> to vector<8x8xf32>
      %118 = vector.extract_strided_slice %37 {offsets = [8, 48], sizes = [8, 16], strides = [1, 1]} : vector<16x64xf32> to vector<8x16xf32>
      %cst_38 = arith.constant dense<0.000000e+00> : vector<8x16xf32>
      %119 = tpu.matmul %117, %118, %cst_38 {dimension_numbers = #tpu.dot_dimension_numbers<[1], [0], [0], [1], [0, 0, 1, 1], [], []>} : vector<8x8xf32>, vector<8x16xf32>, vector<8x16xf32> -> vector<8x16xf32>
      %120 = tpu.concatenate %107, %111, %115, %119 in 1 : vector<8x16xf32>, vector<8x16xf32>, vector<8x16xf32>, vector<8x16xf32> -> vector<8x64xf32>
      %121 = tpu.concatenate %103, %120 in 0 : vector<8x64xf32>, vector<8x64xf32> -> vector<16x64xf32>
      %cst_39 = arith.constant dense<0.000000e+00> : vector<16x64xf32>
      %122 = tpu.matmul %121, %21, %cst_39 {dimension_numbers = #tpu.dot_dimension_numbers<[1], [0], [0], [1], [0, 0, 1, 1], [], []>} : vector<16x64xf32>, vector<64x64xf32>, vector<16x64xf32> -> vector<16x64xf32>
      %123 = vector.broadcast %23 : vector<1x64xf32> to vector<16x64xf32>
      %124 = arith.addf %122, %123 : vector<16x64xf32>
      %125 = arith.addf %15, %124 : vector<16x64xf32>
      %126 = vector.extract_strided_slice %28 {offsets = [0, 0], sizes = [1, 64], strides = [1, 1]} : vector<6x64xf32> to vector<1x64xf32>
      %127 = vector.extract_strided_slice %28 {offsets = [1, 0], sizes = [1, 64], strides = [1, 1]} : vector<6x64xf32> to vector<1x64xf32>
      %cst_40 = arith.constant dense<0.000000e+00> : vector<16xf32>
      %128 = vector.multi_reduction <add>, %125, %cst_40 [1] : vector<16x64xf32> to vector<16xf32>
      %129 = vector.shape_cast %128 : vector<16xf32> to vector<16x1xf32>
      %cst_41 = arith.constant 6.400000e+01 : f32
      %130 = vector.broadcast %cst_41 : f32 to vector<16x1xf32>
      %131 = arith.divf %129, %130 : vector<16x1xf32>
      %132 = vector.broadcast %131 : vector<16x1xf32> to vector<16x64xf32>
      %133 = arith.subf %125, %132 : vector<16x64xf32>
      %134 = vector.broadcast %131 : vector<16x1xf32> to vector<16x64xf32>
      %135 = arith.subf %125, %134 : vector<16x64xf32>
      %136 = arith.mulf %133, %135 : vector<16x64xf32>
      %cst_42 = arith.constant dense<0.000000e+00> : vector<16xf32>
      %137 = vector.multi_reduction <add>, %136, %cst_42 [1] : vector<16x64xf32> to vector<16xf32>
      %138 = vector.shape_cast %137 : vector<16xf32> to vector<16x1xf32>
      %cst_43 = arith.constant 6.400000e+01 : f32
      %139 = vector.broadcast %cst_43 : f32 to vector<16x1xf32>
      %140 = arith.divf %138, %139 : vector<16x1xf32>
      %141 = vector.broadcast %131 : vector<16x1xf32> to vector<16x64xf32>
      %142 = arith.subf %125, %141 : vector<16x64xf32>
      %cst_44 = arith.constant 9.99999974E-6 : f32
      %143 = vector.broadcast %cst_44 : f32 to vector<16x1xf32>
      %144 = arith.addf %140, %143 : vector<16x1xf32>
      %145 = math.rsqrt %144 : vector<16x1xf32>
      %146 = vector.broadcast %145 : vector<16x1xf32> to vector<16x64xf32>
      %147 = arith.mulf %142, %146 : vector<16x64xf32>
      %148 = vector.broadcast %126 : vector<1x64xf32> to vector<16x64xf32>
      %149 = arith.mulf %147, %148 : vector<16x64xf32>
      %150 = vector.broadcast %127 : vector<1x64xf32> to vector<16x64xf32>
      %151 = arith.addf %149, %150 : vector<16x64xf32>
      %152 = vector.broadcast %27 : vector<1x64xf32> to vector<16x64xf32>
      %153 = arith.addf %151, %152 : vector<16x64xf32>
      %154 = vector.extract_strided_slice %28 {offsets = [2, 0], sizes = [1, 64], strides = [1, 1]} : vector<6x64xf32> to vector<1x64xf32>
      %155 = vector.extract_strided_slice %28 {offsets = [3, 0], sizes = [1, 64], strides = [1, 1]} : vector<6x64xf32> to vector<1x64xf32>
      %cst_45 = arith.constant dense<0.000000e+00> : vector<16xf32>
      %156 = vector.multi_reduction <add>, %153, %cst_45 [1] : vector<16x64xf32> to vector<16xf32>
      %157 = vector.shape_cast %156 : vector<16xf32> to vector<16x1xf32>
      %cst_46 = arith.constant 6.400000e+01 : f32
      %158 = vector.broadcast %cst_46 : f32 to vector<16x1xf32>
      %159 = arith.divf %157, %158 : vector<16x1xf32>
      %160 = vector.broadcast %159 : vector<16x1xf32> to vector<16x64xf32>
      %161 = arith.subf %153, %160 : vector<16x64xf32>
      %162 = vector.broadcast %159 : vector<16x1xf32> to vector<16x64xf32>
      %163 = arith.subf %153, %162 : vector<16x64xf32>
      %164 = arith.mulf %161, %163 : vector<16x64xf32>
      %cst_47 = arith.constant dense<0.000000e+00> : vector<16xf32>
      %165 = vector.multi_reduction <add>, %164, %cst_47 [1] : vector<16x64xf32> to vector<16xf32>
      %166 = vector.shape_cast %165 : vector<16xf32> to vector<16x1xf32>
      %cst_48 = arith.constant 6.400000e+01 : f32
      %167 = vector.broadcast %cst_48 : f32 to vector<16x1xf32>
      %168 = arith.divf %166, %167 : vector<16x1xf32>
      %169 = vector.broadcast %159 : vector<16x1xf32> to vector<16x64xf32>
      %170 = arith.subf %153, %169 : vector<16x64xf32>
      %cst_49 = arith.constant 9.99999974E-6 : f32
      %171 = vector.broadcast %cst_49 : f32 to vector<16x1xf32>
      %172 = arith.addf %168, %171 : vector<16x1xf32>
      %173 = math.rsqrt %172 : vector<16x1xf32>
      %174 = vector.broadcast %173 : vector<16x1xf32> to vector<16x64xf32>
      %175 = arith.mulf %170, %174 : vector<16x64xf32>
      %176 = vector.broadcast %154 : vector<1x64xf32> to vector<16x64xf32>
      %177 = arith.mulf %175, %176 : vector<16x64xf32>
      %178 = vector.broadcast %155 : vector<1x64xf32> to vector<16x64xf32>
      %179 = arith.addf %177, %178 : vector<16x64xf32>
      %cst_50 = arith.constant dense<0.000000e+00> : vector<16x128xf32>
      %180 = tpu.matmul %179, %22, %cst_50 {dimension_numbers = #tpu.dot_dimension_numbers<[1], [0], [0], [1], [0, 0, 1, 1], [], []>} : vector<16x64xf32>, vector<64x128xf32>, vector<16x128xf32> -> vector<16x128xf32>
      %181 = vector.broadcast %24 : vector<1x128xf32> to vector<16x128xf32>
      %182 = arith.addf %180, %181 : vector<16x128xf32>
      %cst_51 = arith.constant 0.000000e+00 : f32
      %183 = vector.broadcast %cst_51 : f32 to vector<16x128xf32>
      %184 = arith.maximumf %182, %183 : vector<16x128xf32>
      %cst_52 = arith.constant dense<0.000000e+00> : vector<16x64xf32>
      %185 = tpu.matmul %184, %25, %cst_52 {dimension_numbers = #tpu.dot_dimension_numbers<[1], [0], [0], [1], [0, 0, 1, 1], [], []>} : vector<16x128xf32>, vector<128x64xf32>, vector<16x64xf32> -> vector<16x64xf32>
      %186 = vector.broadcast %26 : vector<1x64xf32> to vector<16x64xf32>
      %187 = arith.addf %185, %186 : vector<16x64xf32>
      %188 = arith.addf %179, %187 : vector<16x64xf32>
      %189 = vector.extract_strided_slice %28 {offsets = [4, 0], sizes = [1, 64], strides = [1, 1]} : vector<6x64xf32> to vector<1x64xf32>
      %190 = vector.extract_strided_slice %28 {offsets = [5, 0], sizes = [1, 64], strides = [1, 1]} : vector<6x64xf32> to vector<1x64xf32>
      %cst_53 = arith.constant dense<0.000000e+00> : vector<16xf32>
      %191 = vector.multi_reduction <add>, %188, %cst_53 [1] : vector<16x64xf32> to vector<16xf32>
      %192 = vector.shape_cast %191 : vector<16xf32> to vector<16x1xf32>
      %cst_54 = arith.constant 6.400000e+01 : f32
      %193 = vector.broadcast %cst_54 : f32 to vector<16x1xf32>
      %194 = arith.divf %192, %193 : vector<16x1xf32>
      %195 = vector.broadcast %194 : vector<16x1xf32> to vector<16x64xf32>
      %196 = arith.subf %188, %195 : vector<16x64xf32>
      %197 = vector.broadcast %194 : vector<16x1xf32> to vector<16x64xf32>
      %198 = arith.subf %188, %197 : vector<16x64xf32>
      %199 = arith.mulf %196, %198 : vector<16x64xf32>
      %cst_55 = arith.constant dense<0.000000e+00> : vector<16xf32>
      %200 = vector.multi_reduction <add>, %199, %cst_55 [1] : vector<16x64xf32> to vector<16xf32>
      %201 = vector.shape_cast %200 : vector<16xf32> to vector<16x1xf32>
      %cst_56 = arith.constant 6.400000e+01 : f32
      %202 = vector.broadcast %cst_56 : f32 to vector<16x1xf32>
      %203 = arith.divf %201, %202 : vector<16x1xf32>
      %204 = vector.broadcast %194 : vector<16x1xf32> to vector<16x64xf32>
      %205 = arith.subf %188, %204 : vector<16x64xf32>
      %cst_57 = arith.constant 9.99999974E-6 : f32
      %206 = vector.broadcast %cst_57 : f32 to vector<16x1xf32>
      %207 = arith.addf %203, %206 : vector<16x1xf32>
      %208 = math.rsqrt %207 : vector<16x1xf32>
      %209 = vector.broadcast %208 : vector<16x1xf32> to vector<16x64xf32>
      %210 = arith.mulf %205, %209 : vector<16x64xf32>
      %211 = vector.broadcast %189 : vector<1x64xf32> to vector<16x64xf32>
      %212 = arith.mulf %210, %211 : vector<16x64xf32>
      %213 = vector.broadcast %190 : vector<1x64xf32> to vector<16x64xf32>
      %214 = arith.addf %212, %213 : vector<16x64xf32>
      %215 = arith.truncf %214 : vector<16x64xf32> to vector<16x64xbf16>
      %c0_58 = arith.constant 0 : index
      %c0_59 = arith.constant 0 : index
      %216 = vector.load %arg9[%c0_58, %c0_59] : memref<16x64xbf16, #tpu.memory_space<vmem>>, vector<16x64xbf16>
      tpu.vector_store %arg9[%c0_58, %c0_59], %215 {strides = array<i32>} : memref<16x64xbf16, #tpu.memory_space<vmem>>, vector<16x64xbf16>,
    } else {
    }
    %c0 = arith.constant 0 : index
    %c0_1 = arith.constant 0 : index
    %3 = vector.load %arg5[%c0, %c0_1] : memref<64x16768xi8, #tpu.memory_space<vmem>>, vector<64x16768xi8>
    %4 = arith.sitofp %3 : vector<64x16768xi8> to vector<64x16768xbf16>
    %c0_2 = arith.constant 0 : index
    %c0_3 = arith.constant 0 : index
    %5 = vector.load %arg9[%c0_2, %c0_3] : memref<16x64xbf16, #tpu.memory_space<vmem>>, vector<16x64xbf16>
    %cst = arith.constant dense<0.000000e+00> : vector<16x16768xf32>
    %6 = tpu.matmul %5, %4, %cst {dimension_numbers = #tpu.dot_dimension_numbers<[1], [0], [0], [1], [0, 0, 1, 1], [], []>} : vector<16x64xbf16>, vector<64x16768xbf16>, vector<16x16768xf32> -> vector<16x16768xf32>
    %c0_4 = arith.constant 0 : index
    %c0_5 = arith.constant 0 : index
    %7 = vector.load %arg6[%c0_4, %c0_5] : memref<1x16768xf32, #tpu.memory_space<vmem>>, vector<1x16768xf32>
    %8 = vector.broadcast %7 : vector<1x16768xf32> to vector<16x16768xf32>
    %9 = arith.mulf %6, %8 : vector<16x16768xf32>
    %c0_6 = arith.constant 0 : index
    %c0_7 = arith.constant 0 : index
    %10 = vector.load %arg7[%c0_6, %c0_7] : memref<1x16768xf32, #tpu.memory_space<vmem>>, vector<1x16768xf32>
    %11 = vector.broadcast %10 : vector<1x16768xf32> to vector<16x16768xf32>
    %12 = arith.addf %9, %11 : vector<16x16768xf32>
    %13 = arith.truncf %12 : vector<16x16768xf32> to vector<16x16768xbf16>
    %c0_8 = arith.constant 0 : index
    %c0_9 = arith.constant 0 : index
    %14 = vector.load %arg8[%c0_8, %c0_9] : memref<16x16768xbf16, #tpu.memory_space<vmem>>, vector<16x16768xbf16>
    tpu.vector_store %arg8[%c0_8, %c0_9], %13 {strides = array<i32>} : memref<16x16768xbf16, #tpu.memory_space<vmem>>, vector<16x16768xbf16>,
    return
  }
  func.func @transform_0(%arg0: i32) -> (i32, i32) {
    %c0_i32 = arith.constant 0 : i32
    %c0_i32_0 = arith.constant 0 : i32
    %c0_i32_1 = arith.constant 0 : i32
    return %c0_i32, %c0_i32_0 : i32, i32
  }
  func.func @transform_1(%arg0: i32) -> (i32, i32) {
    %c0_i32 = arith.constant 0 : i32
    %c0_i32_0 = arith.constant 0 : i32
    %c0_i32_1 = arith.constant 0 : i32
    return %c0_i32, %c0_i32_0 : i32, i32
  }
  func.func @transform_2(%arg0: i32) -> (i32, i32) {
    %c0_i32 = arith.constant 0 : i32
    %c0_i32_0 = arith.constant 0 : i32
    %c0_i32_1 = arith.constant 0 : i32
    return %c0_i32, %c0_i32_0 : i32, i32
  }
  func.func @transform_3(%arg0: i32) -> (i32, i32) {
    %c0_i32 = arith.constant 0 : i32
    %c0_i32_0 = arith.constant 0 : i32
    %c0_i32_1 = arith.constant 0 : i32
    return %c0_i32, %c0_i32_0 : i32, i32
  }
  func.func @transform_4(%arg0: i32) -> (i32, i32) {
    %c0_i32 = arith.constant 0 : i32
    %c0_i32_0 = arith.constant 0 : i32
    return %c0_i32, %arg0 : i32, i32
  }
  func.func @transform_5(%arg0: i32) -> (i32, i32) {
    %c0_i32 = arith.constant 0 : i32
    %c0_i32_0 = arith.constant 0 : i32
    return %c0_i32, %arg0 : i32, i32
  }
  func.func @transform_6(%arg0: i32) -> (i32, i32) {
    %c0_i32 = arith.constant 0 : i32
    %c0_i32_0 = arith.constant 0 : i32
    return %c0_i32, %arg0 : i32, i32
  }
  func.func @transform_7(%arg0: i32) -> (i32, i32) {
    %c0_i32 = arith.constant 0 : i32
    %c0_i32_0 = arith.constant 0 : i32
    return %c0_i32, %arg0 : i32, i32
  }
}

</mosaic_0001>

<llo_original>
// kernel: decoder_only_forward.1
$region0: #{decoder_only_forward.1}
  #allocation0 [shape = 'u32[]', space=smem, size = 0x4, offset = 0x4, fixed_abs, tag = 'smem constant byte address 0x4 - core index']
  #allocation1 [shape = 'u32[144,128]{1,0:T(1,128)}', space=vmem, size = 0x12000, scoped, tag = 'internal scratch']
  #allocation2 [shape = 'bf16[16,64]{1,0:T(16,128)(2,1)}', space=vmem, size = 0x1000, scoped, tag = 'scratch operand']
  %s0 = inlined_call_operand.vmem [shape: f32[16,64], index: 0, kind: input, shape index: {}]
  %s1 = inlined_call_operand.vmem [shape: f32[65,192], index: 1, kind: input, shape index: {}]
  %s2 = inlined_call_operand.vmem [shape: f32[65,192], index: 2, kind: input, shape index: {}]
  %s3 = inlined_call_operand.vmem [shape: f32[136,64], index: 3, kind: input, shape index: {}]
  %s4 = inlined_call_operand.vmem [shape: s8[64,50304], index: 4, kind: input, shape index: {}]
  %s5 = inlined_call_operand.vmem [shape: f32[1,50304], index: 5, kind: input, shape index: {}]
  %s6 = inlined_call_operand.vmem [shape: f32[1,50304], index: 6, kind: input, shape index: {}]
  %s7 = inlined_call_operand.hbm [shape: bf16[16,50257], index: 7, kind: output, shape index: {}]
  %s8 = sld [smem:[#allocation0]]
  $region88: #{decoder_only_forward.1} parent=0
    _
  %s10 = ssub.s32 1, %s8
  %s11 = scalar_select 0, %s10, %s8
  $region1: #{decoder_only_forward.1} parent=0
    #allocation3 [shape = 'u8[2146304]{0}', space=vmem, size = 0x20c000, scoped, tag = 'input window, operand 4']
    #allocation4 [shape = 'u8[1073152]{0}', space=vmem, size = 0x106000, scoped, tag = 'output window, operand 0']
    #allocation5 [shape = 's32[2]{0}', space=sflag, size = 0x8, scoped, tag = 'scoped memory for decoder_only_forward.1']
    %12 = vsyncpa [#allocation5], 0
    %s13 = scalar_lea.sflag [#allocation5], 1
    %14 = vsyncpa %s13, 0
    loop: start=0, step=1, limit=5
    $region2: #{decoder_only_forward.1} parent=1 // loop_pre_header
      _
    $region3: #{decoder_only_forward.1} parent=1 // loop_header
      %s16 = sphi 0, %s20
      %p17 = scmp.ge.s32.totalorder %s16, 5
      %s24 = sphi 0, %s24
      %s26 = sphi 0, %s24
      %s27 = sphi 0, %s26
      %s41 = sphi 0, %s27
      %s45 = sphi 0, %s45
      %s47 = sphi 0, %s45
      %s48 = sphi 0, %s47
      %s62 = sphi 0, %s48
      %s66 = sphi 0, %s66
      %s68 = sphi 0, %s66
      %s69 = sphi 0, %s68
      %s83 = sphi 0, %s69
      %s87 = sphi 0, %s87
      %s89 = sphi 0, %s87
      %s90 = sphi 0, %s89
      %s104 = sphi 0, %s90
      %s110 = sphi 0, %s112
      %s113 = sphi 0, %s110
      %s114 = sphi 0, %s113
      %s130 = sphi 0, %s114
      %s136 = sphi 0, %s138
      %s139 = sphi 0, %s136
      %s140 = sphi 0, %s139
      %s156 = sphi 0, %s140
      %s162 = sphi 0, %s164
      %s165 = sphi 0, %s162
      %s166 = sphi 0, %s165
      %s182 = sphi 0, %s166
      %s188 = sphi 0, %s190
      %s191 = sphi 0, %s188
      %s192 = sphi 0, %s191
      %s208 = sphi 0, %s192
    $region4: #{decoder_only_forward.1} parent=1 // loop_header_branch
      %19 = sbr.rel (%p17) target = $region8
    $region5: #{decoder_only_forward.1} parent=1 // loop_body
      %s21 = ssub.s32 %s16, 1
      %s22 = ssub.s32 %s16, 2
      %s23 = sadd.s32 %s16, 1
      %s25 = sadd.s32 %s24, 1
      %p28 = scmp.eq.s32.totalorder %s16, 2
      %p29 = scmp.ne.s32.totalorder %s24, %s26
      %p30 = scmp.eq.s32.totalorder %s16, 0
      %p31 = por %p29, %p30
      %p32 = scmp.ne.s32.totalorder %s24, %s26
      %p33 = scmp.eq.s32.totalorder %s21, 2
      %p34 = por %p32, %p33
      %p35 = scmp.ne.s32.totalorder %s26, %s27
      %p36 = scmp.eq.s32.totalorder %s21, 0
      %p37 = por %p35, %p36
      %p38 = scmp.ne.s32.totalorder %s26, %s27
      %p39 = scmp.eq.s32.totalorder %s22, 2
      %p40 = por %p38, %p39
      %p42 = scmp.ne.s32.totalorder %s27, %s41
      %p43 = scmp.eq.s32.totalorder %s22, 0
      %p44 = por %p42, %p43
      %s46 = sadd.s32 %s45, 1
      %p49 = scmp.eq.s32.totalorder %s16, 2
      %p50 = scmp.ne.s32.totalorder %s45, %s47
      %p51 = scmp.eq.s32.totalorder %s16, 0
      %p52 = por %p50, %p51
      %p53 = scmp.ne.s32.totalorder %s45, %s47
      %p54 = scmp.eq.s32.totalorder %s21, 2
      %p55 = por %p53, %p54
      %p56 = scmp.ne.s32.totalorder %s47, %s48
      %p57 = scmp.eq.s32.totalorder %s21, 0
      %p58 = por %p56, %p57
      %p59 = scmp.ne.s32.totalorder %s47, %s48
      %p60 = scmp.eq.s32.totalorder %s22, 2
      %p61 = por %p59, %p60
      %p63 = scmp.ne.s32.totalorder %s48, %s62
      %p64 = scmp.eq.s32.totalorder %s22, 0
      %p65 = por %p63, %p64
      %s67 = sadd.s32 %s66, 1
      %p70 = scmp.eq.s32.totalorder %s16, 2
      %p71 = scmp.ne.s32.totalorder %s66, %s68
      %p72 = scmp.eq.s32.totalorder %s16, 0
      %p73 = por %p71, %p72
      %p74 = scmp.ne.s32.totalorder %s66, %s68
      %p75 = scmp.eq.s32.totalorder %s21, 2
      %p76 = por %p74, %p75
      %p77 = scmp.ne.s32.totalorder %s68, %s69
      %p78 = scmp.eq.s32.totalorder %s21, 0
      %p79 = por %p77, %p78
      %p80 = scmp.ne.s32.totalorder %s68, %s69
      %p81 = scmp.eq.s32.totalorder %s22, 2
      %p82 = por %p80, %p81
      %p84 = scmp.ne.s32.totalorder %s69, %s83
      %p85 = scmp.eq.s32.totalorder %s22, 0
      %p86 = por %p84, %p85
      %s88 = sadd.s32 %s87, 1
      %p91 = scmp.eq.s32.totalorder %s16, 2
      %p92 = scmp.ne.s32.totalorder %s87, %s89
      %p93 = scmp.eq.s32.totalorder %s16, 0
      %p94 = por %p92, %p93
      %p95 = scmp.ne.s32.totalorder %s87, %s89
      %p96 = scmp.eq.s32.totalorder %s21, 2
      %p97 = por %p95, %p96
      %p98 = scmp.ne.s32.totalorder %s89, %s90
      %p99 = scmp.eq.s32.totalorder %s21, 0
      %p100 = por %p98, %p99
      %p101 = scmp.ne.s32.totalorder %s89, %s90
      %p102 = scmp.eq.s32.totalorder %s22, 2
      %p103 = por %p101, %p102
      %p105 = scmp.ne.s32.totalorder %s90, %s104
      %p106 = scmp.eq.s32.totalorder %s22, 0
      %p107 = por %p105, %p106
      %s108 = ssub.s32 %s16, %s23
      %p109 = scmp.eq.s32.totalorder %s108, 0
      %s111 = sadd.s32 %s110, 1
      %s112 = scalar_select %p109, %s110, %s111
      %p115 = pneg %p109
      %p116 = scmp.eq.s32.totalorder %s16, 2
      %p117 = por %p115, %p116
      %p118 = scmp.ne.s32.totalorder %s110, %s113
      %p119 = scmp.eq.s32.totalorder %s16, 0
      %p120 = por %p118, %p119
      %p121 = scmp.ne.s32.totalorder %s110, %s113
      %p122 = scmp.eq.s32.totalorder %s21, 2
      %p123 = por %p121, %p122
      %p124 = scmp.ne.s32.totalorder %s113, %s114
      %p125 = scmp.eq.s32.totalorder %s21, 0
      %p126 = por %p124, %p125
      %p127 = scmp.ne.s32.totalorder %s113, %s114
      %p128 = scmp.eq.s32.totalorder %s22, 2
      %p129 = por %p127, %p128
      %p131 = scmp.ne.s32.totalorder %s114, %s130
      %p132 = scmp.eq.s32.totalorder %s22, 0
      %p133 = por %p131, %p132
      %s134 = ssub.s32 %s16, %s23
      %p135 = scmp.eq.s32.totalorder %s134, 0
      %s137 = sadd.s32 %s136, 1
      %s138 = scalar_select %p135, %s136, %s137
      %p141 = pneg %p135
      %p142 = scmp.eq.s32.totalorder %s16, 2
      %p143 = por %p141, %p142
      %p144 = scmp.ne.s32.totalorder %s136, %s139
      %p145 = scmp.eq.s32.totalorder %s16, 0
      %p146 = por %p144, %p145
      %p147 = scmp.ne.s32.totalorder %s136, %s139
      %p148 = scmp.eq.s32.totalorder %s21, 2
      %p149 = por %p147, %p148
      %p150 = scmp.ne.s32.totalorder %s139, %s140
      %p151 = scmp.eq.s32.totalorder %s21, 0
      %p152 = por %p150, %p151
      %p153 = scmp.ne.s32.totalorder %s139, %s140
      %p154 = scmp.eq.s32.totalorder %s22, 2
      %p155 = por %p153, %p154
      %p157 = scmp.ne.s32.totalorder %s140, %s156
      %p158 = scmp.eq.s32.totalorder %s22, 0
      %p159 = por %p157, %p158
      %s160 = ssub.s32 %s16, %s23
      %p161 = scmp.eq.s32.totalorder %s160, 0
      %s163 = sadd.s32 %s162, 1
      %s164 = scalar_select %p161, %s162, %s163
      %p167 = pneg %p161
      %p168 = scmp.eq.s32.totalorder %s16, 2
      %p169 = por %p167, %p168
      %p170 = scmp.ne.s32.totalorder %s162, %s165
      %p171 = scmp.eq.s32.totalorder %s16, 0
      %p172 = por %p170, %p171
      %p173 = scmp.ne.s32.totalorder %s162, %s165
      %p174 = scmp.eq.s32.totalorder %s21, 2
      %p175 = por %p173, %p174
      %p176 = scmp.ne.s32.totalorder %s165, %s166
      %p177 = scmp.eq.s32.totalorder %s21, 0
      %p178 = por %p176, %p177
      %p179 = scmp.ne.s32.totalorder %s165, %s166
      %p180 = scmp.eq.s32.totalorder %s22, 2
      %p181 = por %p179, %p180
      %p183 = scmp.ne.s32.totalorder %s166, %s182
      %p184 = scmp.eq.s32.totalorder %s22, 0
      %p185 = por %p183, %p184
      %s186 = ssub.s32 %s16, %s23
      %p187 = scmp.eq.s32.totalorder %s186, 0
      %s189 = sadd.s32 %s188, 1
      %s190 = scalar_select %p187, %s188, %s189
      %p193 = pneg %p187
      %p194 = scmp.eq.s32.totalorder %s16, 2
      %p195 = por %p193, %p194
      %p196 = scmp.ne.s32.totalorder %s188, %s191
      %p197 = scmp.eq.s32.totalorder %s16, 0
      %p198 = por %p196, %p197
      %p199 = scmp.ne.s32.totalorder %s188, %s191
      %p200 = scmp.eq.s32.totalorder %s21, 2
      %p201 = por %p199, %p200
      %p202 = scmp.ne.s32.totalorder %s191, %s192
      %p203 = scmp.eq.s32.totalorder %s21, 0
      %p204 = por %p202, %p203
      %p205 = scmp.ne.s32.totalorder %s191, %s192
      %p206 = scmp.eq.s32.totalorder %s22, 2
      %p207 = por %p205, %p206
      %p209 = scmp.ne.s32.totalorder %s192, %s208
      %p210 = scmp.eq.s32.totalorder %s22, 0
      %p211 = por %p209, %p210
      %p212 = scmp.le.s32.totalorder 1, %s16
      %p213 = scmp.lt.s32.totalorder %s16, 4
      %p214 = pnand %p212, %p213
      %p215 = pneg %p214
      // Predicated region
      $region9: #{decoder_only_forward.1} parent=5 // pred_check
        _
      $region10: #{decoder_only_forward.1} parent=5 // pred_check_branch
        %217 = sbr.rel (%p214) target = $region12
      $region11: #{decoder_only_forward.1} parent=5 // pred_region
        %s218 = ssub.s32 %s16, 1
        // Predicated region
        $region13: #{decoder_only_forward.1} parent=11 // pred_check
          %p219 = pneg %p37
        $region14: #{decoder_only_forward.1} parent=11 // pred_check_branch
          %221 = sbr.rel (%p219) target = $region16
        $region15: #{decoder_only_forward.1} parent=11 // pred_region
          _
        $region16: #{decoder_only_forward.1} parent=11 // pred_fallthru
          _
        // Predicated region
        $region17: #{decoder_only_forward.1} parent=11 // pred_check
          %p222 = pneg %p58
        $region18: #{decoder_only_forward.1} parent=11 // pred_check_branch
          %224 = sbr.rel (%p222) target = $region20
        $region19: #{decoder_only_forward.1} parent=11 // pred_region
          _
        $region20: #{decoder_only_forward.1} parent=11 // pred_fallthru
          _
        // Predicated region
        $region21: #{decoder_only_forward.1} parent=11 // pred_check
          %p225 = pneg %p79
        $region22: #{decoder_only_forward.1} parent=11 // pred_check_branch
          %227 = sbr.rel (%p225) target = $region24
        $region23: #{decoder_only_forward.1} parent=11 // pred_region
          _
        $region24: #{decoder_only_forward.1} parent=11 // pred_fallthru
          _
        // Predicated region
        $region25: #{decoder_only_forward.1} parent=11 // pred_check
          %p228 = pneg %p100
        $region26: #{decoder_only_forward.1} parent=11 // pred_check_branch
          %230 = sbr.rel (%p228) target = $region28
        $region27: #{decoder_only_forward.1} parent=11 // pred_region
          _
        $region28: #{decoder_only_forward.1} parent=11 // pred_fallthru
          _
      $region12: #{decoder_only_forward.1} parent=5 // pred_fallthru
        _
      %p231 = scmp.lt.s32.totalorder %s16, 3
      // Predicated region
      $region29: #{decoder_only_forward.1} parent=5 // pred_check
        %p232 = pneg %p231
      $region30: #{decoder_only_forward.1} parent=5 // pred_check_branch
        %234 = sbr.rel (%p232) target = $region32
      $region31: #{decoder_only_forward.1} parent=5 // pred_region
        // Predicated region
        $region33: #{decoder_only_forward.1} parent=31 // pred_check
          %p235 = pneg %p120
        $region34: #{decoder_only_forward.1} parent=31 // pred_check_branch
          %237 = sbr.rel (%p235) target = $region36
        $region35: #{decoder_only_forward.1} parent=31 // pred_region
          %s238 = sand.u32 %s110, 1
          %s239 = sand.u32 %s110, 1
          %s240 = smul.addr %s239, 2096
          %s241 = scalar_lea.vmem [#allocation3], %s240
          %s242 = smul.u32 131, %s16
          %s243 = smul.addr %s242, 8
          %s244 = scalar_lea.vmem %s4, %s243
          // Predicated region
          $region37: #{decoder_only_forward.1} parent=35 // pred_check
            _
          $region38: #{decoder_only_forward.1} parent=35 // pred_check_branch
            %246 = sbr.rel (0) target = $region40
          $region39: #{decoder_only_forward.1} parent=35 // pred_region
            // Predicated region
            $region41: #{decoder_only_forward.1} parent=39 // pred_check
              _
            $region42: #{decoder_only_forward.1} parent=39 // pred_check_branch
              %248 = sbr.rel (0) target = $region44
            $region43: #{decoder_only_forward.1} parent=39 // pred_region
              loop: start=0, step=1, limit=1
              $region45: #{decoder_only_forward.1} parent=43 // loop_pre_header
                _
              $region46: #{decoder_only_forward.1} parent=43 // loop_header
                %s250 = sphi 0, %s254
                %p251 = scmp.ge.s32.totalorder %s250, 1
                %s255 = sphi %s244, %s244
                %s256 = sphi %s241, %s241
              $region47: #{decoder_only_forward.1} parent=43 // loop_header_branch
                %253 = sbr.rel (%p251) target = $region51
              $region48: #{decoder_only_forward.1} parent=43 // loop_body
                %v257 = vld [vmem:[%s255] sm:$0xff]
                %258 = vst [vmem:[%s256] sm:$0xff] %v257
                %v259 = vld [vmem:[%s255 + $0x8] sm:$0xff]
                %260 = vst [vmem:[%s256 + $0x8] sm:$0xff] %v259
                %v261 = vld [vmem:[%s255 + $0x10] sm:$0xff]
                %262 = vst [vmem:[%s256 + $0x10] sm:$0xff] %v261
                %v263 = vld [vmem:[%s255 + $0x18] sm:$0xff]
                %264 = vst [vmem:[%s256 + $0x18] sm:$0xff] %v263
                %v265 = vld [vmem:[%s255 + $0x20] sm:$0xff]
                %266 = vst [vmem:[%s256 + $0x20] sm:$0xff] %v265
                %v267 = vld [vmem:[%s255 + $0x28] sm:$0xff]
                %268 = vst [vmem:[%s256 + $0x28] sm:$0xff] %v267
                %v269 = vld [vmem:[%s255 + $0x30] sm:$0xff]
                %270 = vst [vmem:[%s256 + $0x30] sm:$0xff] %v269
                %v271 = vld [vmem:[%s255 + $0x38] sm:$0xff]
                %272 = vst [vmem:[%s256 + $0x38] sm:$0xff] %v271
                %v273 = vld [vmem:[%s255 + $0x40] sm:$0xff]
                %274 = vst [vmem:[%s256 + $0x40] sm:$0xff] %v273
                %v275 = vld [vmem:[%s255 + $0x48] sm:$0xff]
                %276 = vst [vmem:[%s256 + $0x48] sm:$0xff] %v275
                %v277 = vld [vmem:[%s255 + $0x50] sm:$0xff]
                %278 = vst [vmem:[%s256 + $0x50] sm:$0xff] %v277
                %v279 = vld [vmem:[%s255 + $0x58] sm:$0xff]
                %280 = vst [vmem:[%s256 + $0x58] sm:$0xff] %v279
                %v281 = vld [vmem:[%s255 + $0x60] sm:$0xff]
                %282 = vst [vmem:[%s256 + $0x60] sm:$0xff] %v281
                %v283 = vld [vmem:[%s255 + $0x68] sm:$0xff]
                %284 = vst [vmem:[%s256 + $0x68] sm:$0xff] %v283
                %v285 = vld [vmem:[%s255 + $0x70] sm:$0xff]
                %286 = vst [vmem:[%s256 + $0x70] sm:$0xff] %v285
                %v287 = vld [vmem:[%s255 + $0x78] sm:$0xff]
                %288 = vst [vmem:[%s256 + $0x78] sm:$0xff] %v287
                %v289 = vld [vmem:[%s255 + $0x80] sm:$0xff]
                %290 = vst [vmem:[%s256 + $0x80] sm:$0xff] %v289
                %v291 = vld [vmem:[%s255 + $0x88] sm:$0xff]
                %292 = vst [vmem:[%s256 + $0x88] sm:$0xff] %v291
                %v293 = vld [vmem:[%s255 + $0x90] sm:$0xff]
                %294 = vst [vmem:[%s256 + $0x90] sm:$0xff] %v293
                %v295 = vld [vmem:[%s255 + $0x98] sm:$0xff]
                %296 = vst [vmem:[%s256 + $0x98] sm:$0xff] %v295
                %v297 = vld [vmem:[%s255 + $0xa0] sm:$0xff]
                %298 = vst [vmem:[%s256 + $0xa0] sm:$0xff] %v297
                %v299 = vld [vmem:[%s255 + $0xa8] sm:$0xff]
                %300 = vst [vmem:[%s256 + $0xa8] sm:$0xff] %v299
                %v301 = vld [vmem:[%s255 + $0xb0] sm:$0xff]
                %302 = vst [vmem:[%s256 + $0xb0] sm:$0xff] %v301
                %v303 = vld [vmem:[%s255 + $0xb8] sm:$0xff]
                %304 = vst [vmem:[%s256 + $0xb8] sm:$0xff] %v303
                %v305 = vld [vmem:[%s255 + $0xc0] sm:$0xff]
                %306 = vst [vmem:[%s256 + $0xc0] sm:$0xff] %v305
                %v307 = vld [vmem:[%s255 + $0xc8] sm:$0xff]
                %308 = vst [vmem:[%s256 + $0xc8] sm:$0xff] %v307
                %v309 = vld [vmem:[%s255 + $0xd0] sm:$0xff]
                %310 = vst [vmem:[%s256 + $0xd0] sm:$0xff] %v309
                %v311 = vld [vmem:[%s255 + $0xd8] sm:$0xff]
                %312 = vst [vmem:[%s256 + $0xd8] sm:$0xff] %v311
                %v313 = vld [vmem:[%s255 + $0xe0] sm:$0xff]
                %314 = vst [vmem:[%s256 + $0xe0] sm:$0xff] %v313
                %v315 = vld [vmem:[%s255 + $0xe8] sm:$0xff]
                %316 = vst [vmem:[%s256 + $0xe8] sm:$0xff] %v315
                %v317 = vld [vmem:[%s255 + $0xf0] sm:$0xff]
                %318 = vst [vmem:[%s256 + $0xf0] sm:$0xff] %v317
                %v319 = vld [vmem:[%s255 + $0xf8] sm:$0xff]
                %320 = vst [vmem:[%s256 + $0xf8] sm:$0xff] %v319
                %v321 = vld [vmem:[%s255 + $0x100] sm:$0xff]
                %322 = vst [vmem:[%s256 + $0x100] sm:$0xff] %v321
                %v323 = vld [vmem:[%s255 + $0x108] sm:$0xff]
                %324 = vst [vmem:[%s256 + $0x108] sm:$0xff] %v323
                %v325 = vld [vmem:[%s255 + $0x110] sm:$0xff]
                %326 = vst [vmem:[%s256 + $0x110] sm:$0xff] %v325
                %v327 = vld [vmem:[%s255 + $0x118] sm:$0xff]
                %328 = vst [vmem:[%s256 + $0x118] sm:$0xff] %v327
                %v329 = vld [vmem:[%s255 + $0x120] sm:$0xff]
                %330 = vst [vmem:[%s256 + $0x120] sm:$0xff] %v329
                %v331 = vld [vmem:[%s255 + $0x128] sm:$0xff]
                %332 = vst [vmem:[%s256 + $0x128] sm:$0xff] %v331
                %v333 = vld [vmem:[%s255 + $0x130] sm:$0xff]
                %334 = vst [vmem:[%s256 + $0x130] sm:$0xff] %v333
                %v335 = vld [vmem:[%s255 + $0x138] sm:$0xff]
                %336 = vst [vmem:[%s256 + $0x138] sm:$0xff] %v335
                %v337 = vld [vmem:[%s255 + $0x140] sm:$0xff]
                %338 = vst [vmem:[%s256 + $0x140] sm:$0xff] %v337
                %v339 = vld [vmem:[%s255 + $0x148] sm:$0xff]
                %340 = vst [vmem:[%s256 + $0x148] sm:$0xff] %v339
                %v341 = vld [vmem:[%s255 + $0x150] sm:$0xff]
                %342 = vst [vmem:[%s256 + $0x150] sm:$0xff] %v341
                %v343 = vld [vmem:[%s255 + $0x158] sm:$0xff]
                %344 = vst [vmem:[%s256 + $0x158] sm:$0xff] %v343
                %v345 = vld [vmem:[%s255 + $0x160] sm:$0xff]
                %346 = vst [vmem:[%s256 + $0x160] sm:$0xff] %v345
                %v347 = vld [vmem:[%s255 + $0x168] sm:$0xff]
                %348 = vst [vmem:[%s256 + $0x168] sm:$0xff] %v347
                %v349 = vld [vmem:[%s255 + $0x170] sm:$0xff]
                %350 = vst [vmem:[%s256 + $0x170] sm:$0xff] %v349
                %v351 = vld [vmem:[%s255 + $0x178] sm:$0xff]
                %352 = vst [vmem:[%s256 + $0x178] sm:$0xff] %v351
                %v353 = vld [vmem:[%s255 + $0x180] sm:$0xff]
                %354 = vst [vmem:[%s256 + $0x180] sm:$0xff] %v353
                %v355 = vld [vmem:[%s255 + $0x188] sm:$0xff]
                %356 = vst [vmem:[%s256 + $0x188] sm:$0xff] %v355
                %v357 = vld [vmem:[%s255 + $0x190] sm:$0xff]
                %358 = vst [vmem:[%s256 + $0x190] sm:$0xff] %v357
                %v359 = vld [vmem:[%s255 + $0x198] sm:$0xff]
                %360 = vst [vmem:[%s256 + $0x198] sm:$0xff] %v359
                %v361 = vld [vmem:[%s255 + $0x1a0] sm:$0xff]
                %362 = vst [vmem:[%s256 + $0x1a0] sm:$0xff] %v361
                %v363 = vld [vmem:[%s255 + $0x1a8] sm:$0xff]
                %364 = vst [vmem:[%s256 + $0x1a8] sm:$0xff] %v363
                %v365 = vld [vmem:[%s255 + $0x1b0] sm:$0xff]
                %366 = vst [vmem:[%s256 + $0x1b0] sm:$0xff] %v365
                %v367 = vld [vmem:[%s255 + $0x1b8] sm:$0xff]
                %368 = vst [vmem:[%s256 + $0x1b8] sm:$0xff] %v367
                %v369 = vld [vmem:[%s255 + $0x1c0] sm:$0xff]
                %370 = vst [vmem:[%s256 + $0x1c0] sm:$0xff] %v369
                %v371 = vld [vmem:[%s255 + $0x1c8] sm:$0xff]
                %372 = vst [vmem:[%s256 + $0x1c8] sm:$0xff] %v371
                %v373 = vld [vmem:[%s255 + $0x1d0] sm:$0xff]
                %374 = vst [vmem:[%s256 + $0x1d0] sm:$0xff] %v373
                %v375 = vld [vmem:[%s255 + $0x1d8] sm:$0xff]
                %376 = vst [vmem:[%s256 + $0x1d8] sm:$0xff] %v375
                %v377 = vld [vmem:[%s255 + $0x1e0] sm:$0xff]
                %378 = vst [vmem:[%s256 + $0x1e0] sm:$0xff] %v377
                %v379 = vld [vmem:[%s255 + $0x1e8] sm:$0xff]
                %380 = vst [vmem:[%s256 + $0x1e8] sm:$0xff] %v379
                %v381 = vld [vmem:[%s255 + $0x1f0] sm:$0xff]
                %382 = vst [vmem:[%s256 + $0x1f0] sm:$0xff] %v381
                %v383 = vld [vmem:[%s255 + $0x1f8] sm:$0xff]
                %384 = vst [vmem:[%s256 + $0x1f8] sm:$0xff] %v383
                %v385 = vld [vmem:[%s255 + $0x200] sm:$0xff]
                %386 = vst [vmem:[%s256 + $0x200] sm:$0xff] %v385
                %v387 = vld [vmem:[%s255 + $0x208] sm:$0xff]
                %388 = vst [vmem:[%s256 + $0x208] sm:$0xff] %v387
                %v389 = vld [vmem:[%s255 + $0x210] sm:$0xff]
                %390 = vst [vmem:[%s256 + $0x210] sm:$0xff] %v389
                %v391 = vld [vmem:[%s255 + $0x218] sm:$0xff]
                %392 = vst [vmem:[%s256 + $0x218] sm:$0xff] %v391
                %v393 = vld [vmem:[%s255 + $0x220] sm:$0xff]
                %394 = vst [vmem:[%s256 + $0x220] sm:$0xff] %v393
                %v395 = vld [vmem:[%s255 + $0x228] sm:$0xff]
                %396 = vst [vmem:[%s256 + $0x228] sm:$0xff] %v395
                %v397 = vld [vmem:[%s255 + $0x230] sm:$0xff]
                %398 = vst [vmem:[%s256 + $0x230] sm:$0xff] %v397
                %v399 = vld [vmem:[%s255 + $0x238] sm:$0xff]
                %400 = vst [vmem:[%s256 + $0x238] sm:$0xff] %v399
                %v401 = vld [vmem:[%s255 + $0x240] sm:$0xff]
                %402 = vst [vmem:[%s256 + $0x240] sm:$0xff] %v401
                %v403 = vld [vmem:[%s255 + $0x248] sm:$0xff]
                %404 = vst [vmem:[%s256 + $0x248] sm:$0xff] %v403
                %v405 = vld [vmem:[%s255 + $0x250] sm:$0xff]
                %406 = vst [vmem:[%s256 + $0x250] sm:$0xff] %v405
                %v407 = vld [vmem:[%s255 + $0x258] sm:$0xff]
                %408 = vst [vmem:[%s256 + $0x258] sm:$0xff] %v407
                %v409 = vld [vmem:[%s255 + $0x260] sm:$0xff]
                %410 = vst [vmem:[%s256 + $0x260] sm:$0xff] %v409
                %v411 = vld [vmem:[%s255 + $0x268] sm:$0xff]
                %412 = vst [vmem:[%s256 + $0x268] sm:$0xff] %v411
                %v413 = vld [vmem:[%s255 + $0x270] sm:$0xff]
                %414 = vst [vmem:[%s256 + $0x270] sm:$0xff] %v413
                %v415 = vld [vmem:[%s255 + $0x278] sm:$0xff]
                %416 = vst [vmem:[%s256 + $0x278] sm:$0xff] %v415
                %v417 = vld [vmem:[%s255 + $0x280] sm:$0xff]
                %418 = vst [vmem:[%s256 + $0x280] sm:$0xff] %v417
                %v419 = vld [vmem:[%s255 + $0x288] sm:$0xff]
                %420 = vst [vmem:[%s256 + $0x288] sm:$0xff] %v419
                %v421 = vld [vmem:[%s255 + $0x290] sm:$0xff]
                %422 = vst [vmem:[%s256 + $0x290] sm:$0xff] %v421
                %v423 = vld [vmem:[%s255 + $0x298] sm:$0xff]
                %424 = vst [vmem:[%s256 + $0x298] sm:$0xff] %v423
                %v425 = vld [vmem:[%s255 + $0x2a0] sm:$0xff]
                %426 = vst [vmem:[%s256 + $0x2a0] sm:$0xff] %v425
                %v427 = vld [vmem:[%s255 + $0x2a8] sm:$0xff]
                %428 = vst [vmem:[%s256 + $0x2a8] sm:$0xff] %v427
                %v429 = vld [vmem:[%s255 + $0x2b0] sm:$0xff]
                %430 = vst [vmem:[%s256 + $0x2b0] sm:$0xff] %v429
                %v431 = vld [vmem:[%s255 + $0x2b8] sm:$0xff]
                %432 = vst [vmem:[%s256 + $0x2b8] sm:$0xff] %v431
                %v433 = vld [vmem:[%s255 + $0x2c0] sm:$0xff]
                %434 = vst [vmem:[%s256 + $0x2c0] sm:$0xff] %v433
                %v435 = vld [vmem:[%s255 + $0x2c8] sm:$0xff]
                %436 = vst [vmem:[%s256 + $0x2c8] sm:$0xff] %v435
                %v437 = vld [vmem:[%s255 + $0x2d0] sm:$0xff]
                %438 = vst [vmem:[%s256 + $0x2d0] sm:$0xff] %v437
                %v439 = vld [vmem:[%s255 + $0x2d8] sm:$0xff]
                %440 = vst [vmem:[%s256 + $0x2d8] sm:$0xff] %v439
                %v441 = vld [vmem:[%s255 + $0x2e0] sm:$0xff]
                %442 = vst [vmem:[%s256 + $0x2e0] sm:$0xff] %v441
                %v443 = vld [vmem:[%s255 + $0x2e8] sm:$0xff]
                %444 = vst [vmem:[%s256 + $0x2e8] sm:$0xff] %v443
                %v445 = vld [vmem:[%s255 + $0x2f0] sm:$0xff]
                %446 = vst [vmem:[%s256 + $0x2f0] sm:$0xff] %v445
                %v447 = vld [vmem:[%s255 + $0x2f8] sm:$0xff]
                %448 = vst [vmem:[%s256 + $0x2f8] sm:$0xff] %v447
                %v449 = vld [vmem:[%s255 + $0x300] sm:$0xff]
                %450 = vst [vmem:[%s256 + $0x300] sm:$0xff] %v449
                %v451 = vld [vmem:[%s255 + $0x308] sm:$0xff]
                %452 = vst [vmem:[%s256 + $0x308] sm:$0xff] %v451
                %v453 = vld [vmem:[%s255 + $0x310] sm:$0xff]
                %454 = vst [vmem:[%s256 + $0x310] sm:$0xff] %v453
                %v455 = vld [vmem:[%s255 + $0x318] sm:$0xff]
                %456 = vst [vmem:[%s256 + $0x318] sm:$0xff] %v455
                %v457 = vld [vmem:[%s255 + $0x320] sm:$0xff]
                %458 = vst [vmem:[%s256 + $0x320] sm:$0xff] %v457
                %v459 = vld [vmem:[%s255 + $0x328] sm:$0xff]
                %460 = vst [vmem:[%s256 + $0x328] sm:$0xff] %v459
                %v461 = vld [vmem:[%s255 + $0x330] sm:$0xff]
                %462 = vst [vmem:[%s256 + $0x330] sm:$0xff] %v461
                %v463 = vld [vmem:[%s255 + $0x338] sm:$0xff]
                %464 = vst [vmem:[%s256 + $0x338] sm:$0xff] %v463
                %v465 = vld [vmem:[%s255 + $0x340] sm:$0xff]
                %466 = vst [vmem:[%s256 + $0x340] sm:$0xff] %v465
                %v467 = vld [vmem:[%s255 + $0x348] sm:$0xff]
                %468 = vst [vmem:[%s256 + $0x348] sm:$0xff] %v467
                %v469 = vld [vmem:[%s255 + $0x350] sm:$0xff]
                %470 = vst [vmem:[%s256 + $0x350] sm:$0xff] %v469
                %v471 = vld [vmem:[%s255 + $0x358] sm:$0xff]
                %472 = vst [vmem:[%s256 + $0x358] sm:$0xff] %v471
                %v473 = vld [vmem:[%s255 + $0x360] sm:$0xff]
                %474 = vst [vmem:[%s256 + $0x360] sm:$0xff] %v473
                %v475 = vld [vmem:[%s255 + $0x368] sm:$0xff]
                %476 = vst [vmem:[%s256 + $0x368] sm:$0xff] %v475
                %v477 = vld [vmem:[%s255 + $0x370] sm:$0xff]
                %478 = vst [vmem:[%s256 + $0x370] sm:$0xff] %v477
                %v479 = vld [vmem:[%s255 + $0x378] sm:$0xff]
                %480 = vst [vmem:[%s256 + $0x378] sm:$0xff] %v479
                %v481 = vld [vmem:[%s255 + $0x380] sm:$0xff]
                %482 = vst [vmem:[%s256 + $0x380] sm:$0xff] %v481
                %v483 = vld [vmem:[%s255 + $0x388] sm:$0xff]
                %484 = vst [vmem:[%s256 + $0x388] sm:$0xff] %v483
                %v485 = vld [vmem:[%s255 + $0x390] sm:$0xff]
                %486 = vst [vmem:[%s256 + $0x390] sm:$0xff] %v485
                %v487 = vld [vmem:[%s255 + $0x398] sm:$0xff]
                %488 = vst [vmem:[%s256 + $0x398] sm:$0xff] %v487
                %v489 = vld [vmem:[%s255 + $0x3a0] sm:$0xff]
                %490 = vst [vmem:[%s256 + $0x3a0] sm:$0xff] %v489
                %v491 = vld [vmem:[%s255 + $0x3a8] sm:$0xff]
                %492 = vst [vmem:[%s256 + $0x3a8] sm:$0xff] %v491
                %v493 = vld [vmem:[%s255 + $0x3b0] sm:$0xff]
                %494 = vst [vmem:[%s256 + $0x3b0] sm:$0xff] %v493
                %v495 = vld [vmem:[%s255 + $0x3b8] sm:$0xff]
                %496 = vst [vmem:[%s256 + $0x3b8] sm:$0xff] %v495
                %v497 = vld [vmem:[%s255 + $0x3c0] sm:$0xff]
                %498 = vst [vmem:[%s256 + $0x3c0] sm:$0xff] %v497
                %v499 = vld [vmem:[%s255 + $0x3c8] sm:$0xff]
                %500 = vst [vmem:[%s256 + $0x3c8] sm:$0xff] %v499
                %v501 = vld [vmem:[%s255 + $0x3d0] sm:$0xff]
                %502 = vst [vmem:[%s256 + $0x3d0] sm:$0xff] %v501
                %v503 = vld [vmem:[%s255 + $0x3d8] sm:$0xff]
                %504 = vst [vmem:[%s256 + $0x3d8] sm:$0xff] %v503
                %v505 = vld [vmem:[%s255 + $0x3e0] sm:$0xff]
                %506 = vst [vmem:[%s256 + $0x3e0] sm:$0xff] %v505
                %v507 = vld [vmem:[%s255 + $0x3e8] sm:$0xff]
                %508 = vst [vmem:[%s256 + $0x3e8] sm:$0xff] %v507
                %v509 = vld [vmem:[%s255 + $0x3f0] sm:$0xff]
                %510 = vst [vmem:[%s256 + $0x3f0] sm:$0xff] %v509
                %v511 = vld [vmem:[%s255 + $0x3f8] sm:$0xff]
                %512 = vst [vmem:[%s256 + $0x3f8] sm:$0xff] %v511
                %v513 = vld [vmem:[%s255 + $0x400] sm:$0xff]
                %514 = vst [vmem:[%s256 + $0x400] sm:$0xff] %v513
                %v515 = vld [vmem:[%s255 + $0x408] sm:$0xff]
                %516 = vst [vmem:[%s256 + $0x408] sm:$0xff] %v515
                %v517 = vld [vmem:[%s255 + $0x410] sm:$0xff]
                %518 = vst [vmem:[%s256 + $0x410] sm:$0xff] %v517
                %v519 = vld [vmem:[%s255 + $0xc48] sm:$0xff]
                %520 = vst [vmem:[%s256 + $0x418] sm:$0xff] %v519
                %v521 = vld [vmem:[%s255 + $0xc50] sm:$0xff]
                %522 = vst [vmem:[%s256 + $0x420] sm:$0xff] %v521
                %v523 = vld [vmem:[%s255 + $0xc58] sm:$0xff]
                %524 = vst [vmem:[%s256 + $0x428] sm:$0xff] %v523
                %v525 = vld [vmem:[%s255 + $0xc60] sm:$0xff]
                %526 = vst [vmem:[%s256 + $0x430] sm:$0xff] %v525
                %v527 = vld [vmem:[%s255 + $0xc68] sm:$0xff]
                %528 = vst [vmem:[%s256 + $0x438] sm:$0xff] %v527
                %v529 = vld [vmem:[%s255 + $0xc70] sm:$0xff]
                %530 = vst [vmem:[%s256 + $0x440] sm:$0xff] %v529
                %v531 = vld [vmem:[%s255 + $0xc78] sm:$0xff]
                %532 = vst [vmem:[%s256 + $0x448] sm:$0xff] %v531
                %v533 = vld [vmem:[%s255 + $0xc80] sm:$0xff]
                %534 = vst [vmem:[%s256 + $0x450] sm:$0xff] %v533
                %v535 = vld [vmem:[%s255 + $0xc88] sm:$0xff]
                %536 = vst [vmem:[%s256 + $0x458] sm:$0xff] %v535
                %v537 = vld [vmem:[%s255 + $0xc90] sm:$0xff]
                %538 = vst [vmem:[%s256 + $0x460] sm:$0xff] %v537
                %v539 = vld [vmem:[%s255 + $0xc98] sm:$0xff]
                %540 = vst [vmem:[%s256 + $0x468] sm:$0xff] %v539
                %v541 = vld [vmem:[%s255 + $0xca0] sm:$0xff]
                %542 = vst [vmem:[%s256 + $0x470] sm:$0xff] %v541
                %v543 = vld [vmem:[%s255 + $0xca8] sm:$0xff]
                %544 = vst [vmem:[%s256 + $0x478] sm:$0xff] %v543
                %v545 = vld [vmem:[%s255 + $0xcb0] sm:$0xff]
                %546 = vst [vmem:[%s256 + $0x480] sm:$0xff] %v545
                %v547 = vld [vmem:[%s255 + $0xcb8] sm:$0xff]
                %548 = vst [vmem:[%s256 + $0x488] sm:$0xff] %v547
                %v549 = vld [vmem:[%s255 + $0xcc0] sm:$0xff]
                %550 = vst [vmem:[%s256 + $0x490] sm:$0xff] %v549
                %v551 = vld [vmem:[%s255 + $0xcc8] sm:$0xff]
                %552 = vst [vmem:[%s256 + $0x498] sm:$0xff] %v551
                %v553 = vld [vmem:[%s255 + $0xcd0] sm:$0xff]
                %554 = vst [vmem:[%s256 + $0x4a0] sm:$0xff] %v553
                %v555 = vld [vmem:[%s255 + $0xcd8] sm:$0xff]
                %556 = vst [vmem:[%s256 + $0x4a8] sm:$0xff] %v555
                %v557 = vld [vmem:[%s255 + $0xce0] sm:$0xff]
                %558 = vst [vmem:[%s256 + $0x4b0] sm:$0xff] %v557
                %v559 = vld [vmem:[%s255 + $0xce8] sm:$0xff]
                %560 = vst [vmem:[%s256 + $0x4b8] sm:$0xff] %v559
                %v561 = vld [vmem:[%s255 + $0xcf0] sm:$0xff]
                %562 = vst [vmem:[%s256 + $0x4c0] sm:$0xff] %v561
                %v563 = vld [vmem:[%s255 + $0xcf8] sm:$0xff]
                %564 = vst [vmem:[%s256 + $0x4c8] sm:$0xff] %v563
                %v565 = vld [vmem:[%s255 + $0xd00] sm:$0xff]
                %566 = vst [vmem:[%s256 + $0x4d0] sm:$0xff] %v565
                %v567 = vld [vmem:[%s255 + $0xd08] sm:$0xff]
                %568 = vst [vmem:[%s256 + $0x4d8] sm:$0xff] %v567
                %v569 = vld [vmem:[%s255 + $0xd10] sm:$0xff]
                %570 = vst [vmem:[%s256 + $0x4e0] sm:$0xff] %v569
                %v571 = vld [vmem:[%s255 + $0xd18] sm:$0xff]
                %572 = vst [vmem:[%s256 + $0x4e8] sm:$0xff] %v571
                %v573 = vld [vmem:[%s255 + $0xd20] sm:$0xff]
                %574 = vst [vmem:[%s256 + $0x4f0] sm:$0xff] %v573
                %v575 = vld [vmem:[%s255 + $0xd28] sm:$0xff]
                %576 = vst [vmem:[%s256 + $0x4f8] sm:$0xff] %v575
                %v577 = vld [vmem:[%s255 + $0xd30] sm:$0xff]
                %578 = vst [vmem:[%s256 + $0x500] sm:$0xff] %v577
                %v579 = vld [vmem:[%s255 + $0xd38] sm:$0xff]
                %580 = vst [vmem:[%s256 + $0x508] sm:$0xff] %v579
                %v581 = vld [vmem:[%s255 + $0xd40] sm:$0xff]
                %582 = vst [vmem:[%s256 + $0x510] sm:$0xff] %v581
                %v583 = vld [vmem:[%s255 + $0xd48] sm:$0xff]
                %584 = vst [vmem:[%s256 + $0x518] sm:$0xff] %v583
                %v585 = vld [vmem:[%s255 + $0xd50] sm:$0xff]
                %586 = vst [vmem:[%s256 + $0x520] sm:$0xff] %v585
                %v587 = vld [vmem:[%s255 + $0xd58] sm:$0xff]
                %588 = vst [vmem:[%s256 + $0x528] sm:$0xff] %v587
                %v589 = vld [vmem:[%s255 + $0xd60] sm:$0xff]
                %590 = vst [vmem:[%s256 + $0x530] sm:$0xff] %v589
                %v591 = vld [vmem:[%s255 + $0xd68] sm:$0xff]
                %592 = vst [vmem:[%s256 + $0x538] sm:$0xff] %v591
                %v593 = vld [vmem:[%s255 + $0xd70] sm:$0xff]
                %594 = vst [vmem:[%s256 + $0x540] sm:$0xff] %v593
                %v595 = vld [vmem:[%s255 + $0xd78] sm:$0xff]
                %596 = vst [vmem:[%s256 + $0x548] sm:$0xff] %v595
                %v597 = vld [vmem:[%s255 + $0xd80] sm:$0xff]
                %598 = vst [vmem:[%s256 + $0x550] sm:$0xff] %v597
                %v599 = vld [vmem:[%s255 + $0xd88] sm:$0xff]
                %600 = vst [vmem:[%s256 + $0x558] sm:$0xff] %v599
                %v601 = vld [vmem:[%s255 + $0xd90] sm:$0xff]
                %602 = vst [vmem:[%s256 + $0x560] sm:$0xff] %v601
                %v603 = vld [vmem:[%s255 + $0xd98] sm:$0xff]
                %604 = vst [vmem:[%s256 + $0x568] sm:$0xff] %v603
                %v605 = vld [vmem:[%s255 + $0xda0] sm:$0xff]
                %606 = vst [vmem:[%s256 + $0x570] sm:$0xff] %v605
                %v607 = vld [vmem:[%s255 + $0xda8] sm:$0xff]
                %608 = vst [vmem:[%s256 + $0x578] sm:$0xff] %v607
                %v609 = vld [vmem:[%s255 + $0xdb0] sm:$0xff]
                %610 = vst [vmem:[%s256 + $0x580] sm:$0xff] %v609
                %v611 = vld [vmem:[%s255 + $0xdb8] sm:$0xff]
                %612 = vst [vmem:[%s256 + $0x588] sm:$0xff] %v611
                %v613 = vld [vmem:[%s255 + $0xdc0] sm:$0xff]
                %614 = vst [vmem:[%s256 + $0x590] sm:$0xff] %v613
                %v615 = vld [vmem:[%s255 + $0xdc8] sm:$0xff]
                %616 = vst [vmem:[%s256 + $0x598] sm:$0xff] %v615
                %v617 = vld [vmem:[%s255 + $0xdd0] sm:$0xff]
                %618 = vst [vmem:[%s256 + $0x5a0] sm:$0xff] %v617
                %v619 = vld [vmem:[%s255 + $0xdd8] sm:$0xff]
                %620 = vst [vmem:[%s256 + $0x5a8] sm:$0xff] %v619
                %v621 = vld [vmem:[%s255 + $0xde0] sm:$0xff]
                %622 = vst [vmem:[%s256 + $0x5b0] sm:$0xff] %v621
                %v623 = vld [vmem:[%s255 + $0xde8] sm:$0xff]
                %624 = vst [vmem:[%s256 + $0x5b8] sm:$0xff] %v623
                %v625 = vld [vmem:[%s255 + $0xdf0] sm:$0xff]
                %626 = vst [vmem:[%s256 + $0x5c0] sm:$0xff] %v625
                %v627 = vld [vmem:[%s255 + $0xdf8] sm:$0xff]
                %628 = vst [vmem:[%s256 + $0x5c8] sm:$0xff] %v627
                %v629 = vld [vmem:[%s255 + $0xe00] sm:$0xff]
                %630 = vst [vmem:[%s256 + $0x5d0] sm:$0xff] %v629
                %v631 = vld [vmem:[%s255 + $0xe08] sm:$0xff]
                %632 = vst [vmem:[%s256 + $0x5d8] sm:$0xff] %v631
                %v633 = vld [vmem:[%s255 + $0xe10] sm:$0xff]
                %634 = vst [vmem:[%s256 + $0x5e0] sm:$0xff] %v633
                %v635 = vld [vmem:[%s255 + $0xe18] sm:$0xff]
                %636 = vst [vmem:[%s256 + $0x5e8] sm:$0xff] %v635
                %v637 = vld [vmem:[%s255 + $0xe20] sm:$0xff]
                %638 = vst [vmem:[%s256 + $0x5f0] sm:$0xff] %v637
                %v639 = vld [vmem:[%s255 + $0xe28] sm:$0xff]
                %640 = vst [vmem:[%s256 + $0x5f8] sm:$0xff] %v639
                %v641 = vld [vmem:[%s255 + $0xe30] sm:$0xff]
                %642 = vst [vmem:[%s256 + $0x600] sm:$0xff] %v641
                %v643 = vld [vmem:[%s255 + $0xe38] sm:$0xff]
                %644 = vst [vmem:[%s256 + $0x608] sm:$0xff] %v643
                %v645 = vld [vmem:[%s255 + $0xe40] sm:$0xff]
                %646 = vst [vmem:[%s256 + $0x610] sm:$0xff] %v645
                %v647 = vld [vmem:[%s255 + $0xe48] sm:$0xff]
                %648 = vst [vmem:[%s256 + $0x618] sm:$0xff] %v647
                %v649 = vld [vmem:[%s255 + $0xe50] sm:$0xff]
                %650 = vst [vmem:[%s256 + $0x620] sm:$0xff] %v649
                %v651 = vld [vmem:[%s255 + $0xe58] sm:$0xff]
                %652 = vst [vmem:[%s256 + $0x628] sm:$0xff] %v651
                %v653 = vld [vmem:[%s255 + $0xe60] sm:$0xff]
                %654 = vst [vmem:[%s256 + $0x630] sm:$0xff] %v653
                %v655 = vld [vmem:[%s255 + $0xe68] sm:$0xff]
                %656 = vst [vmem:[%s256 + $0x638] sm:$0xff] %v655
                %v657 = vld [vmem:[%s255 + $0xe70] sm:$0xff]
                %658 = vst [vmem:[%s256 + $0x640] sm:$0xff] %v657
                %v659 = vld [vmem:[%s255 + $0xe78] sm:$0xff]
                %660 = vst [vmem:[%s256 + $0x648] sm:$0xff] %v659
                %v661 = vld [vmem:[%s255 + $0xe80] sm:$0xff]
                %662 = vst [vmem:[%s256 + $0x650] sm:$0xff] %v661
                %v663 = vld [vmem:[%s255 + $0xe88] sm:$0xff]
                %664 = vst [vmem:[%s256 + $0x658] sm:$0xff] %v663
                %v665 = vld [vmem:[%s255 + $0xe90] sm:$0xff]
                %666 = vst [vmem:[%s256 + $0x660] sm:$0xff] %v665
                %v667 = vld [vmem:[%s255 + $0xe98] sm:$0xff]
                %668 = vst [vmem:[%s256 + $0x668] sm:$0xff] %v667
                %v669 = vld [vmem:[%s255 + $0xea0] sm:$0xff]
                %670 = vst [vmem:[%s256 + $0x670] sm:$0xff] %v669
                %v671 = vld [vmem:[%s255 + $0xea8] sm:$0xff]
                %672 = vst [vmem:[%s256 + $0x678] sm:$0xff] %v671
                %v673 = vld [vmem:[%s255 + $0xeb0] sm:$0xff]
                %674 = vst [vmem:[%s256 + $0x680] sm:$0xff] %v673
                %v675 = vld [vmem:[%s255 + $0xeb8] sm:$0xff]
                %676 = vst [vmem:[%s256 + $0x688] sm:$0xff] %v675
                %v677 = vld [vmem:[%s255 + $0xec0] sm:$0xff]
                %678 = vst [vmem:[%s256 + $0x690] sm:$0xff] %v677
                %v679 = vld [vmem:[%s255 + $0xec8] sm:$0xff]
                %680 = vst [vmem:[%s256 + $0x698] sm:$0xff] %v679
                %v681 = vld [vmem:[%s255 + $0xed0] sm:$0xff]
                %682 = vst [vmem:[%s256 + $0x6a0] sm:$0xff] %v681
                %v683 = vld [vmem:[%s255 + $0xed8] sm:$0xff]
                %684 = vst [vmem:[%s256 + $0x6a8] sm:$0xff] %v683
                %v685 = vld [vmem:[%s255 + $0xee0] sm:$0xff]
                %686 = vst [vmem:[%s256 + $0x6b0] sm:$0xff] %v685
                %v687 = vld [vmem:[%s255 + $0xee8] sm:$0xff]
                %688 = vst [vmem:[%s256 + $0x6b8] sm:$0xff] %v687
                %v689 = vld [vmem:[%s255 + $0xef0] sm:$0xff]
                %690 = vst [vmem:[%s256 + $0x6c0] sm:$0xff] %v689
                %v691 = vld [vmem:[%s255 + $0xef8] sm:$0xff]
                %692 = vst [vmem:[%s256 + $0x6c8] sm:$0xff] %v691
                %v693 = vld [vmem:[%s255 + $0xf00] sm:$0xff]
                %694 = vst [vmem:[%s256 + $0x6d0] sm:$0xff] %v693
                %v695 = vld [vmem:[%s255 + $0xf08] sm:$0xff]
                %696 = vst [vmem:[%s256 + $0x6d8] sm:$0xff] %v695
                %v697 = vld [vmem:[%s255 + $0xf10] sm:$0xff]
                %698 = vst [vmem:[%s256 + $0x6e0] sm:$0xff] %v697
                %v699 = vld [vmem:[%s255 + $0xf18] sm:$0xff]
                %700 = vst [vmem:[%s256 + $0x6e8] sm:$0xff] %v699
                %v701 = vld [vmem:[%s255 + $0xf20] sm:$0xff]
                %702 = vst [vmem:[%s256 + $0x6f0] sm:$0xff] %v701
                %v703 = vld [vmem:[%s255 + $0xf28] sm:$0xff]
                %704 = vst [vmem:[%s256 + $0x6f8] sm:$0xff] %v703
                %v705 = vld [vmem:[%s255 + $0xf30] sm:$0xff]
                %706 = vst [vmem:[%s256 + $0x700] sm:$0xff] %v705
                %v707 = vld [vmem:[%s255 + $0xf38] sm:$0xff]
                %708 = vst [vmem:[%s256 + $0x708] sm:$0xff] %v707
                %v709 = vld [vmem:[%s255 + $0xf40] sm:$0xff]
                %710 = vst [vmem:[%s256 + $0x710] sm:$0xff] %v709
                %v711 = vld [vmem:[%s255 + $0xf48] sm:$0xff]
                %712 = vst [vmem:[%s256 + $0x718] sm:$0xff] %v711
                %v713 = vld [vmem:[%s255 + $0xf50] sm:$0xff]
                %714 = vst [vmem:[%s256 + $0x720] sm:$0xff] %v713
                %v715 = vld [vmem:[%s255 + $0xf58] sm:$0xff]
                %716 = vst [vmem:[%s256 + $0x728] sm:$0xff] %v715
                %v717 = vld [vmem:[%s255 + $0xf60] sm:$0xff]
                %718 = vst [vmem:[%s256 + $0x730] sm:$0xff] %v717
                %v719 = vld [vmem:[%s255 + $0xf68] sm:$0xff]
                %720 = vst [vmem:[%s256 + $0x738] sm:$0xff] %v719
                %v721 = vld [vmem:[%s255 + $0xf70] sm:$0xff]
                %722 = vst [vmem:[%s256 + $0x740] sm:$0xff] %v721
                %v723 = vld [vmem:[%s255 + $0xf78] sm:$0xff]
                %724 = vst [vmem:[%s256 + $0x748] sm:$0xff] %v723
                %v725 = vld [vmem:[%s255 + $0xf80] sm:$0xff]
                %726 = vst [vmem:[%s256 + $0x750] sm:$0xff] %v725
                %v727 = vld [vmem:[%s255 + $0xf88] sm:$0xff]
                %728 = vst [vmem:[%s256 + $0x758] sm:$0xff] %v727
                %v729 = vld [vmem:[%s255 + $0xf90] sm:$0xff]
                %730 = vst [vmem:[%s256 + $0x760] sm:$0xff] %v729
                %v731 = vld [vmem:[%s255 + $0xf98] sm:$0xff]
                %732 = vst [vmem:[%s256 + $0x768] sm:$0xff] %v731
                %v733 = vld [vmem:[%s255 + $0xfa0] sm:$0xff]
                %734 = vst [vmem:[%s256 + $0x770] sm:$0xff] %v733
                %v735 = vld [vmem:[%s255 + $0xfa8] sm:$0xff]
                %736 = vst [vmem:[%s256 + $0x778] sm:$0xff] %v735
                %v737 = vld [vmem:[%s255 + $0xfb0] sm:$0xff]
                %738 = vst [vmem:[%s256 + $0x780] sm:$0xff] %v737
                %v739 = vld [vmem:[%s255 + $0xfb8] sm:$0xff]
                %740 = vst [vmem:[%s256 + $0x788] sm:$0xff] %v739
                %v741 = vld [vmem:[%s255 + $0xfc0] sm:$0xff]
                %742 = vst [vmem:[%s256 + $0x790] sm:$0xff] %v741
                %v743 = vld [vmem:[%s255 + $0xfc8] sm:$0xff]
                %744 = vst [vmem:[%s256 + $0x798] sm:$0xff] %v743
                %v745 = vld [vmem:[%s255 + $0xfd0] sm:$0xff]
                %746 = vst [vmem:[%s256 + $0x7a0] sm:$0xff] %v745
                %v747 = vld [vmem:[%s255 + $0xfd8] sm:$0xff]
                %748 = vst [vmem:[%s256 + $0x7a8] sm:$0xff] %v747
                %v749 = vld [vmem:[%s255 + $0xfe0] sm:$0xff]
                %750 = vst [vmem:[%s256 + $0x7b0] sm:$0xff] %v749
                %v751 = vld [vmem:[%s255 + $0xfe8] sm:$0xff]
                %752 = vst [vmem:[%s256 + $0x7b8] sm:$0xff] %v751
                %v753 = vld [vmem:[%s255 + $0xff0] sm:$0xff]
                %754 = vst [vmem:[%s256 + $0x7c0] sm:$0xff] %v753
                %v755 = vld [vmem:[%s255 + $0xff8] sm:$0xff]
                %756 = vst [vmem:[%s256 + $0x7c8] sm:$0xff] %v755
                %v757 = vld [vmem:[%s255 + $0x1000] sm:$0xff]
                %758 = vst [vmem:[%s256 + $0x7d0] sm:$0xff] %v757
                %v759 = vld [vmem:[%s255 + $0x1008] sm:$0xff]
                %760 = vst [vmem:[%s256 + $0x7d8] sm:$0xff] %v759
                %v761 = vld [vmem:[%s255 + $0x1010] sm:$0xff]
                %762 = vst [vmem:[%s256 + $0x7e0] sm:$0xff] %v761
                %v763 = vld [vmem:[%s255 + $0x1018] sm:$0xff]
                %764 = vst [vmem:[%s256 + $0x7e8] sm:$0xff] %v763
                %v765 = vld [vmem:[%s255 + $0x1020] sm:$0xff]
                %766 = vst [vmem:[%s256 + $0x7f0] sm:$0xff] %v765
                %v767 = vld [vmem:[%s255 + $0x1028] sm:$0xff]
                %768 = vst [vmem:[%s256 + $0x7f8] sm:$0xff] %v767
                %v769 = vld [vmem:[%s255 + $0x1030] sm:$0xff]
                %770 = vst [vmem:[%s256 + $0x800] sm:$0xff] %v769
                %v771 = vld [vmem:[%s255 + $0x1038] sm:$0xff]
                %772 = vst [vmem:[%s256 + $0x808] sm:$0xff] %v771
                %v773 = vld [vmem:[%s255 + $0x1040] sm:$0xff]
                %774 = vst [vmem:[%s256 + $0x810] sm:$0xff] %v773
                %v775 = vld [vmem:[%s255 + $0x1048] sm:$0xff]
                %776 = vst [vmem:[%s256 + $0x818] sm:$0xff] %v775
                %v777 = vld [vmem:[%s255 + $0x1050] sm:$0xff]
                %778 = vst [vmem:[%s256 + $0x820] sm:$0xff] %v777
                %v779 = vld [vmem:[%s255 + $0x1058] sm:$0xff]
                %780 = vst [vmem:[%s256 + $0x828] sm:$0xff] %v779
              $region49: #{decoder_only_forward.1} parent=43 // loop_footer
                %s254 = sadd.s32 1, %s250
              $region50: #{decoder_only_forward.1} parent=43 // loop_footer_branch
                %249 = sbr.rel target = $region46
              $region51: #{decoder_only_forward.1} parent=43 // loop_exit
                _
            $region44: #{decoder_only_forward.1} parent=39 // pred_fallthru
              _
            // Predicated region
            $region52: #{decoder_only_forward.1} parent=39 // pred_check
              _
            $region53: #{decoder_only_forward.1} parent=39 // pred_check_branch
              %782 = sbr.rel target = $region55
            $region54: #{decoder_only_forward.1} parent=39 // pred_region
              _
            $region55: #{decoder_only_forward.1} parent=39 // pred_fallthru
              _
          $region40: #{decoder_only_forward.1} parent=35 // pred_fallthru
            _
          %783 = vnop
        $region36: #{decoder_only_forward.1} parent=31 // pred_fallthru
          _
        // Predicated region
        $region56: #{decoder_only_forward.1} parent=31 // pred_check
          %p784 = pneg %p146
        $region57: #{decoder_only_forward.1} parent=31 // pred_check_branch
          %786 = sbr.rel (%p784) target = $region59
        $region58: #{decoder_only_forward.1} parent=31 // pred_region
          %s787 = smul.u32 131, %s16
          %p788 = scmp.lt.s32.totalorder %s787, 392
          %s789 = scalar_select %p788, %s787, 392
          %s790 = scalar_lea.vmem %s5, %s789
          %s791 = smul.u32 131, %s16
        $region59: #{decoder_only_forward.1} parent=31 // pred_fallthru
          _
        // Predicated region
        $region60: #{decoder_only_forward.1} parent=31 // pred_check
          %p792 = pneg %p172
        $region61: #{decoder_only_forward.1} parent=31 // pred_check_branch
          %794 = sbr.rel (%p792) target = $region63
        $region62: #{decoder_only_forward.1} parent=31 // pred_region
          %s795 = smul.u32 131, %s16
          %p796 = scmp.lt.s32.totalorder %s795, 392
          %s797 = scalar_select %p796, %s795, 392
          %s798 = scalar_lea.vmem %s6, %s797
          %s799 = smul.u32 131, %s16
        $region63: #{decoder_only_forward.1} parent=31 // pred_fallthru
          _
      $region32: #{decoder_only_forward.1} parent=5 // pred_fallthru
        _
      %p800 = scmp.le.s32.totalorder 1, %s16
      %p801 = scmp.lt.s32.totalorder %s16, 4
      %p802 = pnand %p800, %p801
      %p803 = pneg %p802
      // Predicated region
      $region64: #{decoder_only_forward.1} parent=5 // pred_check
        _
      $region65: #{decoder_only_forward.1} parent=5 // pred_check_branch
        %805 = sbr.rel (%p802) target = $region67
      $region66: #{decoder_only_forward.1} parent=5 // pred_region
        %s806 = ssub.s32 %s16, 1
        %s807 = sand.u32 %s113, 1
        %s808 = sand.u32 %s113, 1
        %s809 = smul.addr %s808, 2096
        %s810 = scalar_lea.vmem [#allocation3], %s809
        // Predicated region
        $region68: #{decoder_only_forward.1} parent=66 // pred_check
          %p811 = pneg %p126
        $region69: #{decoder_only_forward.1} parent=66 // pred_check_branch
          %813 = sbr.rel (%p811) target = $region71
        $region70: #{decoder_only_forward.1} parent=66 // pred_region
          _
        $region71: #{decoder_only_forward.1} parent=66 // pred_fallthru
          _
        %p814 = pneg %p37
        %p815 = pneg %p34
        %p816 = pneg %p58
        %p817 = pneg %p55
        %p818 = pneg %p79
        %p819 = pneg %p76
        %p820 = pneg %p100
        %p821 = pneg %p97
        %s822 = sand.u32 %s113, 1
        %s823 = sand.u32 %s113, 1
        %s824 = smul.addr %s823, 2096
        %s825 = scalar_lea.vmem [#allocation3], %s824
        %p826 = pneg %p126
        %p827 = pneg %p123
        %s828 = smul.u32 131, %s21
        %p829 = scmp.lt.s32.totalorder %s828, 392
        %s830 = scalar_select %p829, %s828, 392
        %s831 = scalar_lea.vmem %s5, %s830
        %p832 = pneg %p152
        %p833 = pneg %p149
        %s834 = smul.u32 131, %s21
        %p835 = scmp.lt.s32.totalorder %s834, 392
        %s836 = scalar_select %p835, %s834, 392
        %s837 = scalar_lea.vmem %s6, %s836
        %p838 = pneg %p178
        %p839 = pneg %p175
        %p840 = pneg %p204
        %p841 = pneg %p201
        %s842 = sand.u32 %s191, 1
        %s843 = scalar_lea.sflag [#allocation5], %s842
        %s844 = sand.u32 %s191, 1
        %s845 = smul.addr %s844, 1048
        %s846 = scalar_lea.vmem [#allocation4], %s845
        %s847 = smul.u32 131, %s21
        %s848 = smul.u32 131, %s21
        %p849 = scmp.lt.s32.totalorder %s848, 392
        %s850 = scalar_select %p849, %s848, 392
        %s851 = scalar_lea.vmem %s5, %s850
        %s852 = smul.u32 131, %s21
        %s853 = smul.u32 131, %s21
        %p854 = scmp.lt.s32.totalorder %s853, 392
        %s855 = scalar_select %p854, %s853, 392
        %s856 = scalar_lea.vmem %s6, %s855
        %s857 = smul.u32 131, %s21
        %s858 = smul.u32 131, %s21
        %p860 = scmp.eq.s32.totalorder %s21, 0
        // Predicated region
        $region72: #{decoder_only_forward.1} parent=66 // pred_check
          %p861 = pneg %p860
        $region73: #{decoder_only_forward.1} parent=66 // pred_check_branch
          %863 = sbr.rel (%p861) target = $region75
        $region74: #{decoder_only_forward.1} parent=66 // pred_region
          %v864 = vld [vmem:[%s0] sm:$0xff]
          %v865 = vld [vmem:[%s0 + $0x8] sm:$0xff]
          %v866 = vld [vmem:[%s1] sm:$0xff]
          %v867 = vld [vmem:[%s1 + $0x8] sm:$0xff]
          %v868 = vld [vmem:[%s1 + $0x10] sm:$0xff]
          %v869 = vld [vmem:[%s1 + $0x18] sm:$0xff]
          %v870 = vld [vmem:[%s1 + $0x20] sm:$0xff]
          %v871 = vld [vmem:[%s1 + $0x28] sm:$0xff]
          %v872 = vld [vmem:[%s1 + $0x30] sm:$0xff]
          %v873 = vld [vmem:[%s1 + $0x38] sm:$0xff]
          %v874 = vld [vmem:[%s1 + $0x40] sm:$0xff]
          %v875 = vld [vmem:[%s1 + $0x48] sm:$0xff]
          %v876 = vld [vmem:[%s1 + $0x50] sm:$0xff]
          %v877 = vld [vmem:[%s1 + $0x58] sm:$0xff]
          %v878 = vld [vmem:[%s1 + $0x60] sm:$0xff]
          %v879 = vld [vmem:[%s1 + $0x68] sm:$0xff]
          %v880 = vld [vmem:[%s1 + $0x70] sm:$0xff]
          %v881 = vld [vmem:[%s1 + $0x78] sm:$0xff]
          %v882 = vld [vmem:[%s1 + $0x80] sm:$0x1]
          %v883 = vld [vmem:[%s1 + $0x88] sm:$0x1]
          %v884 = vld [vmem:[%s2] sm:$0xff]
          %v885 = vld [vmem:[%s2 + $0x8] sm:$0xff]
          %v886 = vld [vmem:[%s2 + $0x10] sm:$0xff]
          %v887 = vld [vmem:[%s2 + $0x18] sm:$0xff]
          %v888 = vld [vmem:[%s2 + $0x20] sm:$0xff]
          %v889 = vld [vmem:[%s2 + $0x28] sm:$0xff]
          %v890 = vld [vmem:[%s2 + $0x30] sm:$0xff]
          %v891 = vld [vmem:[%s2 + $0x38] sm:$0xff]
          %v892 = vld [vmem:[%s2 + $0x40] sm:$0xff]
          %v893 = vld [vmem:[%s2 + $0x48] sm:$0xff]
          %v894 = vld [vmem:[%s2 + $0x50] sm:$0xff]
          %v895 = vld [vmem:[%s2 + $0x58] sm:$0xff]
          %v896 = vld [vmem:[%s2 + $0x60] sm:$0xff]
          %v897 = vld [vmem:[%s2 + $0x68] sm:$0xff]
          %v898 = vld [vmem:[%s2 + $0x70] sm:$0xff]
          %v899 = vld [vmem:[%s2 + $0x78] sm:$0xff]
          %v900 = vld [vmem:[%s2 + $0x80] sm:$0x1]
          %v901 = vld [vmem:[%s2 + $0x88] sm:$0x1]
          %v902 = vld [vmem:[%s3] sm:$0xff]
          %v903 = vld [vmem:[%s3 + $0x8] sm:$0xff]
          %v904 = vld [vmem:[%s3 + $0x10] sm:$0xff]
          %v905 = vld [vmem:[%s3 + $0x18] sm:$0xff]
          %v906 = vld [vmem:[%s3 + $0x20] sm:$0xff]
          %v907 = vld [vmem:[%s3 + $0x28] sm:$0xff]
          %v908 = vld [vmem:[%s3 + $0x30] sm:$0xff]
          %v909 = vld [vmem:[%s3 + $0x38] sm:$0xff]
          %v910 = vld [vmem:[%s3 + $0x40] sm:$0xff]
          %v911 = vld [vmem:[%s3 + $0x48] sm:$0xff]
          %v912 = vld [vmem:[%s3 + $0x50] sm:$0xff]
          %v913 = vld [vmem:[%s3 + $0x58] sm:$0xff]
          %v914 = vld [vmem:[%s3 + $0x60] sm:$0xff]
          %v915 = vld [vmem:[%s3 + $0x68] sm:$0xff]
          %v916 = vld [vmem:[%s3 + $0x70] sm:$0xff]
          %v917 = vld [vmem:[%s3 + $0x78] sm:$0xff]
          %v918 = vld [vmem:[%s3 + $0x80] sm:$0xff]
          %v919 = vlaneseq
          %v920 = vshrl.u32 %v919, 7
          %v921 = vlaneseq
          %v922 = vand.u32 %v921, 127
          %vm923 = vcmp.le.s32.totalorder %v922, %v920
          %v924 = vlaneseq
          %v925 = vshrl.u32 %v924, 7
          %v926 = vsub.s32 0, %v925
          %v927 = vrot.slane %v882, %v926
          %v928 = vlaneseq
          %v929 = vshrl.u32 %v928, 7
          %v930 = vsub.s32 0, %v929
          %v931 = vrot.slane %v883, %v930
          %vm932 = vcmask 523264
          %v934 = vsel %vm932, %v864, 0
          %v937 = vsel %vm932, %v865, 0
          %939 = vmatprep.subr.mxu0 %v867
          %940 = vmatpush1.msra.mxu0 %v866
          %941 = vmatprep.subr.mxu0 %v869
          %942 = vmatpush1.msra.mxu0 %v868
          %943 = vmatprep.subr.mxu0 %v871
          %944 = vmatpush1.msra.mxu0 %v870
          %945 = vmatprep.subr.mxu0 %v873
          %946 = vmatpush1.msra.mxu0 %v872
          %947 = vmatprep.subr.mxu0 %v875
          %948 = vmatpush1.msra.mxu0 %v874
          %949 = vmatprep.subr.mxu0 %v877
          %950 = vmatpush1.msra.mxu0 %v876
          %951 = vmatprep.subr.mxu0 %v879
          %952 = vmatpush1.msra.mxu0 %v878
          %953 = vmatprep.subr.mxu0 %v881
          %954 = vmatpush1.msra.mxu0 %v880
          %955 = vmatprep.subr.mxu0 0.0
          %956 = vmatpush1.msra.mxu0 0.0
          %957 = vmatprep.subr.mxu0 0.0
          %958 = vmatpush1.msra.mxu0 0.0
          %959 = vmatprep.subr.mxu0 0.0
          %960 = vmatpush1.msra.mxu0 0.0
          %961 = vmatprep.subr.mxu0 0.0
          %962 = vmatpush1.msra.mxu0 0.0
          %963 = vmatprep.subr.mxu0 0.0
          %964 = vmatpush1.msra.mxu0 0.0
          %965 = vmatprep.subr.mxu0 0.0
          %966 = vmatpush1.msra.mxu0 0.0
          %967 = vmatprep.subr.mxu0 0.0
          %968 = vmatpush1.msra.mxu0 0.0
          %969 = vmatprep.subr.mxu0 0.0
          %970 = vmatpush1.msra.mxu0 0.0
          %971 = vmatprep.subr.mxu0 0.0
          %972 = vmatpush1.msra.mxu0 0.0
          %973 = vmatprep.subr.mxu0 0.0
          %974 = vmatpush1.msra.mxu0 0.0
          %975 = vmatprep.subr.mxu0 0.0
          %976 = vmatpush1.msra.mxu0 0.0
          %977 = vmatprep.subr.mxu0 0.0
          %978 = vmatpush1.msra.mxu0 0.0
          %979 = vmatprep.subr.mxu0 0.0
          %980 = vmatpush1.msra.mxu0 0.0
          %981 = vmatprep.subr.mxu0 0.0
          %982 = vmatpush1.msra.mxu0 0.0
          %983 = vmatprep.subr.mxu0 0.0
          %984 = vmatpush1.msra.mxu0 0.0
          %985 = vmatprep.subr.mxu0 0.0
          %986 = vmatpush1.msra.mxu0 0.0
          %987 = vmatprep.subr.mxu0 0.0
          %988 = vmatpush1.msra.mxu0 0.0
          %989 = vmatprep.subr.mxu0 0.0
          %990 = vmatpush1.msra.mxu0 0.0
          %991 = vmatprep.subr.mxu0 0.0
          %992 = vmatpush1.msra.mxu0 0.0
          %993 = vmatprep.subr.mxu0 0.0
          %994 = vmatpush1.msra.mxu0 0.0
          %995 = vmatprep.subr.mxu0 0.0
          %996 = vmatpush1.msra.mxu0 0.0
          %997 = vmatprep.subr.mxu0 0.0
          %998 = vmatpush1.msra.mxu0 0.0
          %999 = vmatprep.subr.mxu0 0.0
          %1000 = vmatpush1.msra.mxu0 0.0
          %1001 = vmatprep.subr.mxu0 0.0
          %1002 = vmatpush1.msra.mxu0 0.0
          %1003 = vmatprep.mubr.f32.mxu0 0.0
          %1004 = vmatmul.mubr.f32.gmra.mrb[0].mxu0 %v934
          %v1005 = vpop.f32.mrb[0].mxu0
          %v1006 = vadd.f32 %v927, %v1005
          %v1007 = vpop.f32.mrb[0].mxu0
          %v1008 = vadd.f32 %v931, %v1007
          %1009 = vmatprep.mubr.f32.mxu0 0.0
          %1010 = vmatmul.mubr.f32.gmra.mrb[0].mxu0 %v937
          %v1011 = vpop.f32.mrb[0].mxu0
          %v1012 = vadd.f32 %v927, %v1011
          %v1013 = vpop.f32.mrb[0].mxu0
          %v1014 = vadd.f32 %v931, %v1013
          %1015 = vdwg.mxu0
          %1017 = vrot.lane.b32.xlu0 %v1006, 64
          %v1018 = vpop.permute.xlu0 %1017
          %vm1019 = vcmask 130048
          %v1020 = vsel %vm1019, %v1006, 0
          %v1022 = vsel %vm1019, %v1018, 0
          %1024 = vmatprep.subr.mxu0 0.0
          %1025 = vmatpush1.xpose.msra.mxu0 %v1022
          %1026 = vmatprep.subr.mxu0 0.0
          %1027 = vmatpush1.xpose.msra.mxu0 0.0
          %1028 = vmatprep.subr.mxu0 0.0
          %1029 = vmatpush1.xpose.msra.mxu0 0.0
          %1030 = vmatprep.subr.mxu0 0.0
          %1031 = vmatpush1.xpose.msra.mxu0 0.0
          %1032 = vmatprep.subr.mxu0 0.0
          %1033 = vmatpush1.xpose.msra.mxu0 0.0
          %1034 = vmatprep.subr.mxu0 0.0
          %1035 = vmatpush1.xpose.msra.mxu0 0.0
          %1036 = vmatprep.subr.mxu0 0.0
          %1037 = vmatpush1.xpose.msra.mxu0 0.0
          %1038 = vmatprep.subr.mxu0 0.0
          %1039 = vmatpush1.xpose.msra.mxu0 0.0
          %1040 = vmatprep.subr.mxu0 0.0
          %1041 = vmatpush1.xpose.msra.mxu0 0.0
          %1042 = vmatprep.subr.mxu0 0.0
          %1043 = vmatpush1.xpose.msra.mxu0 0.0
          %1044 = vmatprep.subr.mxu0 0.0
          %1045 = vmatpush1.xpose.msra.mxu0 0.0
          %1046 = vmatprep.subr.mxu0 0.0
          %1047 = vmatpush1.xpose.msra.mxu0 0.0
          %1048 = vmatprep.subr.mxu0 0.0
          %1049 = vmatpush1.xpose.msra.mxu0 0.0
          %1050 = vmatprep.subr.mxu0 0.0
          %1051 = vmatpush1.xpose.msra.mxu0 0.0
          %1052 = vmatprep.subr.mxu0 0.0
          %1053 = vmatpush1.xpose.msra.mxu0 0.0
          %1054 = vmatprep.subr.mxu0 0.0
          %1055 = vmatpush1.xpose.msra.mxu0 0.0
          %1056 = vmatprep.subr.mxu0 0.0
          %1057 = vmatpush1.xpose.msra.mxu0 0.0
          %1058 = vmatprep.subr.mxu0 0.0
          %1059 = vmatpush1.xpose.msra.mxu0 0.0
          %1060 = vmatprep.subr.mxu0 0.0
          %1061 = vmatpush1.xpose.msra.mxu0 0.0
          %1062 = vmatprep.subr.mxu0 0.0
          %1063 = vmatpush1.xpose.msra.mxu0 0.0
          %1064 = vmatprep.subr.mxu0 0.0
          %1065 = vmatpush1.xpose.msra.mxu0 0.0
          %1066 = vmatprep.subr.mxu0 0.0
          %1067 = vmatpush1.xpose.msra.mxu0 0.0
          %1068 = vmatprep.subr.mxu0 0.0
          %1069 = vmatpush1.xpose.msra.mxu0 0.0
          %1070 = vmatprep.subr.mxu0 0.0
          %1071 = vmatpush1.xpose.msra.mxu0 0.0
          %1072 = vmatprep.subr.mxu0 0.0
          %1073 = vmatpush1.xpose.msra.mxu0 0.0
          %1074 = vmatprep.subr.mxu0 0.0
          %1075 = vmatpush1.xpose.msra.mxu0 0.0
          %1076 = vmatprep.subr.mxu0 0.0
          %1077 = vmatpush1.xpose.msra.mxu0 0.0
          %1078 = vmatprep.subr.mxu0 0.0
          %1079 = vmatpush1.xpose.msra.mxu0 0.0
          %1080 = vmatprep.subr.mxu0 0.0
          %1081 = vmatpush1.xpose.msra.mxu0 0.0
          %1082 = vmatprep.subr.mxu0 0.0
          %1083 = vmatpush1.xpose.msra.mxu0 0.0
          %1084 = vmatprep.subr.mxu0 0.0
          %1085 = vmatpush1.xpose.msra.mxu0 0.0
          %1086 = vmatprep.subr.mxu0 0.0
          %1087 = vmatpush1.xpose.msra.mxu0 0.0
          %1088 = vmatprep.mubr.f32.mxu0 0.0
          %1089 = vmatmul.mubr.f32.gmra.mrb[0].mxu0 %v1020
          %v1090 = vpop.f32.mrb[0].mxu0
          %v1091 = vadd.f32 0.0, %v1090
          %v1092 = vpop.f32.mrb[0].mxu0
          %1093 = vdwg.mxu0
          %1094 = vrot.lane.b32.xlu0 %v1006, 112
          %v1095 = vpop.permute.xlu0 %1094
          %1096 = vrot.lane.b32.xlu0 %v1006, 48
          %v1097 = vpop.permute.xlu0 %1096
          %v1098 = vsel %vm1019, %v1095, 0
          %v1100 = vsel %vm1019, %v1097, 0
          %1102 = vmatprep.subr.mxu0 0.0
          %1103 = vmatpush1.xpose.msra.mxu0 %v1100
          %1104 = vmatprep.subr.mxu0 0.0
          %1105 = vmatpush1.xpose.msra.mxu0 0.0
          %1106 = vmatprep.subr.mxu0 0.0
          %1107 = vmatpush1.xpose.msra.mxu0 0.0
          %1108 = vmatprep.subr.mxu0 0.0
          %1109 = vmatpush1.xpose.msra.mxu0 0.0
          %1110 = vmatprep.subr.mxu0 0.0
          %1111 = vmatpush1.xpose.msra.mxu0 0.0
          %1112 = vmatprep.subr.mxu0 0.0
          %1113 = vmatpush1.xpose.msra.mxu0 0.0
          %1114 = vmatprep.subr.mxu0 0.0
          %1115 = vmatpush1.xpose.msra.mxu0 0.0
          %1116 = vmatprep.subr.mxu0 0.0
          %1117 = vmatpush1.xpose.msra.mxu0 0.0
          %1118 = vmatprep.subr.mxu0 0.0
          %1119 = vmatpush1.xpose.msra.mxu0 0.0
          %1120 = vmatprep.subr.mxu0 0.0
          %1121 = vmatpush1.xpose.msra.mxu0 0.0
          %1122 = vmatprep.subr.mxu0 0.0
          %1123 = vmatpush1.xpose.msra.mxu0 0.0
          %1124 = vmatprep.subr.mxu0 0.0
          %1125 = vmatpush1.xpose.msra.mxu0 0.0
          %1126 = vmatprep.subr.mxu0 0.0
          %1127 = vmatpush1.xpose.msra.mxu0 0.0
          %1128 = vmatprep.subr.mxu0 0.0
          %1129 = vmatpush1.xpose.msra.mxu0 0.0
          %1130 = vmatprep.subr.mxu0 0.0
          %1131 = vmatpush1.xpose.msra.mxu0 0.0
          %1132 = vmatprep.subr.mxu0 0.0
          %1133 = vmatpush1.xpose.msra.mxu0 0.0
          %1134 = vmatprep.subr.mxu0 0.0
          %1135 = vmatpush1.xpose.msra.mxu0 0.0
          %1136 = vmatprep.subr.mxu0 0.0
          %1137 = vmatpush1.xpose.msra.mxu0 0.0
          %1138 = vmatprep.subr.mxu0 0.0
          %1139 = vmatpush1.xpose.msra.mxu0 0.0
          %1140 = vmatprep.subr.mxu0 0.0
          %1141 = vmatpush1.xpose.msra.mxu0 0.0
          %1142 = vmatprep.subr.mxu0 0.0
          %1143 = vmatpush1.xpose.msra.mxu0 0.0
          %1144 = vmatprep.subr.mxu0 0.0
          %1145 = vmatpush1.xpose.msra.mxu0 0.0
          %1146 = vmatprep.subr.mxu0 0.0
          %1147 = vmatpush1.xpose.msra.mxu0 0.0
          %1148 = vmatprep.subr.mxu0 0.0
          %1149 = vmatpush1.xpose.msra.mxu0 0.0
          %1150 = vmatprep.subr.mxu0 0.0
          %1151 = vmatpush1.xpose.msra.mxu0 0.0
          %1152 = vmatprep.subr.mxu0 0.0
          %1153 = vmatpush1.xpose.msra.mxu0 0.0
          %1154 = vmatprep.subr.mxu0 0.0
          %1155 = vmatpush1.xpose.msra.mxu0 0.0
          %1156 = vmatprep.subr.mxu0 0.0
          %1157 = vmatpush1.xpose.msra.mxu0 0.0
          %1158 = vmatprep.subr.mxu0 0.0
          %1159 = vmatpush1.xpose.msra.mxu0 0.0
          %1160 = vmatprep.subr.mxu0 0.0
          %1161 = vmatpush1.xpose.msra.mxu0 0.0
          %1162 = vmatprep.subr.mxu0 0.0
          %1163 = vmatpush1.xpose.msra.mxu0 0.0
          %1164 = vmatprep.subr.mxu0 0.0
          %1165 = vmatpush1.xpose.msra.mxu0 0.0
          %1166 = vmatprep.mubr.f32.mxu0 0.0
          %1167 = vmatmul.mubr.f32.gmra.mrb[0].mxu0 %v1098
          %v1168 = vpop.f32.mrb[0].mxu0
          %v1169 = vadd.f32 0.0, %v1168
          %v1170 = vpop.f32.mrb[0].mxu0
          %1171 = vdwg.mxu0
          %1172 = vrot.lane.b32.xlu0 %v1006, 96
          %v1173 = vpop.permute.xlu0 %1172
          %1174 = vrot.lane.b32.xlu0 %v1006, 32
          %v1175 = vpop.permute.xlu0 %1174
          %v1176 = vsel %vm1019, %v1173, 0
          %v1178 = vsel %vm1019, %v1175, 0
          %1180 = vmatprep.subr.mxu0 0.0
          %1181 = vmatpush1.xpose.msra.mxu0 %v1178
          %1182 = vmatprep.subr.mxu0 0.0
          %1183 = vmatpush1.xpose.msra.mxu0 0.0
          %1184 = vmatprep.subr.mxu0 0.0
          %1185 = vmatpush1.xpose.msra.mxu0 0.0
          %1186 = vmatprep.subr.mxu0 0.0
          %1187 = vmatpush1.xpose.msra.mxu0 0.0
          %1188 = vmatprep.subr.mxu0 0.0
          %1189 = vmatpush1.xpose.msra.mxu0 0.0
          %1190 = vmatprep.subr.mxu0 0.0
          %1191 = vmatpush1.xpose.msra.mxu0 0.0
          %1192 = vmatprep.subr.mxu0 0.0
          %1193 = vmatpush1.xpose.msra.mxu0 0.0
          %1194 = vmatprep.subr.mxu0 0.0
          %1195 = vmatpush1.xpose.msra.mxu0 0.0
          %1196 = vmatprep.subr.mxu0 0.0
          %1197 = vmatpush1.xpose.msra.mxu0 0.0
          %1198 = vmatprep.subr.mxu0 0.0
          %1199 = vmatpush1.xpose.msra.mxu0 0.0
          %1200 = vmatprep.subr.mxu0 0.0
          %1201 = vmatpush1.xpose.msra.mxu0 0.0
          %1202 = vmatprep.subr.mxu0 0.0
          %1203 = vmatpush1.xpose.msra.mxu0 0.0
          %1204 = vmatprep.subr.mxu0 0.0
          %1205 = vmatpush1.xpose.msra.mxu0 0.0
          %1206 = vmatprep.subr.mxu0 0.0
          %1207 = vmatpush1.xpose.msra.mxu0 0.0
          %1208 = vmatprep.subr.mxu0 0.0
          %1209 = vmatpush1.xpose.msra.mxu0 0.0
          %1210 = vmatprep.subr.mxu0 0.0
          %1211 = vmatpush1.xpose.msra.mxu0 0.0
          %1212 = vmatprep.subr.mxu0 0.0
          %1213 = vmatpush1.xpose.msra.mxu0 0.0
          %1214 = vmatprep.subr.mxu0 0.0
          %1215 = vmatpush1.xpose.msra.mxu0 0.0
          %1216 = vmatprep.subr.mxu0 0.0
          %1217 = vmatpush1.xpose.msra.mxu0 0.0
          %1218 = vmatprep.subr.mxu0 0.0
          %1219 = vmatpush1.xpose.msra.mxu0 0.0
          %1220 = vmatprep.subr.mxu0 0.0
          %1221 = vmatpush1.xpose.msra.mxu0 0.0
          %1222 = vmatprep.subr.mxu0 0.0
          %1223 = vmatpush1.xpose.msra.mxu0 0.0
          %1224 = vmatprep.subr.mxu0 0.0
          %1225 = vmatpush1.xpose.msra.mxu0 0.0
          %1226 = vmatprep.subr.mxu0 0.0
          %1227 = vmatpush1.xpose.msra.mxu0 0.0
          %1228 = vmatprep.subr.mxu0 0.0
          %1229 = vmatpush1.xpose.msra.mxu0 0.0
          %1230 = vmatprep.subr.mxu0 0.0
          %1231 = vmatpush1.xpose.msra.mxu0 0.0
          %1232 = vmatprep.subr.mxu0 0.0
          %1233 = vmatpush1.xpose.msra.mxu0 0.0
          %1234 = vmatprep.subr.mxu0 0.0
          %1235 = vmatpush1.xpose.msra.mxu0 0.0
          %1236 = vmatprep.subr.mxu0 0.0
          %1237 = vmatpush1.xpose.msra.mxu0 0.0
          %1238 = vmatprep.subr.mxu0 0.0
          %1239 = vmatpush1.xpose.msra.mxu0 0.0
          %1240 = vmatprep.subr.mxu0 0.0
          %1241 = vmatpush1.xpose.msra.mxu0 0.0
          %1242 = vmatprep.subr.mxu0 0.0
          %1243 = vmatpush1.xpose.msra.mxu0 0.0
          %1244 = vmatprep.mubr.f32.mxu0 0.0
          %1245 = vmatmul.mubr.f32.gmra.mrb[0].mxu0 %v1176
          %v1246 = vpop.f32.mrb[0].mxu0
          %v1247 = vadd.f32 0.0, %v1246
          %v1248 = vpop.f32.mrb[0].mxu0
          %1249 = vdwg.mxu0
          %1250 = vrot.lane.b32.xlu0 %v1006, 80
          %v1251 = vpop.permute.xlu0 %1250
          %1252 = vrot.lane.b32.xlu0 %v1006, 16
          %v1253 = vpop.permute.xlu0 %1252
          %v1254 = vsel %vm1019, %v1251, 0
          %v1256 = vsel %vm1019, %v1253, 0
          %1258 = vmatprep.subr.mxu0 0.0
          %1259 = vmatpush1.xpose.msra.mxu0 %v1256
          %1260 = vmatprep.subr.mxu0 0.0
          %1261 = vmatpush1.xpose.msra.mxu0 0.0
          %1262 = vmatprep.subr.mxu0 0.0
          %1263 = vmatpush1.xpose.msra.mxu0 0.0
          %1264 = vmatprep.subr.mxu0 0.0
          %1265 = vmatpush1.xpose.msra.mxu0 0.0
          %1266 = vmatprep.subr.mxu0 0.0
          %1267 = vmatpush1.xpose.msra.mxu0 0.0
          %1268 = vmatprep.subr.mxu0 0.0
          %1269 = vmatpush1.xpose.msra.mxu0 0.0
          %1270 = vmatprep.subr.mxu0 0.0
          %1271 = vmatpush1.xpose.msra.mxu0 0.0
          %1272 = vmatprep.subr.mxu0 0.0
          %1273 = vmatpush1.xpose.msra.mxu0 0.0
          %1274 = vmatprep.subr.mxu0 0.0
          %1275 = vmatpush1.xpose.msra.mxu0 0.0
          %1276 = vmatprep.subr.mxu0 0.0
          %1277 = vmatpush1.xpose.msra.mxu0 0.0
          %1278 = vmatprep.subr.mxu0 0.0
          %1279 = vmatpush1.xpose.msra.mxu0 0.0
          %1280 = vmatprep.subr.mxu0 0.0
          %1281 = vmatpush1.xpose.msra.mxu0 0.0
          %1282 = vmatprep.subr.mxu0 0.0
          %1283 = vmatpush1.xpose.msra.mxu0 0.0
          %1284 = vmatprep.subr.mxu0 0.0
          %1285 = vmatpush1.xpose.msra.mxu0 0.0
          %1286 = vmatprep.subr.mxu0 0.0
          %1287 = vmatpush1.xpose.msra.mxu0 0.0
          %1288 = vmatprep.subr.mxu0 0.0
          %1289 = vmatpush1.xpose.msra.mxu0 0.0
          %1290 = vmatprep.subr.mxu0 0.0
          %1291 = vmatpush1.xpose.msra.mxu0 0.0
          %1292 = vmatprep.subr.mxu0 0.0
          %1293 = vmatpush1.xpose.msra.mxu0 0.0
          %1294 = vmatprep.subr.mxu0 0.0
          %1295 = vmatpush1.xpose.msra.mxu0 0.0
          %1296 = vmatprep.subr.mxu0 0.0
          %1297 = vmatpush1.xpose.msra.mxu0 0.0
          %1298 = vmatprep.subr.mxu0 0.0
          %1299 = vmatpush1.xpose.msra.mxu0 0.0
          %1300 = vmatprep.subr.mxu0 0.0
          %1301 = vmatpush1.xpose.msra.mxu0 0.0
          %1302 = vmatprep.subr.mxu0 0.0
          %1303 = vmatpush1.xpose.msra.mxu0 0.0
          %1304 = vmatprep.subr.mxu0 0.0
          %1305 = vmatpush1.xpose.msra.mxu0 0.0
          %1306 = vmatprep.subr.mxu0 0.0
          %1307 = vmatpush1.xpose.msra.mxu0 0.0
          %1308 = vmatprep.subr.mxu0 0.0
          %1309 = vmatpush1.xpose.msra.mxu0 0.0
          %1310 = vmatprep.subr.mxu0 0.0
          %1311 = vmatpush1.xpose.msra.mxu0 0.0
          %1312 = vmatprep.subr.mxu0 0.0
          %1313 = vmatpush1.xpose.msra.mxu0 0.0
          %1314 = vmatprep.subr.mxu0 0.0
          %1315 = vmatpush1.xpose.msra.mxu0 0.0
          %1316 = vmatprep.subr.mxu0 0.0
          %1317 = vmatpush1.xpose.msra.mxu0 0.0
          %1318 = vmatprep.subr.mxu0 0.0
          %1319 = vmatpush1.xpose.msra.mxu0 0.0
          %1320 = vmatprep.subr.mxu0 0.0
          %1321 = vmatpush1.xpose.msra.mxu0 0.0
          %1322 = vmatprep.mubr.f32.mxu0 0.0
          %1323 = vmatmul.mubr.f32.gmra.mrb[0].mxu0 %v1254
          %v1324 = vpop.f32.mrb[0].mxu0
          %v1325 = vadd.f32 0.0, %v1324
          %v1326 = vpop.f32.mrb[0].mxu0
          %1327 = vdwg.mxu0
          %1329 = vrot.lane.b32.xlu0 %v1012, 64
          %v1330 = vpop.permute.xlu0 %1329
          %v1331 = vsel %vm1019, %v1012, 0
          %v1333 = vsel %vm1019, %v1330, 0
          %1335 = vmatprep.subr.mxu0 0.0
          %1336 = vmatpush1.xpose.msra.mxu0 %v1333
          %1337 = vmatprep.subr.mxu0 0.0
          %1338 = vmatpush1.xpose.msra.mxu0 0.0
          %1339 = vmatprep.subr.mxu0 0.0
          %1340 = vmatpush1.xpose.msra.mxu0 0.0
          %1341 = vmatprep.subr.mxu0 0.0
          %1342 = vmatpush1.xpose.msra.mxu0 0.0
          %1343 = vmatprep.subr.mxu0 0.0
          %1344 = vmatpush1.xpose.msra.mxu0 0.0
          %1345 = vmatprep.subr.mxu0 0.0
          %1346 = vmatpush1.xpose.msra.mxu0 0.0
          %1347 = vmatprep.subr.mxu0 0.0
          %1348 = vmatpush1.xpose.msra.mxu0 0.0
          %1349 = vmatprep.subr.mxu0 0.0
          %1350 = vmatpush1.xpose.msra.mxu0 0.0
          %1351 = vmatprep.subr.mxu0 0.0
          %1352 = vmatpush1.xpose.msra.mxu0 0.0
          %1353 = vmatprep.subr.mxu0 0.0
          %1354 = vmatpush1.xpose.msra.mxu0 0.0
          %1355 = vmatprep.subr.mxu0 0.0
          %1356 = vmatpush1.xpose.msra.mxu0 0.0
          %1357 = vmatprep.subr.mxu0 0.0
          %1358 = vmatpush1.xpose.msra.mxu0 0.0
          %1359 = vmatprep.subr.mxu0 0.0
          %1360 = vmatpush1.xpose.msra.mxu0 0.0
          %1361 = vmatprep.subr.mxu0 0.0
          %1362 = vmatpush1.xpose.msra.mxu0 0.0
          %1363 = vmatprep.subr.mxu0 0.0
          %1364 = vmatpush1.xpose.msra.mxu0 0.0
          %1365 = vmatprep.subr.mxu0 0.0
          %1366 = vmatpush1.xpose.msra.mxu0 0.0
          %1367 = vmatprep.subr.mxu0 0.0
          %1368 = vmatpush1.xpose.msra.mxu0 0.0
          %1369 = vmatprep.subr.mxu0 0.0
          %1370 = vmatpush1.xpose.msra.mxu0 0.0
          %1371 = vmatprep.subr.mxu0 0.0
          %1372 = vmatpush1.xpose.msra.mxu0 0.0
          %1373 = vmatprep.subr.mxu0 0.0
          %1374 = vmatpush1.xpose.msra.mxu0 0.0
          %1375 = vmatprep.subr.mxu0 0.0
          %1376 = vmatpush1.xpose.msra.mxu0 0.0
          %1377 = vmatprep.subr.mxu0 0.0
          %1378 = vmatpush1.xpose.msra.mxu0 0.0
          %1379 = vmatprep.subr.mxu0 0.0
          %1380 = vmatpush1.xpose.msra.mxu0 0.0
          %1381 = vmatprep.subr.mxu0 0.0
          %1382 = vmatpush1.xpose.msra.mxu0 0.0
          %1383 = vmatprep.subr.mxu0 0.0
          %1384 = vmatpush1.xpose.msra.mxu0 0.0
          %1385 = vmatprep.subr.mxu0 0.0
          %1386 = vmatpush1.xpose.msra.mxu0 0.0
          %1387 = vmatprep.subr.mxu0 0.0
          %1388 = vmatpush1.xpose.msra.mxu0 0.0
          %1389 = vmatprep.subr.mxu0 0.0
          %1390 = vmatpush1.xpose.msra.mxu0 0.0
          %1391 = vmatprep.subr.mxu0 0.0
          %1392 = vmatpush1.xpose.msra.mxu0 0.0
          %1393 = vmatprep.subr.mxu0 0.0
          %1394 = vmatpush1.xpose.msra.mxu0 0.0
          %1395 = vmatprep.subr.mxu0 0.0
          %1396 = vmatpush1.xpose.msra.mxu0 0.0
          %1397 = vmatprep.subr.mxu0 0.0
          %1398 = vmatpush1.xpose.msra.mxu0 0.0
          %1399 = vmatprep.mubr.f32.mxu0 0.0
          %1400 = vmatmul.mubr.f32.gmra.mrb[0].mxu0 %v1331
          %v1401 = vpop.f32.mrb[0].mxu0
          %v1402 = vadd.f32 0.0, %v1401
          %v1403 = vpop.f32.mrb[0].mxu0
          %1404 = vdwg.mxu0
          %1405 = vrot.lane.b32.xlu0 %v1012, 112
          %v1406 = vpop.permute.xlu0 %1405
          %1407 = vrot.lane.b32.xlu0 %v1012, 48
          %v1408 = vpop.permute.xlu0 %1407
          %v1409 = vsel %vm1019, %v1406, 0
          %v1411 = vsel %vm1019, %v1408, 0
          %1413 = vmatprep.subr.mxu0 0.0
          %1414 = vmatpush1.xpose.msra.mxu0 %v1411
          %1415 = vmatprep.subr.mxu0 0.0
          %1416 = vmatpush1.xpose.msra.mxu0 0.0
          %1417 = vmatprep.subr.mxu0 0.0
          %1418 = vmatpush1.xpose.msra.mxu0 0.0
          %1419 = vmatprep.subr.mxu0 0.0
          %1420 = vmatpush1.xpose.msra.mxu0 0.0
          %1421 = vmatprep.subr.mxu0 0.0
          %1422 = vmatpush1.xpose.msra.mxu0 0.0
          %1423 = vmatprep.subr.mxu0 0.0
          %1424 = vmatpush1.xpose.msra.mxu0 0.0
          %1425 = vmatprep.subr.mxu0 0.0
          %1426 = vmatpush1.xpose.msra.mxu0 0.0
          %1427 = vmatprep.subr.mxu0 0.0
          %1428 = vmatpush1.xpose.msra.mxu0 0.0
          %1429 = vmatprep.subr.mxu0 0.0
          %1430 = vmatpush1.xpose.msra.mxu0 0.0
          %1431 = vmatprep.subr.mxu0 0.0
          %1432 = vmatpush1.xpose.msra.mxu0 0.0
          %1433 = vmatprep.subr.mxu0 0.0
          %1434 = vmatpush1.xpose.msra.mxu0 0.0
          %1435 = vmatprep.subr.mxu0 0.0
          %1436 = vmatpush1.xpose.msra.mxu0 0.0
          %1437 = vmatprep.subr.mxu0 0.0
          %1438 = vmatpush1.xpose.msra.mxu0 0.0
          %1439 = vmatprep.subr.mxu0 0.0
          %1440 = vmatpush1.xpose.msra.mxu0 0.0
          %1441 = vmatprep.subr.mxu0 0.0
          %1442 = vmatpush1.xpose.msra.mxu0 0.0
          %1443 = vmatprep.subr.mxu0 0.0
          %1444 = vmatpush1.xpose.msra.mxu0 0.0
          %1445 = vmatprep.subr.mxu0 0.0
          %1446 = vmatpush1.xpose.msra.mxu0 0.0
          %1447 = vmatprep.subr.mxu0 0.0
          %1448 = vmatpush1.xpose.msra.mxu0 0.0
          %1449 = vmatprep.subr.mxu0 0.0
          %1450 = vmatpush1.xpose.msra.mxu0 0.0
          %1451 = vmatprep.subr.mxu0 0.0
          %1452 = vmatpush1.xpose.msra.mxu0 0.0
          %1453 = vmatprep.subr.mxu0 0.0
          %1454 = vmatpush1.xpose.msra.mxu0 0.0
          %1455 = vmatprep.subr.mxu0 0.0
          %1456 = vmatpush1.xpose.msra.mxu0 0.0
          %1457 = vmatprep.subr.mxu0 0.0
          %1458 = vmatpush1.xpose.msra.mxu0 0.0
          %1459 = vmatprep.subr.mxu0 0.0
          %1460 = vmatpush1.xpose.msra.mxu0 0.0
          %1461 = vmatprep.subr.mxu0 0.0
          %1462 = vmatpush1.xpose.msra.mxu0 0.0
          %1463 = vmatprep.subr.mxu0 0.0
          %1464 = vmatpush1.xpose.msra.mxu0 0.0
          %1465 = vmatprep.subr.mxu0 0.0
          %1466 = vmatpush1.xpose.msra.mxu0 0.0
          %1467 = vmatprep.subr.mxu0 0.0
          %1468 = vmatpush1.xpose.msra.mxu0 0.0
          %1469 = vmatprep.subr.mxu0 0.0
          %1470 = vmatpush1.xpose.msra.mxu0 0.0
          %1471 = vmatprep.subr.mxu0 0.0
          %1472 = vmatpush1.xpose.msra.mxu0 0.0
          %1473 = vmatprep.subr.mxu0 0.0
          %1474 = vmatpush1.xpose.msra.mxu0 0.0
          %1475 = vmatprep.subr.mxu0 0.0
          %1476 = vmatpush1.xpose.msra.mxu0 0.0
          %1477 = vmatprep.mubr.f32.mxu0 0.0
          %1478 = vmatmul.mubr.f32.gmra.mrb[0].mxu0 %v1409
          %v1479 = vpop.f32.mrb[0].mxu0
          %v1480 = vadd.f32 0.0, %v1479
          %v1481 = vpop.f32.mrb[0].mxu0
          %1482 = vdwg.mxu0
          %1483 = vrot.lane.b32.xlu0 %v1012, 96
          %v1484 = vpop.permute.xlu0 %1483
          %1485 = vrot.lane.b32.xlu0 %v1012, 32
          %v1486 = vpop.permute.xlu0 %1485
          %v1487 = vsel %vm1019, %v1484, 0
          %v1489 = vsel %vm1019, %v1486, 0
          %1491 = vmatprep.subr.mxu0 0.0
          %1492 = vmatpush1.xpose.msra.mxu0 %v1489
          %1493 = vmatprep.subr.mxu0 0.0
          %1494 = vmatpush1.xpose.msra.mxu0 0.0
          %1495 = vmatprep.subr.mxu0 0.0
          %1496 = vmatpush1.xpose.msra.mxu0 0.0
          %1497 = vmatprep.subr.mxu0 0.0
          %1498 = vmatpush1.xpose.msra.mxu0 0.0
          %1499 = vmatprep.subr.mxu0 0.0
          %1500 = vmatpush1.xpose.msra.mxu0 0.0
          %1501 = vmatprep.subr.mxu0 0.0
          %1502 = vmatpush1.xpose.msra.mxu0 0.0
          %1503 = vmatprep.subr.mxu0 0.0
          %1504 = vmatpush1.xpose.msra.mxu0 0.0
          %1505 = vmatprep.subr.mxu0 0.0
          %1506 = vmatpush1.xpose.msra.mxu0 0.0
          %1507 = vmatprep.subr.mxu0 0.0
          %1508 = vmatpush1.xpose.msra.mxu0 0.0
          %1509 = vmatprep.subr.mxu0 0.0
          %1510 = vmatpush1.xpose.msra.mxu0 0.0
          %1511 = vmatprep.subr.mxu0 0.0
          %1512 = vmatpush1.xpose.msra.mxu0 0.0
          %1513 = vmatprep.subr.mxu0 0.0
          %1514 = vmatpush1.xpose.msra.mxu0 0.0
          %1515 = vmatprep.subr.mxu0 0.0
          %1516 = vmatpush1.xpose.msra.mxu0 0.0
          %1517 = vmatprep.subr.mxu0 0.0
          %1518 = vmatpush1.xpose.msra.mxu0 0.0
          %1519 = vmatprep.subr.mxu0 0.0
          %1520 = vmatpush1.xpose.msra.mxu0 0.0
          %1521 = vmatprep.subr.mxu0 0.0
          %1522 = vmatpush1.xpose.msra.mxu0 0.0
          %1523 = vmatprep.subr.mxu0 0.0
          %1524 = vmatpush1.xpose.msra.mxu0 0.0
          %1525 = vmatprep.subr.mxu0 0.0
          %1526 = vmatpush1.xpose.msra.mxu0 0.0
          %1527 = vmatprep.subr.mxu0 0.0
          %1528 = vmatpush1.xpose.msra.mxu0 0.0
          %1529 = vmatprep.subr.mxu0 0.0
          %1530 = vmatpush1.xpose.msra.mxu0 0.0
          %1531 = vmatprep.subr.mxu0 0.0
          %1532 = vmatpush1.xpose.msra.mxu0 0.0
          %1533 = vmatprep.subr.mxu0 0.0
          %1534 = vmatpush1.xpose.msra.mxu0 0.0
          %1535 = vmatprep.subr.mxu0 0.0
          %1536 = vmatpush1.xpose.msra.mxu0 0.0
          %1537 = vmatprep.subr.mxu0 0.0
          %1538 = vmatpush1.xpose.msra.mxu0 0.0
          %1539 = vmatprep.subr.mxu0 0.0
          %1540 = vmatpush1.xpose.msra.mxu0 0.0
          %1541 = vmatprep.subr.mxu0 0.0
          %1542 = vmatpush1.xpose.msra.mxu0 0.0
          %1543 = vmatprep.subr.mxu0 0.0
          %1544 = vmatpush1.xpose.msra.mxu0 0.0
          %1545 = vmatprep.subr.mxu0 0.0
          %1546 = vmatpush1.xpose.msra.mxu0 0.0
          %1547 = vmatprep.subr.mxu0 0.0
          %1548 = vmatpush1.xpose.msra.mxu0 0.0
          %1549 = vmatprep.subr.mxu0 0.0
          %1550 = vmatpush1.xpose.msra.mxu0 0.0
          %1551 = vmatprep.subr.mxu0 0.0
          %1552 = vmatpush1.xpose.msra.mxu0 0.0
          %1553 = vmatprep.subr.mxu0 0.0
          %1554 = vmatpush1.xpose.msra.mxu0 0.0
          %1555 = vmatprep.mubr.f32.mxu0 0.0
          %1556 = vmatmul.mubr.f32.gmra.mrb[0].mxu0 %v1487
          %v1557 = vpop.f32.mrb[0].mxu0
          %v1558 = vadd.f32 0.0, %v1557
          %v1559 = vpop.f32.mrb[0].mxu0
          %1560 = vdwg.mxu0
          %1561 = vrot.lane.b32.xlu0 %v1012, 80
          %v1562 = vpop.permute.xlu0 %1561
          %1563 = vrot.lane.b32.xlu0 %v1012, 16
          %v1564 = vpop.permute.xlu0 %1563
          %v1565 = vsel %vm1019, %v1562, 0
          %v1567 = vsel %vm1019, %v1564, 0
          %1569 = vmatprep.subr.mxu0 0.0
          %1570 = vmatpush1.xpose.msra.mxu0 %v1567
          %1571 = vmatprep.subr.mxu0 0.0
          %1572 = vmatpush1.xpose.msra.mxu0 0.0
          %1573 = vmatprep.subr.mxu0 0.0
          %1574 = vmatpush1.xpose.msra.mxu0 0.0
          %1575 = vmatprep.subr.mxu0 0.0
          %1576 = vmatpush1.xpose.msra.mxu0 0.0
          %1577 = vmatprep.subr.mxu0 0.0
          %1578 = vmatpush1.xpose.msra.mxu0 0.0
          %1579 = vmatprep.subr.mxu0 0.0
          %1580 = vmatpush1.xpose.msra.mxu0 0.0
          %1581 = vmatprep.subr.mxu0 0.0
          %1582 = vmatpush1.xpose.msra.mxu0 0.0
          %1583 = vmatprep.subr.mxu0 0.0
          %1584 = vmatpush1.xpose.msra.mxu0 0.0
          %1585 = vmatprep.subr.mxu0 0.0
          %1586 = vmatpush1.xpose.msra.mxu0 0.0
          %1587 = vmatprep.subr.mxu0 0.0
          %1588 = vmatpush1.xpose.msra.mxu0 0.0
          %1589 = vmatprep.subr.mxu0 0.0
          %1590 = vmatpush1.xpose.msra.mxu0 0.0
          %1591 = vmatprep.subr.mxu0 0.0
          %1592 = vmatpush1.xpose.msra.mxu0 0.0
          %1593 = vmatprep.subr.mxu0 0.0
          %1594 = vmatpush1.xpose.msra.mxu0 0.0
          %1595 = vmatprep.subr.mxu0 0.0
          %1596 = vmatpush1.xpose.msra.mxu0 0.0
          %1597 = vmatprep.subr.mxu0 0.0
          %1598 = vmatpush1.xpose.msra.mxu0 0.0
          %1599 = vmatprep.subr.mxu0 0.0
          %1600 = vmatpush1.xpose.msra.mxu0 0.0
          %1601 = vmatprep.subr.mxu0 0.0
          %1602 = vmatpush1.xpose.msra.mxu0 0.0
          %1603 = vmatprep.subr.mxu0 0.0
          %1604 = vmatpush1.xpose.msra.mxu0 0.0
          %1605 = vmatprep.subr.mxu0 0.0
          %1606 = vmatpush1.xpose.msra.mxu0 0.0
          %1607 = vmatprep.subr.mxu0 0.0
          %1608 = vmatpush1.xpose.msra.mxu0 0.0
          %1609 = vmatprep.subr.mxu0 0.0
          %1610 = vmatpush1.xpose.msra.mxu0 0.0
          %1611 = vmatprep.subr.mxu0 0.0
          %1612 = vmatpush1.xpose.msra.mxu0 0.0
          %1613 = vmatprep.subr.mxu0 0.0
          %1614 = vmatpush1.xpose.msra.mxu0 0.0
          %1615 = vmatprep.subr.mxu0 0.0
          %1616 = vmatpush1.xpose.msra.mxu0 0.0
          %1617 = vmatprep.subr.mxu0 0.0
          %1618 = vmatpush1.xpose.msra.mxu0 0.0
          %1619 = vmatprep.subr.mxu0 0.0
          %1620 = vmatpush1.xpose.msra.mxu0 0.0
          %1621 = vmatprep.subr.mxu0 0.0
          %1622 = vmatpush1.xpose.msra.mxu0 0.0
          %1623 = vmatprep.subr.mxu0 0.0
          %1624 = vmatpush1.xpose.msra.mxu0 0.0
          %1625 = vmatprep.subr.mxu0 0.0
          %1626 = vmatpush1.xpose.msra.mxu0 0.0
          %1627 = vmatprep.subr.mxu0 0.0
          %1628 = vmatpush1.xpose.msra.mxu0 0.0
          %1629 = vmatprep.subr.mxu0 0.0
          %1630 = vmatpush1.xpose.msra.mxu0 0.0
          %1631 = vmatprep.subr.mxu0 0.0
          %1632 = vmatpush1.xpose.msra.mxu0 0.0
          %1633 = vmatprep.mubr.f32.mxu0 0.0
          %1634 = vmatmul.mubr.f32.gmra.mrb[0].mxu0 %v1565
          %v1635 = vpop.f32.mrb[0].mxu0
          %v1636 = vadd.f32 0.0, %v1635
          %v1637 = vpop.f32.mrb[0].mxu0
          %1638 = vdwg.mxu0
          %v1639 = vmul.f32 %v1091, 0.25
          %v1640 = vmul.f32 %v1169, 0.25
          %v1641 = vmul.f32 %v1247, 0.25
          %v1642 = vmul.f32 %v1325, 0.25
          %v1643 = vmul.f32 %v1402, 0.25
          %v1644 = vmul.f32 %v1480, 0.25
          %v1645 = vmul.f32 %v1558, 0.25
          %v1646 = vmul.f32 %v1636, 0.25
          %v1647 = vsel %vm923, 1, 0
          %vm1648 = vcmp.eq.s32.totalorder %v1647, 1
          %v1649 = vsel %vm1648, %v1639, -1e+30
          %v1650 = vsel %vm1648, %v1640, -1e+30
          %v1651 = vsel %vm1648, %v1641, -1e+30
          %v1652 = vsel %vm1648, %v1642, -1e+30
          %v1653 = vsel %vm1648, %v1643, -1e+30
          %v1654 = vsel %vm1648, %v1644, -1e+30
          %v1655 = vsel %vm1648, %v1645, -1e+30
          %v1656 = vsel %vm1648, %v1646, -1e+30
          %vm1657 = vcmask 64512
          %v1658 = vsel %vm1657, %v1649, -inf
          %1659 = vmax.xlane.f32.xlu0 %v1658
          %v1660 = vpop.xlane.xlu0 %1659
          %v1661 = vsel %vm1657, %v1650, -inf
          %1662 = vmax.xlane.f32.xlu0 %v1661
          %v1663 = vpop.xlane.xlu0 %1662
          %v1664 = vsel %vm1657, %v1651, -inf
          %1665 = vmax.xlane.f32.xlu0 %v1664
          %v1666 = vpop.xlane.xlu0 %1665
          %v1667 = vsel %vm1657, %v1652, -inf
          %1668 = vmax.xlane.f32.xlu0 %v1667
          %v1669 = vpop.xlane.xlu0 %1668
          %v1670 = vsel %vm1657, %v1653, -inf
          %1671 = vmax.xlane.f32.xlu0 %v1670
          %v1672 = vpop.xlane.xlu0 %1671
          %v1673 = vsel %vm1657, %v1654, -inf
          %1674 = vmax.xlane.f32.xlu0 %v1673
          %v1675 = vpop.xlane.xlu0 %1674
          %v1676 = vsel %vm1657, %v1655, -inf
          %1677 = vmax.xlane.f32.xlu0 %v1676
          %v1678 = vpop.xlane.xlu0 %1677
          %v1679 = vsel %vm1657, %v1656, -inf
          %1680 = vmax.xlane.f32.xlu0 %v1679
          %v1681 = vpop.xlane.xlu0 %1680
          %v1682 = vsub.f32 %v1649, %v1660
          %v1683 = vsub.f32 %v1650, %v1663
          %v1684 = vsub.f32 %v1651, %v1666
          %v1685 = vsub.f32 %v1652, %v1669
          %v1686 = vsub.f32 %v1653, %v1672
          %v1687 = vsub.f32 %v1654, %v1675
          %v1688 = vsub.f32 %v1655, %v1678
          %v1689 = vsub.f32 %v1656, %v1681
          %v1690 = vmul.f32 %v1682, 1.442695
          %v1691 = vpow.pop %v1690
          %v1692 = vmul.f32 %v1683, 1.442695
          %v1693 = vpow.pop %v1692
          %v1694 = vmul.f32 %v1684, 1.442695
          %v1695 = vpow.pop %v1694
          %v1696 = vmul.f32 %v1685, 1.442695
          %v1697 = vpow.pop %v1696
          %v1698 = vmul.f32 %v1686, 1.442695
          %v1699 = vpow.pop %v1698
          %v1700 = vmul.f32 %v1687, 1.442695
          %v1701 = vpow.pop %v1700
          %v1702 = vmul.f32 %v1688, 1.442695
          %v1703 = vpow.pop %v1702
          %v1704 = vmul.f32 %v1689, 1.442695
          %v1705 = vpow.pop %v1704
          %v1706 = vsel %vm1657, %v1691, 0.0
          %1707 = vadd.xlane.f32.xlu0 %v1706
          %v1708 = vpop.xlane.xlu0 %1707
          %v1709 = vsel %vm1657, %v1693, 0.0
          %1710 = vadd.xlane.f32.xlu0 %v1709
          %v1711 = vpop.xlane.xlu0 %1710
          %v1712 = vsel %vm1657, %v1695, 0.0
          %1713 = vadd.xlane.f32.xlu0 %v1712
          %v1714 = vpop.xlane.xlu0 %1713
          %v1715 = vsel %vm1657, %v1697, 0.0
          %1716 = vadd.xlane.f32.xlu0 %v1715
          %v1717 = vpop.xlane.xlu0 %1716
          %v1718 = vsel %vm1657, %v1699, 0.0
          %1719 = vadd.xlane.f32.xlu0 %v1718
          %v1720 = vpop.xlane.xlu0 %1719
          %v1721 = vsel %vm1657, %v1701, 0.0
          %1722 = vadd.xlane.f32.xlu0 %v1721
          %v1723 = vpop.xlane.xlu0 %1722
          %v1724 = vsel %vm1657, %v1703, 0.0
          %1725 = vadd.xlane.f32.xlu0 %v1724
          %v1726 = vpop.xlane.xlu0 %1725
          %v1727 = vsel %vm1657, %v1705, 0.0
          %1728 = vadd.xlane.f32.xlu0 %v1727
          %v1729 = vpop.xlane.xlu0 %1728
          %v1730 = vrcp.pop %v1708
          %v1731 = vmul.f32 %v1691, %v1730
          %v1732 = vrcp.pop %v1711
          %v1733 = vmul.f32 %v1693, %v1732
          %v1734 = vrcp.pop %v1714
          %v1735 = vmul.f32 %v1695, %v1734
          %v1736 = vrcp.pop %v1717
          %v1737 = vmul.f32 %v1697, %v1736
          %v1738 = vrcp.pop %v1720
          %v1739 = vmul.f32 %v1699, %v1738
          %v1740 = vrcp.pop %v1723
          %v1741 = vmul.f32 %v1701, %v1740
          %v1742 = vrcp.pop %v1726
          %v1743 = vmul.f32 %v1703, %v1742
          %v1744 = vrcp.pop %v1729
          %v1745 = vmul.f32 %v1705, %v1744
          %v1747 = vsel %vm1657, %v1731, 0
          %1749 = vmatprep.subr.mxu0 0.0
          %1750 = vmatpush1.msra.mxu0 %v1008
          %1751 = vmatprep.subr.mxu0 0.0
          %1752 = vmatpush1.msra.mxu0 0.0
          %1753 = vmatprep.subr.mxu0 0.0
          %1754 = vmatpush1.msra.mxu0 0.0
          %1755 = vmatprep.subr.mxu0 0.0
          %1756 = vmatpush1.msra.mxu0 0.0
          %1757 = vmatprep.subr.mxu0 0.0
          %1758 = vmatpush1.msra.mxu0 0.0
          %1759 = vmatprep.subr.mxu0 0.0
          %1760 = vmatpush1.msra.mxu0 0.0
          %1761 = vmatprep.subr.mxu0 0.0
          %1762 = vmatpush1.msra.mxu0 0.0
          %1763 = vmatprep.subr.mxu0 0.0
          %1764 = vmatpush1.msra.mxu0 0.0
          %1765 = vmatprep.subr.mxu0 0.0
          %1766 = vmatpush1.msra.mxu0 0.0
          %1767 = vmatprep.subr.mxu0 0.0
          %1768 = vmatpush1.msra.mxu0 0.0
          %1769 = vmatprep.subr.mxu0 0.0
          %1770 = vmatpush1.msra.mxu0 0.0
          %1771 = vmatprep.subr.mxu0 0.0
          %1772 = vmatpush1.msra.mxu0 0.0
          %1773 = vmatprep.subr.mxu0 0.0
          %1774 = vmatpush1.msra.mxu0 0.0
          %1775 = vmatprep.subr.mxu0 0.0
          %1776 = vmatpush1.msra.mxu0 0.0
          %1777 = vmatprep.subr.mxu0 0.0
          %1778 = vmatpush1.msra.mxu0 0.0
          %1779 = vmatprep.subr.mxu0 0.0
          %1780 = vmatpush1.msra.mxu0 0.0
          %1781 = vmatprep.subr.mxu0 0.0
          %1782 = vmatpush1.msra.mxu0 0.0
          %1783 = vmatprep.subr.mxu0 0.0
          %1784 = vmatpush1.msra.mxu0 0.0
          %1785 = vmatprep.subr.mxu0 0.0
          %1786 = vmatpush1.msra.mxu0 0.0
          %1787 = vmatprep.subr.mxu0 0.0
          %1788 = vmatpush1.msra.mxu0 0.0
          %1789 = vmatprep.subr.mxu0 0.0
          %1790 = vmatpush1.msra.mxu0 0.0
          %1791 = vmatprep.subr.mxu0 0.0
          %1792 = vmatpush1.msra.mxu0 0.0
          %1793 = vmatprep.subr.mxu0 0.0
          %1794 = vmatpush1.msra.mxu0 0.0
          %1795 = vmatprep.subr.mxu0 0.0
          %1796 = vmatpush1.msra.mxu0 0.0
          %1797 = vmatprep.subr.mxu0 0.0
          %1798 = vmatpush1.msra.mxu0 0.0
          %1799 = vmatprep.subr.mxu0 0.0
          %1800 = vmatpush1.msra.mxu0 0.0
          %1801 = vmatprep.subr.mxu0 0.0
          %1802 = vmatpush1.msra.mxu0 0.0
          %1803 = vmatprep.subr.mxu0 0.0
          %1804 = vmatpush1.msra.mxu0 0.0
          %1805 = vmatprep.subr.mxu0 0.0
          %1806 = vmatpush1.msra.mxu0 0.0
          %1807 = vmatprep.subr.mxu0 0.0
          %1808 = vmatpush1.msra.mxu0 0.0
          %1809 = vmatprep.subr.mxu0 0.0
          %1810 = vmatpush1.msra.mxu0 0.0
          %1811 = vmatprep.subr.mxu0 0.0
          %1812 = vmatpush1.msra.mxu0 0.0
          %1813 = vmatprep.mubr.f32.mxu0 0.0
          %1814 = vmatmul.mubr.f32.gmra.mrb[0].mxu0 %v1747
          %v1815 = vpop.f32.mrb[0].mxu0
          %v1816 = vadd.f32 0.0, %v1815
          %v1817 = vpop.f32.mrb[0].mxu0
          %1818 = vdwg.mxu0
          %1820 = vrot.lane.b32.xlu0 %v1008, 112
          %v1821 = vpop.permute.xlu0 %1820
          %v1824 = vsel %vm1657, %v1733, 0
          %1826 = vmatprep.subr.mxu0 0.0
          %1827 = vmatpush1.msra.mxu0 %v1821
          %1828 = vmatprep.subr.mxu0 0.0
          %1829 = vmatpush1.msra.mxu0 0.0
          %1830 = vmatprep.subr.mxu0 0.0
          %1831 = vmatpush1.msra.mxu0 0.0
          %1832 = vmatprep.subr.mxu0 0.0
          %1833 = vmatpush1.msra.mxu0 0.0
          %1834 = vmatprep.subr.mxu0 0.0
          %1835 = vmatpush1.msra.mxu0 0.0
          %1836 = vmatprep.subr.mxu0 0.0
          %1837 = vmatpush1.msra.mxu0 0.0
          %1838 = vmatprep.subr.mxu0 0.0
          %1839 = vmatpush1.msra.mxu0 0.0
          %1840 = vmatprep.subr.mxu0 0.0
          %1841 = vmatpush1.msra.mxu0 0.0
          %1842 = vmatprep.subr.mxu0 0.0
          %1843 = vmatpush1.msra.mxu0 0.0
          %1844 = vmatprep.subr.mxu0 0.0
          %1845 = vmatpush1.msra.mxu0 0.0
          %1846 = vmatprep.subr.mxu0 0.0
          %1847 = vmatpush1.msra.mxu0 0.0
          %1848 = vmatprep.subr.mxu0 0.0
          %1849 = vmatpush1.msra.mxu0 0.0
          %1850 = vmatprep.subr.mxu0 0.0
          %1851 = vmatpush1.msra.mxu0 0.0
          %1852 = vmatprep.subr.mxu0 0.0
          %1853 = vmatpush1.msra.mxu0 0.0
          %1854 = vmatprep.subr.mxu0 0.0
          %1855 = vmatpush1.msra.mxu0 0.0
          %1856 = vmatprep.subr.mxu0 0.0
          %1857 = vmatpush1.msra.mxu0 0.0
          %1858 = vmatprep.subr.mxu0 0.0
          %1859 = vmatpush1.msra.mxu0 0.0
          %1860 = vmatprep.subr.mxu0 0.0
          %1861 = vmatpush1.msra.mxu0 0.0
          %1862 = vmatprep.subr.mxu0 0.0
          %1863 = vmatpush1.msra.mxu0 0.0
          %1864 = vmatprep.subr.mxu0 0.0
          %1865 = vmatpush1.msra.mxu0 0.0
          %1866 = vmatprep.subr.mxu0 0.0
          %1867 = vmatpush1.msra.mxu0 0.0
          %1868 = vmatprep.subr.mxu0 0.0
          %1869 = vmatpush1.msra.mxu0 0.0
          %1870 = vmatprep.subr.mxu0 0.0
          %1871 = vmatpush1.msra.mxu0 0.0
          %1872 = vmatprep.subr.mxu0 0.0
          %1873 = vmatpush1.msra.mxu0 0.0
          %1874 = vmatprep.subr.mxu0 0.0
          %1875 = vmatpush1.msra.mxu0 0.0
          %1876 = vmatprep.subr.mxu0 0.0
          %1877 = vmatpush1.msra.mxu0 0.0
          %1878 = vmatprep.subr.mxu0 0.0
          %1879 = vmatpush1.msra.mxu0 0.0
          %1880 = vmatprep.subr.mxu0 0.0
          %1881 = vmatpush1.msra.mxu0 0.0
          %1882 = vmatprep.subr.mxu0 0.0
          %1883 = vmatpush1.msra.mxu0 0.0
          %1884 = vmatprep.subr.mxu0 0.0
          %1885 = vmatpush1.msra.mxu0 0.0
          %1886 = vmatprep.subr.mxu0 0.0
          %1887 = vmatpush1.msra.mxu0 0.0
          %1888 = vmatprep.subr.mxu0 0.0
          %1889 = vmatpush1.msra.mxu0 0.0
          %1890 = vmatprep.mubr.f32.mxu0 0.0
          %1891 = vmatmul.mubr.f32.gmra.mrb[0].mxu0 %v1824
          %v1892 = vpop.f32.mrb[0].mxu0
          %v1893 = vadd.f32 0.0, %v1892
          %v1894 = vpop.f32.mrb[0].mxu0
          %1895 = vdwg.mxu0
          %1896 = vrot.lane.b32.xlu0 %v1008, 96
          %v1897 = vpop.permute.xlu0 %1896
          %v1900 = vsel %vm1657, %v1735, 0
          %1902 = vmatprep.subr.mxu0 0.0
          %1903 = vmatpush1.msra.mxu0 %v1897
          %1904 = vmatprep.subr.mxu0 0.0
          %1905 = vmatpush1.msra.mxu0 0.0
          %1906 = vmatprep.subr.mxu0 0.0
          %1907 = vmatpush1.msra.mxu0 0.0
          %1908 = vmatprep.subr.mxu0 0.0
          %1909 = vmatpush1.msra.mxu0 0.0
          %1910 = vmatprep.subr.mxu0 0.0
          %1911 = vmatpush1.msra.mxu0 0.0
          %1912 = vmatprep.subr.mxu0 0.0
          %1913 = vmatpush1.msra.mxu0 0.0
          %1914 = vmatprep.subr.mxu0 0.0
          %1915 = vmatpush1.msra.mxu0 0.0
          %1916 = vmatprep.subr.mxu0 0.0
          %1917 = vmatpush1.msra.mxu0 0.0
          %1918 = vmatprep.subr.mxu0 0.0
          %1919 = vmatpush1.msra.mxu0 0.0
          %1920 = vmatprep.subr.mxu0 0.0
          %1921 = vmatpush1.msra.mxu0 0.0
          %1922 = vmatprep.subr.mxu0 0.0
          %1923 = vmatpush1.msra.mxu0 0.0
          %1924 = vmatprep.subr.mxu0 0.0
          %1925 = vmatpush1.msra.mxu0 0.0
          %1926 = vmatprep.subr.mxu0 0.0
          %1927 = vmatpush1.msra.mxu0 0.0
          %1928 = vmatprep.subr.mxu0 0.0
          %1929 = vmatpush1.msra.mxu0 0.0
          %1930 = vmatprep.subr.mxu0 0.0
          %1931 = vmatpush1.msra.mxu0 0.0
          %1932 = vmatprep.subr.mxu0 0.0
          %1933 = vmatpush1.msra.mxu0 0.0
          %1934 = vmatprep.subr.mxu0 0.0
          %1935 = vmatpush1.msra.mxu0 0.0
          %1936 = vmatprep.subr.mxu0 0.0
          %1937 = vmatpush1.msra.mxu0 0.0
          %1938 = vmatprep.subr.mxu0 0.0
          %1939 = vmatpush1.msra.mxu0 0.0
          %1940 = vmatprep.subr.mxu0 0.0
          %1941 = vmatpush1.msra.mxu0 0.0
          %1942 = vmatprep.subr.mxu0 0.0
          %1943 = vmatpush1.msra.mxu0 0.0
          %1944 = vmatprep.subr.mxu0 0.0
          %1945 = vmatpush1.msra.mxu0 0.0
          %1946 = vmatprep.subr.mxu0 0.0
          %1947 = vmatpush1.msra.mxu0 0.0
          %1948 = vmatprep.subr.mxu0 0.0
          %1949 = vmatpush1.msra.mxu0 0.0
          %1950 = vmatprep.subr.mxu0 0.0
          %1951 = vmatpush1.msra.mxu0 0.0
          %1952 = vmatprep.subr.mxu0 0.0
          %1953 = vmatpush1.msra.mxu0 0.0
          %1954 = vmatprep.subr.mxu0 0.0
          %1955 = vmatpush1.msra.mxu0 0.0
          %1956 = vmatprep.subr.mxu0 0.0
          %1957 = vmatpush1.msra.mxu0 0.0
          %1958 = vmatprep.subr.mxu0 0.0
          %1959 = vmatpush1.msra.mxu0 0.0
          %1960 = vmatprep.subr.mxu0 0.0
          %1961 = vmatpush1.msra.mxu0 0.0
          %1962 = vmatprep.subr.mxu0 0.0
          %1963 = vmatpush1.msra.mxu0 0.0
          %1964 = vmatprep.subr.mxu0 0.0
          %1965 = vmatpush1.msra.mxu0 0.0
          %1966 = vmatprep.mubr.f32.mxu0 0.0
          %1967 = vmatmul.mubr.f32.gmra.mrb[0].mxu0 %v1900
          %v1968 = vpop.f32.mrb[0].mxu0
          %v1969 = vadd.f32 0.0, %v1968
          %v1970 = vpop.f32.mrb[0].mxu0
          %1971 = vdwg.mxu0
          %1972 = vrot.lane.b32.xlu0 %v1008, 80
          %v1973 = vpop.permute.xlu0 %1972
          %v1976 = vsel %vm1657, %v1737, 0
          %1978 = vmatprep.subr.mxu0 0.0
          %1979 = vmatpush1.msra.mxu0 %v1973
          %1980 = vmatprep.subr.mxu0 0.0
          %1981 = vmatpush1.msra.mxu0 0.0
          %1982 = vmatprep.subr.mxu0 0.0
          %1983 = vmatpush1.msra.mxu0 0.0
          %1984 = vmatprep.subr.mxu0 0.0
          %1985 = vmatpush1.msra.mxu0 0.0
          %1986 = vmatprep.subr.mxu0 0.0
          %1987 = vmatpush1.msra.mxu0 0.0
          %1988 = vmatprep.subr.mxu0 0.0
          %1989 = vmatpush1.msra.mxu0 0.0
          %1990 = vmatprep.subr.mxu0 0.0
          %1991 = vmatpush1.msra.mxu0 0.0
          %1992 = vmatprep.subr.mxu0 0.0
          %1993 = vmatpush1.msra.mxu0 0.0
          %1994 = vmatprep.subr.mxu0 0.0
          %1995 = vmatpush1.msra.mxu0 0.0
          %1996 = vmatprep.subr.mxu0 0.0
          %1997 = vmatpush1.msra.mxu0 0.0
          %1998 = vmatprep.subr.mxu0 0.0
          %1999 = vmatpush1.msra.mxu0 0.0
          %2000 = vmatprep.subr.mxu0 0.0
          %2001 = vmatpush1.msra.mxu0 0.0
          %2002 = vmatprep.subr.mxu0 0.0
          %2003 = vmatpush1.msra.mxu0 0.0
          %2004 = vmatprep.subr.mxu0 0.0
          %2005 = vmatpush1.msra.mxu0 0.0
          %2006 = vmatprep.subr.mxu0 0.0
          %2007 = vmatpush1.msra.mxu0 0.0
          %2008 = vmatprep.subr.mxu0 0.0
          %2009 = vmatpush1.msra.mxu0 0.0
          %2010 = vmatprep.subr.mxu0 0.0
          %2011 = vmatpush1.msra.mxu0 0.0
          %2012 = vmatprep.subr.mxu0 0.0
          %2013 = vmatpush1.msra.mxu0 0.0
          %2014 = vmatprep.subr.mxu0 0.0
          %2015 = vmatpush1.msra.mxu0 0.0
          %2016 = vmatprep.subr.mxu0 0.0
          %2017 = vmatpush1.msra.mxu0 0.0
          %2018 = vmatprep.subr.mxu0 0.0
          %2019 = vmatpush1.msra.mxu0 0.0
          %2020 = vmatprep.subr.mxu0 0.0
          %2021 = vmatpush1.msra.mxu0 0.0
          %2022 = vmatprep.subr.mxu0 0.0
          %2023 = vmatpush1.msra.mxu0 0.0
          %2024 = vmatprep.subr.mxu0 0.0
          %2025 = vmatpush1.msra.mxu0 0.0
          %2026 = vmatprep.subr.mxu0 0.0
          %2027 = vmatpush1.msra.mxu0 0.0
          %2028 = vmatprep.subr.mxu0 0.0
          %2029 = vmatpush1.msra.mxu0 0.0
          %2030 = vmatprep.subr.mxu0 0.0
          %2031 = vmatpush1.msra.mxu0 0.0
          %2032 = vmatprep.subr.mxu0 0.0
          %2033 = vmatpush1.msra.mxu0 0.0
          %2034 = vmatprep.subr.mxu0 0.0
          %2035 = vmatpush1.msra.mxu0 0.0
          %2036 = vmatprep.subr.mxu0 0.0
          %2037 = vmatpush1.msra.mxu0 0.0
          %2038 = vmatprep.subr.mxu0 0.0
          %2039 = vmatpush1.msra.mxu0 0.0
          %2040 = vmatprep.subr.mxu0 0.0
          %2041 = vmatpush1.msra.mxu0 0.0
          %2042 = vmatprep.mubr.f32.mxu0 0.0
          %2043 = vmatmul.mubr.f32.gmra.mrb[0].mxu0 %v1976
          %v2044 = vpop.f32.mrb[0].mxu0
          %v2045 = vadd.f32 0.0, %v2044
          %v2046 = vpop.f32.mrb[0].mxu0
          %2047 = vdwg.mxu0
          %2049 = vrot.lane.b32.xlu0 %v1893, 16
          %v2050 = vpop.permute.xlu0 %2049
          %2053 = vrot.lane.b32.xlu0 %v1969, 32
          %v2054 = vpop.permute.xlu0 %2053
          %2057 = vrot.lane.b32.xlu0 %v2045, 48
          %v2058 = vpop.permute.xlu0 %2057
          %v2060 = vsel %vm1019, %v1816, %v2050
          %vm2061 = vcmask 261120
          %v2062 = vsel %vm2061, %v2060, %v2054
          %vm2063 = vcmask 392192
          %v2064 = vsel %vm2063, %v2062, %v2058
          %v2066 = vsel %vm1657, %v1739, 0
          %2068 = vmatprep.subr.mxu0 0.0
          %2069 = vmatpush1.msra.mxu0 %v1014
          %2070 = vmatprep.subr.mxu0 0.0
          %2071 = vmatpush1.msra.mxu0 0.0
          %2072 = vmatprep.subr.mxu0 0.0
          %2073 = vmatpush1.msra.mxu0 0.0
          %2074 = vmatprep.subr.mxu0 0.0
          %2075 = vmatpush1.msra.mxu0 0.0
          %2076 = vmatprep.subr.mxu0 0.0
          %2077 = vmatpush1.msra.mxu0 0.0
          %2078 = vmatprep.subr.mxu0 0.0
          %2079 = vmatpush1.msra.mxu0 0.0
          %2080 = vmatprep.subr.mxu0 0.0
          %2081 = vmatpush1.msra.mxu0 0.0
          %2082 = vmatprep.subr.mxu0 0.0
          %2083 = vmatpush1.msra.mxu0 0.0
          %2084 = vmatprep.subr.mxu0 0.0
          %2085 = vmatpush1.msra.mxu0 0.0
          %2086 = vmatprep.subr.mxu0 0.0
          %2087 = vmatpush1.msra.mxu0 0.0
          %2088 = vmatprep.subr.mxu0 0.0
          %2089 = vmatpush1.msra.mxu0 0.0
          %2090 = vmatprep.subr.mxu0 0.0
          %2091 = vmatpush1.msra.mxu0 0.0
          %2092 = vmatprep.subr.mxu0 0.0
          %2093 = vmatpush1.msra.mxu0 0.0
          %2094 = vmatprep.subr.mxu0 0.0
          %2095 = vmatpush1.msra.mxu0 0.0
          %2096 = vmatprep.subr.mxu0 0.0
          %2097 = vmatpush1.msra.mxu0 0.0
          %2098 = vmatprep.subr.mxu0 0.0
          %2099 = vmatpush1.msra.mxu0 0.0
          %2100 = vmatprep.subr.mxu0 0.0
          %2101 = vmatpush1.msra.mxu0 0.0
          %2102 = vmatprep.subr.mxu0 0.0
          %2103 = vmatpush1.msra.mxu0 0.0
          %2104 = vmatprep.subr.mxu0 0.0
          %2105 = vmatpush1.msra.mxu0 0.0
          %2106 = vmatprep.subr.mxu0 0.0
          %2107 = vmatpush1.msra.mxu0 0.0
          %2108 = vmatprep.subr.mxu0 0.0
          %2109 = vmatpush1.msra.mxu0 0.0
          %2110 = vmatprep.subr.mxu0 0.0
          %2111 = vmatpush1.msra.mxu0 0.0
          %2112 = vmatprep.subr.mxu0 0.0
          %2113 = vmatpush1.msra.mxu0 0.0
          %2114 = vmatprep.subr.mxu0 0.0
          %2115 = vmatpush1.msra.mxu0 0.0
          %2116 = vmatprep.subr.mxu0 0.0
          %2117 = vmatpush1.msra.mxu0 0.0
          %2118 = vmatprep.subr.mxu0 0.0
          %2119 = vmatpush1.msra.mxu0 0.0
          %2120 = vmatprep.subr.mxu0 0.0
          %2121 = vmatpush1.msra.mxu0 0.0
          %2122 = vmatprep.subr.mxu0 0.0
          %2123 = vmatpush1.msra.mxu0 0.0
          %2124 = vmatprep.subr.mxu0 0.0
          %2125 = vmatpush1.msra.mxu0 0.0
          %2126 = vmatprep.subr.mxu0 0.0
          %2127 = vmatpush1.msra.mxu0 0.0
          %2128 = vmatprep.subr.mxu0 0.0
          %2129 = vmatpush1.msra.mxu0 0.0
          %2130 = vmatprep.subr.mxu0 0.0
          %2131 = vmatpush1.msra.mxu0 0.0
          %2132 = vmatprep.mubr.f32.mxu0 0.0
          %2133 = vmatmul.mubr.f32.gmra.mrb[0].mxu0 %v2066
          %v2134 = vpop.f32.mrb[0].mxu0
          %v2135 = vadd.f32 0.0, %v2134
          %v2136 = vpop.f32.mrb[0].mxu0
          %2137 = vdwg.mxu0
          %2139 = vrot.lane.b32.xlu0 %v1014, 112
          %v2140 = vpop.permute.xlu0 %2139
          %v2143 = vsel %vm1657, %v1741, 0
          %2145 = vmatprep.subr.mxu0 0.0
          %2146 = vmatpush1.msra.mxu0 %v2140
          %2147 = vmatprep.subr.mxu0 0.0
          %2148 = vmatpush1.msra.mxu0 0.0
          %2149 = vmatprep.subr.mxu0 0.0
          %2150 = vmatpush1.msra.mxu0 0.0
          %2151 = vmatprep.subr.mxu0 0.0
          %2152 = vmatpush1.msra.mxu0 0.0
          %2153 = vmatprep.subr.mxu0 0.0
          %2154 = vmatpush1.msra.mxu0 0.0
          %2155 = vmatprep.subr.mxu0 0.0
          %2156 = vmatpush1.msra.mxu0 0.0
          %2157 = vmatprep.subr.mxu0 0.0
          %2158 = vmatpush1.msra.mxu0 0.0
          %2159 = vmatprep.subr.mxu0 0.0
          %2160 = vmatpush1.msra.mxu0 0.0
          %2161 = vmatprep.subr.mxu0 0.0
          %2162 = vmatpush1.msra.mxu0 0.0
          %2163 = vmatprep.subr.mxu0 0.0
          %2164 = vmatpush1.msra.mxu0 0.0
          %2165 = vmatprep.subr.mxu0 0.0
          %2166 = vmatpush1.msra.mxu0 0.0
          %2167 = vmatprep.subr.mxu0 0.0
          %2168 = vmatpush1.msra.mxu0 0.0
          %2169 = vmatprep.subr.mxu0 0.0
          %2170 = vmatpush1.msra.mxu0 0.0
          %2171 = vmatprep.subr.mxu0 0.0
          %2172 = vmatpush1.msra.mxu0 0.0
          %2173 = vmatprep.subr.mxu0 0.0
          %2174 = vmatpush1.msra.mxu0 0.0
          %2175 = vmatprep.subr.mxu0 0.0
          %2176 = vmatpush1.msra.mxu0 0.0
          %2177 = vmatprep.subr.mxu0 0.0
          %2178 = vmatpush1.msra.mxu0 0.0
          %2179 = vmatprep.subr.mxu0 0.0
          %2180 = vmatpush1.msra.mxu0 0.0
          %2181 = vmatprep.subr.mxu0 0.0
          %2182 = vmatpush1.msra.mxu0 0.0
          %2183 = vmatprep.subr.mxu0 0.0
          %2184 = vmatpush1.msra.mxu0 0.0
          %2185 = vmatprep.subr.mxu0 0.0
          %2186 = vmatpush1.msra.mxu0 0.0
          %2187 = vmatprep.subr.mxu0 0.0
          %2188 = vmatpush1.msra.mxu0 0.0
          %2189 = vmatprep.subr.mxu0 0.0
          %2190 = vmatpush1.msra.mxu0 0.0
          %2191 = vmatprep.subr.mxu0 0.0
          %2192 = vmatpush1.msra.mxu0 0.0
          %2193 = vmatprep.subr.mxu0 0.0
          %2194 = vmatpush1.msra.mxu0 0.0
          %2195 = vmatprep.subr.mxu0 0.0
          %2196 = vmatpush1.msra.mxu0 0.0
          %2197 = vmatprep.subr.mxu0 0.0
          %2198 = vmatpush1.msra.mxu0 0.0
          %2199 = vmatprep.subr.mxu0 0.0
          %2200 = vmatpush1.msra.mxu0 0.0
          %2201 = vmatprep.subr.mxu0 0.0
          %2202 = vmatpush1.msra.mxu0 0.0
          %2203 = vmatprep.subr.mxu0 0.0
          %2204 = vmatpush1.msra.mxu0 0.0
          %2205 = vmatprep.subr.mxu0 0.0
          %2206 = vmatpush1.msra.mxu0 0.0
          %2207 = vmatprep.subr.mxu0 0.0
          %2208 = vmatpush1.msra.mxu0 0.0
          %2209 = vmatprep.mubr.f32.mxu0 0.0
          %2210 = vmatmul.mubr.f32.gmra.mrb[0].mxu0 %v2143
          %v2211 = vpop.f32.mrb[0].mxu0
          %v2212 = vadd.f32 0.0, %v2211
          %v2213 = vpop.f32.mrb[0].mxu0
          %2214 = vdwg.mxu0
          %2215 = vrot.lane.b32.xlu0 %v1014, 96
          %v2216 = vpop.permute.xlu0 %2215
          %v2219 = vsel %vm1657, %v1743, 0
          %2221 = vmatprep.subr.mxu0 0.0
          %2222 = vmatpush1.msra.mxu0 %v2216
          %2223 = vmatprep.subr.mxu0 0.0
          %2224 = vmatpush1.msra.mxu0 0.0
          %2225 = vmatprep.subr.mxu0 0.0
          %2226 = vmatpush1.msra.mxu0 0.0
          %2227 = vmatprep.subr.mxu0 0.0
          %2228 = vmatpush1.msra.mxu0 0.0
          %2229 = vmatprep.subr.mxu0 0.0
          %2230 = vmatpush1.msra.mxu0 0.0
          %2231 = vmatprep.subr.mxu0 0.0
          %2232 = vmatpush1.msra.mxu0 0.0
          %2233 = vmatprep.subr.mxu0 0.0
          %2234 = vmatpush1.msra.mxu0 0.0
          %2235 = vmatprep.subr.mxu0 0.0
          %2236 = vmatpush1.msra.mxu0 0.0
          %2237 = vmatprep.subr.mxu0 0.0
          %2238 = vmatpush1.msra.mxu0 0.0
          %2239 = vmatprep.subr.mxu0 0.0
          %2240 = vmatpush1.msra.mxu0 0.0
          %2241 = vmatprep.subr.mxu0 0.0
          %2242 = vmatpush1.msra.mxu0 0.0
          %2243 = vmatprep.subr.mxu0 0.0
          %2244 = vmatpush1.msra.mxu0 0.0
          %2245 = vmatprep.subr.mxu0 0.0
          %2246 = vmatpush1.msra.mxu0 0.0
          %2247 = vmatprep.subr.mxu0 0.0
          %2248 = vmatpush1.msra.mxu0 0.0
          %2249 = vmatprep.subr.mxu0 0.0
          %2250 = vmatpush1.msra.mxu0 0.0
          %2251 = vmatprep.subr.mxu0 0.0
          %2252 = vmatpush1.msra.mxu0 0.0
          %2253 = vmatprep.subr.mxu0 0.0
          %2254 = vmatpush1.msra.mxu0 0.0
          %2255 = vmatprep.subr.mxu0 0.0
          %2256 = vmatpush1.msra.mxu0 0.0
          %2257 = vmatprep.subr.mxu0 0.0
          %2258 = vmatpush1.msra.mxu0 0.0
          %2259 = vmatprep.subr.mxu0 0.0
          %2260 = vmatpush1.msra.mxu0 0.0
          %2261 = vmatprep.subr.mxu0 0.0
          %2262 = vmatpush1.msra.mxu0 0.0
          %2263 = vmatprep.subr.mxu0 0.0
          %2264 = vmatpush1.msra.mxu0 0.0
          %2265 = vmatprep.subr.mxu0 0.0
          %2266 = vmatpush1.msra.mxu0 0.0
          %2267 = vmatprep.subr.mxu0 0.0
          %2268 = vmatpush1.msra.mxu0 0.0
          %2269 = vmatprep.subr.mxu0 0.0
          %2270 = vmatpush1.msra.mxu0 0.0
          %2271 = vmatprep.subr.mxu0 0.0
          %2272 = vmatpush1.msra.mxu0 0.0
          %2273 = vmatprep.subr.mxu0 0.0
          %2274 = vmatpush1.msra.mxu0 0.0
          %2275 = vmatprep.subr.mxu0 0.0
          %2276 = vmatpush1.msra.mxu0 0.0
          %2277 = vmatprep.subr.mxu0 0.0
          %2278 = vmatpush1.msra.mxu0 0.0
          %2279 = vmatprep.subr.mxu0 0.0
          %2280 = vmatpush1.msra.mxu0 0.0
          %2281 = vmatprep.subr.mxu0 0.0
          %2282 = vmatpush1.msra.mxu0 0.0
          %2283 = vmatprep.subr.mxu0 0.0
          %2284 = vmatpush1.msra.mxu0 0.0
          %2285 = vmatprep.mubr.f32.mxu0 0.0
          %2286 = vmatmul.mubr.f32.gmra.mrb[0].mxu0 %v2219
          %v2287 = vpop.f32.mrb[0].mxu0
          %v2288 = vadd.f32 0.0, %v2287
          %v2289 = vpop.f32.mrb[0].mxu0
          %2290 = vdwg.mxu0
          %2291 = vrot.lane.b32.xlu0 %v1014, 80
          %v2292 = vpop.permute.xlu0 %2291
          %v2295 = vsel %vm1657, %v1745, 0
          %2297 = vmatprep.subr.mxu0 0.0
          %2298 = vmatpush1.msra.mxu0 %v2292
          %2299 = vmatprep.subr.mxu0 0.0
          %2300 = vmatpush1.msra.mxu0 0.0
          %2301 = vmatprep.subr.mxu0 0.0
          %2302 = vmatpush1.msra.mxu0 0.0
          %2303 = vmatprep.subr.mxu0 0.0
          %2304 = vmatpush1.msra.mxu0 0.0
          %2305 = vmatprep.subr.mxu0 0.0
          %2306 = vmatpush1.msra.mxu0 0.0
          %2307 = vmatprep.subr.mxu0 0.0
          %2308 = vmatpush1.msra.mxu0 0.0
          %2309 = vmatprep.subr.mxu0 0.0
          %2310 = vmatpush1.msra.mxu0 0.0
          %2311 = vmatprep.subr.mxu0 0.0
          %2312 = vmatpush1.msra.mxu0 0.0
          %2313 = vmatprep.subr.mxu0 0.0
          %2314 = vmatpush1.msra.mxu0 0.0
          %2315 = vmatprep.subr.mxu0 0.0
          %2316 = vmatpush1.msra.mxu0 0.0
          %2317 = vmatprep.subr.mxu0 0.0
          %2318 = vmatpush1.msra.mxu0 0.0
          %2319 = vmatprep.subr.mxu0 0.0
          %2320 = vmatpush1.msra.mxu0 0.0
          %2321 = vmatprep.subr.mxu0 0.0
          %2322 = vmatpush1.msra.mxu0 0.0
          %2323 = vmatprep.subr.mxu0 0.0
          %2324 = vmatpush1.msra.mxu0 0.0
          %2325 = vmatprep.subr.mxu0 0.0
          %2326 = vmatpush1.msra.mxu0 0.0
          %2327 = vmatprep.subr.mxu0 0.0
          %2328 = vmatpush1.msra.mxu0 0.0
          %2329 = vmatprep.subr.mxu0 0.0
          %2330 = vmatpush1.msra.mxu0 0.0
          %2331 = vmatprep.subr.mxu0 0.0
          %2332 = vmatpush1.msra.mxu0 0.0
          %2333 = vmatprep.subr.mxu0 0.0
          %2334 = vmatpush1.msra.mxu0 0.0
          %2335 = vmatprep.subr.mxu0 0.0
          %2336 = vmatpush1.msra.mxu0 0.0
          %2337 = vmatprep.subr.mxu0 0.0
          %2338 = vmatpush1.msra.mxu0 0.0
          %2339 = vmatprep.subr.mxu0 0.0
          %2340 = vmatpush1.msra.mxu0 0.0
          %2341 = vmatprep.subr.mxu0 0.0
          %2342 = vmatpush1.msra.mxu0 0.0
          %2343 = vmatprep.subr.mxu0 0.0
          %2344 = vmatpush1.msra.mxu0 0.0
          %2345 = vmatprep.subr.mxu0 0.0
          %2346 = vmatpush1.msra.mxu0 0.0
          %2347 = vmatprep.subr.mxu0 0.0
          %2348 = vmatpush1.msra.mxu0 0.0
          %2349 = vmatprep.subr.mxu0 0.0
          %2350 = vmatpush1.msra.mxu0 0.0
          %2351 = vmatprep.subr.mxu0 0.0
          %2352 = vmatpush1.msra.mxu0 0.0
          %2353 = vmatprep.subr.mxu0 0.0
          %2354 = vmatpush1.msra.mxu0 0.0
          %2355 = vmatprep.subr.mxu0 0.0
          %2356 = vmatpush1.msra.mxu0 0.0
          %2357 = vmatprep.subr.mxu0 0.0
          %2358 = vmatpush1.msra.mxu0 0.0
          %2359 = vmatprep.subr.mxu0 0.0
          %2360 = vmatpush1.msra.mxu0 0.0
          %2361 = vmatprep.mubr.f32.mxu0 0.0
          %2362 = vmatmul.mubr.f32.gmra.mrb[0].mxu0 %v2295
          %v2363 = vpop.f32.mrb[0].mxu0
          %v2364 = vadd.f32 0.0, %v2363
          %v2365 = vpop.f32.mrb[0].mxu0
          %2366 = vdwg.mxu0
          %2368 = vrot.lane.b32.xlu0 %v2212, 16
          %v2369 = vpop.permute.xlu0 %2368
          %2372 = vrot.lane.b32.xlu0 %v2288, 32
          %v2373 = vpop.permute.xlu0 %2372
          %2376 = vrot.lane.b32.xlu0 %v2364, 48
          %v2377 = vpop.permute.xlu0 %2376
          %v2379 = vsel %vm1019, %v2135, %v2369
          %v2380 = vsel %vm2061, %v2379, %v2373
          %v2381 = vsel %vm2063, %v2380, %v2377
          %v2382 = vlaneseq
          %v2383 = vshrl.u32 %v2382, 7
          %v2384 = vsub.s32 0, %v2383
          %v2385 = vrot.slane %v900, %v2384
          %v2387 = vsel %vm932, %v2064, 0
          %v2390 = vsel %vm932, %v2381, 0
          %2392 = vmatprep.subr.mxu0 0.0
          %2393 = vmatpush1.msra.mxu0 %v884
          %2394 = vmatprep.subr.mxu0 0.0
          %2395 = vmatpush1.msra.mxu0 %v886
          %2396 = vmatprep.subr.mxu0 0.0
          %2397 = vmatpush1.msra.mxu0 %v888
          %2398 = vmatprep.subr.mxu0 0.0
          %2399 = vmatpush1.msra.mxu0 %v890
          %2400 = vmatprep.subr.mxu0 0.0
          %2401 = vmatpush1.msra.mxu0 %v892
          %2402 = vmatprep.subr.mxu0 0.0
          %2403 = vmatpush1.msra.mxu0 %v894
          %2404 = vmatprep.subr.mxu0 0.0
          %2405 = vmatpush1.msra.mxu0 %v896
          %2406 = vmatprep.subr.mxu0 0.0
          %2407 = vmatpush1.msra.mxu0 %v898
          %2408 = vmatprep.subr.mxu0 0.0
          %2409 = vmatpush1.msra.mxu0 0.0
          %2410 = vmatprep.subr.mxu0 0.0
          %2411 = vmatpush1.msra.mxu0 0.0
          %2412 = vmatprep.subr.mxu0 0.0
          %2413 = vmatpush1.msra.mxu0 0.0
          %2414 = vmatprep.subr.mxu0 0.0
          %2415 = vmatpush1.msra.mxu0 0.0
          %2416 = vmatprep.subr.mxu0 0.0
          %2417 = vmatpush1.msra.mxu0 0.0
          %2418 = vmatprep.subr.mxu0 0.0
          %2419 = vmatpush1.msra.mxu0 0.0
          %2420 = vmatprep.subr.mxu0 0.0
          %2421 = vmatpush1.msra.mxu0 0.0
          %2422 = vmatprep.subr.mxu0 0.0
          %2423 = vmatpush1.msra.mxu0 0.0
          %2424 = vmatprep.subr.mxu0 0.0
          %2425 = vmatpush1.msra.mxu0 0.0
          %2426 = vmatprep.subr.mxu0 0.0
          %2427 = vmatpush1.msra.mxu0 0.0
          %2428 = vmatprep.subr.mxu0 0.0
          %2429 = vmatpush1.msra.mxu0 0.0
          %2430 = vmatprep.subr.mxu0 0.0
          %2431 = vmatpush1.msra.mxu0 0.0
          %2432 = vmatprep.subr.mxu0 0.0
          %2433 = vmatpush1.msra.mxu0 0.0
          %2434 = vmatprep.subr.mxu0 0.0
          %2435 = vmatpush1.msra.mxu0 0.0
          %2436 = vmatprep.subr.mxu0 0.0
          %2437 = vmatpush1.msra.mxu0 0.0
          %2438 = vmatprep.subr.mxu0 0.0
          %2439 = vmatpush1.msra.mxu0 0.0
          %2440 = vmatprep.subr.mxu0 0.0
          %2441 = vmatpush1.msra.mxu0 0.0
          %2442 = vmatprep.subr.mxu0 0.0
          %2443 = vmatpush1.msra.mxu0 0.0
          %2444 = vmatprep.subr.mxu0 0.0
          %2445 = vmatpush1.msra.mxu0 0.0
          %2446 = vmatprep.subr.mxu0 0.0
          %2447 = vmatpush1.msra.mxu0 0.0
          %2448 = vmatprep.subr.mxu0 0.0
          %2449 = vmatpush1.msra.mxu0 0.0
          %2450 = vmatprep.subr.mxu0 0.0
          %2451 = vmatpush1.msra.mxu0 0.0
          %2452 = vmatprep.subr.mxu0 0.0
          %2453 = vmatpush1.msra.mxu0 0.0
          %2454 = vmatprep.subr.mxu0 0.0
          %2455 = vmatpush1.msra.mxu0 0.0
          %2456 = vmatprep.mubr.f32.mxu0 0.0
          %2457 = vmatmul.mubr.f32.gmra.mrb[0].mxu0 %v2387
          %v2458 = vpop.f32.mrb[0].mxu0
          %v2459 = vadd.f32 %v2385, %v2458
          %v2460 = vpop.f32.mrb[0].mxu0
          %2461 = vmatprep.mubr.f32.mxu0 0.0
          %2462 = vmatmul.mubr.f32.gmra.mrb[0].mxu0 %v2390
          %v2463 = vpop.f32.mrb[0].mxu0
          %v2464 = vadd.f32 %v2385, %v2463
          %v2465 = vpop.f32.mrb[0].mxu0
          %2466 = vdwg.mxu0
          %v2467 = vadd.f32 %v864, %v2459
          %v2468 = vadd.f32 %v865, %v2464
          %v2469 = vsel %vm932, %v2467, 0.0
          %2470 = vadd.xlane.f32.xlu0 %v2469
          %v2471 = vpop.xlane.xlu0 %2470
          %v2472 = vsel %vm932, %v2468, 0.0
          %2473 = vadd.xlane.f32.xlu0 %v2472
          %v2474 = vpop.xlane.xlu0 %2473
          %v2475 = vrcp.pop 64.0
          %v2476 = vmul.f32 %v2471, %v2475
          %v2477 = vmul.f32 %v2474, %v2475
          %v2478 = vsub.f32 %v2467, %v2476
          %v2479 = vsub.f32 %v2468, %v2477
          %v2480 = vmul.f32 %v2478, %v2478
          %v2481 = vmul.f32 %v2479, %v2479
          %v2482 = vsel %vm932, %v2480, 0.0
          %2483 = vadd.xlane.f32.xlu0 %v2482
          %v2484 = vpop.xlane.xlu0 %2483
          %v2485 = vsel %vm932, %v2481, 0.0
          %2486 = vadd.xlane.f32.xlu0 %v2485
          %v2487 = vpop.xlane.xlu0 %2486
          %v2488 = vmul.f32 %v2484, %v2475
          %v2489 = vmul.f32 %v2487, %v2475
          %v2490 = vadd.f32 %v2488, 1e-05
          %v2491 = vadd.f32 %v2489, 1e-05
          %v2492 = vrsqrt.pop %v2490
          %v2493 = vrsqrt.pop %v2491
          %v2494 = vmul.f32 %v2478, %v2492
          %v2495 = vmul.f32 %v2479, %v2493
          %v2496 = vlaneseq
          %v2497 = vshrl.u32 %v2496, 7
          %v2498 = vsub.s32 2, %v2497
          %v2499 = vrot.slane %v918, %v2498
          %v2500 = vmul.f32 %v2494, %v2499
          %v2501 = vmul.f32 %v2495, %v2499
          %v2502 = vlaneseq
          %v2503 = vshrl.u32 %v2502, 7
          %v2504 = vsub.s32 3, %v2503
          %v2505 = vrot.slane %v918, %v2504
          %v2506 = vadd.f32 %v2500, %v2505
          %v2507 = vadd.f32 %v2501, %v2505
          %v2508 = vlaneseq
          %v2509 = vshrl.u32 %v2508, 7
          %v2510 = vsub.s32 1, %v2509
          %v2511 = vrot.slane %v918, %v2510
          %v2512 = vadd.f32 %v2506, %v2511
          %v2513 = vadd.f32 %v2507, %v2511
          %v2514 = vsel %vm932, %v2512, 0.0
          %2515 = vadd.xlane.f32.xlu0 %v2514
          %v2516 = vpop.xlane.xlu0 %2515
          %v2517 = vsel %vm932, %v2513, 0.0
          %2518 = vadd.xlane.f32.xlu0 %v2517
          %v2519 = vpop.xlane.xlu0 %2518
          %v2520 = vmul.f32 %v2516, %v2475
          %v2521 = vmul.f32 %v2519, %v2475
          %v2522 = vsub.f32 %v2512, %v2520
          %v2523 = vsub.f32 %v2513, %v2521
          %v2524 = vmul.f32 %v2522, %v2522
          %v2525 = vmul.f32 %v2523, %v2523
          %v2526 = vsel %vm932, %v2524, 0.0
          %2527 = vadd.xlane.f32.xlu0 %v2526
          %v2528 = vpop.xlane.xlu0 %2527
          %v2529 = vsel %vm932, %v2525, 0.0
          %2530 = vadd.xlane.f32.xlu0 %v2529
          %v2531 = vpop.xlane.xlu0 %2530
          %v2532 = vmul.f32 %v2528, %v2475
          %v2533 = vmul.f32 %v2531, %v2475
          %v2534 = vadd.f32 %v2532, 1e-05
          %v2535 = vadd.f32 %v2533, 1e-05
          %v2536 = vrsqrt.pop %v2534
          %v2537 = vrsqrt.pop %v2535
          %v2538 = vmul.f32 %v2522, %v2536
          %v2539 = vmul.f32 %v2523, %v2537
          %v2540 = vlaneseq
          %v2541 = vshrl.u32 %v2540, 7
          %v2542 = vsub.s32 4, %v2541
          %v2543 = vrot.slane %v918, %v2542
          %v2544 = vmul.f32 %v2538, %v2543
          %v2545 = vmul.f32 %v2539, %v2543
          %v2546 = vlaneseq
          %v2547 = vshrl.u32 %v2546, 7
          %v2548 = vsub.s32 5, %v2547
          %v2549 = vrot.slane %v918, %v2548
          %v2550 = vadd.f32 %v2544, %v2549
          %v2551 = vadd.f32 %v2545, %v2549
          %v2552 = vlaneseq
          %v2553 = vshrl.u32 %v2552, 7
          %v2554 = vsub.s32 0, %v2553
          %v2555 = vrot.slane %v901, %v2554
          %2572 = vrot.lane.b32.xlu0 %v884, 64
          %v2573 = vpop.permute.xlu0 %2572
          %2574 = vrot.lane.b32.xlu0 %v885, 64
          %v2575 = vpop.permute.xlu0 %2574
          %2576 = vrot.lane.b32.xlu0 %v886, 64
          %v2577 = vpop.permute.xlu0 %2576
          %2578 = vrot.lane.b32.xlu0 %v887, 64
          %v2579 = vpop.permute.xlu0 %2578
          %2580 = vrot.lane.b32.xlu0 %v888, 64
          %v2581 = vpop.permute.xlu0 %2580
          %2582 = vrot.lane.b32.xlu0 %v889, 64
          %v2583 = vpop.permute.xlu0 %2582
          %2584 = vrot.lane.b32.xlu0 %v890, 64
          %v2585 = vpop.permute.xlu0 %2584
          %2586 = vrot.lane.b32.xlu0 %v891, 64
          %v2587 = vpop.permute.xlu0 %2586
          %2588 = vrot.lane.b32.xlu0 %v892, 64
          %v2589 = vpop.permute.xlu0 %2588
          %2590 = vrot.lane.b32.xlu0 %v893, 64
          %v2591 = vpop.permute.xlu0 %2590
          %2592 = vrot.lane.b32.xlu0 %v894, 64
          %v2593 = vpop.permute.xlu0 %2592
          %2594 = vrot.lane.b32.xlu0 %v895, 64
          %v2595 = vpop.permute.xlu0 %2594
          %2596 = vrot.lane.b32.xlu0 %v896, 64
          %v2597 = vpop.permute.xlu0 %2596
          %2598 = vrot.lane.b32.xlu0 %v897, 64
          %v2599 = vpop.permute.xlu0 %2598
          %2600 = vrot.lane.b32.xlu0 %v898, 64
          %v2601 = vpop.permute.xlu0 %2600
          %2602 = vrot.lane.b32.xlu0 %v899, 64
          %v2603 = vpop.permute.xlu0 %2602
          %v2604 = vsel %vm932, %v2573, %v2575
          %v2605 = vsel %vm932, %v2577, %v2579
          %v2606 = vsel %vm932, %v2581, %v2583
          %v2607 = vsel %vm932, %v2585, %v2587
          %v2608 = vsel %vm932, %v2589, %v2591
          %v2609 = vsel %vm932, %v2593, %v2595
          %v2610 = vsel %vm932, %v2597, %v2599
          %v2611 = vsel %vm932, %v2601, %v2603
          %2622 = vrot.lane.b32.xlu0 %v2385, 64
          %v2623 = vpop.permute.xlu0 %2622
          %2624 = vrot.lane.b32.xlu0 %v2555, 64
          %v2625 = vpop.permute.xlu0 %2624
          %v2626 = vsel %vm932, %v2623, %v2625
          %v2629 = vsel %vm932, %v2550, 0
          %v2632 = vsel %vm932, %v2551, 0
          %2634 = vmatprep.subr.mxu0 0.0
          %2635 = vmatpush1.msra.mxu0 %v2604
          %2636 = vmatprep.subr.mxu0 0.0
          %2637 = vmatpush1.msra.mxu0 %v2605
          %2638 = vmatprep.subr.mxu0 0.0
          %2639 = vmatpush1.msra.mxu0 %v2606
          %2640 = vmatprep.subr.mxu0 0.0
          %2641 = vmatpush1.msra.mxu0 %v2607
          %2642 = vmatprep.subr.mxu0 0.0
          %2643 = vmatpush1.msra.mxu0 %v2608
          %2644 = vmatprep.subr.mxu0 0.0
          %2645 = vmatpush1.msra.mxu0 %v2609
          %2646 = vmatprep.subr.mxu0 0.0
          %2647 = vmatpush1.msra.mxu0 %v2610
          %2648 = vmatprep.subr.mxu0 0.0
          %2649 = vmatpush1.msra.mxu0 %v2611
          %2650 = vmatprep.subr.mxu0 0.0
          %2651 = vmatpush1.msra.mxu0 0.0
          %2652 = vmatprep.subr.mxu0 0.0
          %2653 = vmatpush1.msra.mxu0 0.0
          %2654 = vmatprep.subr.mxu0 0.0
          %2655 = vmatpush1.msra.mxu0 0.0
          %2656 = vmatprep.subr.mxu0 0.0
          %2657 = vmatpush1.msra.mxu0 0.0
          %2658 = vmatprep.subr.mxu0 0.0
          %2659 = vmatpush1.msra.mxu0 0.0
          %2660 = vmatprep.subr.mxu0 0.0
          %2661 = vmatpush1.msra.mxu0 0.0
          %2662 = vmatprep.subr.mxu0 0.0
          %2663 = vmatpush1.msra.mxu0 0.0
          %2664 = vmatprep.subr.mxu0 0.0
          %2665 = vmatpush1.msra.mxu0 0.0
          %2666 = vmatprep.subr.mxu0 0.0
          %2667 = vmatpush1.msra.mxu0 0.0
          %2668 = vmatprep.subr.mxu0 0.0
          %2669 = vmatpush1.msra.mxu0 0.0
          %2670 = vmatprep.subr.mxu0 0.0
          %2671 = vmatpush1.msra.mxu0 0.0
          %2672 = vmatprep.subr.mxu0 0.0
          %2673 = vmatpush1.msra.mxu0 0.0
          %2674 = vmatprep.subr.mxu0 0.0
          %2675 = vmatpush1.msra.mxu0 0.0
          %2676 = vmatprep.subr.mxu0 0.0
          %2677 = vmatpush1.msra.mxu0 0.0
          %2678 = vmatprep.subr.mxu0 0.0
          %2679 = vmatpush1.msra.mxu0 0.0
          %2680 = vmatprep.subr.mxu0 0.0
          %2681 = vmatpush1.msra.mxu0 0.0
          %2682 = vmatprep.subr.mxu0 0.0
          %2683 = vmatpush1.msra.mxu0 0.0
          %2684 = vmatprep.subr.mxu0 0.0
          %2685 = vmatpush1.msra.mxu0 0.0
          %2686 = vmatprep.subr.mxu0 0.0
          %2687 = vmatpush1.msra.mxu0 0.0
          %2688 = vmatprep.subr.mxu0 0.0
          %2689 = vmatpush1.msra.mxu0 0.0
          %2690 = vmatprep.subr.mxu0 0.0
          %2691 = vmatpush1.msra.mxu0 0.0
          %2692 = vmatprep.subr.mxu0 0.0
          %2693 = vmatpush1.msra.mxu0 0.0
          %2694 = vmatprep.subr.mxu0 0.0
          %2695 = vmatpush1.msra.mxu0 0.0
          %2696 = vmatprep.subr.mxu0 0.0
          %2697 = vmatpush1.msra.mxu0 0.0
          %2698 = vmatprep.mubr.f32.mxu0 0.0
          %2699 = vmatmul.mubr.f32.gmra.mrb[0].mxu0 %v2629
          %v2700 = vpop.f32.mrb[0].mxu0
          %v2701 = vadd.f32 %v2626, %v2700
          %v2702 = vpop.f32.mrb[0].mxu0
          %2703 = vmatprep.mubr.f32.mxu0 0.0
          %2704 = vmatmul.mubr.f32.gmra.mrb[0].mxu0 %v2632
          %v2705 = vpop.f32.mrb[0].mxu0
          %v2706 = vadd.f32 %v2626, %v2705
          %v2707 = vpop.f32.mrb[0].mxu0
          %2708 = vdwg.mxu0
          %v2709 = vmax.f32 %v2701, 0.0
          %v2710 = vmax.f32 %v2706, 0.0
          %v2711 = vlaneseq
          %v2712 = vshrl.u32 %v2711, 7
          %v2713 = vsub.s32 0, %v2712
          %v2714 = vrot.slane %v918, %v2713
          %2715 = vmatprep.subr.mxu0 0.0
          %2716 = vmatpush1.msra.mxu0 %v902
          %2717 = vmatprep.subr.mxu0 0.0
          %2718 = vmatpush1.msra.mxu0 %v903
          %2719 = vmatprep.subr.mxu0 0.0
          %2720 = vmatpush1.msra.mxu0 %v904
          %2721 = vmatprep.subr.mxu0 0.0
          %2722 = vmatpush1.msra.mxu0 %v905
          %2723 = vmatprep.subr.mxu0 0.0
          %2724 = vmatpush1.msra.mxu0 %v906
          %2725 = vmatprep.subr.mxu0 0.0
          %2726 = vmatpush1.msra.mxu0 %v907
          %2727 = vmatprep.subr.mxu0 0.0
          %2728 = vmatpush1.msra.mxu0 %v908
          %2729 = vmatprep.subr.mxu0 0.0
          %2730 = vmatpush1.msra.mxu0 %v909
          %2731 = vmatprep.subr.mxu0 0.0
          %2732 = vmatpush1.msra.mxu0 %v910
          %2733 = vmatprep.subr.mxu0 0.0
          %2734 = vmatpush1.msra.mxu0 %v911
          %2735 = vmatprep.subr.mxu0 0.0
          %2736 = vmatpush1.msra.mxu0 %v912
          %2737 = vmatprep.subr.mxu0 0.0
          %2738 = vmatpush1.msra.mxu0 %v913
          %2739 = vmatprep.subr.mxu0 0.0
          %2740 = vmatpush1.msra.mxu0 %v914
          %2741 = vmatprep.subr.mxu0 0.0
          %2742 = vmatpush1.msra.mxu0 %v915
          %2743 = vmatprep.subr.mxu0 0.0
          %2744 = vmatpush1.msra.mxu0 %v916
          %2745 = vmatprep.subr.mxu0 0.0
          %2746 = vmatpush1.msra.mxu0 %v917
          %2747 = vmatprep.subr.mxu0 0.0
          %2748 = vmatpush1.msra.mxu0 0.0
          %2749 = vmatprep.subr.mxu0 0.0
          %2750 = vmatpush1.msra.mxu0 0.0
          %2751 = vmatprep.subr.mxu0 0.0
          %2752 = vmatpush1.msra.mxu0 0.0
          %2753 = vmatprep.subr.mxu0 0.0
          %2754 = vmatpush1.msra.mxu0 0.0
          %2755 = vmatprep.subr.mxu0 0.0
          %2756 = vmatpush1.msra.mxu0 0.0
          %2757 = vmatprep.subr.mxu0 0.0
          %2758 = vmatpush1.msra.mxu0 0.0
          %2759 = vmatprep.subr.mxu0 0.0
          %2760 = vmatpush1.msra.mxu0 0.0
          %2761 = vmatprep.subr.mxu0 0.0
          %2762 = vmatpush1.msra.mxu0 0.0
          %2763 = vmatprep.subr.mxu0 0.0
          %2764 = vmatpush1.msra.mxu0 0.0
          %2765 = vmatprep.subr.mxu0 0.0
          %2766 = vmatpush1.msra.mxu0 0.0
          %2767 = vmatprep.subr.mxu0 0.0
          %2768 = vmatpush1.msra.mxu0 0.0
          %2769 = vmatprep.subr.mxu0 0.0
          %2770 = vmatpush1.msra.mxu0 0.0
          %2771 = vmatprep.subr.mxu0 0.0
          %2772 = vmatpush1.msra.mxu0 0.0
          %2773 = vmatprep.subr.mxu0 0.0
          %2774 = vmatpush1.msra.mxu0 0.0
          %2775 = vmatprep.subr.mxu0 0.0
          %2776 = vmatpush1.msra.mxu0 0.0
          %2777 = vmatprep.subr.mxu0 0.0
          %2778 = vmatpush1.msra.mxu0 0.0
          %2779 = vmatprep.mubr.f32.mxu0 0.0
          %2780 = vmatmul.mubr.f32.gmra.mrb[0].mxu0 %v2709
          %v2781 = vpop.f32.mrb[0].mxu0
          %v2782 = vadd.f32 %v2714, %v2781
          %v2783 = vpop.f32.mrb[0].mxu0
          %2784 = vmatprep.mubr.f32.mxu0 0.0
          %2785 = vmatmul.mubr.f32.gmra.mrb[0].mxu0 %v2710
          %v2786 = vpop.f32.mrb[0].mxu0
          %v2787 = vadd.f32 %v2714, %v2786
          %v2788 = vpop.f32.mrb[0].mxu0
          %2789 = vdwg.mxu0
          %v2790 = vadd.f32 %v2550, %v2782
          %v2791 = vadd.f32 %v2551, %v2787
          %v2792 = vsel %vm932, %v2790, 0.0
          %2793 = vadd.xlane.f32.xlu0 %v2792
          %v2794 = vpop.xlane.xlu0 %2793
          %v2795 = vsel %vm932, %v2791, 0.0
          %2796 = vadd.xlane.f32.xlu0 %v2795
          %v2797 = vpop.xlane.xlu0 %2796
          %v2798 = vmul.f32 %v2794, %v2475
          %v2799 = vmul.f32 %v2797, %v2475
          %v2800 = vsub.f32 %v2790, %v2798
          %v2801 = vsub.f32 %v2791, %v2799
          %v2802 = vmul.f32 %v2800, %v2800
          %v2803 = vmul.f32 %v2801, %v2801
          %v2804 = vsel %vm932, %v2802, 0.0
          %2805 = vadd.xlane.f32.xlu0 %v2804
          %v2806 = vpop.xlane.xlu0 %2805
          %v2807 = vsel %vm932, %v2803, 0.0
          %2808 = vadd.xlane.f32.xlu0 %v2807
          %v2809 = vpop.xlane.xlu0 %2808
          %v2810 = vmul.f32 %v2806, %v2475
          %v2811 = vmul.f32 %v2809, %v2475
          %v2812 = vadd.f32 %v2810, 1e-05
          %v2813 = vadd.f32 %v2811, 1e-05
          %v2814 = vrsqrt.pop %v2812
          %v2815 = vrsqrt.pop %v2813
          %v2816 = vmul.f32 %v2800, %v2814
          %v2817 = vmul.f32 %v2801, %v2815
          %v2818 = vlaneseq
          %v2819 = vshrl.u32 %v2818, 7
          %v2820 = vsub.s32 6, %v2819
          %v2821 = vrot.slane %v918, %v2820
          %v2822 = vmul.f32 %v2816, %v2821
          %v2823 = vmul.f32 %v2817, %v2821
          %v2824 = vlaneseq
          %v2825 = vshrl.u32 %v2824, 7
          %v2826 = vsub.s32 7, %v2825
          %v2827 = vrot.slane %v918, %v2826
          %v2828 = vadd.f32 %v2822, %v2827
          %v2829 = vadd.f32 %v2823, %v2827
          %v2830 = vpack.c.bf16 %v2829, %v2828
          %2831 = vst.msk [vmem:[#allocation2] sm:$0xff] %vm932, %v2830
        $region75: #{decoder_only_forward.1} parent=66 // pred_fallthru
          _
        %v2832 = vld [vmem:[%s810] sm:$0xff]
        %v2833 = vld [vmem:[%s810 + $0x8] sm:$0xff]
        %v2834 = vld [vmem:[%s810 + $0x10] sm:$0xff]
        %v2835 = vld [vmem:[%s810 + $0x18] sm:$0xff]
        %v2836 = vld [vmem:[%s810 + $0x20] sm:$0xff]
        %v2837 = vld [vmem:[%s810 + $0x28] sm:$0xff]
        %v2838 = vld [vmem:[%s810 + $0x30] sm:$0xff]
        %v2839 = vld [vmem:[%s810 + $0x38] sm:$0xff]
        %v2840 = vld [vmem:[%s810 + $0x40] sm:$0xff]
        %v2841 = vld [vmem:[%s810 + $0x48] sm:$0xff]
        %v2842 = vld [vmem:[%s810 + $0x50] sm:$0xff]
        %v2843 = vld [vmem:[%s810 + $0x58] sm:$0xff]
        %v2844 = vld [vmem:[%s810 + $0x60] sm:$0xff]
        %v2845 = vld [vmem:[%s810 + $0x68] sm:$0xff]
        %v2846 = vld [vmem:[%s810 + $0x70] sm:$0xff]
        %v2847 = vld [vmem:[%s810 + $0x78] sm:$0xff]
        %v2848 = vld [vmem:[%s810 + $0x80] sm:$0xff]
        %v2849 = vld [vmem:[%s810 + $0x88] sm:$0xff]
        %v2850 = vld [vmem:[%s810 + $0x90] sm:$0xff]
        %v2851 = vld [vmem:[%s810 + $0x98] sm:$0xff]
        %v2852 = vld [vmem:[%s810 + $0xa0] sm:$0xff]
        %v2853 = vld [vmem:[%s810 + $0xa8] sm:$0xff]
        %v2854 = vld [vmem:[%s810 + $0xb0] sm:$0xff]
        %v2855 = vld [vmem:[%s810 + $0xb8] sm:$0xff]
        %v2856 = vld [vmem:[%s810 + $0xc0] sm:$0xff]
        %v2857 = vld [vmem:[%s810 + $0xc8] sm:$0xff]
        %v2858 = vld [vmem:[%s810 + $0xd0] sm:$0xff]
        %v2859 = vld [vmem:[%s810 + $0xd8] sm:$0xff]
        %v2860 = vld [vmem:[%s810 + $0xe0] sm:$0xff]
        %v2861 = vld [vmem:[%s810 + $0xe8] sm:$0xff]
        %v2862 = vld [vmem:[%s810 + $0xf0] sm:$0xff]
        %v2863 = vld [vmem:[%s810 + $0xf8] sm:$0xff]
        %v2864 = vld [vmem:[%s810 + $0x100] sm:$0xff]
        %v2865 = vld [vmem:[%s810 + $0x108] sm:$0xff]
        %v2866 = vld [vmem:[%s810 + $0x110] sm:$0xff]
        %v2867 = vld [vmem:[%s810 + $0x118] sm:$0xff]
        %v2868 = vld [vmem:[%s810 + $0x120] sm:$0xff]
        %v2869 = vld [vmem:[%s810 + $0x128] sm:$0xff]
        %v2870 = vld [vmem:[%s810 + $0x130] sm:$0xff]
        %v2871 = vld [vmem:[%s810 + $0x138] sm:$0xff]
        %v2872 = vld [vmem:[%s810 + $0x140] sm:$0xff]
        %v2873 = vld [vmem:[%s810 + $0x148] sm:$0xff]
        %v2874 = vld [vmem:[%s810 + $0x150] sm:$0xff]
        %v2875 = vld [vmem:[%s810 + $0x158] sm:$0xff]
        %v2876 = vld [vmem:[%s810 + $0x160] sm:$0xff]
        %v2877 = vld [vmem:[%s810 + $0x168] sm:$0xff]
        %v2878 = vld [vmem:[%s810 + $0x170] sm:$0xff]
        %v2879 = vld [vmem:[%s810 + $0x178] sm:$0xff]
        %v2880 = vld [vmem:[%s810 + $0x180] sm:$0xff]
        %v2881 = vld [vmem:[%s810 + $0x188] sm:$0xff]
        %v2882 = vld [vmem:[%s810 + $0x190] sm:$0xff]
        %v2883 = vld [vmem:[%s810 + $0x198] sm:$0xff]
        %v2884 = vld [vmem:[%s810 + $0x1a0] sm:$0xff]
        %v2885 = vld [vmem:[%s810 + $0x1a8] sm:$0xff]
        %v2886 = vld [vmem:[%s810 + $0x1b0] sm:$0xff]
        %v2887 = vld [vmem:[%s810 + $0x1b8] sm:$0xff]
        %v2888 = vld [vmem:[%s810 + $0x1c0] sm:$0xff]
        %v2889 = vld [vmem:[%s810 + $0x1c8] sm:$0xff]
        %v2890 = vld [vmem:[%s810 + $0x1d0] sm:$0xff]
        %v2891 = vld [vmem:[%s810 + $0x1d8] sm:$0xff]
        %v2892 = vld [vmem:[%s810 + $0x1e0] sm:$0xff]
        %v2893 = vld [vmem:[%s810 + $0x1e8] sm:$0xff]
        %v2894 = vld [vmem:[%s810 + $0x1f0] sm:$0xff]
        %v2895 = vld [vmem:[%s810 + $0x1f8] sm:$0xff]
        %v2896 = vld [vmem:[%s810 + $0x200] sm:$0xff]
        %v2897 = vld [vmem:[%s810 + $0x208] sm:$0xff]
        %v2898 = vld [vmem:[%s810 + $0x210] sm:$0xff]
        %v2899 = vld [vmem:[%s810 + $0x218] sm:$0xff]
        %v2900 = vld [vmem:[%s810 + $0x220] sm:$0xff]
        %v2901 = vld [vmem:[%s810 + $0x228] sm:$0xff]
        %v2902 = vld [vmem:[%s810 + $0x230] sm:$0xff]
        %v2903 = vld [vmem:[%s810 + $0x238] sm:$0xff]
        %v2904 = vld [vmem:[%s810 + $0x240] sm:$0xff]
        %v2905 = vld [vmem:[%s810 + $0x248] sm:$0xff]
        %v2906 = vld [vmem:[%s810 + $0x250] sm:$0xff]
        %v2907 = vld [vmem:[%s810 + $0x258] sm:$0xff]
        %v2908 = vld [vmem:[%s810 + $0x260] sm:$0xff]
        %v2909 = vld [vmem:[%s810 + $0x268] sm:$0xff]
        %v2910 = vld [vmem:[%s810 + $0x270] sm:$0xff]
        %v2911 = vld [vmem:[%s810 + $0x278] sm:$0xff]
        %v2912 = vld [vmem:[%s810 + $0x280] sm:$0xff]
        %v2913 = vld [vmem:[%s810 + $0x288] sm:$0xff]
        %v2914 = vld [vmem:[%s810 + $0x290] sm:$0xff]
        %v2915 = vld [vmem:[%s810 + $0x298] sm:$0xff]
        %v2916 = vld [vmem:[%s810 + $0x2a0] sm:$0xff]
        %v2917 = vld [vmem:[%s810 + $0x2a8] sm:$0xff]
        %v2918 = vld [vmem:[%s810 + $0x2b0] sm:$0xff]
        %v2919 = vld [vmem:[%s810 + $0x2b8] sm:$0xff]
        %v2920 = vld [vmem:[%s810 + $0x2c0] sm:$0xff]
        %v2921 = vld [vmem:[%s810 + $0x2c8] sm:$0xff]
        %v2922 = vld [vmem:[%s810 + $0x2d0] sm:$0xff]
        %v2923 = vld [vmem:[%s810 + $0x2d8] sm:$0xff]
        %v2924 = vld [vmem:[%s810 + $0x2e0] sm:$0xff]
        %v2925 = vld [vmem:[%s810 + $0x2e8] sm:$0xff]
        %v2926 = vld [vmem:[%s810 + $0x2f0] sm:$0xff]
        %v2927 = vld [vmem:[%s810 + $0x2f8] sm:$0xff]
        %v2928 = vld [vmem:[%s810 + $0x300] sm:$0xff]
        %v2929 = vld [vmem:[%s810 + $0x308] sm:$0xff]
        %v2930 = vld [vmem:[%s810 + $0x310] sm:$0xff]
        %v2931 = vld [vmem:[%s810 + $0x318] sm:$0xff]
        %v2932 = vld [vmem:[%s810 + $0x320] sm:$0xff]
        %v2933 = vld [vmem:[%s810 + $0x328] sm:$0xff]
        %v2934 = vld [vmem:[%s810 + $0x330] sm:$0xff]
        %v2935 = vld [vmem:[%s810 + $0x338] sm:$0xff]
        %v2936 = vld [vmem:[%s810 + $0x340] sm:$0xff]
        %v2937 = vld [vmem:[%s810 + $0x348] sm:$0xff]
        %v2938 = vld [vmem:[%s810 + $0x350] sm:$0xff]
        %v2939 = vld [vmem:[%s810 + $0x358] sm:$0xff]
        %v2940 = vld [vmem:[%s810 + $0x360] sm:$0xff]
        %v2941 = vld [vmem:[%s810 + $0x368] sm:$0xff]
        %v2942 = vld [vmem:[%s810 + $0x370] sm:$0xff]
        %v2943 = vld [vmem:[%s810 + $0x378] sm:$0xff]
        %v2944 = vld [vmem:[%s810 + $0x380] sm:$0xff]
        %v2945 = vld [vmem:[%s810 + $0x388] sm:$0xff]
        %v2946 = vld [vmem:[%s810 + $0x390] sm:$0xff]
        %v2947 = vld [vmem:[%s810 + $0x398] sm:$0xff]
        %v2948 = vld [vmem:[%s810 + $0x3a0] sm:$0xff]
        %v2949 = vld [vmem:[%s810 + $0x3a8] sm:$0xff]
        %v2950 = vld [vmem:[%s810 + $0x3b0] sm:$0xff]
        %v2951 = vld [vmem:[%s810 + $0x3b8] sm:$0xff]
        %v2952 = vld [vmem:[%s810 + $0x3c0] sm:$0xff]
        %v2953 = vld [vmem:[%s810 + $0x3c8] sm:$0xff]
        %v2954 = vld [vmem:[%s810 + $0x3d0] sm:$0xff]
        %v2955 = vld [vmem:[%s810 + $0x3d8] sm:$0xff]
        %v2956 = vld [vmem:[%s810 + $0x3e0] sm:$0xff]
        %v2957 = vld [vmem:[%s810 + $0x3e8] sm:$0xff]
        %v2958 = vld [vmem:[%s810 + $0x3f0] sm:$0xff]
        %v2959 = vld [vmem:[%s810 + $0x3f8] sm:$0xff]
        %v2960 = vld [vmem:[%s810 + $0x400] sm:$0xff]
        %v2961 = vld [vmem:[%s810 + $0x408] sm:$0xff]
        %v2962 = vld [vmem:[%s810 + $0x410] sm:$0xff]
        %v2963 = vld [vmem:[%s810 + $0x418] sm:$0xff]
        %v2964 = vld [vmem:[%s810 + $0x420] sm:$0xff]
        %v2965 = vld [vmem:[%s810 + $0x428] sm:$0xff]
        %v2966 = vld [vmem:[%s810 + $0x430] sm:$0xff]
        %v2967 = vld [vmem:[%s810 + $0x438] sm:$0xff]
        %v2968 = vld [vmem:[%s810 + $0x440] sm:$0xff]
        %v2969 = vld [vmem:[%s810 + $0x448] sm:$0xff]
        %v2970 = vld [vmem:[%s810 + $0x450] sm:$0xff]
        %v2971 = vld [vmem:[%s810 + $0x458] sm:$0xff]
        %v2972 = vld [vmem:[%s810 + $0x460] sm:$0xff]
        %v2973 = vld [vmem:[%s810 + $0x468] sm:$0xff]
        %v2974 = vld [vmem:[%s810 + $0x470] sm:$0xff]
        %v2975 = vld [vmem:[%s810 + $0x478] sm:$0xff]
        %v2976 = vld [vmem:[%s810 + $0x480] sm:$0xff]
        %v2977 = vld [vmem:[%s810 + $0x488] sm:$0xff]
        %v2978 = vld [vmem:[%s810 + $0x490] sm:$0xff]
        %v2979 = vld [vmem:[%s810 + $0x498] sm:$0xff]
        %v2980 = vld [vmem:[%s810 + $0x4a0] sm:$0xff]
        %v2981 = vld [vmem:[%s810 + $0x4a8] sm:$0xff]
        %v2982 = vld [vmem:[%s810 + $0x4b0] sm:$0xff]
        %v2983 = vld [vmem:[%s810 + $0x4b8] sm:$0xff]
        %v2984 = vld [vmem:[%s810 + $0x4c0] sm:$0xff]
        %v2985 = vld [vmem:[%s810 + $0x4c8] sm:$0xff]
        %v2986 = vld [vmem:[%s810 + $0x4d0] sm:$0xff]
        %v2987 = vld [vmem:[%s810 + $0x4d8] sm:$0xff]
        %v2988 = vld [vmem:[%s810 + $0x4e0] sm:$0xff]
        %v2989 = vld [vmem:[%s810 + $0x4e8] sm:$0xff]
        %v2990 = vld [vmem:[%s810 + $0x4f0] sm:$0xff]
        %v2991 = vld [vmem:[%s810 + $0x4f8] sm:$0xff]
        %v2992 = vld [vmem:[%s810 + $0x500] sm:$0xff]
        %v2993 = vld [vmem:[%s810 + $0x508] sm:$0xff]
        %v2994 = vld [vmem:[%s810 + $0x510] sm:$0xff]
        %v2995 = vld [vmem:[%s810 + $0x518] sm:$0xff]
        %v2996 = vld [vmem:[%s810 + $0x520] sm:$0xff]
        %v2997 = vld [vmem:[%s810 + $0x528] sm:$0xff]
        %v2998 = vld [vmem:[%s810 + $0x530] sm:$0xff]
        %v2999 = vld [vmem:[%s810 + $0x538] sm:$0xff]
        %v3000 = vld [vmem:[%s810 + $0x540] sm:$0xff]
        %v3001 = vld [vmem:[%s810 + $0x548] sm:$0xff]
        %v3002 = vld [vmem:[%s810 + $0x550] sm:$0xff]
        %v3003 = vld [vmem:[%s810 + $0x558] sm:$0xff]
        %v3004 = vld [vmem:[%s810 + $0x560] sm:$0xff]
        %v3005 = vld [vmem:[%s810 + $0x568] sm:$0xff]
        %v3006 = vld [vmem:[%s810 + $0x570] sm:$0xff]
        %v3007 = vld [vmem:[%s810 + $0x578] sm:$0xff]
        %v3008 = vld [vmem:[%s810 + $0x580] sm:$0xff]
        %v3009 = vld [vmem:[%s810 + $0x588] sm:$0xff]
        %v3010 = vld [vmem:[%s810 + $0x590] sm:$0xff]
        %v3011 = vld [vmem:[%s810 + $0x598] sm:$0xff]
        %v3012 = vld [vmem:[%s810 + $0x5a0] sm:$0xff]
        %v3013 = vld [vmem:[%s810 + $0x5a8] sm:$0xff]
        %v3014 = vld [vmem:[%s810 + $0x5b0] sm:$0xff]
        %v3015 = vld [vmem:[%s810 + $0x5b8] sm:$0xff]
        %v3016 = vld [vmem:[%s810 + $0x5c0] sm:$0xff]
        %v3017 = vld [vmem:[%s810 + $0x5c8] sm:$0xff]
        %v3018 = vld [vmem:[%s810 + $0x5d0] sm:$0xff]
        %v3019 = vld [vmem:[%s810 + $0x5d8] sm:$0xff]
        %v3020 = vld [vmem:[%s810 + $0x5e0] sm:$0xff]
        %v3021 = vld [vmem:[%s810 + $0x5e8] sm:$0xff]
        %v3022 = vld [vmem:[%s810 + $0x5f0] sm:$0xff]
        %v3023 = vld [vmem:[%s810 + $0x5f8] sm:$0xff]
        %v3024 = vld [vmem:[%s810 + $0x600] sm:$0xff]
        %v3025 = vld [vmem:[%s810 + $0x608] sm:$0xff]
        %v3026 = vld [vmem:[%s810 + $0x610] sm:$0xff]
        %v3027 = vld [vmem:[%s810 + $0x618] sm:$0xff]
        %v3028 = vld [vmem:[%s810 + $0x620] sm:$0xff]
        %v3029 = vld [vmem:[%s810 + $0x628] sm:$0xff]
        %v3030 = vld [vmem:[%s810 + $0x630] sm:$0xff]
        %v3031 = vld [vmem:[%s810 + $0x638] sm:$0xff]
        %v3032 = vld [vmem:[%s810 + $0x640] sm:$0xff]
        %v3033 = vld [vmem:[%s810 + $0x648] sm:$0xff]
        %v3034 = vld [vmem:[%s810 + $0x650] sm:$0xff]
        %v3035 = vld [vmem:[%s810 + $0x658] sm:$0xff]
        %v3036 = vld [vmem:[%s810 + $0x660] sm:$0xff]
        %v3037 = vld [vmem:[%s810 + $0x668] sm:$0xff]
        %v3038 = vld [vmem:[%s810 + $0x670] sm:$0xff]
        %v3039 = vld [vmem:[%s810 + $0x678] sm:$0xff]
        %v3040 = vld [vmem:[%s810 + $0x680] sm:$0xff]
        %v3041 = vld [vmem:[%s810 + $0x688] sm:$0xff]
        %v3042 = vld [vmem:[%s810 + $0x690] sm:$0xff]
        %v3043 = vld [vmem:[%s810 + $0x698] sm:$0xff]
        %v3044 = vld [vmem:[%s810 + $0x6a0] sm:$0xff]
        %v3045 = vld [vmem:[%s810 + $0x6a8] sm:$0xff]
        %v3046 = vld [vmem:[%s810 + $0x6b0] sm:$0xff]
        %v3047 = vld [vmem:[%s810 + $0x6b8] sm:$0xff]
        %v3048 = vld [vmem:[%s810 + $0x6c0] sm:$0xff]
        %v3049 = vld [vmem:[%s810 + $0x6c8] sm:$0xff]
        %v3050 = vld [vmem:[%s810 + $0x6d0] sm:$0xff]
        %v3051 = vld [vmem:[%s810 + $0x6d8] sm:$0xff]
        %v3052 = vld [vmem:[%s810 + $0x6e0] sm:$0xff]
        %v3053 = vld [vmem:[%s810 + $0x6e8] sm:$0xff]
        %v3054 = vld [vmem:[%s810 + $0x6f0] sm:$0xff]
        %v3055 = vld [vmem:[%s810 + $0x6f8] sm:$0xff]
        %v3056 = vld [vmem:[%s810 + $0x700] sm:$0xff]
        %v3057 = vld [vmem:[%s810 + $0x708] sm:$0xff]
        %v3058 = vld [vmem:[%s810 + $0x710] sm:$0xff]
        %v3059 = vld [vmem:[%s810 + $0x718] sm:$0xff]
        %v3060 = vld [vmem:[%s810 + $0x720] sm:$0xff]
        %v3061 = vld [vmem:[%s810 + $0x728] sm:$0xff]
        %v3062 = vld [vmem:[%s810 + $0x730] sm:$0xff]
        %v3063 = vld [vmem:[%s810 + $0x738] sm:$0xff]
        %v3064 = vld [vmem:[%s810 + $0x740] sm:$0xff]
        %v3065 = vld [vmem:[%s810 + $0x748] sm:$0xff]
        %v3066 = vld [vmem:[%s810 + $0x750] sm:$0xff]
        %v3067 = vld [vmem:[%s810 + $0x758] sm:$0xff]
        %v3068 = vld [vmem:[%s810 + $0x760] sm:$0xff]
        %v3069 = vld [vmem:[%s810 + $0x768] sm:$0xff]
        %v3070 = vld [vmem:[%s810 + $0x770] sm:$0xff]
        %v3071 = vld [vmem:[%s810 + $0x778] sm:$0xff]
        %v3072 = vld [vmem:[%s810 + $0x780] sm:$0xff]
        %v3073 = vld [vmem:[%s810 + $0x788] sm:$0xff]
        %v3074 = vld [vmem:[%s810 + $0x790] sm:$0xff]
        %v3075 = vld [vmem:[%s810 + $0x798] sm:$0xff]
        %v3076 = vld [vmem:[%s810 + $0x7a0] sm:$0xff]
        %v3077 = vld [vmem:[%s810 + $0x7a8] sm:$0xff]
        %v3078 = vld [vmem:[%s810 + $0x7b0] sm:$0xff]
        %v3079 = vld [vmem:[%s810 + $0x7b8] sm:$0xff]
        %v3080 = vld [vmem:[%s810 + $0x7c0] sm:$0xff]
        %v3081 = vld [vmem:[%s810 + $0x7c8] sm:$0xff]
        %v3082 = vld [vmem:[%s810 + $0x7d0] sm:$0xff]
        %v3083 = vld [vmem:[%s810 + $0x7d8] sm:$0xff]
        %v3084 = vld [vmem:[%s810 + $0x7e0] sm:$0xff]
        %v3085 = vld [vmem:[%s810 + $0x7e8] sm:$0xff]
        %v3086 = vld [vmem:[%s810 + $0x7f0] sm:$0xff]
        %v3087 = vld [vmem:[%s810 + $0x7f8] sm:$0xff]
        %v3088 = vld [vmem:[%s810 + $0x800] sm:$0xff]
        %v3089 = vld [vmem:[%s810 + $0x808] sm:$0xff]
        %v3090 = vld [vmem:[%s810 + $0x810] sm:$0xff]
        %v3091 = vld [vmem:[%s810 + $0x818] sm:$0xff]
        %v3092 = vld [vmem:[%s810 + $0x820] sm:$0xff]
        %v3093 = vld [vmem:[%s810 + $0x828] sm:$0xff]
        %v3094 = vunpack.c.l.s8.bf16 %v2832
        %v3095 = vunpack.c.l.s8.bf16 %v2833
        %v3096 = vunpack.c.l.s8.bf16 %v2834
        %v3097 = vunpack.c.l.s8.bf16 %v2835
        %v3098 = vunpack.c.l.s8.bf16 %v2836
        %v3099 = vunpack.c.l.s8.bf16 %v2837
        %v3100 = vunpack.c.l.s8.bf16 %v2838
        %v3101 = vunpack.c.l.s8.bf16 %v2839
        %v3102 = vunpack.c.l.s8.bf16 %v2840
        %v3103 = vunpack.c.l.s8.bf16 %v2841
        %v3104 = vunpack.c.l.s8.bf16 %v2842
        %v3105 = vunpack.c.l.s8.bf16 %v2843
        %v3106 = vunpack.c.l.s8.bf16 %v2844
        %v3107 = vunpack.c.l.s8.bf16 %v2845
        %v3108 = vunpack.c.l.s8.bf16 %v2846
        %v3109 = vunpack.c.l.s8.bf16 %v2847
        %v3110 = vunpack.c.l.s8.bf16 %v2848
        %v3111 = vunpack.c.l.s8.bf16 %v2849
        %v3112 = vunpack.c.l.s8.bf16 %v2850
        %v3113 = vunpack.c.l.s8.bf16 %v2851
        %v3114 = vunpack.c.l.s8.bf16 %v2852
        %v3115 = vunpack.c.l.s8.bf16 %v2853
        %v3116 = vunpack.c.l.s8.bf16 %v2854
        %v3117 = vunpack.c.l.s8.bf16 %v2855
        %v3118 = vunpack.c.l.s8.bf16 %v2856
        %v3119 = vunpack.c.l.s8.bf16 %v2857
        %v3120 = vunpack.c.l.s8.bf16 %v2858
        %v3121 = vunpack.c.l.s8.bf16 %v2859
        %v3122 = vunpack.c.l.s8.bf16 %v2860
        %v3123 = vunpack.c.l.s8.bf16 %v2861
        %v3124 = vunpack.c.l.s8.bf16 %v2862
        %v3125 = vunpack.c.l.s8.bf16 %v2863
        %v3126 = vunpack.c.l.s8.bf16 %v2864
        %v3127 = vunpack.c.l.s8.bf16 %v2865
        %v3128 = vunpack.c.l.s8.bf16 %v2866
        %v3129 = vunpack.c.l.s8.bf16 %v2867
        %v3130 = vunpack.c.l.s8.bf16 %v2868
        %v3131 = vunpack.c.l.s8.bf16 %v2869
        %v3132 = vunpack.c.l.s8.bf16 %v2870
        %v3133 = vunpack.c.l.s8.bf16 %v2871
        %v3134 = vunpack.c.l.s8.bf16 %v2872
        %v3135 = vunpack.c.l.s8.bf16 %v2873
        %v3136 = vunpack.c.l.s8.bf16 %v2874
        %v3137 = vunpack.c.l.s8.bf16 %v2875
        %v3138 = vunpack.c.l.s8.bf16 %v2876
        %v3139 = vunpack.c.l.s8.bf16 %v2877
        %v3140 = vunpack.c.l.s8.bf16 %v2878
        %v3141 = vunpack.c.l.s8.bf16 %v2879
        %v3142 = vunpack.c.l.s8.bf16 %v2880
        %v3143 = vunpack.c.l.s8.bf16 %v2881
        %v3144 = vunpack.c.l.s8.bf16 %v2882
        %v3145 = vunpack.c.l.s8.bf16 %v2883
        %v3146 = vunpack.c.l.s8.bf16 %v2884
        %v3147 = vunpack.c.l.s8.bf16 %v2885
        %v3148 = vunpack.c.l.s8.bf16 %v2886
        %v3149 = vunpack.c.l.s8.bf16 %v2887
        %v3150 = vunpack.c.l.s8.bf16 %v2888
        %v3151 = vunpack.c.l.s8.bf16 %v2889
        %v3152 = vunpack.c.l.s8.bf16 %v2890
        %v3153 = vunpack.c.l.s8.bf16 %v2891
        %v3154 = vunpack.c.l.s8.bf16 %v2892
        %v3155 = vunpack.c.l.s8.bf16 %v2893
        %v3156 = vunpack.c.l.s8.bf16 %v2894
        %v3157 = vunpack.c.l.s8.bf16 %v2895
        %v3158 = vunpack.c.l.s8.bf16 %v2896
        %v3159 = vunpack.c.l.s8.bf16 %v2897
        %v3160 = vunpack.c.l.s8.bf16 %v2898
        %v3161 = vunpack.c.l.s8.bf16 %v2899
        %v3162 = vunpack.c.l.s8.bf16 %v2900
        %v3163 = vunpack.c.l.s8.bf16 %v2901
        %v3164 = vunpack.c.l.s8.bf16 %v2902
        %v3165 = vunpack.c.l.s8.bf16 %v2903
        %v3166 = vunpack.c.l.s8.bf16 %v2904
        %v3167 = vunpack.c.l.s8.bf16 %v2905
        %v3168 = vunpack.c.l.s8.bf16 %v2906
        %v3169 = vunpack.c.l.s8.bf16 %v2907
        %v3170 = vunpack.c.l.s8.bf16 %v2908
        %v3171 = vunpack.c.l.s8.bf16 %v2909
        %v3172 = vunpack.c.l.s8.bf16 %v2910
        %v3173 = vunpack.c.l.s8.bf16 %v2911
        %v3174 = vunpack.c.l.s8.bf16 %v2912
        %v3175 = vunpack.c.l.s8.bf16 %v2913
        %v3176 = vunpack.c.l.s8.bf16 %v2914
        %v3177 = vunpack.c.l.s8.bf16 %v2915
        %v3178 = vunpack.c.l.s8.bf16 %v2916
        %v3179 = vunpack.c.l.s8.bf16 %v2917
        %v3180 = vunpack.c.l.s8.bf16 %v2918
        %v3181 = vunpack.c.l.s8.bf16 %v2919
        %v3182 = vunpack.c.l.s8.bf16 %v2920
        %v3183 = vunpack.c.l.s8.bf16 %v2921
        %v3184 = vunpack.c.l.s8.bf16 %v2922
        %v3185 = vunpack.c.l.s8.bf16 %v2923
        %v3186 = vunpack.c.l.s8.bf16 %v2924
        %v3187 = vunpack.c.l.s8.bf16 %v2925
        %v3188 = vunpack.c.l.s8.bf16 %v2926
        %v3189 = vunpack.c.l.s8.bf16 %v2927
        %v3190 = vunpack.c.l.s8.bf16 %v2928
        %v3191 = vunpack.c.l.s8.bf16 %v2929
        %v3192 = vunpack.c.l.s8.bf16 %v2930
        %v3193 = vunpack.c.l.s8.bf16 %v2931
        %v3194 = vunpack.c.l.s8.bf16 %v2932
        %v3195 = vunpack.c.l.s8.bf16 %v2933
        %v3196 = vunpack.c.l.s8.bf16 %v2934
        %v3197 = vunpack.c.l.s8.bf16 %v2935
        %v3198 = vunpack.c.l.s8.bf16 %v2936
        %v3199 = vunpack.c.l.s8.bf16 %v2937
        %v3200 = vunpack.c.l.s8.bf16 %v2938
        %v3201 = vunpack.c.l.s8.bf16 %v2939
        %v3202 = vunpack.c.l.s8.bf16 %v2940
        %v3203 = vunpack.c.l.s8.bf16 %v2941
        %v3204 = vunpack.c.l.s8.bf16 %v2942
        %v3205 = vunpack.c.l.s8.bf16 %v2943
        %v3206 = vunpack.c.l.s8.bf16 %v2944
        %v3207 = vunpack.c.l.s8.bf16 %v2945
        %v3208 = vunpack.c.l.s8.bf16 %v2946
        %v3209 = vunpack.c.l.s8.bf16 %v2947
        %v3210 = vunpack.c.l.s8.bf16 %v2948
        %v3211 = vunpack.c.l.s8.bf16 %v2949
        %v3212 = vunpack.c.l.s8.bf16 %v2950
        %v3213 = vunpack.c.l.s8.bf16 %v2951
        %v3214 = vunpack.c.l.s8.bf16 %v2952
        %v3215 = vunpack.c.l.s8.bf16 %v2953
        %v3216 = vunpack.c.l.s8.bf16 %v2954
        %v3217 = vunpack.c.l.s8.bf16 %v2955
        %v3218 = vunpack.c.l.s8.bf16 %v2956
        %v3219 = vunpack.c.l.s8.bf16 %v2957
        %v3220 = vunpack.c.l.s8.bf16 %v2958
        %v3221 = vunpack.c.l.s8.bf16 %v2959
        %v3222 = vunpack.c.l.s8.bf16 %v2960
        %v3223 = vunpack.c.l.s8.bf16 %v2961
        %v3224 = vunpack.c.l.s8.bf16 %v2962
        %v3225 = vunpack.c.h.s8.bf16 %v2832
        %v3226 = vunpack.c.h.s8.bf16 %v2833
        %v3227 = vunpack.c.h.s8.bf16 %v2834
        %v3228 = vunpack.c.h.s8.bf16 %v2835
        %v3229 = vunpack.c.h.s8.bf16 %v2836
        %v3230 = vunpack.c.h.s8.bf16 %v2837
        %v3231 = vunpack.c.h.s8.bf16 %v2838
        %v3232 = vunpack.c.h.s8.bf16 %v2839
        %v3233 = vunpack.c.h.s8.bf16 %v2840
        %v3234 = vunpack.c.h.s8.bf16 %v2841
        %v3235 = vunpack.c.h.s8.bf16 %v2842
        %v3236 = vunpack.c.h.s8.bf16 %v2843
        %v3237 = vunpack.c.h.s8.bf16 %v2844
        %v3238 = vunpack.c.h.s8.bf16 %v2845
        %v3239 = vunpack.c.h.s8.bf16 %v2846
        %v3240 = vunpack.c.h.s8.bf16 %v2847
        %v3241 = vunpack.c.h.s8.bf16 %v2848
        %v3242 = vunpack.c.h.s8.bf16 %v2849
        %v3243 = vunpack.c.h.s8.bf16 %v2850
        %v3244 = vunpack.c.h.s8.bf16 %v2851
        %v3245 = vunpack.c.h.s8.bf16 %v2852
        %v3246 = vunpack.c.h.s8.bf16 %v2853
        %v3247 = vunpack.c.h.s8.bf16 %v2854
        %v3248 = vunpack.c.h.s8.bf16 %v2855
        %v3249 = vunpack.c.h.s8.bf16 %v2856
        %v3250 = vunpack.c.h.s8.bf16 %v2857
        %v3251 = vunpack.c.h.s8.bf16 %v2858
        %v3252 = vunpack.c.h.s8.bf16 %v2859
        %v3253 = vunpack.c.h.s8.bf16 %v2860
        %v3254 = vunpack.c.h.s8.bf16 %v2861
        %v3255 = vunpack.c.h.s8.bf16 %v2862
        %v3256 = vunpack.c.h.s8.bf16 %v2863
        %v3257 = vunpack.c.h.s8.bf16 %v2864
        %v3258 = vunpack.c.h.s8.bf16 %v2865
        %v3259 = vunpack.c.h.s8.bf16 %v2866
        %v3260 = vunpack.c.h.s8.bf16 %v2867
        %v3261 = vunpack.c.h.s8.bf16 %v2868
        %v3262 = vunpack.c.h.s8.bf16 %v2869
        %v3263 = vunpack.c.h.s8.bf16 %v2870
        %v3264 = vunpack.c.h.s8.bf16 %v2871
        %v3265 = vunpack.c.h.s8.bf16 %v2872
        %v3266 = vunpack.c.h.s8.bf16 %v2873
        %v3267 = vunpack.c.h.s8.bf16 %v2874
        %v3268 = vunpack.c.h.s8.bf16 %v2875
        %v3269 = vunpack.c.h.s8.bf16 %v2876
        %v3270 = vunpack.c.h.s8.bf16 %v2877
        %v3271 = vunpack.c.h.s8.bf16 %v2878
        %v3272 = vunpack.c.h.s8.bf16 %v2879
        %v3273 = vunpack.c.h.s8.bf16 %v2880
        %v3274 = vunpack.c.h.s8.bf16 %v2881
        %v3275 = vunpack.c.h.s8.bf16 %v2882
        %v3276 = vunpack.c.h.s8.bf16 %v2883
        %v3277 = vunpack.c.h.s8.bf16 %v2884
        %v3278 = vunpack.c.h.s8.bf16 %v2885
        %v3279 = vunpack.c.h.s8.bf16 %v2886
        %v3280 = vunpack.c.h.s8.bf16 %v2887
        %v3281 = vunpack.c.h.s8.bf16 %v2888
        %v3282 = vunpack.c.h.s8.bf16 %v2889
        %v3283 = vunpack.c.h.s8.bf16 %v2890
        %v3284 = vunpack.c.h.s8.bf16 %v2891
        %v3285 = vunpack.c.h.s8.bf16 %v2892
        %v3286 = vunpack.c.h.s8.bf16 %v2893
        %v3287 = vunpack.c.h.s8.bf16 %v2894
        %v3288 = vunpack.c.h.s8.bf16 %v2895
        %v3289 = vunpack.c.h.s8.bf16 %v2896
        %v3290 = vunpack.c.h.s8.bf16 %v2897
        %v3291 = vunpack.c.h.s8.bf16 %v2898
        %v3292 = vunpack.c.h.s8.bf16 %v2899
        %v3293 = vunpack.c.h.s8.bf16 %v2900
        %v3294 = vunpack.c.h.s8.bf16 %v2901
        %v3295 = vunpack.c.h.s8.bf16 %v2902
        %v3296 = vunpack.c.h.s8.bf16 %v2903
        %v3297 = vunpack.c.h.s8.bf16 %v2904
        %v3298 = vunpack.c.h.s8.bf16 %v2905
        %v3299 = vunpack.c.h.s8.bf16 %v2906
        %v3300 = vunpack.c.h.s8.bf16 %v2907
        %v3301 = vunpack.c.h.s8.bf16 %v2908
        %v3302 = vunpack.c.h.s8.bf16 %v2909
        %v3303 = vunpack.c.h.s8.bf16 %v2910
        %v3304 = vunpack.c.h.s8.bf16 %v2911
        %v3305 = vunpack.c.h.s8.bf16 %v2912
        %v3306 = vunpack.c.h.s8.bf16 %v2913
        %v3307 = vunpack.c.h.s8.bf16 %v2914
        %v3308 = vunpack.c.h.s8.bf16 %v2915
        %v3309 = vunpack.c.h.s8.bf16 %v2916
        %v3310 = vunpack.c.h.s8.bf16 %v2917
        %v3311 = vunpack.c.h.s8.bf16 %v2918
        %v3312 = vunpack.c.h.s8.bf16 %v2919
        %v3313 = vunpack.c.h.s8.bf16 %v2920
        %v3314 = vunpack.c.h.s8.bf16 %v2921
        %v3315 = vunpack.c.h.s8.bf16 %v2922
        %v3316 = vunpack.c.h.s8.bf16 %v2923
        %v3317 = vunpack.c.h.s8.bf16 %v2924
        %v3318 = vunpack.c.h.s8.bf16 %v2925
        %v3319 = vunpack.c.h.s8.bf16 %v2926
        %v3320 = vunpack.c.h.s8.bf16 %v2927
        %v3321 = vunpack.c.h.s8.bf16 %v2928
        %v3322 = vunpack.c.h.s8.bf16 %v2929
        %v3323 = vunpack.c.h.s8.bf16 %v2930
        %v3324 = vunpack.c.h.s8.bf16 %v2931
        %v3325 = vunpack.c.h.s8.bf16 %v2932
        %v3326 = vunpack.c.h.s8.bf16 %v2933
        %v3327 = vunpack.c.h.s8.bf16 %v2934
        %v3328 = vunpack.c.h.s8.bf16 %v2935
        %v3329 = vunpack.c.h.s8.bf16 %v2936
        %v3330 = vunpack.c.h.s8.bf16 %v2937
        %v3331 = vunpack.c.h.s8.bf16 %v2938
        %v3332 = vunpack.c.h.s8.bf16 %v2939
        %v3333 = vunpack.c.h.s8.bf16 %v2940
        %v3334 = vunpack.c.h.s8.bf16 %v2941
        %v3335 = vunpack.c.h.s8.bf16 %v2942
        %v3336 = vunpack.c.h.s8.bf16 %v2943
        %v3337 = vunpack.c.h.s8.bf16 %v2944
        %v3338 = vunpack.c.h.s8.bf16 %v2945
        %v3339 = vunpack.c.h.s8.bf16 %v2946
        %v3340 = vunpack.c.h.s8.bf16 %v2947
        %v3341 = vunpack.c.h.s8.bf16 %v2948
        %v3342 = vunpack.c.h.s8.bf16 %v2949
        %v3343 = vunpack.c.h.s8.bf16 %v2950
        %v3344 = vunpack.c.h.s8.bf16 %v2951
        %v3345 = vunpack.c.h.s8.bf16 %v2952
        %v3346 = vunpack.c.h.s8.bf16 %v2953
        %v3347 = vunpack.c.h.s8.bf16 %v2954
        %v3348 = vunpack.c.h.s8.bf16 %v2955
        %v3349 = vunpack.c.h.s8.bf16 %v2956
        %v3350 = vunpack.c.h.s8.bf16 %v2957
        %v3351 = vunpack.c.h.s8.bf16 %v2958
        %v3352 = vunpack.c.h.s8.bf16 %v2959
        %v3353 = vunpack.c.h.s8.bf16 %v2960
        %v3354 = vunpack.c.h.s8.bf16 %v2961
        %v3355 = vunpack.c.h.s8.bf16 %v2962
        %v3356 = vunpack.c.l.s8.bf16 %v2963
        %v3357 = vunpack.c.l.s8.bf16 %v2964
        %v3358 = vunpack.c.l.s8.bf16 %v2965
        %v3359 = vunpack.c.l.s8.bf16 %v2966
        %v3360 = vunpack.c.l.s8.bf16 %v2967
        %v3361 = vunpack.c.l.s8.bf16 %v2968
        %v3362 = vunpack.c.l.s8.bf16 %v2969
        %v3363 = vunpack.c.l.s8.bf16 %v2970
        %v3364 = vunpack.c.l.s8.bf16 %v2971
        %v3365 = vunpack.c.l.s8.bf16 %v2972
        %v3366 = vunpack.c.l.s8.bf16 %v2973
        %v3367 = vunpack.c.l.s8.bf16 %v2974
        %v3368 = vunpack.c.l.s8.bf16 %v2975
        %v3369 = vunpack.c.l.s8.bf16 %v2976
        %v3370 = vunpack.c.l.s8.bf16 %v2977
        %v3371 = vunpack.c.l.s8.bf16 %v2978
        %v3372 = vunpack.c.l.s8.bf16 %v2979
        %v3373 = vunpack.c.l.s8.bf16 %v2980
        %v3374 = vunpack.c.l.s8.bf16 %v2981
        %v3375 = vunpack.c.l.s8.bf16 %v2982
        %v3376 = vunpack.c.l.s8.bf16 %v2983
        %v3377 = vunpack.c.l.s8.bf16 %v2984
        %v3378 = vunpack.c.l.s8.bf16 %v2985
        %v3379 = vunpack.c.l.s8.bf16 %v2986
        %v3380 = vunpack.c.l.s8.bf16 %v2987
        %v3381 = vunpack.c.l.s8.bf16 %v2988
        %v3382 = vunpack.c.l.s8.bf16 %v2989
        %v3383 = vunpack.c.l.s8.bf16 %v2990
        %v3384 = vunpack.c.l.s8.bf16 %v2991
        %v3385 = vunpack.c.l.s8.bf16 %v2992
        %v3386 = vunpack.c.l.s8.bf16 %v2993
        %v3387 = vunpack.c.l.s8.bf16 %v2994
        %v3388 = vunpack.c.l.s8.bf16 %v2995
        %v3389 = vunpack.c.l.s8.bf16 %v2996
        %v3390 = vunpack.c.l.s8.bf16 %v2997
        %v3391 = vunpack.c.l.s8.bf16 %v2998
        %v3392 = vunpack.c.l.s8.bf16 %v2999
        %v3393 = vunpack.c.l.s8.bf16 %v3000
        %v3394 = vunpack.c.l.s8.bf16 %v3001
        %v3395 = vunpack.c.l.s8.bf16 %v3002
        %v3396 = vunpack.c.l.s8.bf16 %v3003
        %v3397 = vunpack.c.l.s8.bf16 %v3004
        %v3398 = vunpack.c.l.s8.bf16 %v3005
        %v3399 = vunpack.c.l.s8.bf16 %v3006
        %v3400 = vunpack.c.l.s8.bf16 %v3007
        %v3401 = vunpack.c.l.s8.bf16 %v3008
        %v3402 = vunpack.c.l.s8.bf16 %v3009
        %v3403 = vunpack.c.l.s8.bf16 %v3010
        %v3404 = vunpack.c.l.s8.bf16 %v3011
        %v3405 = vunpack.c.l.s8.bf16 %v3012
        %v3406 = vunpack.c.l.s8.bf16 %v3013
        %v3407 = vunpack.c.l.s8.bf16 %v3014
        %v3408 = vunpack.c.l.s8.bf16 %v3015
        %v3409 = vunpack.c.l.s8.bf16 %v3016
        %v3410 = vunpack.c.l.s8.bf16 %v3017
        %v3411 = vunpack.c.l.s8.bf16 %v3018
        %v3412 = vunpack.c.l.s8.bf16 %v3019
        %v3413 = vunpack.c.l.s8.bf16 %v3020
        %v3414 = vunpack.c.l.s8.bf16 %v3021
        %v3415 = vunpack.c.l.s8.bf16 %v3022
        %v3416 = vunpack.c.l.s8.bf16 %v3023
        %v3417 = vunpack.c.l.s8.bf16 %v3024
        %v3418 = vunpack.c.l.s8.bf16 %v3025
        %v3419 = vunpack.c.l.s8.bf16 %v3026
        %v3420 = vunpack.c.l.s8.bf16 %v3027
        %v3421 = vunpack.c.l.s8.bf16 %v3028
        %v3422 = vunpack.c.l.s8.bf16 %v3029
        %v3423 = vunpack.c.l.s8.bf16 %v3030
        %v3424 = vunpack.c.l.s8.bf16 %v3031
        %v3425 = vunpack.c.l.s8.bf16 %v3032
        %v3426 = vunpack.c.l.s8.bf16 %v3033
        %v3427 = vunpack.c.l.s8.bf16 %v3034
        %v3428 = vunpack.c.l.s8.bf16 %v3035
        %v3429 = vunpack.c.l.s8.bf16 %v3036
        %v3430 = vunpack.c.l.s8.bf16 %v3037
        %v3431 = vunpack.c.l.s8.bf16 %v3038
        %v3432 = vunpack.c.l.s8.bf16 %v3039
        %v3433 = vunpack.c.l.s8.bf16 %v3040
        %v3434 = vunpack.c.l.s8.bf16 %v3041
        %v3435 = vunpack.c.l.s8.bf16 %v3042
        %v3436 = vunpack.c.l.s8.bf16 %v3043
        %v3437 = vunpack.c.l.s8.bf16 %v3044
        %v3438 = vunpack.c.l.s8.bf16 %v3045
        %v3439 = vunpack.c.l.s8.bf16 %v3046
        %v3440 = vunpack.c.l.s8.bf16 %v3047
        %v3441 = vunpack.c.l.s8.bf16 %v3048
        %v3442 = vunpack.c.l.s8.bf16 %v3049
        %v3443 = vunpack.c.l.s8.bf16 %v3050
        %v3444 = vunpack.c.l.s8.bf16 %v3051
        %v3445 = vunpack.c.l.s8.bf16 %v3052
        %v3446 = vunpack.c.l.s8.bf16 %v3053
        %v3447 = vunpack.c.l.s8.bf16 %v3054
        %v3448 = vunpack.c.l.s8.bf16 %v3055
        %v3449 = vunpack.c.l.s8.bf16 %v3056
        %v3450 = vunpack.c.l.s8.bf16 %v3057
        %v3451 = vunpack.c.l.s8.bf16 %v3058
        %v3452 = vunpack.c.l.s8.bf16 %v3059
        %v3453 = vunpack.c.l.s8.bf16 %v3060
        %v3454 = vunpack.c.l.s8.bf16 %v3061
        %v3455 = vunpack.c.l.s8.bf16 %v3062
        %v3456 = vunpack.c.l.s8.bf16 %v3063
        %v3457 = vunpack.c.l.s8.bf16 %v3064
        %v3458 = vunpack.c.l.s8.bf16 %v3065
        %v3459 = vunpack.c.l.s8.bf16 %v3066
        %v3460 = vunpack.c.l.s8.bf16 %v3067
        %v3461 = vunpack.c.l.s8.bf16 %v3068
        %v3462 = vunpack.c.l.s8.bf16 %v3069
        %v3463 = vunpack.c.l.s8.bf16 %v3070
        %v3464 = vunpack.c.l.s8.bf16 %v3071
        %v3465 = vunpack.c.l.s8.bf16 %v3072
        %v3466 = vunpack.c.l.s8.bf16 %v3073
        %v3467 = vunpack.c.l.s8.bf16 %v3074
        %v3468 = vunpack.c.l.s8.bf16 %v3075
        %v3469 = vunpack.c.l.s8.bf16 %v3076
        %v3470 = vunpack.c.l.s8.bf16 %v3077
        %v3471 = vunpack.c.l.s8.bf16 %v3078
        %v3472 = vunpack.c.l.s8.bf16 %v3079
        %v3473 = vunpack.c.l.s8.bf16 %v3080
        %v3474 = vunpack.c.l.s8.bf16 %v3081
        %v3475 = vunpack.c.l.s8.bf16 %v3082
        %v3476 = vunpack.c.l.s8.bf16 %v3083
        %v3477 = vunpack.c.l.s8.bf16 %v3084
        %v3478 = vunpack.c.l.s8.bf16 %v3085
        %v3479 = vunpack.c.l.s8.bf16 %v3086
        %v3480 = vunpack.c.l.s8.bf16 %v3087
        %v3481 = vunpack.c.l.s8.bf16 %v3088
        %v3482 = vunpack.c.l.s8.bf16 %v3089
        %v3483 = vunpack.c.l.s8.bf16 %v3090
        %v3484 = vunpack.c.l.s8.bf16 %v3091
        %v3485 = vunpack.c.l.s8.bf16 %v3092
        %v3486 = vunpack.c.l.s8.bf16 %v3093
        %v3487 = vunpack.c.h.s8.bf16 %v2963
        %v3488 = vunpack.c.h.s8.bf16 %v2964
        %v3489 = vunpack.c.h.s8.bf16 %v2965
        %v3490 = vunpack.c.h.s8.bf16 %v2966
        %v3491 = vunpack.c.h.s8.bf16 %v2967
        %v3492 = vunpack.c.h.s8.bf16 %v2968
        %v3493 = vunpack.c.h.s8.bf16 %v2969
        %v3494 = vunpack.c.h.s8.bf16 %v2970
        %v3495 = vunpack.c.h.s8.bf16 %v2971
        %v3496 = vunpack.c.h.s8.bf16 %v2972
        %v3497 = vunpack.c.h.s8.bf16 %v2973
        %v3498 = vunpack.c.h.s8.bf16 %v2974
        %v3499 = vunpack.c.h.s8.bf16 %v2975
        %v3500 = vunpack.c.h.s8.bf16 %v2976
        %v3501 = vunpack.c.h.s8.bf16 %v2977
        %v3502 = vunpack.c.h.s8.bf16 %v2978
        %v3503 = vunpack.c.h.s8.bf16 %v2979
        %v3504 = vunpack.c.h.s8.bf16 %v2980
        %v3505 = vunpack.c.h.s8.bf16 %v2981
        %v3506 = vunpack.c.h.s8.bf16 %v2982
        %v3507 = vunpack.c.h.s8.bf16 %v2983
        %v3508 = vunpack.c.h.s8.bf16 %v2984
        %v3509 = vunpack.c.h.s8.bf16 %v2985
        %v3510 = vunpack.c.h.s8.bf16 %v2986
        %v3511 = vunpack.c.h.s8.bf16 %v2987
        %v3512 = vunpack.c.h.s8.bf16 %v2988
        %v3513 = vunpack.c.h.s8.bf16 %v2989
        %v3514 = vunpack.c.h.s8.bf16 %v2990
        %v3515 = vunpack.c.h.s8.bf16 %v2991
        %v3516 = vunpack.c.h.s8.bf16 %v2992
        %v3517 = vunpack.c.h.s8.bf16 %v2993
        %v3518 = vunpack.c.h.s8.bf16 %v2994
        %v3519 = vunpack.c.h.s8.bf16 %v2995
        %v3520 = vunpack.c.h.s8.bf16 %v2996
        %v3521 = vunpack.c.h.s8.bf16 %v2997
        %v3522 = vunpack.c.h.s8.bf16 %v2998
        %v3523 = vunpack.c.h.s8.bf16 %v2999
        %v3524 = vunpack.c.h.s8.bf16 %v3000
        %v3525 = vunpack.c.h.s8.bf16 %v3001
        %v3526 = vunpack.c.h.s8.bf16 %v3002
        %v3527 = vunpack.c.h.s8.bf16 %v3003
        %v3528 = vunpack.c.h.s8.bf16 %v3004
        %v3529 = vunpack.c.h.s8.bf16 %v3005
        %v3530 = vunpack.c.h.s8.bf16 %v3006
        %v3531 = vunpack.c.h.s8.bf16 %v3007
        %v3532 = vunpack.c.h.s8.bf16 %v3008
        %v3533 = vunpack.c.h.s8.bf16 %v3009
        %v3534 = vunpack.c.h.s8.bf16 %v3010
        %v3535 = vunpack.c.h.s8.bf16 %v3011
        %v3536 = vunpack.c.h.s8.bf16 %v3012
        %v3537 = vunpack.c.h.s8.bf16 %v3013
        %v3538 = vunpack.c.h.s8.bf16 %v3014
        %v3539 = vunpack.c.h.s8.bf16 %v3015
        %v3540 = vunpack.c.h.s8.bf16 %v3016
        %v3541 = vunpack.c.h.s8.bf16 %v3017
        %v3542 = vunpack.c.h.s8.bf16 %v3018
        %v3543 = vunpack.c.h.s8.bf16 %v3019
        %v3544 = vunpack.c.h.s8.bf16 %v3020
        %v3545 = vunpack.c.h.s8.bf16 %v3021
        %v3546 = vunpack.c.h.s8.bf16 %v3022
        %v3547 = vunpack.c.h.s8.bf16 %v3023
        %v3548 = vunpack.c.h.s8.bf16 %v3024
        %v3549 = vunpack.c.h.s8.bf16 %v3025
        %v3550 = vunpack.c.h.s8.bf16 %v3026
        %v3551 = vunpack.c.h.s8.bf16 %v3027
        %v3552 = vunpack.c.h.s8.bf16 %v3028
        %v3553 = vunpack.c.h.s8.bf16 %v3029
        %v3554 = vunpack.c.h.s8.bf16 %v3030
        %v3555 = vunpack.c.h.s8.bf16 %v3031
        %v3556 = vunpack.c.h.s8.bf16 %v3032
        %v3557 = vunpack.c.h.s8.bf16 %v3033
        %v3558 = vunpack.c.h.s8.bf16 %v3034
        %v3559 = vunpack.c.h.s8.bf16 %v3035
        %v3560 = vunpack.c.h.s8.bf16 %v3036
        %v3561 = vunpack.c.h.s8.bf16 %v3037
        %v3562 = vunpack.c.h.s8.bf16 %v3038
        %v3563 = vunpack.c.h.s8.bf16 %v3039
        %v3564 = vunpack.c.h.s8.bf16 %v3040
        %v3565 = vunpack.c.h.s8.bf16 %v3041
        %v3566 = vunpack.c.h.s8.bf16 %v3042
        %v3567 = vunpack.c.h.s8.bf16 %v3043
        %v3568 = vunpack.c.h.s8.bf16 %v3044
        %v3569 = vunpack.c.h.s8.bf16 %v3045
        %v3570 = vunpack.c.h.s8.bf16 %v3046
        %v3571 = vunpack.c.h.s8.bf16 %v3047
        %v3572 = vunpack.c.h.s8.bf16 %v3048
        %v3573 = vunpack.c.h.s8.bf16 %v3049
        %v3574 = vunpack.c.h.s8.bf16 %v3050
        %v3575 = vunpack.c.h.s8.bf16 %v3051
        %v3576 = vunpack.c.h.s8.bf16 %v3052
        %v3577 = vunpack.c.h.s8.bf16 %v3053
        %v3578 = vunpack.c.h.s8.bf16 %v3054
        %v3579 = vunpack.c.h.s8.bf16 %v3055
        %v3580 = vunpack.c.h.s8.bf16 %v3056
        %v3581 = vunpack.c.h.s8.bf16 %v3057
        %v3582 = vunpack.c.h.s8.bf16 %v3058
        %v3583 = vunpack.c.h.s8.bf16 %v3059
        %v3584 = vunpack.c.h.s8.bf16 %v3060
        %v3585 = vunpack.c.h.s8.bf16 %v3061
        %v3586 = vunpack.c.h.s8.bf16 %v3062
        %v3587 = vunpack.c.h.s8.bf16 %v3063
        %v3588 = vunpack.c.h.s8.bf16 %v3064
        %v3589 = vunpack.c.h.s8.bf16 %v3065
        %v3590 = vunpack.c.h.s8.bf16 %v3066
        %v3591 = vunpack.c.h.s8.bf16 %v3067
        %v3592 = vunpack.c.h.s8.bf16 %v3068
        %v3593 = vunpack.c.h.s8.bf16 %v3069
        %v3594 = vunpack.c.h.s8.bf16 %v3070
        %v3595 = vunpack.c.h.s8.bf16 %v3071
        %v3596 = vunpack.c.h.s8.bf16 %v3072
        %v3597 = vunpack.c.h.s8.bf16 %v3073
        %v3598 = vunpack.c.h.s8.bf16 %v3074
        %v3599 = vunpack.c.h.s8.bf16 %v3075
        %v3600 = vunpack.c.h.s8.bf16 %v3076
        %v3601 = vunpack.c.h.s8.bf16 %v3077
        %v3602 = vunpack.c.h.s8.bf16 %v3078
        %v3603 = vunpack.c.h.s8.bf16 %v3079
        %v3604 = vunpack.c.h.s8.bf16 %v3080
        %v3605 = vunpack.c.h.s8.bf16 %v3081
        %v3606 = vunpack.c.h.s8.bf16 %v3082
        %v3607 = vunpack.c.h.s8.bf16 %v3083
        %v3608 = vunpack.c.h.s8.bf16 %v3084
        %v3609 = vunpack.c.h.s8.bf16 %v3085
        %v3610 = vunpack.c.h.s8.bf16 %v3086
        %v3611 = vunpack.c.h.s8.bf16 %v3087
        %v3612 = vunpack.c.h.s8.bf16 %v3088
        %v3613 = vunpack.c.h.s8.bf16 %v3089
        %v3614 = vunpack.c.h.s8.bf16 %v3090
        %v3615 = vunpack.c.h.s8.bf16 %v3091
        %v3616 = vunpack.c.h.s8.bf16 %v3092
        %v3617 = vunpack.c.h.s8.bf16 %v3093
        %v3618 = vld [vmem:[#allocation2] sm:$0xff]
        %vm3619 = vcmask 523264
        %v3621 = vsel %vm3619, %v3618, 0
        %3623 = vmatprep.subr.bf16.mxu0 %v3095
        %3624 = vmatpush1.bf16.msra.mxu0 %v3094
        %3625 = vmatprep.subr.bf16.mxu0 %v3226
        %3626 = vmatpush1.bf16.msra.mxu0 %v3225
        %3627 = vmatprep.subr.bf16.mxu0 %v3357
        %3628 = vmatpush1.bf16.msra.mxu0 %v3356
        %3629 = vmatprep.subr.bf16.mxu0 %v3488
        %3630 = vmatpush1.bf16.msra.mxu0 %v3487
        %3631 = vmatprep.subr.bf16.mxu0 0
        %3632 = vmatpush1.bf16.msra.mxu0 0
        %3633 = vmatprep.subr.bf16.mxu0 0
        %3634 = vmatpush1.bf16.msra.mxu0 0
        %3635 = vmatprep.subr.bf16.mxu0 0
        %3636 = vmatpush1.bf16.msra.mxu0 0
        %3637 = vmatprep.subr.bf16.mxu0 0
        %3638 = vmatpush1.bf16.msra.mxu0 0
        %3639 = vmatprep.subr.bf16.mxu0 0
        %3640 = vmatpush1.bf16.msra.mxu0 0
        %3641 = vmatprep.subr.bf16.mxu0 0
        %3642 = vmatpush1.bf16.msra.mxu0 0
        %3643 = vmatprep.subr.bf16.mxu0 0
        %3644 = vmatpush1.bf16.msra.mxu0 0
        %3645 = vmatprep.subr.bf16.mxu0 0
        %3646 = vmatpush1.bf16.msra.mxu0 0
        %3647 = vmatprep.subr.bf16.mxu0 0
        %3648 = vmatpush1.bf16.msra.mxu0 0
        %3649 = vmatprep.subr.bf16.mxu0 0
        %3650 = vmatpush1.bf16.msra.mxu0 0
        %3651 = vmatprep.subr.bf16.mxu0 0
        %3652 = vmatpush1.bf16.msra.mxu0 0
        %3653 = vmatprep.subr.bf16.mxu0 0
        %3654 = vmatpush1.bf16.msra.mxu0 0
        %3655 = vmatprep.mubr.bf16.mxu0 0
        %3656 = vmatmul.mubr.bf16.gmra.mrb[0].mxu0 %v3621
        %v3657 = vpop.f32.mrb[0].mxu0
        %v3658 = vadd.f32 0.0, %v3657
        %v3659 = vpop.f32.mrb[0].mxu0
        %v3660 = vadd.f32 0.0, %v3659
        %v3661 = vpop.f32.mrb[0].mxu0
        %v3662 = vadd.f32 0.0, %v3661
        %v3663 = vpop.f32.mrb[0].mxu0
        %v3664 = vadd.f32 0.0, %v3663
        %3665 = vdwg.mxu0
        %3666 = vmatprep.subr.bf16.mxu0 %v3097
        %3667 = vmatpush1.bf16.msra.mxu0 %v3096
        %3668 = vmatprep.subr.bf16.mxu0 %v3228
        %3669 = vmatpush1.bf16.msra.mxu0 %v3227
        %3670 = vmatprep.subr.bf16.mxu0 %v3359
        %3671 = vmatpush1.bf16.msra.mxu0 %v3358
        %3672 = vmatprep.subr.bf16.mxu0 %v3490
        %3673 = vmatpush1.bf16.msra.mxu0 %v3489
        %3674 = vmatprep.subr.bf16.mxu0 0
        %3675 = vmatpush1.bf16.msra.mxu0 0
        %3676 = vmatprep.subr.bf16.mxu0 0
        %3677 = vmatpush1.bf16.msra.mxu0 0
        %3678 = vmatprep.subr.bf16.mxu0 0
        %3679 = vmatpush1.bf16.msra.mxu0 0
        %3680 = vmatprep.subr.bf16.mxu0 0
        %3681 = vmatpush1.bf16.msra.mxu0 0
        %3682 = vmatprep.subr.bf16.mxu0 0
        %3683 = vmatpush1.bf16.msra.mxu0 0
        %3684 = vmatprep.subr.bf16.mxu0 0
        %3685 = vmatpush1.bf16.msra.mxu0 0
        %3686 = vmatprep.subr.bf16.mxu0 0
        %3687 = vmatpush1.bf16.msra.mxu0 0
        %3688 = vmatprep.subr.bf16.mxu0 0
        %3689 = vmatpush1.bf16.msra.mxu0 0
        %3690 = vmatprep.subr.bf16.mxu0 0
        %3691 = vmatpush1.bf16.msra.mxu0 0
        %3692 = vmatprep.subr.bf16.mxu0 0
        %3693 = vmatpush1.bf16.msra.mxu0 0
        %3694 = vmatprep.subr.bf16.mxu0 0
        %3695 = vmatpush1.bf16.msra.mxu0 0
        %3696 = vmatprep.subr.bf16.mxu0 0
        %3697 = vmatpush1.bf16.msra.mxu0 0
        %3698 = vmatprep.mubr.bf16.mxu0 0
        %3699 = vmatmul.mubr.bf16.gmra.mrb[0].mxu0 %v3621
        %v3700 = vpop.f32.mrb[0].mxu0
        %v3701 = vadd.f32 0.0, %v3700
        %v3702 = vpop.f32.mrb[0].mxu0
        %v3703 = vadd.f32 0.0, %v3702
        %v3704 = vpop.f32.mrb[0].mxu0
        %v3705 = vadd.f32 0.0, %v3704
        %v3706 = vpop.f32.mrb[0].mxu0
        %v3707 = vadd.f32 0.0, %v3706
        %3708 = vdwg.mxu0
        %3709 = vmatprep.subr.bf16.mxu0 %v3099
        %3710 = vmatpush1.bf16.msra.mxu0 %v3098
        %3711 = vmatprep.subr.bf16.mxu0 %v3230
        %3712 = vmatpush1.bf16.msra.mxu0 %v3229
        %3713 = vmatprep.subr.bf16.mxu0 %v3361
        %3714 = vmatpush1.bf16.msra.mxu0 %v3360
        %3715 = vmatprep.subr.bf16.mxu0 %v3492
        %3716 = vmatpush1.bf16.msra.mxu0 %v3491
        %3717 = vmatprep.subr.bf16.mxu0 0
        %3718 = vmatpush1.bf16.msra.mxu0 0
        %3719 = vmatprep.subr.bf16.mxu0 0
        %3720 = vmatpush1.bf16.msra.mxu0 0
        %3721 = vmatprep.subr.bf16.mxu0 0
        %3722 = vmatpush1.bf16.msra.mxu0 0
        %3723 = vmatprep.subr.bf16.mxu0 0
        %3724 = vmatpush1.bf16.msra.mxu0 0
        %3725 = vmatprep.subr.bf16.mxu0 0
        %3726 = vmatpush1.bf16.msra.mxu0 0
        %3727 = vmatprep.subr.bf16.mxu0 0
        %3728 = vmatpush1.bf16.msra.mxu0 0
        %3729 = vmatprep.subr.bf16.mxu0 0
        %3730 = vmatpush1.bf16.msra.mxu0 0
        %3731 = vmatprep.subr.bf16.mxu0 0
        %3732 = vmatpush1.bf16.msra.mxu0 0
        %3733 = vmatprep.subr.bf16.mxu0 0
        %3734 = vmatpush1.bf16.msra.mxu0 0
        %3735 = vmatprep.subr.bf16.mxu0 0
        %3736 = vmatpush1.bf16.msra.mxu0 0
        %3737 = vmatprep.subr.bf16.mxu0 0
        %3738 = vmatpush1.bf16.msra.mxu0 0
        %3739 = vmatprep.subr.bf16.mxu0 0
        %3740 = vmatpush1.bf16.msra.mxu0 0
        %3741 = vmatprep.mubr.bf16.mxu0 0
        %3742 = vmatmul.mubr.bf16.gmra.mrb[0].mxu0 %v3621
        %v3743 = vpop.f32.mrb[0].mxu0
        %v3744 = vadd.f32 0.0, %v3743
        %v3745 = vpop.f32.mrb[0].mxu0
        %v3746 = vadd.f32 0.0, %v3745
        %v3747 = vpop.f32.mrb[0].mxu0
        %v3748 = vadd.f32 0.0, %v3747
        %v3749 = vpop.f32.mrb[0].mxu0
        %v3750 = vadd.f32 0.0, %v3749
        %3751 = vdwg.mxu0
        %3752 = vmatprep.subr.bf16.mxu0 %v3101
        %3753 = vmatpush1.bf16.msra.mxu0 %v3100
        %3754 = vmatprep.subr.bf16.mxu0 %v3232
        %3755 = vmatpush1.bf16.msra.mxu0 %v3231
        %3756 = vmatprep.subr.bf16.mxu0 %v3363
        %3757 = vmatpush1.bf16.msra.mxu0 %v3362
        %3758 = vmatprep.subr.bf16.mxu0 %v3494
        %3759 = vmatpush1.bf16.msra.mxu0 %v3493
        %3760 = vmatprep.subr.bf16.mxu0 0
        %3761 = vmatpush1.bf16.msra.mxu0 0
        %3762 = vmatprep.subr.bf16.mxu0 0
        %3763 = vmatpush1.bf16.msra.mxu0 0
        %3764 = vmatprep.subr.bf16.mxu0 0
        %3765 = vmatpush1.bf16.msra.mxu0 0
        %3766 = vmatprep.subr.bf16.mxu0 0
        %3767 = vmatpush1.bf16.msra.mxu0 0
        %3768 = vmatprep.subr.bf16.mxu0 0
        %3769 = vmatpush1.bf16.msra.mxu0 0
        %3770 = vmatprep.subr.bf16.mxu0 0
        %3771 = vmatpush1.bf16.msra.mxu0 0
        %3772 = vmatprep.subr.bf16.mxu0 0
        %3773 = vmatpush1.bf16.msra.mxu0 0
        %3774 = vmatprep.subr.bf16.mxu0 0
        %3775 = vmatpush1.bf16.msra.mxu0 0
        %3776 = vmatprep.subr.bf16.mxu0 0
        %3777 = vmatpush1.bf16.msra.mxu0 0
        %3778 = vmatprep.subr.bf16.mxu0 0
        %3779 = vmatpush1.bf16.msra.mxu0 0
        %3780 = vmatprep.subr.bf16.mxu0 0
        %3781 = vmatpush1.bf16.msra.mxu0 0
        %3782 = vmatprep.subr.bf16.mxu0 0
        %3783 = vmatpush1.bf16.msra.mxu0 0
        %3784 = vmatprep.mubr.bf16.mxu0 0
        %3785 = vmatmul.mubr.bf16.gmra.mrb[0].mxu0 %v3621
        %v3786 = vpop.f32.mrb[0].mxu0
        %v3787 = vadd.f32 0.0, %v3786
        %v3788 = vpop.f32.mrb[0].mxu0
        %v3789 = vadd.f32 0.0, %v3788
        %v3790 = vpop.f32.mrb[0].mxu0
        %v3791 = vadd.f32 0.0, %v3790
        %v3792 = vpop.f32.mrb[0].mxu0
        %v3793 = vadd.f32 0.0, %v3792
        %3794 = vdwg.mxu0
        %3795 = vmatprep.subr.bf16.mxu0 %v3103
        %3796 = vmatpush1.bf16.msra.mxu0 %v3102
        %3797 = vmatprep.subr.bf16.mxu0 %v3234
        %3798 = vmatpush1.bf16.msra.mxu0 %v3233
        %3799 = vmatprep.subr.bf16.mxu0 %v3365
        %3800 = vmatpush1.bf16.msra.mxu0 %v3364
        %3801 = vmatprep.subr.bf16.mxu0 %v3496
        %3802 = vmatpush1.bf16.msra.mxu0 %v3495
        %3803 = vmatprep.subr.bf16.mxu0 0
        %3804 = vmatpush1.bf16.msra.mxu0 0
        %3805 = vmatprep.subr.bf16.mxu0 0
        %3806 = vmatpush1.bf16.msra.mxu0 0
        %3807 = vmatprep.subr.bf16.mxu0 0
        %3808 = vmatpush1.bf16.msra.mxu0 0
        %3809 = vmatprep.subr.bf16.mxu0 0
        %3810 = vmatpush1.bf16.msra.mxu0 0
        %3811 = vmatprep.subr.bf16.mxu0 0
        %3812 = vmatpush1.bf16.msra.mxu0 0
        %3813 = vmatprep.subr.bf16.mxu0 0
        %3814 = vmatpush1.bf16.msra.mxu0 0
        %3815 = vmatprep.subr.bf16.mxu0 0
        %3816 = vmatpush1.bf16.msra.mxu0 0
        %3817 = vmatprep.subr.bf16.mxu0 0
        %3818 = vmatpush1.bf16.msra.mxu0 0
        %3819 = vmatprep.subr.bf16.mxu0 0
        %3820 = vmatpush1.bf16.msra.mxu0 0
        %3821 = vmatprep.subr.bf16.mxu0 0
        %3822 = vmatpush1.bf16.msra.mxu0 0
        %3823 = vmatprep.subr.bf16.mxu0 0
        %3824 = vmatpush1.bf16.msra.mxu0 0
        %3825 = vmatprep.subr.bf16.mxu0 0
        %3826 = vmatpush1.bf16.msra.mxu0 0
        %3827 = vmatprep.mubr.bf16.mxu0 0
        %3828 = vmatmul.mubr.bf16.gmra.mrb[0].mxu0 %v3621
        %v3829 = vpop.f32.mrb[0].mxu0
        %v3830 = vadd.f32 0.0, %v3829
        %v3831 = vpop.f32.mrb[0].mxu0
        %v3832 = vadd.f32 0.0, %v3831
        %v3833 = vpop.f32.mrb[0].mxu0
        %v3834 = vadd.f32 0.0, %v3833
        %v3835 = vpop.f32.mrb[0].mxu0
        %v3836 = vadd.f32 0.0, %v3835
        %3837 = vdwg.mxu0
        %3838 = vmatprep.subr.bf16.mxu0 %v3105
        %3839 = vmatpush1.bf16.msra.mxu0 %v3104
        %3840 = vmatprep.subr.bf16.mxu0 %v3236
        %3841 = vmatpush1.bf16.msra.mxu0 %v3235
        %3842 = vmatprep.subr.bf16.mxu0 %v3367
        %3843 = vmatpush1.bf16.msra.mxu0 %v3366
        %3844 = vmatprep.subr.bf16.mxu0 %v3498
        %3845 = vmatpush1.bf16.msra.mxu0 %v3497
        %3846 = vmatprep.subr.bf16.mxu0 0
        %3847 = vmatpush1.bf16.msra.mxu0 0
        %3848 = vmatprep.subr.bf16.mxu0 0
        %3849 = vmatpush1.bf16.msra.mxu0 0
        %3850 = vmatprep.subr.bf16.mxu0 0
        %3851 = vmatpush1.bf16.msra.mxu0 0
        %3852 = vmatprep.subr.bf16.mxu0 0
        %3853 = vmatpush1.bf16.msra.mxu0 0
        %3854 = vmatprep.subr.bf16.mxu0 0
        %3855 = vmatpush1.bf16.msra.mxu0 0
        %3856 = vmatprep.subr.bf16.mxu0 0
        %3857 = vmatpush1.bf16.msra.mxu0 0
        %3858 = vmatprep.subr.bf16.mxu0 0
        %3859 = vmatpush1.bf16.msra.mxu0 0
        %3860 = vmatprep.subr.bf16.mxu0 0
        %3861 = vmatpush1.bf16.msra.mxu0 0
        %3862 = vmatprep.subr.bf16.mxu0 0
        %3863 = vmatpush1.bf16.msra.mxu0 0
        %3864 = vmatprep.subr.bf16.mxu0 0
        %3865 = vmatpush1.bf16.msra.mxu0 0
        %3866 = vmatprep.subr.bf16.mxu0 0
        %3867 = vmatpush1.bf16.msra.mxu0 0
        %3868 = vmatprep.subr.bf16.mxu0 0
        %3869 = vmatpush1.bf16.msra.mxu0 0
        %3870 = vmatprep.mubr.bf16.mxu0 0
        %3871 = vmatmul.mubr.bf16.gmra.mrb[0].mxu0 %v3621
        %v3872 = vpop.f32.mrb[0].mxu0
        %v3873 = vadd.f32 0.0, %v3872
        %v3874 = vpop.f32.mrb[0].mxu0
        %v3875 = vadd.f32 0.0, %v3874
        %v3876 = vpop.f32.mrb[0].mxu0
        %v3877 = vadd.f32 0.0, %v3876
        %v3878 = vpop.f32.mrb[0].mxu0
        %v3879 = vadd.f32 0.0, %v3878
        %3880 = vdwg.mxu0
        %3881 = vmatprep.subr.bf16.mxu0 %v3107
        %3882 = vmatpush1.bf16.msra.mxu0 %v3106
        %3883 = vmatprep.subr.bf16.mxu0 %v3238
        %3884 = vmatpush1.bf16.msra.mxu0 %v3237
        %3885 = vmatprep.subr.bf16.mxu0 %v3369
        %3886 = vmatpush1.bf16.msra.mxu0 %v3368
        %3887 = vmatprep.subr.bf16.mxu0 %v3500
        %3888 = vmatpush1.bf16.msra.mxu0 %v3499
        %3889 = vmatprep.subr.bf16.mxu0 0
        %3890 = vmatpush1.bf16.msra.mxu0 0
        %3891 = vmatprep.subr.bf16.mxu0 0
        %3892 = vmatpush1.bf16.msra.mxu0 0
        %3893 = vmatprep.subr.bf16.mxu0 0
        %3894 = vmatpush1.bf16.msra.mxu0 0
        %3895 = vmatprep.subr.bf16.mxu0 0
        %3896 = vmatpush1.bf16.msra.mxu0 0
        %3897 = vmatprep.subr.bf16.mxu0 0
        %3898 = vmatpush1.bf16.msra.mxu0 0
        %3899 = vmatprep.subr.bf16.mxu0 0
        %3900 = vmatpush1.bf16.msra.mxu0 0
        %3901 = vmatprep.subr.bf16.mxu0 0
        %3902 = vmatpush1.bf16.msra.mxu0 0
        %3903 = vmatprep.subr.bf16.mxu0 0
        %3904 = vmatpush1.bf16.msra.mxu0 0
        %3905 = vmatprep.subr.bf16.mxu0 0
        %3906 = vmatpush1.bf16.msra.mxu0 0
        %3907 = vmatprep.subr.bf16.mxu0 0
        %3908 = vmatpush1.bf16.msra.mxu0 0
        %3909 = vmatprep.subr.bf16.mxu0 0
        %3910 = vmatpush1.bf16.msra.mxu0 0
        %3911 = vmatprep.subr.bf16.mxu0 0
        %3912 = vmatpush1.bf16.msra.mxu0 0
        %3913 = vmatprep.mubr.bf16.mxu0 0
        %3914 = vmatmul.mubr.bf16.gmra.mrb[0].mxu0 %v3621
        %v3915 = vpop.f32.mrb[0].mxu0
        %v3916 = vadd.f32 0.0, %v3915
        %v3917 = vpop.f32.mrb[0].mxu0
        %v3918 = vadd.f32 0.0, %v3917
        %v3919 = vpop.f32.mrb[0].mxu0
        %v3920 = vadd.f32 0.0, %v3919
        %v3921 = vpop.f32.mrb[0].mxu0
        %v3922 = vadd.f32 0.0, %v3921
        %3923 = vdwg.mxu0
        %3924 = vmatprep.subr.bf16.mxu0 %v3109
        %3925 = vmatpush1.bf16.msra.mxu0 %v3108
        %3926 = vmatprep.subr.bf16.mxu0 %v3240
        %3927 = vmatpush1.bf16.msra.mxu0 %v3239
        %3928 = vmatprep.subr.bf16.mxu0 %v3371
        %3929 = vmatpush1.bf16.msra.mxu0 %v3370
        %3930 = vmatprep.subr.bf16.mxu0 %v3502
        %3931 = vmatpush1.bf16.msra.mxu0 %v3501
        %3932 = vmatprep.subr.bf16.mxu0 0
        %3933 = vmatpush1.bf16.msra.mxu0 0
        %3934 = vmatprep.subr.bf16.mxu0 0
        %3935 = vmatpush1.bf16.msra.mxu0 0
        %3936 = vmatprep.subr.bf16.mxu0 0
        %3937 = vmatpush1.bf16.msra.mxu0 0
        %3938 = vmatprep.subr.bf16.mxu0 0
        %3939 = vmatpush1.bf16.msra.mxu0 0
        %3940 = vmatprep.subr.bf16.mxu0 0
        %3941 = vmatpush1.bf16.msra.mxu0 0
        %3942 = vmatprep.subr.bf16.mxu0 0
        %3943 = vmatpush1.bf16.msra.mxu0 0
        %3944 = vmatprep.subr.bf16.mxu0 0
        %3945 = vmatpush1.bf16.msra.mxu0 0
        %3946 = vmatprep.subr.bf16.mxu0 0
        %3947 = vmatpush1.bf16.msra.mxu0 0
        %3948 = vmatprep.subr.bf16.mxu0 0
        %3949 = vmatpush1.bf16.msra.mxu0 0
        %3950 = vmatprep.subr.bf16.mxu0 0
        %3951 = vmatpush1.bf16.msra.mxu0 0
        %3952 = vmatprep.subr.bf16.mxu0 0
        %3953 = vmatpush1.bf16.msra.mxu0 0
        %3954 = vmatprep.subr.bf16.mxu0 0
        %3955 = vmatpush1.bf16.msra.mxu0 0
        %3956 = vmatprep.mubr.bf16.mxu0 0
        %3957 = vmatmul.mubr.bf16.gmra.mrb[0].mxu0 %v3621
        %v3958 = vpop.f32.mrb[0].mxu0
        %v3959 = vadd.f32 0.0, %v3958
        %v3960 = vpop.f32.mrb[0].mxu0
        %v3961 = vadd.f32 0.0, %v3960
        %v3962 = vpop.f32.mrb[0].mxu0
        %v3963 = vadd.f32 0.0, %v3962
        %v3964 = vpop.f32.mrb[0].mxu0
        %v3965 = vadd.f32 0.0, %v3964
        %3966 = vdwg.mxu0
        %3967 = vmatprep.subr.bf16.mxu0 %v3111
        %3968 = vmatpush1.bf16.msra.mxu0 %v3110
        %3969 = vmatprep.subr.bf16.mxu0 %v3242
        %3970 = vmatpush1.bf16.msra.mxu0 %v3241
        %3971 = vmatprep.subr.bf16.mxu0 %v3373
        %3972 = vmatpush1.bf16.msra.mxu0 %v3372
        %3973 = vmatprep.subr.bf16.mxu0 %v3504
        %3974 = vmatpush1.bf16.msra.mxu0 %v3503
        %3975 = vmatprep.subr.bf16.mxu0 0
        %3976 = vmatpush1.bf16.msra.mxu0 0
        %3977 = vmatprep.subr.bf16.mxu0 0
        %3978 = vmatpush1.bf16.msra.mxu0 0
        %3979 = vmatprep.subr.bf16.mxu0 0
        %3980 = vmatpush1.bf16.msra.mxu0 0
        %3981 = vmatprep.subr.bf16.mxu0 0
        %3982 = vmatpush1.bf16.msra.mxu0 0
        %3983 = vmatprep.subr.bf16.mxu0 0
        %3984 = vmatpush1.bf16.msra.mxu0 0
        %3985 = vmatprep.subr.bf16.mxu0 0
        %3986 = vmatpush1.bf16.msra.mxu0 0
        %3987 = vmatprep.subr.bf16.mxu0 0
        %3988 = vmatpush1.bf16.msra.mxu0 0
        %3989 = vmatprep.subr.bf16.mxu0 0
        %3990 = vmatpush1.bf16.msra.mxu0 0
        %3991 = vmatprep.subr.bf16.mxu0 0
        %3992 = vmatpush1.bf16.msra.mxu0 0
        %3993 = vmatprep.subr.bf16.mxu0 0
        %3994 = vmatpush1.bf16.msra.mxu0 0
        %3995 = vmatprep.subr.bf16.mxu0 0
        %3996 = vmatpush1.bf16.msra.mxu0 0
        %3997 = vmatprep.subr.bf16.mxu0 0
        %3998 = vmatpush1.bf16.msra.mxu0 0
        %3999 = vmatprep.mubr.bf16.mxu0 0
        %4000 = vmatmul.mubr.bf16.gmra.mrb[0].mxu0 %v3621
        %v4001 = vpop.f32.mrb[0].mxu0
        %v4002 = vadd.f32 0.0, %v4001
        %v4003 = vpop.f32.mrb[0].mxu0
        %v4004 = vadd.f32 0.0, %v4003
        %v4005 = vpop.f32.mrb[0].mxu0
        %v4006 = vadd.f32 0.0, %v4005
        %v4007 = vpop.f32.mrb[0].mxu0
        %v4008 = vadd.f32 0.0, %v4007
        %4009 = vdwg.mxu0
        %4010 = vmatprep.subr.bf16.mxu0 %v3113
        %4011 = vmatpush1.bf16.msra.mxu0 %v3112
        %4012 = vmatprep.subr.bf16.mxu0 %v3244
        %4013 = vmatpush1.bf16.msra.mxu0 %v3243
        %4014 = vmatprep.subr.bf16.mxu0 %v3375
        %4015 = vmatpush1.bf16.msra.mxu0 %v3374
        %4016 = vmatprep.subr.bf16.mxu0 %v3506
        %4017 = vmatpush1.bf16.msra.mxu0 %v3505
        %4018 = vmatprep.subr.bf16.mxu0 0
        %4019 = vmatpush1.bf16.msra.mxu0 0
        %4020 = vmatprep.subr.bf16.mxu0 0
        %4021 = vmatpush1.bf16.msra.mxu0 0
        %4022 = vmatprep.subr.bf16.mxu0 0
        %4023 = vmatpush1.bf16.msra.mxu0 0
        %4024 = vmatprep.subr.bf16.mxu0 0
        %4025 = vmatpush1.bf16.msra.mxu0 0
        %4026 = vmatprep.subr.bf16.mxu0 0
        %4027 = vmatpush1.bf16.msra.mxu0 0
        %4028 = vmatprep.subr.bf16.mxu0 0
        %4029 = vmatpush1.bf16.msra.mxu0 0
        %4030 = vmatprep.subr.bf16.mxu0 0
        %4031 = vmatpush1.bf16.msra.mxu0 0
        %4032 = vmatprep.subr.bf16.mxu0 0
        %4033 = vmatpush1.bf16.msra.mxu0 0
        %4034 = vmatprep.subr.bf16.mxu0 0
        %4035 = vmatpush1.bf16.msra.mxu0 0
        %4036 = vmatprep.subr.bf16.mxu0 0
        %4037 = vmatpush1.bf16.msra.mxu0 0
        %4038 = vmatprep.subr.bf16.mxu0 0
        %4039 = vmatpush1.bf16.msra.mxu0 0
        %4040 = vmatprep.subr.bf16.mxu0 0
        %4041 = vmatpush1.bf16.msra.mxu0 0
        %4042 = vmatprep.mubr.bf16.mxu0 0
        %4043 = vmatmul.mubr.bf16.gmra.mrb[0].mxu0 %v3621
        %v4044 = vpop.f32.mrb[0].mxu0
        %v4045 = vadd.f32 0.0, %v4044
        %v4046 = vpop.f32.mrb[0].mxu0
        %v4047 = vadd.f32 0.0, %v4046
        %v4048 = vpop.f32.mrb[0].mxu0
        %v4049 = vadd.f32 0.0, %v4048
        %v4050 = vpop.f32.mrb[0].mxu0
        %v4051 = vadd.f32 0.0, %v4050
        %4052 = vdwg.mxu0
        %4053 = vmatprep.subr.bf16.mxu0 %v3115
        %4054 = vmatpush1.bf16.msra.mxu0 %v3114
        %4055 = vmatprep.subr.bf16.mxu0 %v3246
        %4056 = vmatpush1.bf16.msra.mxu0 %v3245
        %4057 = vmatprep.subr.bf16.mxu0 %v3377
        %4058 = vmatpush1.bf16.msra.mxu0 %v3376
        %4059 = vmatprep.subr.bf16.mxu0 %v3508
        %4060 = vmatpush1.bf16.msra.mxu0 %v3507
        %4061 = vmatprep.subr.bf16.mxu0 0
        %4062 = vmatpush1.bf16.msra.mxu0 0
        %4063 = vmatprep.subr.bf16.mxu0 0
        %4064 = vmatpush1.bf16.msra.mxu0 0
        %4065 = vmatprep.subr.bf16.mxu0 0
        %4066 = vmatpush1.bf16.msra.mxu0 0
        %4067 = vmatprep.subr.bf16.mxu0 0
        %4068 = vmatpush1.bf16.msra.mxu0 0
        %4069 = vmatprep.subr.bf16.mxu0 0
        %4070 = vmatpush1.bf16.msra.mxu0 0
        %4071 = vmatprep.subr.bf16.mxu0 0
        %4072 = vmatpush1.bf16.msra.mxu0 0
        %4073 = vmatprep.subr.bf16.mxu0 0
        %4074 = vmatpush1.bf16.msra.mxu0 0
        %4075 = vmatprep.subr.bf16.mxu0 0
        %4076 = vmatpush1.bf16.msra.mxu0 0
        %4077 = vmatprep.subr.bf16.mxu0 0
        %4078 = vmatpush1.bf16.msra.mxu0 0
        %4079 = vmatprep.subr.bf16.mxu0 0
        %4080 = vmatpush1.bf16.msra.mxu0 0
        %4081 = vmatprep.subr.bf16.mxu0 0
        %4082 = vmatpush1.bf16.msra.mxu0 0
        %4083 = vmatprep.subr.bf16.mxu0 0
        %4084 = vmatpush1.bf16.msra.mxu0 0
        %4085 = vmatprep.mubr.bf16.mxu0 0
        %4086 = vmatmul.mubr.bf16.gmra.mrb[0].mxu0 %v3621
        %v4087 = vpop.f32.mrb[0].mxu0
        %v4088 = vadd.f32 0.0, %v4087
        %v4089 = vpop.f32.mrb[0].mxu0
        %v4090 = vadd.f32 0.0, %v4089
        %v4091 = vpop.f32.mrb[0].mxu0
        %v4092 = vadd.f32 0.0, %v4091
        %v4093 = vpop.f32.mrb[0].mxu0
        %v4094 = vadd.f32 0.0, %v4093
        %4095 = vdwg.mxu0
        %4096 = vmatprep.subr.bf16.mxu0 %v3117
        %4097 = vmatpush1.bf16.msra.mxu0 %v3116
        %4098 = vmatprep.subr.bf16.mxu0 %v3248
        %4099 = vmatpush1.bf16.msra.mxu0 %v3247
        %4100 = vmatprep.subr.bf16.mxu0 %v3379
        %4101 = vmatpush1.bf16.msra.mxu0 %v3378
        %4102 = vmatprep.subr.bf16.mxu0 %v3510
        %4103 = vmatpush1.bf16.msra.mxu0 %v3509
        %4104 = vmatprep.subr.bf16.mxu0 0
        %4105 = vmatpush1.bf16.msra.mxu0 0
        %4106 = vmatprep.subr.bf16.mxu0 0
        %4107 = vmatpush1.bf16.msra.mxu0 0
        %4108 = vmatprep.subr.bf16.mxu0 0
        %4109 = vmatpush1.bf16.msra.mxu0 0
        %4110 = vmatprep.subr.bf16.mxu0 0
        %4111 = vmatpush1.bf16.msra.mxu0 0
        %4112 = vmatprep.subr.bf16.mxu0 0
        %4113 = vmatpush1.bf16.msra.mxu0 0
        %4114 = vmatprep.subr.bf16.mxu0 0
        %4115 = vmatpush1.bf16.msra.mxu0 0
        %4116 = vmatprep.subr.bf16.mxu0 0
        %4117 = vmatpush1.bf16.msra.mxu0 0
        %4118 = vmatprep.subr.bf16.mxu0 0
        %4119 = vmatpush1.bf16.msra.mxu0 0
        %4120 = vmatprep.subr.bf16.mxu0 0
        %4121 = vmatpush1.bf16.msra.mxu0 0
        %4122 = vmatprep.subr.bf16.mxu0 0
        %4123 = vmatpush1.bf16.msra.mxu0 0
        %4124 = vmatprep.subr.bf16.mxu0 0
        %4125 = vmatpush1.bf16.msra.mxu0 0
        %4126 = vmatprep.subr.bf16.mxu0 0
        %4127 = vmatpush1.bf16.msra.mxu0 0
        %4128 = vmatprep.mubr.bf16.mxu0 0
        %4129 = vmatmul.mubr.bf16.gmra.mrb[0].mxu0 %v3621
        %v4130 = vpop.f32.mrb[0].mxu0
        %v4131 = vadd.f32 0.0, %v4130
        %v4132 = vpop.f32.mrb[0].mxu0
        %v4133 = vadd.f32 0.0, %v4132
        %v4134 = vpop.f32.mrb[0].mxu0
        %v4135 = vadd.f32 0.0, %v4134
        %v4136 = vpop.f32.mrb[0].mxu0
        %v4137 = vadd.f32 0.0, %v4136
        %4138 = vdwg.mxu0
        %4139 = vmatprep.subr.bf16.mxu0 %v3119
        %4140 = vmatpush1.bf16.msra.mxu0 %v3118
        %4141 = vmatprep.subr.bf16.mxu0 %v3250
        %4142 = vmatpush1.bf16.msra.mxu0 %v3249
        %4143 = vmatprep.subr.bf16.mxu0 %v3381
        %4144 = vmatpush1.bf16.msra.mxu0 %v3380
        %4145 = vmatprep.subr.bf16.mxu0 %v3512
        %4146 = vmatpush1.bf16.msra.mxu0 %v3511
        %4147 = vmatprep.subr.bf16.mxu0 0
        %4148 = vmatpush1.bf16.msra.mxu0 0
        %4149 = vmatprep.subr.bf16.mxu0 0
        %4150 = vmatpush1.bf16.msra.mxu0 0
        %4151 = vmatprep.subr.bf16.mxu0 0
        %4152 = vmatpush1.bf16.msra.mxu0 0
        %4153 = vmatprep.subr.bf16.mxu0 0
        %4154 = vmatpush1.bf16.msra.mxu0 0
        %4155 = vmatprep.subr.bf16.mxu0 0
        %4156 = vmatpush1.bf16.msra.mxu0 0
        %4157 = vmatprep.subr.bf16.mxu0 0
        %4158 = vmatpush1.bf16.msra.mxu0 0
        %4159 = vmatprep.subr.bf16.mxu0 0
        %4160 = vmatpush1.bf16.msra.mxu0 0
        %4161 = vmatprep.subr.bf16.mxu0 0
        %4162 = vmatpush1.bf16.msra.mxu0 0
        %4163 = vmatprep.subr.bf16.mxu0 0
        %4164 = vmatpush1.bf16.msra.mxu0 0
        %4165 = vmatprep.subr.bf16.mxu0 0
        %4166 = vmatpush1.bf16.msra.mxu0 0
        %4167 = vmatprep.subr.bf16.mxu0 0
        %4168 = vmatpush1.bf16.msra.mxu0 0
        %4169 = vmatprep.subr.bf16.mxu0 0
        %4170 = vmatpush1.bf16.msra.mxu0 0
        %4171 = vmatprep.mubr.bf16.mxu0 0
        %4172 = vmatmul.mubr.bf16.gmra.mrb[0].mxu0 %v3621
        %v4173 = vpop.f32.mrb[0].mxu0
        %v4174 = vadd.f32 0.0, %v4173
        %v4175 = vpop.f32.mrb[0].mxu0
        %v4176 = vadd.f32 0.0, %v4175
        %v4177 = vpop.f32.mrb[0].mxu0
        %v4178 = vadd.f32 0.0, %v4177
        %v4179 = vpop.f32.mrb[0].mxu0
        %v4180 = vadd.f32 0.0, %v4179
        %4181 = vdwg.mxu0
        %4182 = vmatprep.subr.bf16.mxu0 %v3121
        %4183 = vmatpush1.bf16.msra.mxu0 %v3120
        %4184 = vmatprep.subr.bf16.mxu0 %v3252
        %4185 = vmatpush1.bf16.msra.mxu0 %v3251
        %4186 = vmatprep.subr.bf16.mxu0 %v3383
        %4187 = vmatpush1.bf16.msra.mxu0 %v3382
        %4188 = vmatprep.subr.bf16.mxu0 %v3514
        %4189 = vmatpush1.bf16.msra.mxu0 %v3513
        %4190 = vmatprep.subr.bf16.mxu0 0
        %4191 = vmatpush1.bf16.msra.mxu0 0
        %4192 = vmatprep.subr.bf16.mxu0 0
        %4193 = vmatpush1.bf16.msra.mxu0 0
        %4194 = vmatprep.subr.bf16.mxu0 0
        %4195 = vmatpush1.bf16.msra.mxu0 0
        %4196 = vmatprep.subr.bf16.mxu0 0
        %4197 = vmatpush1.bf16.msra.mxu0 0
        %4198 = vmatprep.subr.bf16.mxu0 0
        %4199 = vmatpush1.bf16.msra.mxu0 0
        %4200 = vmatprep.subr.bf16.mxu0 0
        %4201 = vmatpush1.bf16.msra.mxu0 0
        %4202 = vmatprep.subr.bf16.mxu0 0
        %4203 = vmatpush1.bf16.msra.mxu0 0
        %4204 = vmatprep.subr.bf16.mxu0 0
        %4205 = vmatpush1.bf16.msra.mxu0 0
        %4206 = vmatprep.subr.bf16.mxu0 0
        %4207 = vmatpush1.bf16.msra.mxu0 0
        %4208 = vmatprep.subr.bf16.mxu0 0
        %4209 = vmatpush1.bf16.msra.mxu0 0
        %4210 = vmatprep.subr.bf16.mxu0 0
        %4211 = vmatpush1.bf16.msra.mxu0 0
        %4212 = vmatprep.subr.bf16.mxu0 0
        %4213 = vmatpush1.bf16.msra.mxu0 0
        %4214 = vmatprep.mubr.bf16.mxu0 0
        %4215 = vmatmul.mubr.bf16.gmra.mrb[0].mxu0 %v3621
        %v4216 = vpop.f32.mrb[0].mxu0
        %v4217 = vadd.f32 0.0, %v4216
        %v4218 = vpop.f32.mrb[0].mxu0
        %v4219 = vadd.f32 0.0, %v4218
        %v4220 = vpop.f32.mrb[0].mxu0
        %v4221 = vadd.f32 0.0, %v4220
        %v4222 = vpop.f32.mrb[0].mxu0
        %v4223 = vadd.f32 0.0, %v4222
        %4224 = vdwg.mxu0
        %4225 = vmatprep.subr.bf16.mxu0 %v3123
        %4226 = vmatpush1.bf16.msra.mxu0 %v3122
        %4227 = vmatprep.subr.bf16.mxu0 %v3254
        %4228 = vmatpush1.bf16.msra.mxu0 %v3253
        %4229 = vmatprep.subr.bf16.mxu0 %v3385
        %4230 = vmatpush1.bf16.msra.mxu0 %v3384
        %4231 = vmatprep.subr.bf16.mxu0 %v3516
        %4232 = vmatpush1.bf16.msra.mxu0 %v3515
        %4233 = vmatprep.subr.bf16.mxu0 0
        %4234 = vmatpush1.bf16.msra.mxu0 0
        %4235 = vmatprep.subr.bf16.mxu0 0
        %4236 = vmatpush1.bf16.msra.mxu0 0
        %4237 = vmatprep.subr.bf16.mxu0 0
        %4238 = vmatpush1.bf16.msra.mxu0 0
        %4239 = vmatprep.subr.bf16.mxu0 0
        %4240 = vmatpush1.bf16.msra.mxu0 0
        %4241 = vmatprep.subr.bf16.mxu0 0
        %4242 = vmatpush1.bf16.msra.mxu0 0
        %4243 = vmatprep.subr.bf16.mxu0 0
        %4244 = vmatpush1.bf16.msra.mxu0 0
        %4245 = vmatprep.subr.bf16.mxu0 0
        %4246 = vmatpush1.bf16.msra.mxu0 0
        %4247 = vmatprep.subr.bf16.mxu0 0
        %4248 = vmatpush1.bf16.msra.mxu0 0
        %4249 = vmatprep.subr.bf16.mxu0 0
        %4250 = vmatpush1.bf16.msra.mxu0 0
        %4251 = vmatprep.subr.bf16.mxu0 0
        %4252 = vmatpush1.bf16.msra.mxu0 0
        %4253 = vmatprep.subr.bf16.mxu0 0
        %4254 = vmatpush1.bf16.msra.mxu0 0
        %4255 = vmatprep.subr.bf16.mxu0 0
        %4256 = vmatpush1.bf16.msra.mxu0 0
        %4257 = vmatprep.mubr.bf16.mxu0 0
        %4258 = vmatmul.mubr.bf16.gmra.mrb[0].mxu0 %v3621
        %v4259 = vpop.f32.mrb[0].mxu0
        %v4260 = vadd.f32 0.0, %v4259
        %v4261 = vpop.f32.mrb[0].mxu0
        %v4262 = vadd.f32 0.0, %v4261
        %v4263 = vpop.f32.mrb[0].mxu0
        %v4264 = vadd.f32 0.0, %v4263
        %v4265 = vpop.f32.mrb[0].mxu0
        %v4266 = vadd.f32 0.0, %v4265
        %4267 = vdwg.mxu0
        %4268 = vmatprep.subr.bf16.mxu0 %v3125
        %4269 = vmatpush1.bf16.msra.mxu0 %v3124
        %4270 = vmatprep.subr.bf16.mxu0 %v3256
        %4271 = vmatpush1.bf16.msra.mxu0 %v3255
        %4272 = vmatprep.subr.bf16.mxu0 %v3387
        %4273 = vmatpush1.bf16.msra.mxu0 %v3386
        %4274 = vmatprep.subr.bf16.mxu0 %v3518
        %4275 = vmatpush1.bf16.msra.mxu0 %v3517
        %4276 = vmatprep.subr.bf16.mxu0 0
        %4277 = vmatpush1.bf16.msra.mxu0 0
        %4278 = vmatprep.subr.bf16.mxu0 0
        %4279 = vmatpush1.bf16.msra.mxu0 0
        %4280 = vmatprep.subr.bf16.mxu0 0
        %4281 = vmatpush1.bf16.msra.mxu0 0
        %4282 = vmatprep.subr.bf16.mxu0 0
        %4283 = vmatpush1.bf16.msra.mxu0 0
        %4284 = vmatprep.subr.bf16.mxu0 0
        %4285 = vmatpush1.bf16.msra.mxu0 0
        %4286 = vmatprep.subr.bf16.mxu0 0
        %4287 = vmatpush1.bf16.msra.mxu0 0
        %4288 = vmatprep.subr.bf16.mxu0 0
        %4289 = vmatpush1.bf16.msra.mxu0 0
        %4290 = vmatprep.subr.bf16.mxu0 0
        %4291 = vmatpush1.bf16.msra.mxu0 0
        %4292 = vmatprep.subr.bf16.mxu0 0
        %4293 = vmatpush1.bf16.msra.mxu0 0
        %4294 = vmatprep.subr.bf16.mxu0 0
        %4295 = vmatpush1.bf16.msra.mxu0 0
        %4296 = vmatprep.subr.bf16.mxu0 0
        %4297 = vmatpush1.bf16.msra.mxu0 0
        %4298 = vmatprep.subr.bf16.mxu0 0
        %4299 = vmatpush1.bf16.msra.mxu0 0
        %4300 = vmatprep.mubr.bf16.mxu0 0
        %4301 = vmatmul.mubr.bf16.gmra.mrb[0].mxu0 %v3621
        %v4302 = vpop.f32.mrb[0].mxu0
        %v4303 = vadd.f32 0.0, %v4302
        %v4304 = vpop.f32.mrb[0].mxu0
        %v4305 = vadd.f32 0.0, %v4304
        %v4306 = vpop.f32.mrb[0].mxu0
        %v4307 = vadd.f32 0.0, %v4306
        %v4308 = vpop.f32.mrb[0].mxu0
        %v4309 = vadd.f32 0.0, %v4308
        %4310 = vdwg.mxu0
        %4311 = vmatprep.subr.bf16.mxu0 %v3127
        %4312 = vmatpush1.bf16.msra.mxu0 %v3126
        %4313 = vmatprep.subr.bf16.mxu0 %v3258
        %4314 = vmatpush1.bf16.msra.mxu0 %v3257
        %4315 = vmatprep.subr.bf16.mxu0 %v3389
        %4316 = vmatpush1.bf16.msra.mxu0 %v3388
        %4317 = vmatprep.subr.bf16.mxu0 %v3520
        %4318 = vmatpush1.bf16.msra.mxu0 %v3519
        %4319 = vmatprep.subr.bf16.mxu0 0
        %4320 = vmatpush1.bf16.msra.mxu0 0
        %4321 = vmatprep.subr.bf16.mxu0 0
        %4322 = vmatpush1.bf16.msra.mxu0 0
        %4323 = vmatprep.subr.bf16.mxu0 0
        %4324 = vmatpush1.bf16.msra.mxu0 0
        %4325 = vmatprep.subr.bf16.mxu0 0
        %4326 = vmatpush1.bf16.msra.mxu0 0
        %4327 = vmatprep.subr.bf16.mxu0 0
        %4328 = vmatpush1.bf16.msra.mxu0 0
        %4329 = vmatprep.subr.bf16.mxu0 0
        %4330 = vmatpush1.bf16.msra.mxu0 0
        %4331 = vmatprep.subr.bf16.mxu0 0
        %4332 = vmatpush1.bf16.msra.mxu0 0
        %4333 = vmatprep.subr.bf16.mxu0 0
        %4334 = vmatpush1.bf16.msra.mxu0 0
        %4335 = vmatprep.subr.bf16.mxu0 0
        %4336 = vmatpush1.bf16.msra.mxu0 0
        %4337 = vmatprep.subr.bf16.mxu0 0
        %4338 = vmatpush1.bf16.msra.mxu0 0
        %4339 = vmatprep.subr.bf16.mxu0 0
        %4340 = vmatpush1.bf16.msra.mxu0 0
        %4341 = vmatprep.subr.bf16.mxu0 0
        %4342 = vmatpush1.bf16.msra.mxu0 0
        %4343 = vmatprep.mubr.bf16.mxu0 0
        %4344 = vmatmul.mubr.bf16.gmra.mrb[0].mxu0 %v3621
        %v4345 = vpop.f32.mrb[0].mxu0
        %v4346 = vadd.f32 0.0, %v4345
        %v4347 = vpop.f32.mrb[0].mxu0
        %v4348 = vadd.f32 0.0, %v4347
        %v4349 = vpop.f32.mrb[0].mxu0
        %v4350 = vadd.f32 0.0, %v4349
        %v4351 = vpop.f32.mrb[0].mxu0
        %v4352 = vadd.f32 0.0, %v4351
        %4353 = vdwg.mxu0
        %4354 = vmatprep.subr.bf16.mxu0 %v3129
        %4355 = vmatpush1.bf16.msra.mxu0 %v3128
        %4356 = vmatprep.subr.bf16.mxu0 %v3260
        %4357 = vmatpush1.bf16.msra.mxu0 %v3259
        %4358 = vmatprep.subr.bf16.mxu0 %v3391
        %4359 = vmatpush1.bf16.msra.mxu0 %v3390
        %4360 = vmatprep.subr.bf16.mxu0 %v3522
        %4361 = vmatpush1.bf16.msra.mxu0 %v3521
        %4362 = vmatprep.subr.bf16.mxu0 0
        %4363 = vmatpush1.bf16.msra.mxu0 0
        %4364 = vmatprep.subr.bf16.mxu0 0
        %4365 = vmatpush1.bf16.msra.mxu0 0
        %4366 = vmatprep.subr.bf16.mxu0 0
        %4367 = vmatpush1.bf16.msra.mxu0 0
        %4368 = vmatprep.subr.bf16.mxu0 0
        %4369 = vmatpush1.bf16.msra.mxu0 0
        %4370 = vmatprep.subr.bf16.mxu0 0
        %4371 = vmatpush1.bf16.msra.mxu0 0
        %4372 = vmatprep.subr.bf16.mxu0 0
        %4373 = vmatpush1.bf16.msra.mxu0 0
        %4374 = vmatprep.subr.bf16.mxu0 0
        %4375 = vmatpush1.bf16.msra.mxu0 0
        %4376 = vmatprep.subr.bf16.mxu0 0
        %4377 = vmatpush1.bf16.msra.mxu0 0
        %4378 = vmatprep.subr.bf16.mxu0 0
        %4379 = vmatpush1.bf16.msra.mxu0 0
        %4380 = vmatprep.subr.bf16.mxu0 0
        %4381 = vmatpush1.bf16.msra.mxu0 0
        %4382 = vmatprep.subr.bf16.mxu0 0
        %4383 = vmatpush1.bf16.msra.mxu0 0
        %4384 = vmatprep.subr.bf16.mxu0 0
        %4385 = vmatpush1.bf16.msra.mxu0 0
        %4386 = vmatprep.mubr.bf16.mxu0 0
        %4387 = vmatmul.mubr.bf16.gmra.mrb[0].mxu0 %v3621
        %v4388 = vpop.f32.mrb[0].mxu0
        %v4389 = vadd.f32 0.0, %v4388
        %v4390 = vpop.f32.mrb[0].mxu0
        %v4391 = vadd.f32 0.0, %v4390
        %v4392 = vpop.f32.mrb[0].mxu0
        %v4393 = vadd.f32 0.0, %v4392
        %v4394 = vpop.f32.mrb[0].mxu0
        %v4395 = vadd.f32 0.0, %v4394
        %4396 = vdwg.mxu0
        %4397 = vmatprep.subr.bf16.mxu0 %v3131
        %4398 = vmatpush1.bf16.msra.mxu0 %v3130
        %4399 = vmatprep.subr.bf16.mxu0 %v3262
        %4400 = vmatpush1.bf16.msra.mxu0 %v3261
        %4401 = vmatprep.subr.bf16.mxu0 %v3393
        %4402 = vmatpush1.bf16.msra.mxu0 %v3392
        %4403 = vmatprep.subr.bf16.mxu0 %v3524
        %4404 = vmatpush1.bf16.msra.mxu0 %v3523
        %4405 = vmatprep.subr.bf16.mxu0 0
        %4406 = vmatpush1.bf16.msra.mxu0 0
        %4407 = vmatprep.subr.bf16.mxu0 0
        %4408 = vmatpush1.bf16.msra.mxu0 0
        %4409 = vmatprep.subr.bf16.mxu0 0
        %4410 = vmatpush1.bf16.msra.mxu0 0
        %4411 = vmatprep.subr.bf16.mxu0 0
        %4412 = vmatpush1.bf16.msra.mxu0 0
        %4413 = vmatprep.subr.bf16.mxu0 0
        %4414 = vmatpush1.bf16.msra.mxu0 0
        %4415 = vmatprep.subr.bf16.mxu0 0
        %4416 = vmatpush1.bf16.msra.mxu0 0
        %4417 = vmatprep.subr.bf16.mxu0 0
        %4418 = vmatpush1.bf16.msra.mxu0 0
        %4419 = vmatprep.subr.bf16.mxu0 0
        %4420 = vmatpush1.bf16.msra.mxu0 0
        %4421 = vmatprep.subr.bf16.mxu0 0
        %4422 = vmatpush1.bf16.msra.mxu0 0
        %4423 = vmatprep.subr.bf16.mxu0 0
        %4424 = vmatpush1.bf16.msra.mxu0 0
        %4425 = vmatprep.subr.bf16.mxu0 0
        %4426 = vmatpush1.bf16.msra.mxu0 0
        %4427 = vmatprep.subr.bf16.mxu0 0
        %4428 = vmatpush1.bf16.msra.mxu0 0
        %4429 = vmatprep.mubr.bf16.mxu0 0
        %4430 = vmatmul.mubr.bf16.gmra.mrb[0].mxu0 %v3621
        %v4431 = vpop.f32.mrb[0].mxu0
        %v4432 = vadd.f32 0.0, %v4431
        %v4433 = vpop.f32.mrb[0].mxu0
        %v4434 = vadd.f32 0.0, %v4433
        %v4435 = vpop.f32.mrb[0].mxu0
        %v4436 = vadd.f32 0.0, %v4435
        %v4437 = vpop.f32.mrb[0].mxu0
        %v4438 = vadd.f32 0.0, %v4437
        %4439 = vdwg.mxu0
        %4440 = vmatprep.subr.bf16.mxu0 %v3133
        %4441 = vmatpush1.bf16.msra.mxu0 %v3132
        %4442 = vmatprep.subr.bf16.mxu0 %v3264
        %4443 = vmatpush1.bf16.msra.mxu0 %v3263
        %4444 = vmatprep.subr.bf16.mxu0 %v3395
        %4445 = vmatpush1.bf16.msra.mxu0 %v3394
        %4446 = vmatprep.subr.bf16.mxu0 %v3526
        %4447 = vmatpush1.bf16.msra.mxu0 %v3525
        %4448 = vmatprep.subr.bf16.mxu0 0
        %4449 = vmatpush1.bf16.msra.mxu0 0
        %4450 = vmatprep.subr.bf16.mxu0 0
        %4451 = vmatpush1.bf16.msra.mxu0 0
        %4452 = vmatprep.subr.bf16.mxu0 0
        %4453 = vmatpush1.bf16.msra.mxu0 0
        %4454 = vmatprep.subr.bf16.mxu0 0
        %4455 = vmatpush1.bf16.msra.mxu0 0
        %4456 = vmatprep.subr.bf16.mxu0 0
        %4457 = vmatpush1.bf16.msra.mxu0 0
        %4458 = vmatprep.subr.bf16.mxu0 0
        %4459 = vmatpush1.bf16.msra.mxu0 0
        %4460 = vmatprep.subr.bf16.mxu0 0
        %4461 = vmatpush1.bf16.msra.mxu0 0
        %4462 = vmatprep.subr.bf16.mxu0 0
        %4463 = vmatpush1.bf16.msra.mxu0 0
        %4464 = vmatprep.subr.bf16.mxu0 0
        %4465 = vmatpush1.bf16.msra.mxu0 0
        %4466 = vmatprep.subr.bf16.mxu0 0
        %4467 = vmatpush1.bf16.msra.mxu0 0
        %4468 = vmatprep.subr.bf16.mxu0 0
        %4469 = vmatpush1.bf16.msra.mxu0 0
        %4470 = vmatprep.subr.bf16.mxu0 0
        %4471 = vmatpush1.bf16.msra.mxu0 0
        %4472 = vmatprep.mubr.bf16.mxu0 0
        %4473 = vmatmul.mubr.bf16.gmra.mrb[0].mxu0 %v3621
        %v4474 = vpop.f32.mrb[0].mxu0
        %v4475 = vadd.f32 0.0, %v4474
        %v4476 = vpop.f32.mrb[0].mxu0
        %v4477 = vadd.f32 0.0, %v4476
        %v4478 = vpop.f32.mrb[0].mxu0
        %v4479 = vadd.f32 0.0, %v4478
        %v4480 = vpop.f32.mrb[0].mxu0
        %v4481 = vadd.f32 0.0, %v4480
        %4482 = vdwg.mxu0
        %4483 = vmatprep.subr.bf16.mxu0 %v3135
        %4484 = vmatpush1.bf16.msra.mxu0 %v3134
        %4485 = vmatprep.subr.bf16.mxu0 %v3266
        %4486 = vmatpush1.bf16.msra.mxu0 %v3265
        %4487 = vmatprep.subr.bf16.mxu0 %v3397
        %4488 = vmatpush1.bf16.msra.mxu0 %v3396
        %4489 = vmatprep.subr.bf16.mxu0 %v3528
        %4490 = vmatpush1.bf16.msra.mxu0 %v3527
        %4491 = vmatprep.subr.bf16.mxu0 0
        %4492 = vmatpush1.bf16.msra.mxu0 0
        %4493 = vmatprep.subr.bf16.mxu0 0
        %4494 = vmatpush1.bf16.msra.mxu0 0
        %4495 = vmatprep.subr.bf16.mxu0 0
        %4496 = vmatpush1.bf16.msra.mxu0 0
        %4497 = vmatprep.subr.bf16.mxu0 0
        %4498 = vmatpush1.bf16.msra.mxu0 0
        %4499 = vmatprep.subr.bf16.mxu0 0
        %4500 = vmatpush1.bf16.msra.mxu0 0
        %4501 = vmatprep.subr.bf16.mxu0 0
        %4502 = vmatpush1.bf16.msra.mxu0 0
        %4503 = vmatprep.subr.bf16.mxu0 0
        %4504 = vmatpush1.bf16.msra.mxu0 0
        %4505 = vmatprep.subr.bf16.mxu0 0
        %4506 = vmatpush1.bf16.msra.mxu0 0
        %4507 = vmatprep.subr.bf16.mxu0 0
        %4508 = vmatpush1.bf16.msra.mxu0 0
        %4509 = vmatprep.subr.bf16.mxu0 0
        %4510 = vmatpush1.bf16.msra.mxu0 0
        %4511 = vmatprep.subr.bf16.mxu0 0
        %4512 = vmatpush1.bf16.msra.mxu0 0
        %4513 = vmatprep.subr.bf16.mxu0 0
        %4514 = vmatpush1.bf16.msra.mxu0 0
        %4515 = vmatprep.mubr.bf16.mxu0 0
        %4516 = vmatmul.mubr.bf16.gmra.mrb[0].mxu0 %v3621
        %v4517 = vpop.f32.mrb[0].mxu0
        %v4518 = vadd.f32 0.0, %v4517
        %v4519 = vpop.f32.mrb[0].mxu0
        %v4520 = vadd.f32 0.0, %v4519
        %v4521 = vpop.f32.mrb[0].mxu0
        %v4522 = vadd.f32 0.0, %v4521
        %v4523 = vpop.f32.mrb[0].mxu0
        %v4524 = vadd.f32 0.0, %v4523
        %4525 = vdwg.mxu0
        %4526 = vmatprep.subr.bf16.mxu0 %v3137
        %4527 = vmatpush1.bf16.msra.mxu0 %v3136
        %4528 = vmatprep.subr.bf16.mxu0 %v3268
        %4529 = vmatpush1.bf16.msra.mxu0 %v3267
        %4530 = vmatprep.subr.bf16.mxu0 %v3399
        %4531 = vmatpush1.bf16.msra.mxu0 %v3398
        %4532 = vmatprep.subr.bf16.mxu0 %v3530
        %4533 = vmatpush1.bf16.msra.mxu0 %v3529
        %4534 = vmatprep.subr.bf16.mxu0 0
        %4535 = vmatpush1.bf16.msra.mxu0 0
        %4536 = vmatprep.subr.bf16.mxu0 0
        %4537 = vmatpush1.bf16.msra.mxu0 0
        %4538 = vmatprep.subr.bf16.mxu0 0
        %4539 = vmatpush1.bf16.msra.mxu0 0
        %4540 = vmatprep.subr.bf16.mxu0 0
        %4541 = vmatpush1.bf16.msra.mxu0 0
        %4542 = vmatprep.subr.bf16.mxu0 0
        %4543 = vmatpush1.bf16.msra.mxu0 0
        %4544 = vmatprep.subr.bf16.mxu0 0
        %4545 = vmatpush1.bf16.msra.mxu0 0
        %4546 = vmatprep.subr.bf16.mxu0 0
        %4547 = vmatpush1.bf16.msra.mxu0 0
        %4548 = vmatprep.subr.bf16.mxu0 0
        %4549 = vmatpush1.bf16.msra.mxu0 0
        %4550 = vmatprep.subr.bf16.mxu0 0
        %4551 = vmatpush1.bf16.msra.mxu0 0
        %4552 = vmatprep.subr.bf16.mxu0 0
        %4553 = vmatpush1.bf16.msra.mxu0 0
        %4554 = vmatprep.subr.bf16.mxu0 0
        %4555 = vmatpush1.bf16.msra.mxu0 0
        %4556 = vmatprep.subr.bf16.mxu0 0
        %4557 = vmatpush1.bf16.msra.mxu0 0
        %4558 = vmatprep.mubr.bf16.mxu0 0
        %4559 = vmatmul.mubr.bf16.gmra.mrb[0].mxu0 %v3621
        %v4560 = vpop.f32.mrb[0].mxu0
        %v4561 = vadd.f32 0.0, %v4560
        %v4562 = vpop.f32.mrb[0].mxu0
        %v4563 = vadd.f32 0.0, %v4562
        %v4564 = vpop.f32.mrb[0].mxu0
        %v4565 = vadd.f32 0.0, %v4564
        %v4566 = vpop.f32.mrb[0].mxu0
        %v4567 = vadd.f32 0.0, %v4566
        %4568 = vdwg.mxu0
        %4569 = vmatprep.subr.bf16.mxu0 %v3139
        %4570 = vmatpush1.bf16.msra.mxu0 %v3138
        %4571 = vmatprep.subr.bf16.mxu0 %v3270
        %4572 = vmatpush1.bf16.msra.mxu0 %v3269
        %4573 = vmatprep.subr.bf16.mxu0 %v3401
        %4574 = vmatpush1.bf16.msra.mxu0 %v3400
        %4575 = vmatprep.subr.bf16.mxu0 %v3532
        %4576 = vmatpush1.bf16.msra.mxu0 %v3531
        %4577 = vmatprep.subr.bf16.mxu0 0
        %4578 = vmatpush1.bf16.msra.mxu0 0
        %4579 = vmatprep.subr.bf16.mxu0 0
        %4580 = vmatpush1.bf16.msra.mxu0 0
        %4581 = vmatprep.subr.bf16.mxu0 0
        %4582 = vmatpush1.bf16.msra.mxu0 0
        %4583 = vmatprep.subr.bf16.mxu0 0
        %4584 = vmatpush1.bf16.msra.mxu0 0
        %4585 = vmatprep.subr.bf16.mxu0 0
        %4586 = vmatpush1.bf16.msra.mxu0 0
        %4587 = vmatprep.subr.bf16.mxu0 0
        %4588 = vmatpush1.bf16.msra.mxu0 0
        %4589 = vmatprep.subr.bf16.mxu0 0
        %4590 = vmatpush1.bf16.msra.mxu0 0
        %4591 = vmatprep.subr.bf16.mxu0 0
        %4592 = vmatpush1.bf16.msra.mxu0 0
        %4593 = vmatprep.subr.bf16.mxu0 0
        %4594 = vmatpush1.bf16.msra.mxu0 0
        %4595 = vmatprep.subr.bf16.mxu0 0
        %4596 = vmatpush1.bf16.msra.mxu0 0
        %4597 = vmatprep.subr.bf16.mxu0 0
        %4598 = vmatpush1.bf16.msra.mxu0 0
        %4599 = vmatprep.subr.bf16.mxu0 0
        %4600 = vmatpush1.bf16.msra.mxu0 0
        %4601 = vmatprep.mubr.bf16.mxu0 0
        %4602 = vmatmul.mubr.bf16.gmra.mrb[0].mxu0 %v3621
        %v4603 = vpop.f32.mrb[0].mxu0
        %v4604 = vadd.f32 0.0, %v4603
        %v4605 = vpop.f32.mrb[0].mxu0
        %v4606 = vadd.f32 0.0, %v4605
        %v4607 = vpop.f32.mrb[0].mxu0
        %v4608 = vadd.f32 0.0, %v4607
        %v4609 = vpop.f32.mrb[0].mxu0
        %v4610 = vadd.f32 0.0, %v4609
        %4611 = vdwg.mxu0
        %4612 = vmatprep.subr.bf16.mxu0 %v3141
        %4613 = vmatpush1.bf16.msra.mxu0 %v3140
        %4614 = vmatprep.subr.bf16.mxu0 %v3272
        %4615 = vmatpush1.bf16.msra.mxu0 %v3271
        %4616 = vmatprep.subr.bf16.mxu0 %v3403
        %4617 = vmatpush1.bf16.msra.mxu0 %v3402
        %4618 = vmatprep.subr.bf16.mxu0 %v3534
        %4619 = vmatpush1.bf16.msra.mxu0 %v3533
        %4620 = vmatprep.subr.bf16.mxu0 0
        %4621 = vmatpush1.bf16.msra.mxu0 0
        %4622 = vmatprep.subr.bf16.mxu0 0
        %4623 = vmatpush1.bf16.msra.mxu0 0
        %4624 = vmatprep.subr.bf16.mxu0 0
        %4625 = vmatpush1.bf16.msra.mxu0 0
        %4626 = vmatprep.subr.bf16.mxu0 0
        %4627 = vmatpush1.bf16.msra.mxu0 0
        %4628 = vmatprep.subr.bf16.mxu0 0
        %4629 = vmatpush1.bf16.msra.mxu0 0
        %4630 = vmatprep.subr.bf16.mxu0 0
        %4631 = vmatpush1.bf16.msra.mxu0 0
        %4632 = vmatprep.subr.bf16.mxu0 0
        %4633 = vmatpush1.bf16.msra.mxu0 0
        %4634 = vmatprep.subr.bf16.mxu0 0
        %4635 = vmatpush1.bf16.msra.mxu0 0
        %4636 = vmatprep.subr.bf16.mxu0 0
        %4637 = vmatpush1.bf16.msra.mxu0 0
        %4638 = vmatprep.subr.bf16.mxu0 0
        %4639 = vmatpush1.bf16.msra.mxu0 0
        %4640 = vmatprep.subr.bf16.mxu0 0
        %4641 = vmatpush1.bf16.msra.mxu0 0
        %4642 = vmatprep.subr.bf16.mxu0 0
        %4643 = vmatpush1.bf16.msra.mxu0 0
        %4644 = vmatprep.mubr.bf16.mxu0 0
        %4645 = vmatmul.mubr.bf16.gmra.mrb[0].mxu0 %v3621
        %v4646 = vpop.f32.mrb[0].mxu0
        %v4647 = vadd.f32 0.0, %v4646
        %v4648 = vpop.f32.mrb[0].mxu0
        %v4649 = vadd.f32 0.0, %v4648
        %v4650 = vpop.f32.mrb[0].mxu0
        %v4651 = vadd.f32 0.0, %v4650
        %v4652 = vpop.f32.mrb[0].mxu0
        %v4653 = vadd.f32 0.0, %v4652
        %4654 = vdwg.mxu0
        %4655 = vmatprep.subr.bf16.mxu0 %v3143
        %4656 = vmatpush1.bf16.msra.mxu0 %v3142
        %4657 = vmatprep.subr.bf16.mxu0 %v3274
        %4658 = vmatpush1.bf16.msra.mxu0 %v3273
        %4659 = vmatprep.subr.bf16.mxu0 %v3405
        %4660 = vmatpush1.bf16.msra.mxu0 %v3404
        %4661 = vmatprep.subr.bf16.mxu0 %v3536
        %4662 = vmatpush1.bf16.msra.mxu0 %v3535
        %4663 = vmatprep.subr.bf16.mxu0 0
        %4664 = vmatpush1.bf16.msra.mxu0 0
        %4665 = vmatprep.subr.bf16.mxu0 0
        %4666 = vmatpush1.bf16.msra.mxu0 0
        %4667 = vmatprep.subr.bf16.mxu0 0
        %4668 = vmatpush1.bf16.msra.mxu0 0
        %4669 = vmatprep.subr.bf16.mxu0 0
        %4670 = vmatpush1.bf16.msra.mxu0 0
        %4671 = vmatprep.subr.bf16.mxu0 0
        %4672 = vmatpush1.bf16.msra.mxu0 0
        %4673 = vmatprep.subr.bf16.mxu0 0
        %4674 = vmatpush1.bf16.msra.mxu0 0
        %4675 = vmatprep.subr.bf16.mxu0 0
        %4676 = vmatpush1.bf16.msra.mxu0 0
        %4677 = vmatprep.subr.bf16.mxu0 0
        %4678 = vmatpush1.bf16.msra.mxu0 0
        %4679 = vmatprep.subr.bf16.mxu0 0
        %4680 = vmatpush1.bf16.msra.mxu0 0
        %4681 = vmatprep.subr.bf16.mxu0 0
        %4682 = vmatpush1.bf16.msra.mxu0 0
        %4683 = vmatprep.subr.bf16.mxu0 0
        %4684 = vmatpush1.bf16.msra.mxu0 0
        %4685 = vmatprep.subr.bf16.mxu0 0
        %4686 = vmatpush1.bf16.msra.mxu0 0
        %4687 = vmatprep.mubr.bf16.mxu0 0
        %4688 = vmatmul.mubr.bf16.gmra.mrb[0].mxu0 %v3621
        %v4689 = vpop.f32.mrb[0].mxu0
        %v4690 = vadd.f32 0.0, %v4689
        %v4691 = vpop.f32.mrb[0].mxu0
        %v4692 = vadd.f32 0.0, %v4691
        %v4693 = vpop.f32.mrb[0].mxu0
        %v4694 = vadd.f32 0.0, %v4693
        %v4695 = vpop.f32.mrb[0].mxu0
        %v4696 = vadd.f32 0.0, %v4695
        %4697 = vdwg.mxu0
        %4698 = vmatprep.subr.bf16.mxu0 %v3145
        %4699 = vmatpush1.bf16.msra.mxu0 %v3144
        %4700 = vmatprep.subr.bf16.mxu0 %v3276
        %4701 = vmatpush1.bf16.msra.mxu0 %v3275
        %4702 = vmatprep.subr.bf16.mxu0 %v3407
        %4703 = vmatpush1.bf16.msra.mxu0 %v3406
        %4704 = vmatprep.subr.bf16.mxu0 %v3538
        %4705 = vmatpush1.bf16.msra.mxu0 %v3537
        %4706 = vmatprep.subr.bf16.mxu0 0
        %4707 = vmatpush1.bf16.msra.mxu0 0
        %4708 = vmatprep.subr.bf16.mxu0 0
        %4709 = vmatpush1.bf16.msra.mxu0 0
        %4710 = vmatprep.subr.bf16.mxu0 0
        %4711 = vmatpush1.bf16.msra.mxu0 0
        %4712 = vmatprep.subr.bf16.mxu0 0
        %4713 = vmatpush1.bf16.msra.mxu0 0
        %4714 = vmatprep.subr.bf16.mxu0 0
        %4715 = vmatpush1.bf16.msra.mxu0 0
        %4716 = vmatprep.subr.bf16.mxu0 0
        %4717 = vmatpush1.bf16.msra.mxu0 0
        %4718 = vmatprep.subr.bf16.mxu0 0
        %4719 = vmatpush1.bf16.msra.mxu0 0
        %4720 = vmatprep.subr.bf16.mxu0 0
        %4721 = vmatpush1.bf16.msra.mxu0 0
        %4722 = vmatprep.subr.bf16.mxu0 0
        %4723 = vmatpush1.bf16.msra.mxu0 0
        %4724 = vmatprep.subr.bf16.mxu0 0
        %4725 = vmatpush1.bf16.msra.mxu0 0
        %4726 = vmatprep.subr.bf16.mxu0 0
        %4727 = vmatpush1.bf16.msra.mxu0 0
        %4728 = vmatprep.subr.bf16.mxu0 0
        %4729 = vmatpush1.bf16.msra.mxu0 0
        %4730 = vmatprep.mubr.bf16.mxu0 0
        %4731 = vmatmul.mubr.bf16.gmra.mrb[0].mxu0 %v3621
        %v4732 = vpop.f32.mrb[0].mxu0
        %v4733 = vadd.f32 0.0, %v4732
        %v4734 = vpop.f32.mrb[0].mxu0
        %v4735 = vadd.f32 0.0, %v4734
        %v4736 = vpop.f32.mrb[0].mxu0
        %v4737 = vadd.f32 0.0, %v4736
        %v4738 = vpop.f32.mrb[0].mxu0
        %v4739 = vadd.f32 0.0, %v4738
        %4740 = vdwg.mxu0
        %4741 = vmatprep.subr.bf16.mxu0 %v3147
        %4742 = vmatpush1.bf16.msra.mxu0 %v3146
        %4743 = vmatprep.subr.bf16.mxu0 %v3278
        %4744 = vmatpush1.bf16.msra.mxu0 %v3277
        %4745 = vmatprep.subr.bf16.mxu0 %v3409
        %4746 = vmatpush1.bf16.msra.mxu0 %v3408
        %4747 = vmatprep.subr.bf16.mxu0 %v3540
        %4748 = vmatpush1.bf16.msra.mxu0 %v3539
        %4749 = vmatprep.subr.bf16.mxu0 0
        %4750 = vmatpush1.bf16.msra.mxu0 0
        %4751 = vmatprep.subr.bf16.mxu0 0
        %4752 = vmatpush1.bf16.msra.mxu0 0
        %4753 = vmatprep.subr.bf16.mxu0 0
        %4754 = vmatpush1.bf16.msra.mxu0 0
        %4755 = vmatprep.subr.bf16.mxu0 0
        %4756 = vmatpush1.bf16.msra.mxu0 0
        %4757 = vmatprep.subr.bf16.mxu0 0
        %4758 = vmatpush1.bf16.msra.mxu0 0
        %4759 = vmatprep.subr.bf16.mxu0 0
        %4760 = vmatpush1.bf16.msra.mxu0 0
        %4761 = vmatprep.subr.bf16.mxu0 0
        %4762 = vmatpush1.bf16.msra.mxu0 0
        %4763 = vmatprep.subr.bf16.mxu0 0
        %4764 = vmatpush1.bf16.msra.mxu0 0
        %4765 = vmatprep.subr.bf16.mxu0 0
        %4766 = vmatpush1.bf16.msra.mxu0 0
        %4767 = vmatprep.subr.bf16.mxu0 0
        %4768 = vmatpush1.bf16.msra.mxu0 0
        %4769 = vmatprep.subr.bf16.mxu0 0
        %4770 = vmatpush1.bf16.msra.mxu0 0
        %4771 = vmatprep.subr.bf16.mxu0 0
        %4772 = vmatpush1.bf16.msra.mxu0 0
        %4773 = vmatprep.mubr.bf16.mxu0 0
        %4774 = vmatmul.mubr.bf16.gmra.mrb[0].mxu0 %v3621
        %v4775 = vpop.f32.mrb[0].mxu0
        %v4776 = vadd.f32 0.0, %v4775
        %v4777 = vpop.f32.mrb[0].mxu0
        %v4778 = vadd.f32 0.0, %v4777
        %v4779 = vpop.f32.mrb[0].mxu0
        %v4780 = vadd.f32 0.0, %v4779
        %v4781 = vpop.f32.mrb[0].mxu0
        %v4782 = vadd.f32 0.0, %v4781
        %4783 = vdwg.mxu0
        %4784 = vmatprep.subr.bf16.mxu0 %v3149
        %4785 = vmatpush1.bf16.msra.mxu0 %v3148
        %4786 = vmatprep.subr.bf16.mxu0 %v3280
        %4787 = vmatpush1.bf16.msra.mxu0 %v3279
        %4788 = vmatprep.subr.bf16.mxu0 %v3411
        %4789 = vmatpush1.bf16.msra.mxu0 %v3410
        %4790 = vmatprep.subr.bf16.mxu0 %v3542
        %4791 = vmatpush1.bf16.msra.mxu0 %v3541
        %4792 = vmatprep.subr.bf16.mxu0 0
        %4793 = vmatpush1.bf16.msra.mxu0 0
        %4794 = vmatprep.subr.bf16.mxu0 0
        %4795 = vmatpush1.bf16.msra.mxu0 0
        %4796 = vmatprep.subr.bf16.mxu0 0
        %4797 = vmatpush1.bf16.msra.mxu0 0
        %4798 = vmatprep.subr.bf16.mxu0 0
        %4799 = vmatpush1.bf16.msra.mxu0 0
        %4800 = vmatprep.subr.bf16.mxu0 0
        %4801 = vmatpush1.bf16.msra.mxu0 0
        %4802 = vmatprep.subr.bf16.mxu0 0
        %4803 = vmatpush1.bf16.msra.mxu0 0
        %4804 = vmatprep.subr.bf16.mxu0 0
        %4805 = vmatpush1.bf16.msra.mxu0 0
        %4806 = vmatprep.subr.bf16.mxu0 0
        %4807 = vmatpush1.bf16.msra.mxu0 0
        %4808 = vmatprep.subr.bf16.mxu0 0
        %4809 = vmatpush1.bf16.msra.mxu0 0
        %4810 = vmatprep.subr.bf16.mxu0 0
        %4811 = vmatpush1.bf16.msra.mxu0 0
        %4812 = vmatprep.subr.bf16.mxu0 0
        %4813 = vmatpush1.bf16.msra.mxu0 0
        %4814 = vmatprep.subr.bf16.mxu0 0
        %4815 = vmatpush1.bf16.msra.mxu0 0
        %4816 = vmatprep.mubr.bf16.mxu0 0
        %4817 = vmatmul.mubr.bf16.gmra.mrb[0].mxu0 %v3621
        %v4818 = vpop.f32.mrb[0].mxu0
        %v4819 = vadd.f32 0.0, %v4818
        %v4820 = vpop.f32.mrb[0].mxu0
        %v4821 = vadd.f32 0.0, %v4820
        %v4822 = vpop.f32.mrb[0].mxu0
        %v4823 = vadd.f32 0.0, %v4822
        %v4824 = vpop.f32.mrb[0].mxu0
        %v4825 = vadd.f32 0.0, %v4824
        %4826 = vdwg.mxu0
        %4827 = vmatprep.subr.bf16.mxu0 %v3151
        %4828 = vmatpush1.bf16.msra.mxu0 %v3150
        %4829 = vmatprep.subr.bf16.mxu0 %v3282
        %4830 = vmatpush1.bf16.msra.mxu0 %v3281
        %4831 = vmatprep.subr.bf16.mxu0 %v3413
        %4832 = vmatpush1.bf16.msra.mxu0 %v3412
        %4833 = vmatprep.subr.bf16.mxu0 %v3544
        %4834 = vmatpush1.bf16.msra.mxu0 %v3543
        %4835 = vmatprep.subr.bf16.mxu0 0
        %4836 = vmatpush1.bf16.msra.mxu0 0
        %4837 = vmatprep.subr.bf16.mxu0 0
        %4838 = vmatpush1.bf16.msra.mxu0 0
        %4839 = vmatprep.subr.bf16.mxu0 0
        %4840 = vmatpush1.bf16.msra.mxu0 0
        %4841 = vmatprep.subr.bf16.mxu0 0
        %4842 = vmatpush1.bf16.msra.mxu0 0
        %4843 = vmatprep.subr.bf16.mxu0 0
        %4844 = vmatpush1.bf16.msra.mxu0 0
        %4845 = vmatprep.subr.bf16.mxu0 0
        %4846 = vmatpush1.bf16.msra.mxu0 0
        %4847 = vmatprep.subr.bf16.mxu0 0
        %4848 = vmatpush1.bf16.msra.mxu0 0
        %4849 = vmatprep.subr.bf16.mxu0 0
        %4850 = vmatpush1.bf16.msra.mxu0 0
        %4851 = vmatprep.subr.bf16.mxu0 0
        %4852 = vmatpush1.bf16.msra.mxu0 0
        %4853 = vmatprep.subr.bf16.mxu0 0
        %4854 = vmatpush1.bf16.msra.mxu0 0
        %4855 = vmatprep.subr.bf16.mxu0 0
        %4856 = vmatpush1.bf16.msra.mxu0 0
        %4857 = vmatprep.subr.bf16.mxu0 0
        %4858 = vmatpush1.bf16.msra.mxu0 0
        %4859 = vmatprep.mubr.bf16.mxu0 0
        %4860 = vmatmul.mubr.bf16.gmra.mrb[0].mxu0 %v3621
        %v4861 = vpop.f32.mrb[0].mxu0
        %v4862 = vadd.f32 0.0, %v4861
        %v4863 = vpop.f32.mrb[0].mxu0
        %v4864 = vadd.f32 0.0, %v4863
        %v4865 = vpop.f32.mrb[0].mxu0
        %v4866 = vadd.f32 0.0, %v4865
        %v4867 = vpop.f32.mrb[0].mxu0
        %v4868 = vadd.f32 0.0, %v4867
        %4869 = vdwg.mxu0
        %4870 = vmatprep.subr.bf16.mxu0 %v3153
        %4871 = vmatpush1.bf16.msra.mxu0 %v3152
        %4872 = vmatprep.subr.bf16.mxu0 %v3284
        %4873 = vmatpush1.bf16.msra.mxu0 %v3283
        %4874 = vmatprep.subr.bf16.mxu0 %v3415
        %4875 = vmatpush1.bf16.msra.mxu0 %v3414
        %4876 = vmatprep.subr.bf16.mxu0 %v3546
        %4877 = vmatpush1.bf16.msra.mxu0 %v3545
        %4878 = vmatprep.subr.bf16.mxu0 0
        %4879 = vmatpush1.bf16.msra.mxu0 0
        %4880 = vmatprep.subr.bf16.mxu0 0
        %4881 = vmatpush1.bf16.msra.mxu0 0
        %4882 = vmatprep.subr.bf16.mxu0 0
        %4883 = vmatpush1.bf16.msra.mxu0 0
        %4884 = vmatprep.subr.bf16.mxu0 0
        %4885 = vmatpush1.bf16.msra.mxu0 0
        %4886 = vmatprep.subr.bf16.mxu0 0
        %4887 = vmatpush1.bf16.msra.mxu0 0
        %4888 = vmatprep.subr.bf16.mxu0 0
        %4889 = vmatpush1.bf16.msra.mxu0 0
        %4890 = vmatprep.subr.bf16.mxu0 0
        %4891 = vmatpush1.bf16.msra.mxu0 0
        %4892 = vmatprep.subr.bf16.mxu0 0
        %4893 = vmatpush1.bf16.msra.mxu0 0
        %4894 = vmatprep.subr.bf16.mxu0 0
        %4895 = vmatpush1.bf16.msra.mxu0 0
        %4896 = vmatprep.subr.bf16.mxu0 0
        %4897 = vmatpush1.bf16.msra.mxu0 0
        %4898 = vmatprep.subr.bf16.mxu0 0
        %4899 = vmatpush1.bf16.msra.mxu0 0
        %4900 = vmatprep.subr.bf16.mxu0 0
        %4901 = vmatpush1.bf16.msra.mxu0 0
        %4902 = vmatprep.mubr.bf16.mxu0 0
        %4903 = vmatmul.mubr.bf16.gmra.mrb[0].mxu0 %v3621
        %v4904 = vpop.f32.mrb[0].mxu0
        %v4905 = vadd.f32 0.0, %v4904
        %v4906 = vpop.f32.mrb[0].mxu0
        %v4907 = vadd.f32 0.0, %v4906
        %v4908 = vpop.f32.mrb[0].mxu0
        %v4909 = vadd.f32 0.0, %v4908
        %v4910 = vpop.f32.mrb[0].mxu0
        %v4911 = vadd.f32 0.0, %v4910
        %4912 = vdwg.mxu0
        %4913 = vmatprep.subr.bf16.mxu0 %v3155
        %4914 = vmatpush1.bf16.msra.mxu0 %v3154
        %4915 = vmatprep.subr.bf16.mxu0 %v3286
        %4916 = vmatpush1.bf16.msra.mxu0 %v3285
        %4917 = vmatprep.subr.bf16.mxu0 %v3417
        %4918 = vmatpush1.bf16.msra.mxu0 %v3416
        %4919 = vmatprep.subr.bf16.mxu0 %v3548
        %4920 = vmatpush1.bf16.msra.mxu0 %v3547
        %4921 = vmatprep.subr.bf16.mxu0 0
        %4922 = vmatpush1.bf16.msra.mxu0 0
        %4923 = vmatprep.subr.bf16.mxu0 0
        %4924 = vmatpush1.bf16.msra.mxu0 0
        %4925 = vmatprep.subr.bf16.mxu0 0
        %4926 = vmatpush1.bf16.msra.mxu0 0
        %4927 = vmatprep.subr.bf16.mxu0 0
        %4928 = vmatpush1.bf16.msra.mxu0 0
        %4929 = vmatprep.subr.bf16.mxu0 0
        %4930 = vmatpush1.bf16.msra.mxu0 0
        %4931 = vmatprep.subr.bf16.mxu0 0
        %4932 = vmatpush1.bf16.msra.mxu0 0
        %4933 = vmatprep.subr.bf16.mxu0 0
        %4934 = vmatpush1.bf16.msra.mxu0 0
        %4935 = vmatprep.subr.bf16.mxu0 0
        %4936 = vmatpush1.bf16.msra.mxu0 0
        %4937 = vmatprep.subr.bf16.mxu0 0
        %4938 = vmatpush1.bf16.msra.mxu0 0
        %4939 = vmatprep.subr.bf16.mxu0 0
        %4940 = vmatpush1.bf16.msra.mxu0 0
        %4941 = vmatprep.subr.bf16.mxu0 0
        %4942 = vmatpush1.bf16.msra.mxu0 0
        %4943 = vmatprep.subr.bf16.mxu0 0
        %4944 = vmatpush1.bf16.msra.mxu0 0
        %4945 = vmatprep.mubr.bf16.mxu0 0
        %4946 = vmatmul.mubr.bf16.gmra.mrb[0].mxu0 %v3621
        %v4947 = vpop.f32.mrb[0].mxu0
        %v4948 = vadd.f32 0.0, %v4947
        %v4949 = vpop.f32.mrb[0].mxu0
        %v4950 = vadd.f32 0.0, %v4949
        %v4951 = vpop.f32.mrb[0].mxu0
        %v4952 = vadd.f32 0.0, %v4951
        %v4953 = vpop.f32.mrb[0].mxu0
        %v4954 = vadd.f32 0.0, %v4953
        %4955 = vdwg.mxu0
        %4956 = vmatprep.subr.bf16.mxu0 %v3157
        %4957 = vmatpush1.bf16.msra.mxu0 %v3156
        %4958 = vmatprep.subr.bf16.mxu0 %v3288
        %4959 = vmatpush1.bf16.msra.mxu0 %v3287
        %4960 = vmatprep.subr.bf16.mxu0 %v3419
        %4961 = vmatpush1.bf16.msra.mxu0 %v3418
        %4962 = vmatprep.subr.bf16.mxu0 %v3550
        %4963 = vmatpush1.bf16.msra.mxu0 %v3549
        %4964 = vmatprep.subr.bf16.mxu0 0
        %4965 = vmatpush1.bf16.msra.mxu0 0
        %4966 = vmatprep.subr.bf16.mxu0 0
        %4967 = vmatpush1.bf16.msra.mxu0 0
        %4968 = vmatprep.subr.bf16.mxu0 0
        %4969 = vmatpush1.bf16.msra.mxu0 0
        %4970 = vmatprep.subr.bf16.mxu0 0
        %4971 = vmatpush1.bf16.msra.mxu0 0
        %4972 = vmatprep.subr.bf16.mxu0 0
        %4973 = vmatpush1.bf16.msra.mxu0 0
        %4974 = vmatprep.subr.bf16.mxu0 0
        %4975 = vmatpush1.bf16.msra.mxu0 0
        %4976 = vmatprep.subr.bf16.mxu0 0
        %4977 = vmatpush1.bf16.msra.mxu0 0
        %4978 = vmatprep.subr.bf16.mxu0 0
        %4979 = vmatpush1.bf16.msra.mxu0 0
        %4980 = vmatprep.subr.bf16.mxu0 0
        %4981 = vmatpush1.bf16.msra.mxu0 0
        %4982 = vmatprep.subr.bf16.mxu0 0
        %4983 = vmatpush1.bf16.msra.mxu0 0
        %4984 = vmatprep.subr.bf16.mxu0 0
        %4985 = vmatpush1.bf16.msra.mxu0 0
        %4986 = vmatprep.subr.bf16.mxu0 0
        %4987 = vmatpush1.bf16.msra.mxu0 0
        %4988 = vmatprep.mubr.bf16.mxu0 0
        %4989 = vmatmul.mubr.bf16.gmra.mrb[0].mxu0 %v3621
        %v4990 = vpop.f32.mrb[0].mxu0
        %v4991 = vadd.f32 0.0, %v4990
        %v4992 = vpop.f32.mrb[0].mxu0
        %v4993 = vadd.f32 0.0, %v4992
        %v4994 = vpop.f32.mrb[0].mxu0
        %v4995 = vadd.f32 0.0, %v4994
        %v4996 = vpop.f32.mrb[0].mxu0
        %v4997 = vadd.f32 0.0, %v4996
        %4998 = vdwg.mxu0
        %4999 = vmatprep.subr.bf16.mxu0 %v3159
        %5000 = vmatpush1.bf16.msra.mxu0 %v3158
        %5001 = vmatprep.subr.bf16.mxu0 %v3290
        %5002 = vmatpush1.bf16.msra.mxu0 %v3289
        %5003 = vmatprep.subr.bf16.mxu0 %v3421
        %5004 = vmatpush1.bf16.msra.mxu0 %v3420
        %5005 = vmatprep.subr.bf16.mxu0 %v3552
        %5006 = vmatpush1.bf16.msra.mxu0 %v3551
        %5007 = vmatprep.subr.bf16.mxu0 0
        %5008 = vmatpush1.bf16.msra.mxu0 0
        %5009 = vmatprep.subr.bf16.mxu0 0
        %5010 = vmatpush1.bf16.msra.mxu0 0
        %5011 = vmatprep.subr.bf16.mxu0 0
        %5012 = vmatpush1.bf16.msra.mxu0 0
        %5013 = vmatprep.subr.bf16.mxu0 0
        %5014 = vmatpush1.bf16.msra.mxu0 0
        %5015 = vmatprep.subr.bf16.mxu0 0
        %5016 = vmatpush1.bf16.msra.mxu0 0
        %5017 = vmatprep.subr.bf16.mxu0 0
        %5018 = vmatpush1.bf16.msra.mxu0 0
        %5019 = vmatprep.subr.bf16.mxu0 0
        %5020 = vmatpush1.bf16.msra.mxu0 0
        %5021 = vmatprep.subr.bf16.mxu0 0
        %5022 = vmatpush1.bf16.msra.mxu0 0
        %5023 = vmatprep.subr.bf16.mxu0 0
        %5024 = vmatpush1.bf16.msra.mxu0 0
        %5025 = vmatprep.subr.bf16.mxu0 0
        %5026 = vmatpush1.bf16.msra.mxu0 0
        %5027 = vmatprep.subr.bf16.mxu0 0
        %5028 = vmatpush1.bf16.msra.mxu0 0
        %5029 = vmatprep.subr.bf16.mxu0 0
        %5030 = vmatpush1.bf16.msra.mxu0 0
        %5031 = vmatprep.mubr.bf16.mxu0 0
        %5032 = vmatmul.mubr.bf16.gmra.mrb[0].mxu0 %v3621
        %v5033 = vpop.f32.mrb[0].mxu0
        %v5034 = vadd.f32 0.0, %v5033
        %v5035 = vpop.f32.mrb[0].mxu0
        %v5036 = vadd.f32 0.0, %v5035
        %v5037 = vpop.f32.mrb[0].mxu0
        %v5038 = vadd.f32 0.0, %v5037
        %v5039 = vpop.f32.mrb[0].mxu0
        %v5040 = vadd.f32 0.0, %v5039
        %5041 = vdwg.mxu0
        %5042 = vmatprep.subr.bf16.mxu0 %v3161
        %5043 = vmatpush1.bf16.msra.mxu0 %v3160
        %5044 = vmatprep.subr.bf16.mxu0 %v3292
        %5045 = vmatpush1.bf16.msra.mxu0 %v3291
        %5046 = vmatprep.subr.bf16.mxu0 %v3423
        %5047 = vmatpush1.bf16.msra.mxu0 %v3422
        %5048 = vmatprep.subr.bf16.mxu0 %v3554
        %5049 = vmatpush1.bf16.msra.mxu0 %v3553
        %5050 = vmatprep.subr.bf16.mxu0 0
        %5051 = vmatpush1.bf16.msra.mxu0 0
        %5052 = vmatprep.subr.bf16.mxu0 0
        %5053 = vmatpush1.bf16.msra.mxu0 0
        %5054 = vmatprep.subr.bf16.mxu0 0
        %5055 = vmatpush1.bf16.msra.mxu0 0
        %5056 = vmatprep.subr.bf16.mxu0 0
        %5057 = vmatpush1.bf16.msra.mxu0 0
        %5058 = vmatprep.subr.bf16.mxu0 0
        %5059 = vmatpush1.bf16.msra.mxu0 0
        %5060 = vmatprep.subr.bf16.mxu0 0
        %5061 = vmatpush1.bf16.msra.mxu0 0
        %5062 = vmatprep.subr.bf16.mxu0 0
        %5063 = vmatpush1.bf16.msra.mxu0 0
        %5064 = vmatprep.subr.bf16.mxu0 0
        %5065 = vmatpush1.bf16.msra.mxu0 0
        %5066 = vmatprep.subr.bf16.mxu0 0
        %5067 = vmatpush1.bf16.msra.mxu0 0
        %5068 = vmatprep.subr.bf16.mxu0 0
        %5069 = vmatpush1.bf16.msra.mxu0 0
        %5070 = vmatprep.subr.bf16.mxu0 0
        %5071 = vmatpush1.bf16.msra.mxu0 0
        %5072 = vmatprep.subr.bf16.mxu0 0
        %5073 = vmatpush1.bf16.msra.mxu0 0
        %5074 = vmatprep.mubr.bf16.mxu0 0
        %5075 = vmatmul.mubr.bf16.gmra.mrb[0].mxu0 %v3621
        %v5076 = vpop.f32.mrb[0].mxu0
        %v5077 = vadd.f32 0.0, %v5076
        %v5078 = vpop.f32.mrb[0].mxu0
        %v5079 = vadd.f32 0.0, %v5078
        %v5080 = vpop.f32.mrb[0].mxu0
        %v5081 = vadd.f32 0.0, %v5080
        %v5082 = vpop.f32.mrb[0].mxu0
        %v5083 = vadd.f32 0.0, %v5082
        %5084 = vdwg.mxu0
        %5085 = vmatprep.subr.bf16.mxu0 %v3163
        %5086 = vmatpush1.bf16.msra.mxu0 %v3162
        %5087 = vmatprep.subr.bf16.mxu0 %v3294
        %5088 = vmatpush1.bf16.msra.mxu0 %v3293
        %5089 = vmatprep.subr.bf16.mxu0 %v3425
        %5090 = vmatpush1.bf16.msra.mxu0 %v3424
        %5091 = vmatprep.subr.bf16.mxu0 %v3556
        %5092 = vmatpush1.bf16.msra.mxu0 %v3555
        %5093 = vmatprep.subr.bf16.mxu0 0
        %5094 = vmatpush1.bf16.msra.mxu0 0
        %5095 = vmatprep.subr.bf16.mxu0 0
        %5096 = vmatpush1.bf16.msra.mxu0 0
        %5097 = vmatprep.subr.bf16.mxu0 0
        %5098 = vmatpush1.bf16.msra.mxu0 0
        %5099 = vmatprep.subr.bf16.mxu0 0
        %5100 = vmatpush1.bf16.msra.mxu0 0
        %5101 = vmatprep.subr.bf16.mxu0 0
        %5102 = vmatpush1.bf16.msra.mxu0 0
        %5103 = vmatprep.subr.bf16.mxu0 0
        %5104 = vmatpush1.bf16.msra.mxu0 0
        %5105 = vmatprep.subr.bf16.mxu0 0
        %5106 = vmatpush1.bf16.msra.mxu0 0
        %5107 = vmatprep.subr.bf16.mxu0 0
        %5108 = vmatpush1.bf16.msra.mxu0 0
        %5109 = vmatprep.subr.bf16.mxu0 0
        %5110 = vmatpush1.bf16.msra.mxu0 0
        %5111 = vmatprep.subr.bf16.mxu0 0
        %5112 = vmatpush1.bf16.msra.mxu0 0
        %5113 = vmatprep.subr.bf16.mxu0 0
        %5114 = vmatpush1.bf16.msra.mxu0 0
        %5115 = vmatprep.subr.bf16.mxu0 0
        %5116 = vmatpush1.bf16.msra.mxu0 0
        %5117 = vmatprep.mubr.bf16.mxu0 0
        %5118 = vmatmul.mubr.bf16.gmra.mrb[0].mxu0 %v3621
        %v5119 = vpop.f32.mrb[0].mxu0
        %v5120 = vadd.f32 0.0, %v5119
        %v5121 = vpop.f32.mrb[0].mxu0
        %v5122 = vadd.f32 0.0, %v5121
        %v5123 = vpop.f32.mrb[0].mxu0
        %v5124 = vadd.f32 0.0, %v5123
        %v5125 = vpop.f32.mrb[0].mxu0
        %v5126 = vadd.f32 0.0, %v5125
        %5127 = vdwg.mxu0
        %5128 = vmatprep.subr.bf16.mxu0 %v3165
        %5129 = vmatpush1.bf16.msra.mxu0 %v3164
        %5130 = vmatprep.subr.bf16.mxu0 %v3296
        %5131 = vmatpush1.bf16.msra.mxu0 %v3295
        %5132 = vmatprep.subr.bf16.mxu0 %v3427
        %5133 = vmatpush1.bf16.msra.mxu0 %v3426
        %5134 = vmatprep.subr.bf16.mxu0 %v3558
        %5135 = vmatpush1.bf16.msra.mxu0 %v3557
        %5136 = vmatprep.subr.bf16.mxu0 0
        %5137 = vmatpush1.bf16.msra.mxu0 0
        %5138 = vmatprep.subr.bf16.mxu0 0
        %5139 = vmatpush1.bf16.msra.mxu0 0
        %5140 = vmatprep.subr.bf16.mxu0 0
        %5141 = vmatpush1.bf16.msra.mxu0 0
        %5142 = vmatprep.subr.bf16.mxu0 0
        %5143 = vmatpush1.bf16.msra.mxu0 0
        %5144 = vmatprep.subr.bf16.mxu0 0
        %5145 = vmatpush1.bf16.msra.mxu0 0
        %5146 = vmatprep.subr.bf16.mxu0 0
        %5147 = vmatpush1.bf16.msra.mxu0 0
        %5148 = vmatprep.subr.bf16.mxu0 0
        %5149 = vmatpush1.bf16.msra.mxu0 0
        %5150 = vmatprep.subr.bf16.mxu0 0
        %5151 = vmatpush1.bf16.msra.mxu0 0
        %5152 = vmatprep.subr.bf16.mxu0 0
        %5153 = vmatpush1.bf16.msra.mxu0 0
        %5154 = vmatprep.subr.bf16.mxu0 0
        %5155 = vmatpush1.bf16.msra.mxu0 0
        %5156 = vmatprep.subr.bf16.mxu0 0
        %5157 = vmatpush1.bf16.msra.mxu0 0
        %5158 = vmatprep.subr.bf16.mxu0 0
        %5159 = vmatpush1.bf16.msra.mxu0 0
        %5160 = vmatprep.mubr.bf16.mxu0 0
        %5161 = vmatmul.mubr.bf16.gmra.mrb[0].mxu0 %v3621
        %v5162 = vpop.f32.mrb[0].mxu0
        %v5163 = vadd.f32 0.0, %v5162
        %v5164 = vpop.f32.mrb[0].mxu0
        %v5165 = vadd.f32 0.0, %v5164
        %v5166 = vpop.f32.mrb[0].mxu0
        %v5167 = vadd.f32 0.0, %v5166
        %v5168 = vpop.f32.mrb[0].mxu0
        %v5169 = vadd.f32 0.0, %v5168
        %5170 = vdwg.mxu0
        %5171 = vmatprep.subr.bf16.mxu0 %v3167
        %5172 = vmatpush1.bf16.msra.mxu0 %v3166
        %5173 = vmatprep.subr.bf16.mxu0 %v3298
        %5174 = vmatpush1.bf16.msra.mxu0 %v3297
        %5175 = vmatprep.subr.bf16.mxu0 %v3429
        %5176 = vmatpush1.bf16.msra.mxu0 %v3428
        %5177 = vmatprep.subr.bf16.mxu0 %v3560
        %5178 = vmatpush1.bf16.msra.mxu0 %v3559
        %5179 = vmatprep.subr.bf16.mxu0 0
        %5180 = vmatpush1.bf16.msra.mxu0 0
        %5181 = vmatprep.subr.bf16.mxu0 0
        %5182 = vmatpush1.bf16.msra.mxu0 0
        %5183 = vmatprep.subr.bf16.mxu0 0
        %5184 = vmatpush1.bf16.msra.mxu0 0
        %5185 = vmatprep.subr.bf16.mxu0 0
        %5186 = vmatpush1.bf16.msra.mxu0 0
        %5187 = vmatprep.subr.bf16.mxu0 0
        %5188 = vmatpush1.bf16.msra.mxu0 0
        %5189 = vmatprep.subr.bf16.mxu0 0
        %5190 = vmatpush1.bf16.msra.mxu0 0
        %5191 = vmatprep.subr.bf16.mxu0 0
        %5192 = vmatpush1.bf16.msra.mxu0 0
        %5193 = vmatprep.subr.bf16.mxu0 0
        %5194 = vmatpush1.bf16.msra.mxu0 0
        %5195 = vmatprep.subr.bf16.mxu0 0
        %5196 = vmatpush1.bf16.msra.mxu0 0
        %5197 = vmatprep.subr.bf16.mxu0 0
        %5198 = vmatpush1.bf16.msra.mxu0 0
        %5199 = vmatprep.subr.bf16.mxu0 0
        %5200 = vmatpush1.bf16.msra.mxu0 0
        %5201 = vmatprep.subr.bf16.mxu0 0
        %5202 = vmatpush1.bf16.msra.mxu0 0
        %5203 = vmatprep.mubr.bf16.mxu0 0
        %5204 = vmatmul.mubr.bf16.gmra.mrb[0].mxu0 %v3621
        %v5205 = vpop.f32.mrb[0].mxu0
        %v5206 = vadd.f32 0.0, %v5205
        %v5207 = vpop.f32.mrb[0].mxu0
        %v5208 = vadd.f32 0.0, %v5207
        %v5209 = vpop.f32.mrb[0].mxu0
        %v5210 = vadd.f32 0.0, %v5209
        %v5211 = vpop.f32.mrb[0].mxu0
        %v5212 = vadd.f32 0.0, %v5211
        %5213 = vdwg.mxu0
        %5214 = vmatprep.subr.bf16.mxu0 %v3169
        %5215 = vmatpush1.bf16.msra.mxu0 %v3168
        %5216 = vmatprep.subr.bf16.mxu0 %v3300
        %5217 = vmatpush1.bf16.msra.mxu0 %v3299
        %5218 = vmatprep.subr.bf16.mxu0 %v3431
        %5219 = vmatpush1.bf16.msra.mxu0 %v3430
        %5220 = vmatprep.subr.bf16.mxu0 %v3562
        %5221 = vmatpush1.bf16.msra.mxu0 %v3561
        %5222 = vmatprep.subr.bf16.mxu0 0
        %5223 = vmatpush1.bf16.msra.mxu0 0
        %5224 = vmatprep.subr.bf16.mxu0 0
        %5225 = vmatpush1.bf16.msra.mxu0 0
        %5226 = vmatprep.subr.bf16.mxu0 0
        %5227 = vmatpush1.bf16.msra.mxu0 0
        %5228 = vmatprep.subr.bf16.mxu0 0
        %5229 = vmatpush1.bf16.msra.mxu0 0
        %5230 = vmatprep.subr.bf16.mxu0 0
        %5231 = vmatpush1.bf16.msra.mxu0 0
        %5232 = vmatprep.subr.bf16.mxu0 0
        %5233 = vmatpush1.bf16.msra.mxu0 0
        %5234 = vmatprep.subr.bf16.mxu0 0
        %5235 = vmatpush1.bf16.msra.mxu0 0
        %5236 = vmatprep.subr.bf16.mxu0 0
        %5237 = vmatpush1.bf16.msra.mxu0 0
        %5238 = vmatprep.subr.bf16.mxu0 0
        %5239 = vmatpush1.bf16.msra.mxu0 0
        %5240 = vmatprep.subr.bf16.mxu0 0
        %5241 = vmatpush1.bf16.msra.mxu0 0
        %5242 = vmatprep.subr.bf16.mxu0 0
        %5243 = vmatpush1.bf16.msra.mxu0 0
        %5244 = vmatprep.subr.bf16.mxu0 0
        %5245 = vmatpush1.bf16.msra.mxu0 0
        %5246 = vmatprep.mubr.bf16.mxu0 0
        %5247 = vmatmul.mubr.bf16.gmra.mrb[0].mxu0 %v3621
        %v5248 = vpop.f32.mrb[0].mxu0
        %v5249 = vadd.f32 0.0, %v5248
        %v5250 = vpop.f32.mrb[0].mxu0
        %v5251 = vadd.f32 0.0, %v5250
        %v5252 = vpop.f32.mrb[0].mxu0
        %v5253 = vadd.f32 0.0, %v5252
        %v5254 = vpop.f32.mrb[0].mxu0
        %v5255 = vadd.f32 0.0, %v5254
        %5256 = vdwg.mxu0
        %5257 = vmatprep.subr.bf16.mxu0 %v3171
        %5258 = vmatpush1.bf16.msra.mxu0 %v3170
        %5259 = vmatprep.subr.bf16.mxu0 %v3302
        %5260 = vmatpush1.bf16.msra.mxu0 %v3301
        %5261 = vmatprep.subr.bf16.mxu0 %v3433
        %5262 = vmatpush1.bf16.msra.mxu0 %v3432
        %5263 = vmatprep.subr.bf16.mxu0 %v3564
        %5264 = vmatpush1.bf16.msra.mxu0 %v3563
        %5265 = vmatprep.subr.bf16.mxu0 0
        %5266 = vmatpush1.bf16.msra.mxu0 0
        %5267 = vmatprep.subr.bf16.mxu0 0
        %5268 = vmatpush1.bf16.msra.mxu0 0
        %5269 = vmatprep.subr.bf16.mxu0 0
        %5270 = vmatpush1.bf16.msra.mxu0 0
        %5271 = vmatprep.subr.bf16.mxu0 0
        %5272 = vmatpush1.bf16.msra.mxu0 0
        %5273 = vmatprep.subr.bf16.mxu0 0
        %5274 = vmatpush1.bf16.msra.mxu0 0
        %5275 = vmatprep.subr.bf16.mxu0 0
        %5276 = vmatpush1.bf16.msra.mxu0 0
        %5277 = vmatprep.subr.bf16.mxu0 0
        %5278 = vmatpush1.bf16.msra.mxu0 0
        %5279 = vmatprep.subr.bf16.mxu0 0
        %5280 = vmatpush1.bf16.msra.mxu0 0
        %5281 = vmatprep.subr.bf16.mxu0 0
        %5282 = vmatpush1.bf16.msra.mxu0 0
        %5283 = vmatprep.subr.bf16.mxu0 0
        %5284 = vmatpush1.bf16.msra.mxu0 0
        %5285 = vmatprep.subr.bf16.mxu0 0
        %5286 = vmatpush1.bf16.msra.mxu0 0
        %5287 = vmatprep.subr.bf16.mxu0 0
        %5288 = vmatpush1.bf16.msra.mxu0 0
        %5289 = vmatprep.mubr.bf16.mxu0 0
        %5290 = vmatmul.mubr.bf16.gmra.mrb[0].mxu0 %v3621
        %v5291 = vpop.f32.mrb[0].mxu0
        %v5292 = vadd.f32 0.0, %v5291
        %v5293 = vpop.f32.mrb[0].mxu0
        %v5294 = vadd.f32 0.0, %v5293
        %v5295 = vpop.f32.mrb[0].mxu0
        %v5296 = vadd.f32 0.0, %v5295
        %v5297 = vpop.f32.mrb[0].mxu0
        %v5298 = vadd.f32 0.0, %v5297
        %5299 = vdwg.mxu0
        %5300 = vmatprep.subr.bf16.mxu0 %v3173
        %5301 = vmatpush1.bf16.msra.mxu0 %v3172
        %5302 = vmatprep.subr.bf16.mxu0 %v3304
        %5303 = vmatpush1.bf16.msra.mxu0 %v3303
        %5304 = vmatprep.subr.bf16.mxu0 %v3435
        %5305 = vmatpush1.bf16.msra.mxu0 %v3434
        %5306 = vmatprep.subr.bf16.mxu0 %v3566
        %5307 = vmatpush1.bf16.msra.mxu0 %v3565
        %5308 = vmatprep.subr.bf16.mxu0 0
        %5309 = vmatpush1.bf16.msra.mxu0 0
        %5310 = vmatprep.subr.bf16.mxu0 0
        %5311 = vmatpush1.bf16.msra.mxu0 0
        %5312 = vmatprep.subr.bf16.mxu0 0
        %5313 = vmatpush1.bf16.msra.mxu0 0
        %5314 = vmatprep.subr.bf16.mxu0 0
        %5315 = vmatpush1.bf16.msra.mxu0 0
        %5316 = vmatprep.subr.bf16.mxu0 0
        %5317 = vmatpush1.bf16.msra.mxu0 0
        %5318 = vmatprep.subr.bf16.mxu0 0
        %5319 = vmatpush1.bf16.msra.mxu0 0
        %5320 = vmatprep.subr.bf16.mxu0 0
        %5321 = vmatpush1.bf16.msra.mxu0 0
        %5322 = vmatprep.subr.bf16.mxu0 0
        %5323 = vmatpush1.bf16.msra.mxu0 0
        %5324 = vmatprep.subr.bf16.mxu0 0
        %5325 = vmatpush1.bf16.msra.mxu0 0
        %5326 = vmatprep.subr.bf16.mxu0 0
        %5327 = vmatpush1.bf16.msra.mxu0 0
        %5328 = vmatprep.subr.bf16.mxu0 0
        %5329 = vmatpush1.bf16.msra.mxu0 0
        %5330 = vmatprep.subr.bf16.mxu0 0
        %5331 = vmatpush1.bf16.msra.mxu0 0
        %5332 = vmatprep.mubr.bf16.mxu0 0
        %5333 = vmatmul.mubr.bf16.gmra.mrb[0].mxu0 %v3621
        %v5334 = vpop.f32.mrb[0].mxu0
        %v5335 = vadd.f32 0.0, %v5334
        %v5336 = vpop.f32.mrb[0].mxu0
        %v5337 = vadd.f32 0.0, %v5336
        %v5338 = vpop.f32.mrb[0].mxu0
        %v5339 = vadd.f32 0.0, %v5338
        %v5340 = vpop.f32.mrb[0].mxu0
        %v5341 = vadd.f32 0.0, %v5340
        %5342 = vdwg.mxu0
        %5343 = vmatprep.subr.bf16.mxu0 %v3175
        %5344 = vmatpush1.bf16.msra.mxu0 %v3174
        %5345 = vmatprep.subr.bf16.mxu0 %v3306
        %5346 = vmatpush1.bf16.msra.mxu0 %v3305
        %5347 = vmatprep.subr.bf16.mxu0 %v3437
        %5348 = vmatpush1.bf16.msra.mxu0 %v3436
        %5349 = vmatprep.subr.bf16.mxu0 %v3568
        %5350 = vmatpush1.bf16.msra.mxu0 %v3567
        %5351 = vmatprep.subr.bf16.mxu0 0
        %5352 = vmatpush1.bf16.msra.mxu0 0
        %5353 = vmatprep.subr.bf16.mxu0 0
        %5354 = vmatpush1.bf16.msra.mxu0 0
        %5355 = vmatprep.subr.bf16.mxu0 0
        %5356 = vmatpush1.bf16.msra.mxu0 0
        %5357 = vmatprep.subr.bf16.mxu0 0
        %5358 = vmatpush1.bf16.msra.mxu0 0
        %5359 = vmatprep.subr.bf16.mxu0 0
        %5360 = vmatpush1.bf16.msra.mxu0 0
        %5361 = vmatprep.subr.bf16.mxu0 0
        %5362 = vmatpush1.bf16.msra.mxu0 0
        %5363 = vmatprep.subr.bf16.mxu0 0
        %5364 = vmatpush1.bf16.msra.mxu0 0
        %5365 = vmatprep.subr.bf16.mxu0 0
        %5366 = vmatpush1.bf16.msra.mxu0 0
        %5367 = vmatprep.subr.bf16.mxu0 0
        %5368 = vmatpush1.bf16.msra.mxu0 0
        %5369 = vmatprep.subr.bf16.mxu0 0
        %5370 = vmatpush1.bf16.msra.mxu0 0
        %5371 = vmatprep.subr.bf16.mxu0 0
        %5372 = vmatpush1.bf16.msra.mxu0 0
        %5373 = vmatprep.subr.bf16.mxu0 0
        %5374 = vmatpush1.bf16.msra.mxu0 0
        %5375 = vmatprep.mubr.bf16.mxu0 0
        %5376 = vmatmul.mubr.bf16.gmra.mrb[0].mxu0 %v3621
        %v5377 = vpop.f32.mrb[0].mxu0
        %v5378 = vadd.f32 0.0, %v5377
        %v5379 = vpop.f32.mrb[0].mxu0
        %v5380 = vadd.f32 0.0, %v5379
        %v5381 = vpop.f32.mrb[0].mxu0
        %v5382 = vadd.f32 0.0, %v5381
        %v5383 = vpop.f32.mrb[0].mxu0
        %v5384 = vadd.f32 0.0, %v5383
        %5385 = vdwg.mxu0
        %5386 = vmatprep.subr.bf16.mxu0 %v3177
        %5387 = vmatpush1.bf16.msra.mxu0 %v3176
        %5388 = vmatprep.subr.bf16.mxu0 %v3308
        %5389 = vmatpush1.bf16.msra.mxu0 %v3307
        %5390 = vmatprep.subr.bf16.mxu0 %v3439
        %5391 = vmatpush1.bf16.msra.mxu0 %v3438
        %5392 = vmatprep.subr.bf16.mxu0 %v3570
        %5393 = vmatpush1.bf16.msra.mxu0 %v3569
        %5394 = vmatprep.subr.bf16.mxu0 0
        %5395 = vmatpush1.bf16.msra.mxu0 0
        %5396 = vmatprep.subr.bf16.mxu0 0
        %5397 = vmatpush1.bf16.msra.mxu0 0
        %5398 = vmatprep.subr.bf16.mxu0 0
        %5399 = vmatpush1.bf16.msra.mxu0 0
        %5400 = vmatprep.subr.bf16.mxu0 0
        %5401 = vmatpush1.bf16.msra.mxu0 0
        %5402 = vmatprep.subr.bf16.mxu0 0
        %5403 = vmatpush1.bf16.msra.mxu0 0
        %5404 = vmatprep.subr.bf16.mxu0 0
        %5405 = vmatpush1.bf16.msra.mxu0 0
        %5406 = vmatprep.subr.bf16.mxu0 0
        %5407 = vmatpush1.bf16.msra.mxu0 0
        %5408 = vmatprep.subr.bf16.mxu0 0
        %5409 = vmatpush1.bf16.msra.mxu0 0
        %5410 = vmatprep.subr.bf16.mxu0 0
        %5411 = vmatpush1.bf16.msra.mxu0 0
        %5412 = vmatprep.subr.bf16.mxu0 0
        %5413 = vmatpush1.bf16.msra.mxu0 0
        %5414 = vmatprep.subr.bf16.mxu0 0
        %5415 = vmatpush1.bf16.msra.mxu0 0
        %5416 = vmatprep.subr.bf16.mxu0 0
        %5417 = vmatpush1.bf16.msra.mxu0 0
        %5418 = vmatprep.mubr.bf16.mxu0 0
        %5419 = vmatmul.mubr.bf16.gmra.mrb[0].mxu0 %v3621
        %v5420 = vpop.f32.mrb[0].mxu0
        %v5421 = vadd.f32 0.0, %v5420
        %v5422 = vpop.f32.mrb[0].mxu0
        %v5423 = vadd.f32 0.0, %v5422
        %v5424 = vpop.f32.mrb[0].mxu0
        %v5425 = vadd.f32 0.0, %v5424
        %v5426 = vpop.f32.mrb[0].mxu0
        %v5427 = vadd.f32 0.0, %v5426
        %5428 = vdwg.mxu0
        %5429 = vmatprep.subr.bf16.mxu0 %v3179
        %5430 = vmatpush1.bf16.msra.mxu0 %v3178
        %5431 = vmatprep.subr.bf16.mxu0 %v3310
        %5432 = vmatpush1.bf16.msra.mxu0 %v3309
        %5433 = vmatprep.subr.bf16.mxu0 %v3441
        %5434 = vmatpush1.bf16.msra.mxu0 %v3440
        %5435 = vmatprep.subr.bf16.mxu0 %v3572
        %5436 = vmatpush1.bf16.msra.mxu0 %v3571
        %5437 = vmatprep.subr.bf16.mxu0 0
        %5438 = vmatpush1.bf16.msra.mxu0 0
        %5439 = vmatprep.subr.bf16.mxu0 0
        %5440 = vmatpush1.bf16.msra.mxu0 0
        %5441 = vmatprep.subr.bf16.mxu0 0
        %5442 = vmatpush1.bf16.msra.mxu0 0
        %5443 = vmatprep.subr.bf16.mxu0 0
        %5444 = vmatpush1.bf16.msra.mxu0 0
        %5445 = vmatprep.subr.bf16.mxu0 0
        %5446 = vmatpush1.bf16.msra.mxu0 0
        %5447 = vmatprep.subr.bf16.mxu0 0
        %5448 = vmatpush1.bf16.msra.mxu0 0
        %5449 = vmatprep.subr.bf16.mxu0 0
        %5450 = vmatpush1.bf16.msra.mxu0 0
        %5451 = vmatprep.subr.bf16.mxu0 0
        %5452 = vmatpush1.bf16.msra.mxu0 0
        %5453 = vmatprep.subr.bf16.mxu0 0
        %5454 = vmatpush1.bf16.msra.mxu0 0
        %5455 = vmatprep.subr.bf16.mxu0 0
        %5456 = vmatpush1.bf16.msra.mxu0 0
        %5457 = vmatprep.subr.bf16.mxu0 0
        %5458 = vmatpush1.bf16.msra.mxu0 0
        %5459 = vmatprep.subr.bf16.mxu0 0
        %5460 = vmatpush1.bf16.msra.mxu0 0
        %5461 = vmatprep.mubr.bf16.mxu0 0
        %5462 = vmatmul.mubr.bf16.gmra.mrb[0].mxu0 %v3621
        %v5463 = vpop.f32.mrb[0].mxu0
        %v5464 = vadd.f32 0.0, %v5463
        %v5465 = vpop.f32.mrb[0].mxu0
        %v5466 = vadd.f32 0.0, %v5465
        %v5467 = vpop.f32.mrb[0].mxu0
        %v5468 = vadd.f32 0.0, %v5467
        %v5469 = vpop.f32.mrb[0].mxu0
        %v5470 = vadd.f32 0.0, %v5469
        %5471 = vdwg.mxu0
        %5472 = vmatprep.subr.bf16.mxu0 %v3181
        %5473 = vmatpush1.bf16.msra.mxu0 %v3180
        %5474 = vmatprep.subr.bf16.mxu0 %v3312
        %5475 = vmatpush1.bf16.msra.mxu0 %v3311
        %5476 = vmatprep.subr.bf16.mxu0 %v3443
        %5477 = vmatpush1.bf16.msra.mxu0 %v3442
        %5478 = vmatprep.subr.bf16.mxu0 %v3574
        %5479 = vmatpush1.bf16.msra.mxu0 %v3573
        %5480 = vmatprep.subr.bf16.mxu0 0
        %5481 = vmatpush1.bf16.msra.mxu0 0
        %5482 = vmatprep.subr.bf16.mxu0 0
        %5483 = vmatpush1.bf16.msra.mxu0 0
        %5484 = vmatprep.subr.bf16.mxu0 0
        %5485 = vmatpush1.bf16.msra.mxu0 0
        %5486 = vmatprep.subr.bf16.mxu0 0
        %5487 = vmatpush1.bf16.msra.mxu0 0
        %5488 = vmatprep.subr.bf16.mxu0 0
        %5489 = vmatpush1.bf16.msra.mxu0 0
        %5490 = vmatprep.subr.bf16.mxu0 0
        %5491 = vmatpush1.bf16.msra.mxu0 0
        %5492 = vmatprep.subr.bf16.mxu0 0
        %5493 = vmatpush1.bf16.msra.mxu0 0
        %5494 = vmatprep.subr.bf16.mxu0 0
        %5495 = vmatpush1.bf16.msra.mxu0 0
        %5496 = vmatprep.subr.bf16.mxu0 0
        %5497 = vmatpush1.bf16.msra.mxu0 0
        %5498 = vmatprep.subr.bf16.mxu0 0
        %5499 = vmatpush1.bf16.msra.mxu0 0
        %5500 = vmatprep.subr.bf16.mxu0 0
        %5501 = vmatpush1.bf16.msra.mxu0 0
        %5502 = vmatprep.subr.bf16.mxu0 0
        %5503 = vmatpush1.bf16.msra.mxu0 0
        %5504 = vmatprep.mubr.bf16.mxu0 0
        %5505 = vmatmul.mubr.bf16.gmra.mrb[0].mxu0 %v3621
        %v5506 = vpop.f32.mrb[0].mxu0
        %v5507 = vadd.f32 0.0, %v5506
        %v5508 = vpop.f32.mrb[0].mxu0
        %v5509 = vadd.f32 0.0, %v5508
        %v5510 = vpop.f32.mrb[0].mxu0
        %v5511 = vadd.f32 0.0, %v5510
        %v5512 = vpop.f32.mrb[0].mxu0
        %v5513 = vadd.f32 0.0, %v5512
        %5514 = vdwg.mxu0
        %5515 = vmatprep.subr.bf16.mxu0 %v3183
        %5516 = vmatpush1.bf16.msra.mxu0 %v3182
        %5517 = vmatprep.subr.bf16.mxu0 %v3314
        %5518 = vmatpush1.bf16.msra.mxu0 %v3313
        %5519 = vmatprep.subr.bf16.mxu0 %v3445
        %5520 = vmatpush1.bf16.msra.mxu0 %v3444
        %5521 = vmatprep.subr.bf16.mxu0 %v3576
        %5522 = vmatpush1.bf16.msra.mxu0 %v3575
        %5523 = vmatprep.subr.bf16.mxu0 0
        %5524 = vmatpush1.bf16.msra.mxu0 0
        %5525 = vmatprep.subr.bf16.mxu0 0
        %5526 = vmatpush1.bf16.msra.mxu0 0
        %5527 = vmatprep.subr.bf16.mxu0 0
        %5528 = vmatpush1.bf16.msra.mxu0 0
        %5529 = vmatprep.subr.bf16.mxu0 0
        %5530 = vmatpush1.bf16.msra.mxu0 0
        %5531 = vmatprep.subr.bf16.mxu0 0
        %5532 = vmatpush1.bf16.msra.mxu0 0
        %5533 = vmatprep.subr.bf16.mxu0 0
        %5534 = vmatpush1.bf16.msra.mxu0 0
        %5535 = vmatprep.subr.bf16.mxu0 0
        %5536 = vmatpush1.bf16.msra.mxu0 0
        %5537 = vmatprep.subr.bf16.mxu0 0
        %5538 = vmatpush1.bf16.msra.mxu0 0
        %5539 = vmatprep.subr.bf16.mxu0 0
        %5540 = vmatpush1.bf16.msra.mxu0 0
        %5541 = vmatprep.subr.bf16.mxu0 0
        %5542 = vmatpush1.bf16.msra.mxu0 0
        %5543 = vmatprep.subr.bf16.mxu0 0
        %5544 = vmatpush1.bf16.msra.mxu0 0
        %5545 = vmatprep.subr.bf16.mxu0 0
        %5546 = vmatpush1.bf16.msra.mxu0 0
        %5547 = vmatprep.mubr.bf16.mxu0 0
        %5548 = vmatmul.mubr.bf16.gmra.mrb[0].mxu0 %v3621
        %v5549 = vpop.f32.mrb[0].mxu0
        %v5550 = vadd.f32 0.0, %v5549
        %v5551 = vpop.f32.mrb[0].mxu0
        %v5552 = vadd.f32 0.0, %v5551
        %v5553 = vpop.f32.mrb[0].mxu0
        %v5554 = vadd.f32 0.0, %v5553
        %v5555 = vpop.f32.mrb[0].mxu0
        %v5556 = vadd.f32 0.0, %v5555
        %5557 = vdwg.mxu0
        %5558 = vmatprep.subr.bf16.mxu0 %v3185
        %5559 = vmatpush1.bf16.msra.mxu0 %v3184
        %5560 = vmatprep.subr.bf16.mxu0 %v3316
        %5561 = vmatpush1.bf16.msra.mxu0 %v3315
        %5562 = vmatprep.subr.bf16.mxu0 %v3447
        %5563 = vmatpush1.bf16.msra.mxu0 %v3446
        %5564 = vmatprep.subr.bf16.mxu0 %v3578
        %5565 = vmatpush1.bf16.msra.mxu0 %v3577
        %5566 = vmatprep.subr.bf16.mxu0 0
        %5567 = vmatpush1.bf16.msra.mxu0 0
        %5568 = vmatprep.subr.bf16.mxu0 0
        %5569 = vmatpush1.bf16.msra.mxu0 0
        %5570 = vmatprep.subr.bf16.mxu0 0
        %5571 = vmatpush1.bf16.msra.mxu0 0
        %5572 = vmatprep.subr.bf16.mxu0 0
        %5573 = vmatpush1.bf16.msra.mxu0 0
        %5574 = vmatprep.subr.bf16.mxu0 0
        %5575 = vmatpush1.bf16.msra.mxu0 0
        %5576 = vmatprep.subr.bf16.mxu0 0
        %5577 = vmatpush1.bf16.msra.mxu0 0
        %5578 = vmatprep.subr.bf16.mxu0 0
        %5579 = vmatpush1.bf16.msra.mxu0 0
        %5580 = vmatprep.subr.bf16.mxu0 0
        %5581 = vmatpush1.bf16.msra.mxu0 0
        %5582 = vmatprep.subr.bf16.mxu0 0
        %5583 = vmatpush1.bf16.msra.mxu0 0
        %5584 = vmatprep.subr.bf16.mxu0 0
        %5585 = vmatpush1.bf16.msra.mxu0 0
        %5586 = vmatprep.subr.bf16.mxu0 0
        %5587 = vmatpush1.bf16.msra.mxu0 0
        %5588 = vmatprep.subr.bf16.mxu0 0
        %5589 = vmatpush1.bf16.msra.mxu0 0
        %5590 = vmatprep.mubr.bf16.mxu0 0
        %5591 = vmatmul.mubr.bf16.gmra.mrb[0].mxu0 %v3621
        %v5592 = vpop.f32.mrb[0].mxu0
        %v5593 = vadd.f32 0.0, %v5592
        %v5594 = vpop.f32.mrb[0].mxu0
        %v5595 = vadd.f32 0.0, %v5594
        %v5596 = vpop.f32.mrb[0].mxu0
        %v5597 = vadd.f32 0.0, %v5596
        %v5598 = vpop.f32.mrb[0].mxu0
        %v5599 = vadd.f32 0.0, %v5598
        %5600 = vdwg.mxu0
        %5601 = vmatprep.subr.bf16.mxu0 %v3187
        %5602 = vmatpush1.bf16.msra.mxu0 %v3186
        %5603 = vmatprep.subr.bf16.mxu0 %v3318
        %5604 = vmatpush1.bf16.msra.mxu0 %v3317
        %5605 = vmatprep.subr.bf16.mxu0 %v3449
        %5606 = vmatpush1.bf16.msra.mxu0 %v3448
        %5607 = vmatprep.subr.bf16.mxu0 %v3580
        %5608 = vmatpush1.bf16.msra.mxu0 %v3579
        %5609 = vmatprep.subr.bf16.mxu0 0
        %5610 = vmatpush1.bf16.msra.mxu0 0
        %5611 = vmatprep.subr.bf16.mxu0 0
        %5612 = vmatpush1.bf16.msra.mxu0 0
        %5613 = vmatprep.subr.bf16.mxu0 0
        %5614 = vmatpush1.bf16.msra.mxu0 0
        %5615 = vmatprep.subr.bf16.mxu0 0
        %5616 = vmatpush1.bf16.msra.mxu0 0
        %5617 = vmatprep.subr.bf16.mxu0 0
        %5618 = vmatpush1.bf16.msra.mxu0 0
        %5619 = vmatprep.subr.bf16.mxu0 0
        %5620 = vmatpush1.bf16.msra.mxu0 0
        %5621 = vmatprep.subr.bf16.mxu0 0
        %5622 = vmatpush1.bf16.msra.mxu0 0
        %5623 = vmatprep.subr.bf16.mxu0 0
        %5624 = vmatpush1.bf16.msra.mxu0 0
        %5625 = vmatprep.subr.bf16.mxu0 0
        %5626 = vmatpush1.bf16.msra.mxu0 0
        %5627 = vmatprep.subr.bf16.mxu0 0
        %5628 = vmatpush1.bf16.msra.mxu0 0
        %5629 = vmatprep.subr.bf16.mxu0 0
        %5630 = vmatpush1.bf16.msra.mxu0 0
        %5631 = vmatprep.subr.bf16.mxu0 0
        %5632 = vmatpush1.bf16.msra.mxu0 0
        %5633 = vmatprep.mubr.bf16.mxu0 0
        %5634 = vmatmul.mubr.bf16.gmra.mrb[0].mxu0 %v3621
        %v5635 = vpop.f32.mrb[0].mxu0
        %v5636 = vadd.f32 0.0, %v5635
        %v5637 = vpop.f32.mrb[0].mxu0
        %v5638 = vadd.f32 0.0, %v5637
        %v5639 = vpop.f32.mrb[0].mxu0
        %v5640 = vadd.f32 0.0, %v5639
        %v5641 = vpop.f32.mrb[0].mxu0
        %v5642 = vadd.f32 0.0, %v5641
        %5643 = vdwg.mxu0
        %5644 = vmatprep.subr.bf16.mxu0 %v3189
        %5645 = vmatpush1.bf16.msra.mxu0 %v3188
        %5646 = vmatprep.subr.bf16.mxu0 %v3320
        %5647 = vmatpush1.bf16.msra.mxu0 %v3319
        %5648 = vmatprep.subr.bf16.mxu0 %v3451
        %5649 = vmatpush1.bf16.msra.mxu0 %v3450
        %5650 = vmatprep.subr.bf16.mxu0 %v3582
        %5651 = vmatpush1.bf16.msra.mxu0 %v3581
        %5652 = vmatprep.subr.bf16.mxu0 0
        %5653 = vmatpush1.bf16.msra.mxu0 0
        %5654 = vmatprep.subr.bf16.mxu0 0
        %5655 = vmatpush1.bf16.msra.mxu0 0
        %5656 = vmatprep.subr.bf16.mxu0 0
        %5657 = vmatpush1.bf16.msra.mxu0 0
        %5658 = vmatprep.subr.bf16.mxu0 0
        %5659 = vmatpush1.bf16.msra.mxu0 0
        %5660 = vmatprep.subr.bf16.mxu0 0
        %5661 = vmatpush1.bf16.msra.mxu0 0
        %5662 = vmatprep.subr.bf16.mxu0 0
        %5663 = vmatpush1.bf16.msra.mxu0 0
        %5664 = vmatprep.subr.bf16.mxu0 0
        %5665 = vmatpush1.bf16.msra.mxu0 0
        %5666 = vmatprep.subr.bf16.mxu0 0
        %5667 = vmatpush1.bf16.msra.mxu0 0
        %5668 = vmatprep.subr.bf16.mxu0 0
        %5669 = vmatpush1.bf16.msra.mxu0 0
        %5670 = vmatprep.subr.bf16.mxu0 0
        %5671 = vmatpush1.bf16.msra.mxu0 0
        %5672 = vmatprep.subr.bf16.mxu0 0
        %5673 = vmatpush1.bf16.msra.mxu0 0
        %5674 = vmatprep.subr.bf16.mxu0 0
        %5675 = vmatpush1.bf16.msra.mxu0 0
        %5676 = vmatprep.mubr.bf16.mxu0 0
        %5677 = vmatmul.mubr.bf16.gmra.mrb[0].mxu0 %v3621
        %v5678 = vpop.f32.mrb[0].mxu0
        %v5679 = vadd.f32 0.0, %v5678
        %v5680 = vpop.f32.mrb[0].mxu0
        %v5681 = vadd.f32 0.0, %v5680
        %v5682 = vpop.f32.mrb[0].mxu0
        %v5683 = vadd.f32 0.0, %v5682
        %v5684 = vpop.f32.mrb[0].mxu0
        %v5685 = vadd.f32 0.0, %v5684
        %5686 = vdwg.mxu0
        %5687 = vmatprep.subr.bf16.mxu0 %v3191
        %5688 = vmatpush1.bf16.msra.mxu0 %v3190
        %5689 = vmatprep.subr.bf16.mxu0 %v3322
        %5690 = vmatpush1.bf16.msra.mxu0 %v3321
        %5691 = vmatprep.subr.bf16.mxu0 %v3453
        %5692 = vmatpush1.bf16.msra.mxu0 %v3452
        %5693 = vmatprep.subr.bf16.mxu0 %v3584
        %5694 = vmatpush1.bf16.msra.mxu0 %v3583
        %5695 = vmatprep.subr.bf16.mxu0 0
        %5696 = vmatpush1.bf16.msra.mxu0 0
        %5697 = vmatprep.subr.bf16.mxu0 0
        %5698 = vmatpush1.bf16.msra.mxu0 0
        %5699 = vmatprep.subr.bf16.mxu0 0
        %5700 = vmatpush1.bf16.msra.mxu0 0
        %5701 = vmatprep.subr.bf16.mxu0 0
        %5702 = vmatpush1.bf16.msra.mxu0 0
        %5703 = vmatprep.subr.bf16.mxu0 0
        %5704 = vmatpush1.bf16.msra.mxu0 0
        %5705 = vmatprep.subr.bf16.mxu0 0
        %5706 = vmatpush1.bf16.msra.mxu0 0
        %5707 = vmatprep.subr.bf16.mxu0 0
        %5708 = vmatpush1.bf16.msra.mxu0 0
        %5709 = vmatprep.subr.bf16.mxu0 0
        %5710 = vmatpush1.bf16.msra.mxu0 0
        %5711 = vmatprep.subr.bf16.mxu0 0
        %5712 = vmatpush1.bf16.msra.mxu0 0
        %5713 = vmatprep.subr.bf16.mxu0 0
        %5714 = vmatpush1.bf16.msra.mxu0 0
        %5715 = vmatprep.subr.bf16.mxu0 0
        %5716 = vmatpush1.bf16.msra.mxu0 0
        %5717 = vmatprep.subr.bf16.mxu0 0
        %5718 = vmatpush1.bf16.msra.mxu0 0
        %5719 = vmatprep.mubr.bf16.mxu0 0
        %5720 = vmatmul.mubr.bf16.gmra.mrb[0].mxu0 %v3621
        %v5721 = vpop.f32.mrb[0].mxu0
        %v5722 = vadd.f32 0.0, %v5721
        %v5723 = vpop.f32.mrb[0].mxu0
        %v5724 = vadd.f32 0.0, %v5723
        %v5725 = vpop.f32.mrb[0].mxu0
        %v5726 = vadd.f32 0.0, %v5725
        %v5727 = vpop.f32.mrb[0].mxu0
        %v5728 = vadd.f32 0.0, %v5727
        %5729 = vdwg.mxu0
        %5730 = vmatprep.subr.bf16.mxu0 %v3193
        %5731 = vmatpush1.bf16.msra.mxu0 %v3192
        %5732 = vmatprep.subr.bf16.mxu0 %v3324
        %5733 = vmatpush1.bf16.msra.mxu0 %v3323
        %5734 = vmatprep.subr.bf16.mxu0 %v3455
        %5735 = vmatpush1.bf16.msra.mxu0 %v3454
        %5736 = vmatprep.subr.bf16.mxu0 %v3586
        %5737 = vmatpush1.bf16.msra.mxu0 %v3585
        %5738 = vmatprep.subr.bf16.mxu0 0
        %5739 = vmatpush1.bf16.msra.mxu0 0
        %5740 = vmatprep.subr.bf16.mxu0 0
        %5741 = vmatpush1.bf16.msra.mxu0 0
        %5742 = vmatprep.subr.bf16.mxu0 0
        %5743 = vmatpush1.bf16.msra.mxu0 0
        %5744 = vmatprep.subr.bf16.mxu0 0
        %5745 = vmatpush1.bf16.msra.mxu0 0
        %5746 = vmatprep.subr.bf16.mxu0 0
        %5747 = vmatpush1.bf16.msra.mxu0 0
        %5748 = vmatprep.subr.bf16.mxu0 0
        %5749 = vmatpush1.bf16.msra.mxu0 0
        %5750 = vmatprep.subr.bf16.mxu0 0
        %5751 = vmatpush1.bf16.msra.mxu0 0
        %5752 = vmatprep.subr.bf16.mxu0 0
        %5753 = vmatpush1.bf16.msra.mxu0 0
        %5754 = vmatprep.subr.bf16.mxu0 0
        %5755 = vmatpush1.bf16.msra.mxu0 0
        %5756 = vmatprep.subr.bf16.mxu0 0
        %5757 = vmatpush1.bf16.msra.mxu0 0
        %5758 = vmatprep.subr.bf16.mxu0 0
        %5759 = vmatpush1.bf16.msra.mxu0 0
        %5760 = vmatprep.subr.bf16.mxu0 0
        %5761 = vmatpush1.bf16.msra.mxu0 0
        %5762 = vmatprep.mubr.bf16.mxu0 0
        %5763 = vmatmul.mubr.bf16.gmra.mrb[0].mxu0 %v3621
        %v5764 = vpop.f32.mrb[0].mxu0
        %v5765 = vadd.f32 0.0, %v5764
        %v5766 = vpop.f32.mrb[0].mxu0
        %v5767 = vadd.f32 0.0, %v5766
        %v5768 = vpop.f32.mrb[0].mxu0
        %v5769 = vadd.f32 0.0, %v5768
        %v5770 = vpop.f32.mrb[0].mxu0
        %v5771 = vadd.f32 0.0, %v5770
        %5772 = vdwg.mxu0
        %5773 = vmatprep.subr.bf16.mxu0 %v3195
        %5774 = vmatpush1.bf16.msra.mxu0 %v3194
        %5775 = vmatprep.subr.bf16.mxu0 %v3326
        %5776 = vmatpush1.bf16.msra.mxu0 %v3325
        %5777 = vmatprep.subr.bf16.mxu0 %v3457
        %5778 = vmatpush1.bf16.msra.mxu0 %v3456
        %5779 = vmatprep.subr.bf16.mxu0 %v3588
        %5780 = vmatpush1.bf16.msra.mxu0 %v3587
        %5781 = vmatprep.subr.bf16.mxu0 0
        %5782 = vmatpush1.bf16.msra.mxu0 0
        %5783 = vmatprep.subr.bf16.mxu0 0
        %5784 = vmatpush1.bf16.msra.mxu0 0
        %5785 = vmatprep.subr.bf16.mxu0 0
        %5786 = vmatpush1.bf16.msra.mxu0 0
        %5787 = vmatprep.subr.bf16.mxu0 0
        %5788 = vmatpush1.bf16.msra.mxu0 0
        %5789 = vmatprep.subr.bf16.mxu0 0
        %5790 = vmatpush1.bf16.msra.mxu0 0
        %5791 = vmatprep.subr.bf16.mxu0 0
        %5792 = vmatpush1.bf16.msra.mxu0 0
        %5793 = vmatprep.subr.bf16.mxu0 0
        %5794 = vmatpush1.bf16.msra.mxu0 0
        %5795 = vmatprep.subr.bf16.mxu0 0
        %5796 = vmatpush1.bf16.msra.mxu0 0
        %5797 = vmatprep.subr.bf16.mxu0 0
        %5798 = vmatpush1.bf16.msra.mxu0 0
        %5799 = vmatprep.subr.bf16.mxu0 0
        %5800 = vmatpush1.bf16.msra.mxu0 0
        %5801 = vmatprep.subr.bf16.mxu0 0
        %5802 = vmatpush1.bf16.msra.mxu0 0
        %5803 = vmatprep.subr.bf16.mxu0 0
        %5804 = vmatpush1.bf16.msra.mxu0 0
        %5805 = vmatprep.mubr.bf16.mxu0 0
        %5806 = vmatmul.mubr.bf16.gmra.mrb[0].mxu0 %v3621
        %v5807 = vpop.f32.mrb[0].mxu0
        %v5808 = vadd.f32 0.0, %v5807
        %v5809 = vpop.f32.mrb[0].mxu0
        %v5810 = vadd.f32 0.0, %v5809
        %v5811 = vpop.f32.mrb[0].mxu0
        %v5812 = vadd.f32 0.0, %v5811
        %v5813 = vpop.f32.mrb[0].mxu0
        %v5814 = vadd.f32 0.0, %v5813
        %5815 = vdwg.mxu0
        %5816 = vmatprep.subr.bf16.mxu0 %v3197
        %5817 = vmatpush1.bf16.msra.mxu0 %v3196
        %5818 = vmatprep.subr.bf16.mxu0 %v3328
        %5819 = vmatpush1.bf16.msra.mxu0 %v3327
        %5820 = vmatprep.subr.bf16.mxu0 %v3459
        %5821 = vmatpush1.bf16.msra.mxu0 %v3458
        %5822 = vmatprep.subr.bf16.mxu0 %v3590
        %5823 = vmatpush1.bf16.msra.mxu0 %v3589
        %5824 = vmatprep.subr.bf16.mxu0 0
        %5825 = vmatpush1.bf16.msra.mxu0 0
        %5826 = vmatprep.subr.bf16.mxu0 0
        %5827 = vmatpush1.bf16.msra.mxu0 0
        %5828 = vmatprep.subr.bf16.mxu0 0
        %5829 = vmatpush1.bf16.msra.mxu0 0
        %5830 = vmatprep.subr.bf16.mxu0 0
        %5831 = vmatpush1.bf16.msra.mxu0 0
        %5832 = vmatprep.subr.bf16.mxu0 0
        %5833 = vmatpush1.bf16.msra.mxu0 0
        %5834 = vmatprep.subr.bf16.mxu0 0
        %5835 = vmatpush1.bf16.msra.mxu0 0
        %5836 = vmatprep.subr.bf16.mxu0 0
        %5837 = vmatpush1.bf16.msra.mxu0 0
        %5838 = vmatprep.subr.bf16.mxu0 0
        %5839 = vmatpush1.bf16.msra.mxu0 0
        %5840 = vmatprep.subr.bf16.mxu0 0
        %5841 = vmatpush1.bf16.msra.mxu0 0
        %5842 = vmatprep.subr.bf16.mxu0 0
        %5843 = vmatpush1.bf16.msra.mxu0 0
        %5844 = vmatprep.subr.bf16.mxu0 0
        %5845 = vmatpush1.bf16.msra.mxu0 0
        %5846 = vmatprep.subr.bf16.mxu0 0
        %5847 = vmatpush1.bf16.msra.mxu0 0
        %5848 = vmatprep.mubr.bf16.mxu0 0
        %5849 = vmatmul.mubr.bf16.gmra.mrb[0].mxu0 %v3621
        %v5850 = vpop.f32.mrb[0].mxu0
        %v5851 = vadd.f32 0.0, %v5850
        %v5852 = vpop.f32.mrb[0].mxu0
        %v5853 = vadd.f32 0.0, %v5852
        %v5854 = vpop.f32.mrb[0].mxu0
        %v5855 = vadd.f32 0.0, %v5854
        %v5856 = vpop.f32.mrb[0].mxu0
        %v5857 = vadd.f32 0.0, %v5856
        %5858 = vdwg.mxu0
        %5859 = vmatprep.subr.bf16.mxu0 %v3199
        %5860 = vmatpush1.bf16.msra.mxu0 %v3198
        %5861 = vmatprep.subr.bf16.mxu0 %v3330
        %5862 = vmatpush1.bf16.msra.mxu0 %v3329
        %5863 = vmatprep.subr.bf16.mxu0 %v3461
        %5864 = vmatpush1.bf16.msra.mxu0 %v3460
        %5865 = vmatprep.subr.bf16.mxu0 %v3592
        %5866 = vmatpush1.bf16.msra.mxu0 %v3591
        %5867 = vmatprep.subr.bf16.mxu0 0
        %5868 = vmatpush1.bf16.msra.mxu0 0
        %5869 = vmatprep.subr.bf16.mxu0 0
        %5870 = vmatpush1.bf16.msra.mxu0 0
        %5871 = vmatprep.subr.bf16.mxu0 0
        %5872 = vmatpush1.bf16.msra.mxu0 0
        %5873 = vmatprep.subr.bf16.mxu0 0
        %5874 = vmatpush1.bf16.msra.mxu0 0
        %5875 = vmatprep.subr.bf16.mxu0 0
        %5876 = vmatpush1.bf16.msra.mxu0 0
        %5877 = vmatprep.subr.bf16.mxu0 0
        %5878 = vmatpush1.bf16.msra.mxu0 0
        %5879 = vmatprep.subr.bf16.mxu0 0
        %5880 = vmatpush1.bf16.msra.mxu0 0
        %5881 = vmatprep.subr.bf16.mxu0 0
        %5882 = vmatpush1.bf16.msra.mxu0 0
        %5883 = vmatprep.subr.bf16.mxu0 0
        %5884 = vmatpush1.bf16.msra.mxu0 0
        %5885 = vmatprep.subr.bf16.mxu0 0
        %5886 = vmatpush1.bf16.msra.mxu0 0
        %5887 = vmatprep.subr.bf16.mxu0 0
        %5888 = vmatpush1.bf16.msra.mxu0 0
        %5889 = vmatprep.subr.bf16.mxu0 0
        %5890 = vmatpush1.bf16.msra.mxu0 0
        %5891 = vmatprep.mubr.bf16.mxu0 0
        %5892 = vmatmul.mubr.bf16.gmra.mrb[0].mxu0 %v3621
        %v5893 = vpop.f32.mrb[0].mxu0
        %v5894 = vadd.f32 0.0, %v5893
        %v5895 = vpop.f32.mrb[0].mxu0
        %v5896 = vadd.f32 0.0, %v5895
        %v5897 = vpop.f32.mrb[0].mxu0
        %v5898 = vadd.f32 0.0, %v5897
        %v5899 = vpop.f32.mrb[0].mxu0
        %v5900 = vadd.f32 0.0, %v5899
        %5901 = vdwg.mxu0
        %5902 = vmatprep.subr.bf16.mxu0 %v3201
        %5903 = vmatpush1.bf16.msra.mxu0 %v3200
        %5904 = vmatprep.subr.bf16.mxu0 %v3332
        %5905 = vmatpush1.bf16.msra.mxu0 %v3331
        %5906 = vmatprep.subr.bf16.mxu0 %v3463
        %5907 = vmatpush1.bf16.msra.mxu0 %v3462
        %5908 = vmatprep.subr.bf16.mxu0 %v3594
        %5909 = vmatpush1.bf16.msra.mxu0 %v3593
        %5910 = vmatprep.subr.bf16.mxu0 0
        %5911 = vmatpush1.bf16.msra.mxu0 0
        %5912 = vmatprep.subr.bf16.mxu0 0
        %5913 = vmatpush1.bf16.msra.mxu0 0
        %5914 = vmatprep.subr.bf16.mxu0 0
        %5915 = vmatpush1.bf16.msra.mxu0 0
        %5916 = vmatprep.subr.bf16.mxu0 0
        %5917 = vmatpush1.bf16.msra.mxu0 0
        %5918 = vmatprep.subr.bf16.mxu0 0
        %5919 = vmatpush1.bf16.msra.mxu0 0
        %5920 = vmatprep.subr.bf16.mxu0 0
        %5921 = vmatpush1.bf16.msra.mxu0 0
        %5922 = vmatprep.subr.bf16.mxu0 0
        %5923 = vmatpush1.bf16.msra.mxu0 0
        %5924 = vmatprep.subr.bf16.mxu0 0
        %5925 = vmatpush1.bf16.msra.mxu0 0
        %5926 = vmatprep.subr.bf16.mxu0 0
        %5927 = vmatpush1.bf16.msra.mxu0 0
        %5928 = vmatprep.subr.bf16.mxu0 0
        %5929 = vmatpush1.bf16.msra.mxu0 0
        %5930 = vmatprep.subr.bf16.mxu0 0
        %5931 = vmatpush1.bf16.msra.mxu0 0
        %5932 = vmatprep.subr.bf16.mxu0 0
        %5933 = vmatpush1.bf16.msra.mxu0 0
        %5934 = vmatprep.mubr.bf16.mxu0 0
        %5935 = vmatmul.mubr.bf16.gmra.mrb[0].mxu0 %v3621
        %v5936 = vpop.f32.mrb[0].mxu0
        %v5937 = vadd.f32 0.0, %v5936
        %v5938 = vpop.f32.mrb[0].mxu0
        %v5939 = vadd.f32 0.0, %v5938
        %v5940 = vpop.f32.mrb[0].mxu0
        %v5941 = vadd.f32 0.0, %v5940
        %v5942 = vpop.f32.mrb[0].mxu0
        %v5943 = vadd.f32 0.0, %v5942
        %5944 = vdwg.mxu0
        %5945 = vmatprep.subr.bf16.mxu0 %v3203
        %5946 = vmatpush1.bf16.msra.mxu0 %v3202
        %5947 = vmatprep.subr.bf16.mxu0 %v3334
        %5948 = vmatpush1.bf16.msra.mxu0 %v3333
        %5949 = vmatprep.subr.bf16.mxu0 %v3465
        %5950 = vmatpush1.bf16.msra.mxu0 %v3464
        %5951 = vmatprep.subr.bf16.mxu0 %v3596
        %5952 = vmatpush1.bf16.msra.mxu0 %v3595
        %5953 = vmatprep.subr.bf16.mxu0 0
        %5954 = vmatpush1.bf16.msra.mxu0 0
        %5955 = vmatprep.subr.bf16.mxu0 0
        %5956 = vmatpush1.bf16.msra.mxu0 0
        %5957 = vmatprep.subr.bf16.mxu0 0
        %5958 = vmatpush1.bf16.msra.mxu0 0
        %5959 = vmatprep.subr.bf16.mxu0 0
        %5960 = vmatpush1.bf16.msra.mxu0 0
        %5961 = vmatprep.subr.bf16.mxu0 0
        %5962 = vmatpush1.bf16.msra.mxu0 0
        %5963 = vmatprep.subr.bf16.mxu0 0
        %5964 = vmatpush1.bf16.msra.mxu0 0
        %5965 = vmatprep.subr.bf16.mxu0 0
        %5966 = vmatpush1.bf16.msra.mxu0 0
        %5967 = vmatprep.subr.bf16.mxu0 0
        %5968 = vmatpush1.bf16.msra.mxu0 0
        %5969 = vmatprep.subr.bf16.mxu0 0
        %5970 = vmatpush1.bf16.msra.mxu0 0
        %5971 = vmatprep.subr.bf16.mxu0 0
        %5972 = vmatpush1.bf16.msra.mxu0 0
        %5973 = vmatprep.subr.bf16.mxu0 0
        %5974 = vmatpush1.bf16.msra.mxu0 0
        %5975 = vmatprep.subr.bf16.mxu0 0
        %5976 = vmatpush1.bf16.msra.mxu0 0
        %5977 = vmatprep.mubr.bf16.mxu0 0
        %5978 = vmatmul.mubr.bf16.gmra.mrb[0].mxu0 %v3621
        %v5979 = vpop.f32.mrb[0].mxu0
        %v5980 = vadd.f32 0.0, %v5979
        %v5981 = vpop.f32.mrb[0].mxu0
        %v5982 = vadd.f32 0.0, %v5981
        %v5983 = vpop.f32.mrb[0].mxu0
        %v5984 = vadd.f32 0.0, %v5983
        %v5985 = vpop.f32.mrb[0].mxu0
        %v5986 = vadd.f32 0.0, %v5985
        %5987 = vdwg.mxu0
        %5988 = vmatprep.subr.bf16.mxu0 %v3205
        %5989 = vmatpush1.bf16.msra.mxu0 %v3204
        %5990 = vmatprep.subr.bf16.mxu0 %v3336
        %5991 = vmatpush1.bf16.msra.mxu0 %v3335
        %5992 = vmatprep.subr.bf16.mxu0 %v3467
        %5993 = vmatpush1.bf16.msra.mxu0 %v3466
        %5994 = vmatprep.subr.bf16.mxu0 %v3598
        %5995 = vmatpush1.bf16.msra.mxu0 %v3597
        %5996 = vmatprep.subr.bf16.mxu0 0
        %5997 = vmatpush1.bf16.msra.mxu0 0
        %5998 = vmatprep.subr.bf16.mxu0 0
        %5999 = vmatpush1.bf16.msra.mxu0 0
        %6000 = vmatprep.subr.bf16.mxu0 0
        %6001 = vmatpush1.bf16.msra.mxu0 0
        %6002 = vmatprep.subr.bf16.mxu0 0
        %6003 = vmatpush1.bf16.msra.mxu0 0
        %6004 = vmatprep.subr.bf16.mxu0 0
        %6005 = vmatpush1.bf16.msra.mxu0 0
        %6006 = vmatprep.subr.bf16.mxu0 0
        %6007 = vmatpush1.bf16.msra.mxu0 0
        %6008 = vmatprep.subr.bf16.mxu0 0
        %6009 = vmatpush1.bf16.msra.mxu0 0
        %6010 = vmatprep.subr.bf16.mxu0 0
        %6011 = vmatpush1.bf16.msra.mxu0 0
        %6012 = vmatprep.subr.bf16.mxu0 0
        %6013 = vmatpush1.bf16.msra.mxu0 0
        %6014 = vmatprep.subr.bf16.mxu0 0
        %6015 = vmatpush1.bf16.msra.mxu0 0
        %6016 = vmatprep.subr.bf16.mxu0 0
        %6017 = vmatpush1.bf16.msra.mxu0 0
        %6018 = vmatprep.subr.bf16.mxu0 0
        %6019 = vmatpush1.bf16.msra.mxu0 0
        %6020 = vmatprep.mubr.bf16.mxu0 0
        %6021 = vmatmul.mubr.bf16.gmra.mrb[0].mxu0 %v3621
        %v6022 = vpop.f32.mrb[0].mxu0
        %v6023 = vadd.f32 0.0, %v6022
        %v6024 = vpop.f32.mrb[0].mxu0
        %v6025 = vadd.f32 0.0, %v6024
        %v6026 = vpop.f32.mrb[0].mxu0
        %v6027 = vadd.f32 0.0, %v6026
        %v6028 = vpop.f32.mrb[0].mxu0
        %v6029 = vadd.f32 0.0, %v6028
        %6030 = vdwg.mxu0
        %6031 = vmatprep.subr.bf16.mxu0 %v3207
        %6032 = vmatpush1.bf16.msra.mxu0 %v3206
        %6033 = vmatprep.subr.bf16.mxu0 %v3338
        %6034 = vmatpush1.bf16.msra.mxu0 %v3337
        %6035 = vmatprep.subr.bf16.mxu0 %v3469
        %6036 = vmatpush1.bf16.msra.mxu0 %v3468
        %6037 = vmatprep.subr.bf16.mxu0 %v3600
        %6038 = vmatpush1.bf16.msra.mxu0 %v3599
        %6039 = vmatprep.subr.bf16.mxu0 0
        %6040 = vmatpush1.bf16.msra.mxu0 0
        %6041 = vmatprep.subr.bf16.mxu0 0
        %6042 = vmatpush1.bf16.msra.mxu0 0
        %6043 = vmatprep.subr.bf16.mxu0 0
        %6044 = vmatpush1.bf16.msra.mxu0 0
        %6045 = vmatprep.subr.bf16.mxu0 0
        %6046 = vmatpush1.bf16.msra.mxu0 0
        %6047 = vmatprep.subr.bf16.mxu0 0
        %6048 = vmatpush1.bf16.msra.mxu0 0
        %6049 = vmatprep.subr.bf16.mxu0 0
        %6050 = vmatpush1.bf16.msra.mxu0 0
        %6051 = vmatprep.subr.bf16.mxu0 0
        %6052 = vmatpush1.bf16.msra.mxu0 0
        %6053 = vmatprep.subr.bf16.mxu0 0
        %6054 = vmatpush1.bf16.msra.mxu0 0
        %6055 = vmatprep.subr.bf16.mxu0 0
        %6056 = vmatpush1.bf16.msra.mxu0 0
        %6057 = vmatprep.subr.bf16.mxu0 0
        %6058 = vmatpush1.bf16.msra.mxu0 0
        %6059 = vmatprep.subr.bf16.mxu0 0
        %6060 = vmatpush1.bf16.msra.mxu0 0
        %6061 = vmatprep.subr.bf16.mxu0 0
        %6062 = vmatpush1.bf16.msra.mxu0 0
        %6063 = vmatprep.mubr.bf16.mxu0 0
        %6064 = vmatmul.mubr.bf16.gmra.mrb[0].mxu0 %v3621
        %v6065 = vpop.f32.mrb[0].mxu0
        %v6066 = vadd.f32 0.0, %v6065
        %v6067 = vpop.f32.mrb[0].mxu0
        %v6068 = vadd.f32 0.0, %v6067
        %v6069 = vpop.f32.mrb[0].mxu0
        %v6070 = vadd.f32 0.0, %v6069
        %v6071 = vpop.f32.mrb[0].mxu0
        %v6072 = vadd.f32 0.0, %v6071
        %6073 = vdwg.mxu0
        %6074 = vmatprep.subr.bf16.mxu0 %v3209
        %6075 = vmatpush1.bf16.msra.mxu0 %v3208
        %6076 = vmatprep.subr.bf16.mxu0 %v3340
        %6077 = vmatpush1.bf16.msra.mxu0 %v3339
        %6078 = vmatprep.subr.bf16.mxu0 %v3471
        %6079 = vmatpush1.bf16.msra.mxu0 %v3470
        %6080 = vmatprep.subr.bf16.mxu0 %v3602
        %6081 = vmatpush1.bf16.msra.mxu0 %v3601
        %6082 = vmatprep.subr.bf16.mxu0 0
        %6083 = vmatpush1.bf16.msra.mxu0 0
        %6084 = vmatprep.subr.bf16.mxu0 0
        %6085 = vmatpush1.bf16.msra.mxu0 0
        %6086 = vmatprep.subr.bf16.mxu0 0
        %6087 = vmatpush1.bf16.msra.mxu0 0
        %6088 = vmatprep.subr.bf16.mxu0 0
        %6089 = vmatpush1.bf16.msra.mxu0 0
        %6090 = vmatprep.subr.bf16.mxu0 0
        %6091 = vmatpush1.bf16.msra.mxu0 0
        %6092 = vmatprep.subr.bf16.mxu0 0
        %6093 = vmatpush1.bf16.msra.mxu0 0
        %6094 = vmatprep.subr.bf16.mxu0 0
        %6095 = vmatpush1.bf16.msra.mxu0 0
        %6096 = vmatprep.subr.bf16.mxu0 0
        %6097 = vmatpush1.bf16.msra.mxu0 0
        %6098 = vmatprep.subr.bf16.mxu0 0
        %6099 = vmatpush1.bf16.msra.mxu0 0
        %6100 = vmatprep.subr.bf16.mxu0 0
        %6101 = vmatpush1.bf16.msra.mxu0 0
        %6102 = vmatprep.subr.bf16.mxu0 0
        %6103 = vmatpush1.bf16.msra.mxu0 0
        %6104 = vmatprep.subr.bf16.mxu0 0
        %6105 = vmatpush1.bf16.msra.mxu0 0
        %6106 = vmatprep.mubr.bf16.mxu0 0
        %6107 = vmatmul.mubr.bf16.gmra.mrb[0].mxu0 %v3621
        %v6108 = vpop.f32.mrb[0].mxu0
        %v6109 = vadd.f32 0.0, %v6108
        %v6110 = vpop.f32.mrb[0].mxu0
        %v6111 = vadd.f32 0.0, %v6110
        %v6112 = vpop.f32.mrb[0].mxu0
        %v6113 = vadd.f32 0.0, %v6112
        %v6114 = vpop.f32.mrb[0].mxu0
        %v6115 = vadd.f32 0.0, %v6114
        %6116 = vdwg.mxu0
        %6117 = vmatprep.subr.bf16.mxu0 %v3211
        %6118 = vmatpush1.bf16.msra.mxu0 %v3210
        %6119 = vmatprep.subr.bf16.mxu0 %v3342
        %6120 = vmatpush1.bf16.msra.mxu0 %v3341
        %6121 = vmatprep.subr.bf16.mxu0 %v3473
        %6122 = vmatpush1.bf16.msra.mxu0 %v3472
        %6123 = vmatprep.subr.bf16.mxu0 %v3604
        %6124 = vmatpush1.bf16.msra.mxu0 %v3603
        %6125 = vmatprep.subr.bf16.mxu0 0
        %6126 = vmatpush1.bf16.msra.mxu0 0
        %6127 = vmatprep.subr.bf16.mxu0 0
        %6128 = vmatpush1.bf16.msra.mxu0 0
        %6129 = vmatprep.subr.bf16.mxu0 0
        %6130 = vmatpush1.bf16.msra.mxu0 0
        %6131 = vmatprep.subr.bf16.mxu0 0
        %6132 = vmatpush1.bf16.msra.mxu0 0
        %6133 = vmatprep.subr.bf16.mxu0 0
        %6134 = vmatpush1.bf16.msra.mxu0 0
        %6135 = vmatprep.subr.bf16.mxu0 0
        %6136 = vmatpush1.bf16.msra.mxu0 0
        %6137 = vmatprep.subr.bf16.mxu0 0
        %6138 = vmatpush1.bf16.msra.mxu0 0
        %6139 = vmatprep.subr.bf16.mxu0 0
        %6140 = vmatpush1.bf16.msra.mxu0 0
        %6141 = vmatprep.subr.bf16.mxu0 0
        %6142 = vmatpush1.bf16.msra.mxu0 0
        %6143 = vmatprep.subr.bf16.mxu0 0
        %6144 = vmatpush1.bf16.msra.mxu0 0
        %6145 = vmatprep.subr.bf16.mxu0 0
        %6146 = vmatpush1.bf16.msra.mxu0 0
        %6147 = vmatprep.subr.bf16.mxu0 0
        %6148 = vmatpush1.bf16.msra.mxu0 0
        %6149 = vmatprep.mubr.bf16.mxu0 0
        %6150 = vmatmul.mubr.bf16.gmra.mrb[0].mxu0 %v3621
        %v6151 = vpop.f32.mrb[0].mxu0
        %v6152 = vadd.f32 0.0, %v6151
        %v6153 = vpop.f32.mrb[0].mxu0
        %v6154 = vadd.f32 0.0, %v6153
        %v6155 = vpop.f32.mrb[0].mxu0
        %v6156 = vadd.f32 0.0, %v6155
        %v6157 = vpop.f32.mrb[0].mxu0
        %v6158 = vadd.f32 0.0, %v6157
        %6159 = vdwg.mxu0
        %6160 = vmatprep.subr.bf16.mxu0 %v3213
        %6161 = vmatpush1.bf16.msra.mxu0 %v3212
        %6162 = vmatprep.subr.bf16.mxu0 %v3344
        %6163 = vmatpush1.bf16.msra.mxu0 %v3343
        %6164 = vmatprep.subr.bf16.mxu0 %v3475
        %6165 = vmatpush1.bf16.msra.mxu0 %v3474
        %6166 = vmatprep.subr.bf16.mxu0 %v3606
        %6167 = vmatpush1.bf16.msra.mxu0 %v3605
        %6168 = vmatprep.subr.bf16.mxu0 0
        %6169 = vmatpush1.bf16.msra.mxu0 0
        %6170 = vmatprep.subr.bf16.mxu0 0
        %6171 = vmatpush1.bf16.msra.mxu0 0
        %6172 = vmatprep.subr.bf16.mxu0 0
        %6173 = vmatpush1.bf16.msra.mxu0 0
        %6174 = vmatprep.subr.bf16.mxu0 0
        %6175 = vmatpush1.bf16.msra.mxu0 0
        %6176 = vmatprep.subr.bf16.mxu0 0
        %6177 = vmatpush1.bf16.msra.mxu0 0
        %6178 = vmatprep.subr.bf16.mxu0 0
        %6179 = vmatpush1.bf16.msra.mxu0 0
        %6180 = vmatprep.subr.bf16.mxu0 0
        %6181 = vmatpush1.bf16.msra.mxu0 0
        %6182 = vmatprep.subr.bf16.mxu0 0
        %6183 = vmatpush1.bf16.msra.mxu0 0
        %6184 = vmatprep.subr.bf16.mxu0 0
        %6185 = vmatpush1.bf16.msra.mxu0 0
        %6186 = vmatprep.subr.bf16.mxu0 0
        %6187 = vmatpush1.bf16.msra.mxu0 0
        %6188 = vmatprep.subr.bf16.mxu0 0
        %6189 = vmatpush1.bf16.msra.mxu0 0
        %6190 = vmatprep.subr.bf16.mxu0 0
        %6191 = vmatpush1.bf16.msra.mxu0 0
        %6192 = vmatprep.mubr.bf16.mxu0 0
        %6193 = vmatmul.mubr.bf16.gmra.mrb[0].mxu0 %v3621
        %v6194 = vpop.f32.mrb[0].mxu0
        %v6195 = vadd.f32 0.0, %v6194
        %v6196 = vpop.f32.mrb[0].mxu0
        %v6197 = vadd.f32 0.0, %v6196
        %v6198 = vpop.f32.mrb[0].mxu0
        %v6199 = vadd.f32 0.0, %v6198
        %v6200 = vpop.f32.mrb[0].mxu0
        %v6201 = vadd.f32 0.0, %v6200
        %6202 = vdwg.mxu0
        %6203 = vmatprep.subr.bf16.mxu0 %v3215
        %6204 = vmatpush1.bf16.msra.mxu0 %v3214
        %6205 = vmatprep.subr.bf16.mxu0 %v3346
        %6206 = vmatpush1.bf16.msra.mxu0 %v3345
        %6207 = vmatprep.subr.bf16.mxu0 %v3477
        %6208 = vmatpush1.bf16.msra.mxu0 %v3476
        %6209 = vmatprep.subr.bf16.mxu0 %v3608
        %6210 = vmatpush1.bf16.msra.mxu0 %v3607
        %6211 = vmatprep.subr.bf16.mxu0 0
        %6212 = vmatpush1.bf16.msra.mxu0 0
        %6213 = vmatprep.subr.bf16.mxu0 0
        %6214 = vmatpush1.bf16.msra.mxu0 0
        %6215 = vmatprep.subr.bf16.mxu0 0
        %6216 = vmatpush1.bf16.msra.mxu0 0
        %6217 = vmatprep.subr.bf16.mxu0 0
        %6218 = vmatpush1.bf16.msra.mxu0 0
        %6219 = vmatprep.subr.bf16.mxu0 0
        %6220 = vmatpush1.bf16.msra.mxu0 0
        %6221 = vmatprep.subr.bf16.mxu0 0
        %6222 = vmatpush1.bf16.msra.mxu0 0
        %6223 = vmatprep.subr.bf16.mxu0 0
        %6224 = vmatpush1.bf16.msra.mxu0 0
        %6225 = vmatprep.subr.bf16.mxu0 0
        %6226 = vmatpush1.bf16.msra.mxu0 0
        %6227 = vmatprep.subr.bf16.mxu0 0
        %6228 = vmatpush1.bf16.msra.mxu0 0
        %6229 = vmatprep.subr.bf16.mxu0 0
        %6230 = vmatpush1.bf16.msra.mxu0 0
        %6231 = vmatprep.subr.bf16.mxu0 0
        %6232 = vmatpush1.bf16.msra.mxu0 0
        %6233 = vmatprep.subr.bf16.mxu0 0
        %6234 = vmatpush1.bf16.msra.mxu0 0
        %6235 = vmatprep.mubr.bf16.mxu0 0
        %6236 = vmatmul.mubr.bf16.gmra.mrb[0].mxu0 %v3621
        %v6237 = vpop.f32.mrb[0].mxu0
        %v6238 = vadd.f32 0.0, %v6237
        %v6239 = vpop.f32.mrb[0].mxu0
        %v6240 = vadd.f32 0.0, %v6239
        %v6241 = vpop.f32.mrb[0].mxu0
        %v6242 = vadd.f32 0.0, %v6241
        %v6243 = vpop.f32.mrb[0].mxu0
        %v6244 = vadd.f32 0.0, %v6243
        %6245 = vdwg.mxu0
        %6246 = vmatprep.subr.bf16.mxu0 %v3217
        %6247 = vmatpush1.bf16.msra.mxu0 %v3216
        %6248 = vmatprep.subr.bf16.mxu0 %v3348
        %6249 = vmatpush1.bf16.msra.mxu0 %v3347
        %6250 = vmatprep.subr.bf16.mxu0 %v3479
        %6251 = vmatpush1.bf16.msra.mxu0 %v3478
        %6252 = vmatprep.subr.bf16.mxu0 %v3610
        %6253 = vmatpush1.bf16.msra.mxu0 %v3609
        %6254 = vmatprep.subr.bf16.mxu0 0
        %6255 = vmatpush1.bf16.msra.mxu0 0
        %6256 = vmatprep.subr.bf16.mxu0 0
        %6257 = vmatpush1.bf16.msra.mxu0 0
        %6258 = vmatprep.subr.bf16.mxu0 0
        %6259 = vmatpush1.bf16.msra.mxu0 0
        %6260 = vmatprep.subr.bf16.mxu0 0
        %6261 = vmatpush1.bf16.msra.mxu0 0
        %6262 = vmatprep.subr.bf16.mxu0 0
        %6263 = vmatpush1.bf16.msra.mxu0 0
        %6264 = vmatprep.subr.bf16.mxu0 0
        %6265 = vmatpush1.bf16.msra.mxu0 0
        %6266 = vmatprep.subr.bf16.mxu0 0
        %6267 = vmatpush1.bf16.msra.mxu0 0
        %6268 = vmatprep.subr.bf16.mxu0 0
        %6269 = vmatpush1.bf16.msra.mxu0 0
        %6270 = vmatprep.subr.bf16.mxu0 0
        %6271 = vmatpush1.bf16.msra.mxu0 0
        %6272 = vmatprep.subr.bf16.mxu0 0
        %6273 = vmatpush1.bf16.msra.mxu0 0
        %6274 = vmatprep.subr.bf16.mxu0 0
        %6275 = vmatpush1.bf16.msra.mxu0 0
        %6276 = vmatprep.subr.bf16.mxu0 0
        %6277 = vmatpush1.bf16.msra.mxu0 0
        %6278 = vmatprep.mubr.bf16.mxu0 0
        %6279 = vmatmul.mubr.bf16.gmra.mrb[0].mxu0 %v3621
        %v6280 = vpop.f32.mrb[0].mxu0
        %v6281 = vadd.f32 0.0, %v6280
        %v6282 = vpop.f32.mrb[0].mxu0
        %v6283 = vadd.f32 0.0, %v6282
        %v6284 = vpop.f32.mrb[0].mxu0
        %v6285 = vadd.f32 0.0, %v6284
        %v6286 = vpop.f32.mrb[0].mxu0
        %v6287 = vadd.f32 0.0, %v6286
        %6288 = vdwg.mxu0
        %6289 = vmatprep.subr.bf16.mxu0 %v3219
        %6290 = vmatpush1.bf16.msra.mxu0 %v3218
        %6291 = vmatprep.subr.bf16.mxu0 %v3350
        %6292 = vmatpush1.bf16.msra.mxu0 %v3349
        %6293 = vmatprep.subr.bf16.mxu0 %v3481
        %6294 = vmatpush1.bf16.msra.mxu0 %v3480
        %6295 = vmatprep.subr.bf16.mxu0 %v3612
        %6296 = vmatpush1.bf16.msra.mxu0 %v3611
        %6297 = vmatprep.subr.bf16.mxu0 0
        %6298 = vmatpush1.bf16.msra.mxu0 0
        %6299 = vmatprep.subr.bf16.mxu0 0
        %6300 = vmatpush1.bf16.msra.mxu0 0
        %6301 = vmatprep.subr.bf16.mxu0 0
        %6302 = vmatpush1.bf16.msra.mxu0 0
        %6303 = vmatprep.subr.bf16.mxu0 0
        %6304 = vmatpush1.bf16.msra.mxu0 0
        %6305 = vmatprep.subr.bf16.mxu0 0
        %6306 = vmatpush1.bf16.msra.mxu0 0
        %6307 = vmatprep.subr.bf16.mxu0 0
        %6308 = vmatpush1.bf16.msra.mxu0 0
        %6309 = vmatprep.subr.bf16.mxu0 0
        %6310 = vmatpush1.bf16.msra.mxu0 0
        %6311 = vmatprep.subr.bf16.mxu0 0
        %6312 = vmatpush1.bf16.msra.mxu0 0
        %6313 = vmatprep.subr.bf16.mxu0 0
        %6314 = vmatpush1.bf16.msra.mxu0 0
        %6315 = vmatprep.subr.bf16.mxu0 0
        %6316 = vmatpush1.bf16.msra.mxu0 0
        %6317 = vmatprep.subr.bf16.mxu0 0
        %6318 = vmatpush1.bf16.msra.mxu0 0
        %6319 = vmatprep.subr.bf16.mxu0 0
        %6320 = vmatpush1.bf16.msra.mxu0 0
        %6321 = vmatprep.mubr.bf16.mxu0 0
        %6322 = vmatmul.mubr.bf16.gmra.mrb[0].mxu0 %v3621
        %v6323 = vpop.f32.mrb[0].mxu0
        %v6324 = vadd.f32 0.0, %v6323
        %v6325 = vpop.f32.mrb[0].mxu0
        %v6326 = vadd.f32 0.0, %v6325
        %v6327 = vpop.f32.mrb[0].mxu0
        %v6328 = vadd.f32 0.0, %v6327
        %v6329 = vpop.f32.mrb[0].mxu0
        %v6330 = vadd.f32 0.0, %v6329
        %6331 = vdwg.mxu0
        %6332 = vmatprep.subr.bf16.mxu0 %v3221
        %6333 = vmatpush1.bf16.msra.mxu0 %v3220
        %6334 = vmatprep.subr.bf16.mxu0 %v3352
        %6335 = vmatpush1.bf16.msra.mxu0 %v3351
        %6336 = vmatprep.subr.bf16.mxu0 %v3483
        %6337 = vmatpush1.bf16.msra.mxu0 %v3482
        %6338 = vmatprep.subr.bf16.mxu0 %v3614
        %6339 = vmatpush1.bf16.msra.mxu0 %v3613
        %6340 = vmatprep.subr.bf16.mxu0 0
        %6341 = vmatpush1.bf16.msra.mxu0 0
        %6342 = vmatprep.subr.bf16.mxu0 0
        %6343 = vmatpush1.bf16.msra.mxu0 0
        %6344 = vmatprep.subr.bf16.mxu0 0
        %6345 = vmatpush1.bf16.msra.mxu0 0
        %6346 = vmatprep.subr.bf16.mxu0 0
        %6347 = vmatpush1.bf16.msra.mxu0 0
        %6348 = vmatprep.subr.bf16.mxu0 0
        %6349 = vmatpush1.bf16.msra.mxu0 0
        %6350 = vmatprep.subr.bf16.mxu0 0
        %6351 = vmatpush1.bf16.msra.mxu0 0
        %6352 = vmatprep.subr.bf16.mxu0 0
        %6353 = vmatpush1.bf16.msra.mxu0 0
        %6354 = vmatprep.subr.bf16.mxu0 0
        %6355 = vmatpush1.bf16.msra.mxu0 0
        %6356 = vmatprep.subr.bf16.mxu0 0
        %6357 = vmatpush1.bf16.msra.mxu0 0
        %6358 = vmatprep.subr.bf16.mxu0 0
        %6359 = vmatpush1.bf16.msra.mxu0 0
        %6360 = vmatprep.subr.bf16.mxu0 0
        %6361 = vmatpush1.bf16.msra.mxu0 0
        %6362 = vmatprep.subr.bf16.mxu0 0
        %6363 = vmatpush1.bf16.msra.mxu0 0
        %6364 = vmatprep.mubr.bf16.mxu0 0
        %6365 = vmatmul.mubr.bf16.gmra.mrb[0].mxu0 %v3621
        %v6366 = vpop.f32.mrb[0].mxu0
        %v6367 = vadd.f32 0.0, %v6366
        %v6368 = vpop.f32.mrb[0].mxu0
        %v6369 = vadd.f32 0.0, %v6368
        %v6370 = vpop.f32.mrb[0].mxu0
        %v6371 = vadd.f32 0.0, %v6370
        %v6372 = vpop.f32.mrb[0].mxu0
        %v6373 = vadd.f32 0.0, %v6372
        %6374 = vdwg.mxu0
        %6375 = vmatprep.subr.bf16.mxu0 %v3223
        %6376 = vmatpush1.bf16.msra.mxu0 %v3222
        %6377 = vmatprep.subr.bf16.mxu0 %v3354
        %6378 = vmatpush1.bf16.msra.mxu0 %v3353
        %6379 = vmatprep.subr.bf16.mxu0 %v3485
        %6380 = vmatpush1.bf16.msra.mxu0 %v3484
        %6381 = vmatprep.subr.bf16.mxu0 %v3616
        %6382 = vmatpush1.bf16.msra.mxu0 %v3615
        %6383 = vmatprep.subr.bf16.mxu0 0
        %6384 = vmatpush1.bf16.msra.mxu0 0
        %6385 = vmatprep.subr.bf16.mxu0 0
        %6386 = vmatpush1.bf16.msra.mxu0 0
        %6387 = vmatprep.subr.bf16.mxu0 0
        %6388 = vmatpush1.bf16.msra.mxu0 0
        %6389 = vmatprep.subr.bf16.mxu0 0
        %6390 = vmatpush1.bf16.msra.mxu0 0
        %6391 = vmatprep.subr.bf16.mxu0 0
        %6392 = vmatpush1.bf16.msra.mxu0 0
        %6393 = vmatprep.subr.bf16.mxu0 0
        %6394 = vmatpush1.bf16.msra.mxu0 0
        %6395 = vmatprep.subr.bf16.mxu0 0
        %6396 = vmatpush1.bf16.msra.mxu0 0
        %6397 = vmatprep.subr.bf16.mxu0 0
        %6398 = vmatpush1.bf16.msra.mxu0 0
        %6399 = vmatprep.subr.bf16.mxu0 0
        %6400 = vmatpush1.bf16.msra.mxu0 0
        %6401 = vmatprep.subr.bf16.mxu0 0
        %6402 = vmatpush1.bf16.msra.mxu0 0
        %6403 = vmatprep.subr.bf16.mxu0 0
        %6404 = vmatpush1.bf16.msra.mxu0 0
        %6405 = vmatprep.subr.bf16.mxu0 0
        %6406 = vmatpush1.bf16.msra.mxu0 0
        %6407 = vmatprep.mubr.bf16.mxu0 0
        %6408 = vmatmul.mubr.bf16.gmra.mrb[0].mxu0 %v3621
        %v6409 = vpop.f32.mrb[0].mxu0
        %v6410 = vadd.f32 0.0, %v6409
        %v6411 = vpop.f32.mrb[0].mxu0
        %v6412 = vadd.f32 0.0, %v6411
        %v6413 = vpop.f32.mrb[0].mxu0
        %v6414 = vadd.f32 0.0, %v6413
        %v6415 = vpop.f32.mrb[0].mxu0
        %v6416 = vadd.f32 0.0, %v6415
        %6417 = vdwg.mxu0
        %6418 = vmatprep.subr.bf16.mxu0 0
        %6419 = vmatpush1.bf16.msra.mxu0 %v3224
        %6420 = vmatprep.subr.bf16.mxu0 0
        %6421 = vmatpush1.bf16.msra.mxu0 %v3355
        %6422 = vmatprep.subr.bf16.mxu0 0
        %6423 = vmatpush1.bf16.msra.mxu0 %v3486
        %6424 = vmatprep.subr.bf16.mxu0 0
        %6425 = vmatpush1.bf16.msra.mxu0 %v3617
        %6426 = vmatprep.subr.bf16.mxu0 0
        %6427 = vmatpush1.bf16.msra.mxu0 0
        %6428 = vmatprep.subr.bf16.mxu0 0
        %6429 = vmatpush1.bf16.msra.mxu0 0
        %6430 = vmatprep.subr.bf16.mxu0 0
        %6431 = vmatpush1.bf16.msra.mxu0 0
        %6432 = vmatprep.subr.bf16.mxu0 0
        %6433 = vmatpush1.bf16.msra.mxu0 0
        %6434 = vmatprep.subr.bf16.mxu0 0
        %6435 = vmatpush1.bf16.msra.mxu0 0
        %6436 = vmatprep.subr.bf16.mxu0 0
        %6437 = vmatpush1.bf16.msra.mxu0 0
        %6438 = vmatprep.subr.bf16.mxu0 0
        %6439 = vmatpush1.bf16.msra.mxu0 0
        %6440 = vmatprep.subr.bf16.mxu0 0
        %6441 = vmatpush1.bf16.msra.mxu0 0
        %6442 = vmatprep.subr.bf16.mxu0 0
        %6443 = vmatpush1.bf16.msra.mxu0 0
        %6444 = vmatprep.subr.bf16.mxu0 0
        %6445 = vmatpush1.bf16.msra.mxu0 0
        %6446 = vmatprep.subr.bf16.mxu0 0
        %6447 = vmatpush1.bf16.msra.mxu0 0
        %6448 = vmatprep.subr.bf16.mxu0 0
        %6449 = vmatpush1.bf16.msra.mxu0 0
        %6450 = vmatprep.mubr.bf16.mxu0 0
        %6451 = vmatmul.mubr.bf16.gmra.mrb[0].mxu0 %v3621
        %v6452 = vpop.f32.mrb[0].mxu0
        %v6453 = vadd.f32 0.0, %v6452
        %v6454 = vpop.f32.mrb[0].mxu0
        %v6455 = vpop.f32.mrb[0].mxu0
        %v6456 = vadd.f32 0.0, %v6455
        %v6457 = vpop.f32.mrb[0].mxu0
        %6458 = vdwg.mxu0
        %v6459 = vld [vmem:[%s851] sm:$0xff]
        %v6460 = vld [vmem:[%s851 + $0x8] sm:$0xff]
        %v6461 = vld [vmem:[%s851 + $0x10] sm:$0xff]
        %v6462 = vld [vmem:[%s851 + $0x18] sm:$0xff]
        %v6463 = vld [vmem:[%s851 + $0x20] sm:$0xff]
        %v6464 = vld [vmem:[%s851 + $0x28] sm:$0xff]
        %v6465 = vld [vmem:[%s851 + $0x30] sm:$0xff]
        %v6466 = vld [vmem:[%s851 + $0x38] sm:$0xff]
        %v6467 = vld [vmem:[%s851 + $0x40] sm:$0xff]
        %v6468 = vld [vmem:[%s851 + $0x48] sm:$0xff]
        %v6469 = vld [vmem:[%s851 + $0x50] sm:$0xff]
        %v6470 = vld [vmem:[%s851 + $0x58] sm:$0xff]
        %v6471 = vld [vmem:[%s851 + $0x60] sm:$0xff]
        %v6472 = vld [vmem:[%s851 + $0x68] sm:$0xff]
        %v6473 = vld [vmem:[%s851 + $0x70] sm:$0xff]
        %v6474 = vld [vmem:[%s851 + $0x78] sm:$0xff]
        %v6475 = vld [vmem:[%s851 + $0x80] sm:$0x7]
        %v6493 = vlaneseq
        %v6494 = vshrl.u32 %v6493, 7
        %v6495 = vsub.s32 0, %v6494
        %v6496 = vrot.slane %v6459, %v6495
        %v6497 = vlaneseq
        %v6498 = vshrl.u32 %v6497, 7
        %v6499 = vsub.s32 1, %v6498
        %v6500 = vrot.slane %v6459, %v6499
        %v6501 = vlaneseq
        %v6502 = vshrl.u32 %v6501, 7
        %v6503 = vsub.s32 2, %v6502
        %v6504 = vrot.slane %v6459, %v6503
        %v6505 = vlaneseq
        %v6506 = vshrl.u32 %v6505, 7
        %v6507 = vsub.s32 3, %v6506
        %v6508 = vrot.slane %v6459, %v6507
        %v6509 = vlaneseq
        %v6510 = vshrl.u32 %v6509, 7
        %v6511 = vsub.s32 4, %v6510
        %v6512 = vrot.slane %v6459, %v6511
        %v6513 = vlaneseq
        %v6514 = vshrl.u32 %v6513, 7
        %v6515 = vsub.s32 5, %v6514
        %v6516 = vrot.slane %v6459, %v6515
        %v6517 = vlaneseq
        %v6518 = vshrl.u32 %v6517, 7
        %v6519 = vsub.s32 6, %v6518
        %v6520 = vrot.slane %v6459, %v6519
        %v6521 = vlaneseq
        %v6522 = vshrl.u32 %v6521, 7
        %v6523 = vsub.s32 7, %v6522
        %v6524 = vrot.slane %v6459, %v6523
        %v6525 = vlaneseq
        %v6526 = vshrl.u32 %v6525, 7
        %v6527 = vsub.s32 0, %v6526
        %v6528 = vrot.slane %v6460, %v6527
        %v6529 = vlaneseq
        %v6530 = vshrl.u32 %v6529, 7
        %v6531 = vsub.s32 1, %v6530
        %v6532 = vrot.slane %v6460, %v6531
        %v6533 = vlaneseq
        %v6534 = vshrl.u32 %v6533, 7
        %v6535 = vsub.s32 2, %v6534
        %v6536 = vrot.slane %v6460, %v6535
        %v6537 = vlaneseq
        %v6538 = vshrl.u32 %v6537, 7
        %v6539 = vsub.s32 3, %v6538
        %v6540 = vrot.slane %v6460, %v6539
        %v6541 = vlaneseq
        %v6542 = vshrl.u32 %v6541, 7
        %v6543 = vsub.s32 4, %v6542
        %v6544 = vrot.slane %v6460, %v6543
        %v6545 = vlaneseq
        %v6546 = vshrl.u32 %v6545, 7
        %v6547 = vsub.s32 5, %v6546
        %v6548 = vrot.slane %v6460, %v6547
        %v6549 = vlaneseq
        %v6550 = vshrl.u32 %v6549, 7
        %v6551 = vsub.s32 6, %v6550
        %v6552 = vrot.slane %v6460, %v6551
        %v6553 = vlaneseq
        %v6554 = vshrl.u32 %v6553, 7
        %v6555 = vsub.s32 7, %v6554
        %v6556 = vrot.slane %v6460, %v6555
        %v6557 = vlaneseq
        %v6558 = vshrl.u32 %v6557, 7
        %v6559 = vsub.s32 0, %v6558
        %v6560 = vrot.slane %v6461, %v6559
        %v6561 = vlaneseq
        %v6562 = vshrl.u32 %v6561, 7
        %v6563 = vsub.s32 1, %v6562
        %v6564 = vrot.slane %v6461, %v6563
        %v6565 = vlaneseq
        %v6566 = vshrl.u32 %v6565, 7
        %v6567 = vsub.s32 2, %v6566
        %v6568 = vrot.slane %v6461, %v6567
        %v6569 = vlaneseq
        %v6570 = vshrl.u32 %v6569, 7
        %v6571 = vsub.s32 3, %v6570
        %v6572 = vrot.slane %v6461, %v6571
        %v6573 = vlaneseq
        %v6574 = vshrl.u32 %v6573, 7
        %v6575 = vsub.s32 4, %v6574
        %v6576 = vrot.slane %v6461, %v6575
        %v6577 = vlaneseq
        %v6578 = vshrl.u32 %v6577, 7
        %v6579 = vsub.s32 5, %v6578
        %v6580 = vrot.slane %v6461, %v6579
        %v6581 = vlaneseq
        %v6582 = vshrl.u32 %v6581, 7
        %v6583 = vsub.s32 6, %v6582
        %v6584 = vrot.slane %v6461, %v6583
        %v6585 = vlaneseq
        %v6586 = vshrl.u32 %v6585, 7
        %v6587 = vsub.s32 7, %v6586
        %v6588 = vrot.slane %v6461, %v6587
        %v6589 = vlaneseq
        %v6590 = vshrl.u32 %v6589, 7
        %v6591 = vsub.s32 0, %v6590
        %v6592 = vrot.slane %v6462, %v6591
        %v6593 = vlaneseq
        %v6594 = vshrl.u32 %v6593, 7
        %v6595 = vsub.s32 1, %v6594
        %v6596 = vrot.slane %v6462, %v6595
        %v6597 = vlaneseq
        %v6598 = vshrl.u32 %v6597, 7
        %v6599 = vsub.s32 2, %v6598
        %v6600 = vrot.slane %v6462, %v6599
        %v6601 = vlaneseq
        %v6602 = vshrl.u32 %v6601, 7
        %v6603 = vsub.s32 3, %v6602
        %v6604 = vrot.slane %v6462, %v6603
        %v6605 = vlaneseq
        %v6606 = vshrl.u32 %v6605, 7
        %v6607 = vsub.s32 4, %v6606
        %v6608 = vrot.slane %v6462, %v6607
        %v6609 = vlaneseq
        %v6610 = vshrl.u32 %v6609, 7
        %v6611 = vsub.s32 5, %v6610
        %v6612 = vrot.slane %v6462, %v6611
        %v6613 = vlaneseq
        %v6614 = vshrl.u32 %v6613, 7
        %v6615 = vsub.s32 6, %v6614
        %v6616 = vrot.slane %v6462, %v6615
        %v6617 = vlaneseq
        %v6618 = vshrl.u32 %v6617, 7
        %v6619 = vsub.s32 7, %v6618
        %v6620 = vrot.slane %v6462, %v6619
        %v6621 = vlaneseq
        %v6622 = vshrl.u32 %v6621, 7
        %v6623 = vsub.s32 0, %v6622
        %v6624 = vrot.slane %v6463, %v6623
        %v6625 = vlaneseq
        %v6626 = vshrl.u32 %v6625, 7
        %v6627 = vsub.s32 1, %v6626
        %v6628 = vrot.slane %v6463, %v6627
        %v6629 = vlaneseq
        %v6630 = vshrl.u32 %v6629, 7
        %v6631 = vsub.s32 2, %v6630
        %v6632 = vrot.slane %v6463, %v6631
        %v6633 = vlaneseq
        %v6634 = vshrl.u32 %v6633, 7
        %v6635 = vsub.s32 3, %v6634
        %v6636 = vrot.slane %v6463, %v6635
        %v6637 = vlaneseq
        %v6638 = vshrl.u32 %v6637, 7
        %v6639 = vsub.s32 4, %v6638
        %v6640 = vrot.slane %v6463, %v6639
        %v6641 = vlaneseq
        %v6642 = vshrl.u32 %v6641, 7
        %v6643 = vsub.s32 5, %v6642
        %v6644 = vrot.slane %v6463, %v6643
        %v6645 = vlaneseq
        %v6646 = vshrl.u32 %v6645, 7
        %v6647 = vsub.s32 6, %v6646
        %v6648 = vrot.slane %v6463, %v6647
        %v6649 = vlaneseq
        %v6650 = vshrl.u32 %v6649, 7
        %v6651 = vsub.s32 7, %v6650
        %v6652 = vrot.slane %v6463, %v6651
        %v6653 = vlaneseq
        %v6654 = vshrl.u32 %v6653, 7
        %v6655 = vsub.s32 0, %v6654
        %v6656 = vrot.slane %v6464, %v6655
        %v6657 = vlaneseq
        %v6658 = vshrl.u32 %v6657, 7
        %v6659 = vsub.s32 1, %v6658
        %v6660 = vrot.slane %v6464, %v6659
        %v6661 = vlaneseq
        %v6662 = vshrl.u32 %v6661, 7
        %v6663 = vsub.s32 2, %v6662
        %v6664 = vrot.slane %v6464, %v6663
        %v6665 = vlaneseq
        %v6666 = vshrl.u32 %v6665, 7
        %v6667 = vsub.s32 3, %v6666
        %v6668 = vrot.slane %v6464, %v6667
        %v6669 = vlaneseq
        %v6670 = vshrl.u32 %v6669, 7
        %v6671 = vsub.s32 4, %v6670
        %v6672 = vrot.slane %v6464, %v6671
        %v6673 = vlaneseq
        %v6674 = vshrl.u32 %v6673, 7
        %v6675 = vsub.s32 5, %v6674
        %v6676 = vrot.slane %v6464, %v6675
        %v6677 = vlaneseq
        %v6678 = vshrl.u32 %v6677, 7
        %v6679 = vsub.s32 6, %v6678
        %v6680 = vrot.slane %v6464, %v6679
        %v6681 = vlaneseq
        %v6682 = vshrl.u32 %v6681, 7
        %v6683 = vsub.s32 7, %v6682
        %v6684 = vrot.slane %v6464, %v6683
        %v6685 = vlaneseq
        %v6686 = vshrl.u32 %v6685, 7
        %v6687 = vsub.s32 0, %v6686
        %v6688 = vrot.slane %v6465, %v6687
        %v6689 = vlaneseq
        %v6690 = vshrl.u32 %v6689, 7
        %v6691 = vsub.s32 1, %v6690
        %v6692 = vrot.slane %v6465, %v6691
        %v6693 = vlaneseq
        %v6694 = vshrl.u32 %v6693, 7
        %v6695 = vsub.s32 2, %v6694
        %v6696 = vrot.slane %v6465, %v6695
        %v6697 = vlaneseq
        %v6698 = vshrl.u32 %v6697, 7
        %v6699 = vsub.s32 3, %v6698
        %v6700 = vrot.slane %v6465, %v6699
        %v6701 = vlaneseq
        %v6702 = vshrl.u32 %v6701, 7
        %v6703 = vsub.s32 4, %v6702
        %v6704 = vrot.slane %v6465, %v6703
        %v6705 = vlaneseq
        %v6706 = vshrl.u32 %v6705, 7
        %v6707 = vsub.s32 5, %v6706
        %v6708 = vrot.slane %v6465, %v6707
        %v6709 = vlaneseq
        %v6710 = vshrl.u32 %v6709, 7
        %v6711 = vsub.s32 6, %v6710
        %v6712 = vrot.slane %v6465, %v6711
        %v6713 = vlaneseq
        %v6714 = vshrl.u32 %v6713, 7
        %v6715 = vsub.s32 7, %v6714
        %v6716 = vrot.slane %v6465, %v6715
        %v6717 = vlaneseq
        %v6718 = vshrl.u32 %v6717, 7
        %v6719 = vsub.s32 0, %v6718
        %v6720 = vrot.slane %v6466, %v6719
        %v6721 = vlaneseq
        %v6722 = vshrl.u32 %v6721, 7
        %v6723 = vsub.s32 1, %v6722
        %v6724 = vrot.slane %v6466, %v6723
        %v6725 = vlaneseq
        %v6726 = vshrl.u32 %v6725, 7
        %v6727 = vsub.s32 2, %v6726
        %v6728 = vrot.slane %v6466, %v6727
        %v6729 = vlaneseq
        %v6730 = vshrl.u32 %v6729, 7
        %v6731 = vsub.s32 3, %v6730
        %v6732 = vrot.slane %v6466, %v6731
        %v6733 = vlaneseq
        %v6734 = vshrl.u32 %v6733, 7
        %v6735 = vsub.s32 4, %v6734
        %v6736 = vrot.slane %v6466, %v6735
        %v6737 = vlaneseq
        %v6738 = vshrl.u32 %v6737, 7
        %v6739 = vsub.s32 5, %v6738
        %v6740 = vrot.slane %v6466, %v6739
        %v6741 = vlaneseq
        %v6742 = vshrl.u32 %v6741, 7
        %v6743 = vsub.s32 6, %v6742
        %v6744 = vrot.slane %v6466, %v6743
        %v6745 = vlaneseq
        %v6746 = vshrl.u32 %v6745, 7
        %v6747 = vsub.s32 7, %v6746
        %v6748 = vrot.slane %v6466, %v6747
        %v6749 = vlaneseq
        %v6750 = vshrl.u32 %v6749, 7
        %v6751 = vsub.s32 0, %v6750
        %v6752 = vrot.slane %v6467, %v6751
        %v6753 = vlaneseq
        %v6754 = vshrl.u32 %v6753, 7
        %v6755 = vsub.s32 1, %v6754
        %v6756 = vrot.slane %v6467, %v6755
        %v6757 = vlaneseq
        %v6758 = vshrl.u32 %v6757, 7
        %v6759 = vsub.s32 2, %v6758
        %v6760 = vrot.slane %v6467, %v6759
        %v6761 = vlaneseq
        %v6762 = vshrl.u32 %v6761, 7
        %v6763 = vsub.s32 3, %v6762
        %v6764 = vrot.slane %v6467, %v6763
        %v6765 = vlaneseq
        %v6766 = vshrl.u32 %v6765, 7
        %v6767 = vsub.s32 4, %v6766
        %v6768 = vrot.slane %v6467, %v6767
        %v6769 = vlaneseq
        %v6770 = vshrl.u32 %v6769, 7
        %v6771 = vsub.s32 5, %v6770
        %v6772 = vrot.slane %v6467, %v6771
        %v6773 = vlaneseq
        %v6774 = vshrl.u32 %v6773, 7
        %v6775 = vsub.s32 6, %v6774
        %v6776 = vrot.slane %v6467, %v6775
        %v6777 = vlaneseq
        %v6778 = vshrl.u32 %v6777, 7
        %v6779 = vsub.s32 7, %v6778
        %v6780 = vrot.slane %v6467, %v6779
        %v6781 = vlaneseq
        %v6782 = vshrl.u32 %v6781, 7
        %v6783 = vsub.s32 0, %v6782
        %v6784 = vrot.slane %v6468, %v6783
        %v6785 = vlaneseq
        %v6786 = vshrl.u32 %v6785, 7
        %v6787 = vsub.s32 1, %v6786
        %v6788 = vrot.slane %v6468, %v6787
        %v6789 = vlaneseq
        %v6790 = vshrl.u32 %v6789, 7
        %v6791 = vsub.s32 2, %v6790
        %v6792 = vrot.slane %v6468, %v6791
        %v6793 = vlaneseq
        %v6794 = vshrl.u32 %v6793, 7
        %v6795 = vsub.s32 3, %v6794
        %v6796 = vrot.slane %v6468, %v6795
        %v6797 = vlaneseq
        %v6798 = vshrl.u32 %v6797, 7
        %v6799 = vsub.s32 4, %v6798
        %v6800 = vrot.slane %v6468, %v6799
        %v6801 = vlaneseq
        %v6802 = vshrl.u32 %v6801, 7
        %v6803 = vsub.s32 5, %v6802
        %v6804 = vrot.slane %v6468, %v6803
        %v6805 = vlaneseq
        %v6806 = vshrl.u32 %v6805, 7
        %v6807 = vsub.s32 6, %v6806
        %v6808 = vrot.slane %v6468, %v6807
        %v6809 = vlaneseq
        %v6810 = vshrl.u32 %v6809, 7
        %v6811 = vsub.s32 7, %v6810
        %v6812 = vrot.slane %v6468, %v6811
        %v6813 = vlaneseq
        %v6814 = vshrl.u32 %v6813, 7
        %v6815 = vsub.s32 0, %v6814
        %v6816 = vrot.slane %v6469, %v6815
        %v6817 = vlaneseq
        %v6818 = vshrl.u32 %v6817, 7
        %v6819 = vsub.s32 1, %v6818
        %v6820 = vrot.slane %v6469, %v6819
        %v6821 = vlaneseq
        %v6822 = vshrl.u32 %v6821, 7
        %v6823 = vsub.s32 2, %v6822
        %v6824 = vrot.slane %v6469, %v6823
        %v6825 = vlaneseq
        %v6826 = vshrl.u32 %v6825, 7
        %v6827 = vsub.s32 3, %v6826
        %v6828 = vrot.slane %v6469, %v6827
        %v6829 = vlaneseq
        %v6830 = vshrl.u32 %v6829, 7
        %v6831 = vsub.s32 4, %v6830
        %v6832 = vrot.slane %v6469, %v6831
        %v6833 = vlaneseq
        %v6834 = vshrl.u32 %v6833, 7
        %v6835 = vsub.s32 5, %v6834
        %v6836 = vrot.slane %v6469, %v6835
        %v6837 = vlaneseq
        %v6838 = vshrl.u32 %v6837, 7
        %v6839 = vsub.s32 6, %v6838
        %v6840 = vrot.slane %v6469, %v6839
        %v6841 = vlaneseq
        %v6842 = vshrl.u32 %v6841, 7
        %v6843 = vsub.s32 7, %v6842
        %v6844 = vrot.slane %v6469, %v6843
        %v6845 = vlaneseq
        %v6846 = vshrl.u32 %v6845, 7
        %v6847 = vsub.s32 0, %v6846
        %v6848 = vrot.slane %v6470, %v6847
        %v6849 = vlaneseq
        %v6850 = vshrl.u32 %v6849, 7
        %v6851 = vsub.s32 1, %v6850
        %v6852 = vrot.slane %v6470, %v6851
        %v6853 = vlaneseq
        %v6854 = vshrl.u32 %v6853, 7
        %v6855 = vsub.s32 2, %v6854
        %v6856 = vrot.slane %v6470, %v6855
        %v6857 = vlaneseq
        %v6858 = vshrl.u32 %v6857, 7
        %v6859 = vsub.s32 3, %v6858
        %v6860 = vrot.slane %v6470, %v6859
        %v6861 = vlaneseq
        %v6862 = vshrl.u32 %v6861, 7
        %v6863 = vsub.s32 4, %v6862
        %v6864 = vrot.slane %v6470, %v6863
        %v6865 = vlaneseq
        %v6866 = vshrl.u32 %v6865, 7
        %v6867 = vsub.s32 5, %v6866
        %v6868 = vrot.slane %v6470, %v6867
        %v6869 = vlaneseq
        %v6870 = vshrl.u32 %v6869, 7
        %v6871 = vsub.s32 6, %v6870
        %v6872 = vrot.slane %v6470, %v6871
        %v6873 = vlaneseq
        %v6874 = vshrl.u32 %v6873, 7
        %v6875 = vsub.s32 7, %v6874
        %v6876 = vrot.slane %v6470, %v6875
        %v6877 = vlaneseq
        %v6878 = vshrl.u32 %v6877, 7
        %v6879 = vsub.s32 0, %v6878
        %v6880 = vrot.slane %v6471, %v6879
        %v6881 = vlaneseq
        %v6882 = vshrl.u32 %v6881, 7
        %v6883 = vsub.s32 1, %v6882
        %v6884 = vrot.slane %v6471, %v6883
        %v6885 = vlaneseq
        %v6886 = vshrl.u32 %v6885, 7
        %v6887 = vsub.s32 2, %v6886
        %v6888 = vrot.slane %v6471, %v6887
        %v6889 = vlaneseq
        %v6890 = vshrl.u32 %v6889, 7
        %v6891 = vsub.s32 3, %v6890
        %v6892 = vrot.slane %v6471, %v6891
        %v6893 = vlaneseq
        %v6894 = vshrl.u32 %v6893, 7
        %v6895 = vsub.s32 4, %v6894
        %v6896 = vrot.slane %v6471, %v6895
        %v6897 = vlaneseq
        %v6898 = vshrl.u32 %v6897, 7
        %v6899 = vsub.s32 5, %v6898
        %v6900 = vrot.slane %v6471, %v6899
        %v6901 = vlaneseq
        %v6902 = vshrl.u32 %v6901, 7
        %v6903 = vsub.s32 6, %v6902
        %v6904 = vrot.slane %v6471, %v6903
        %v6905 = vlaneseq
        %v6906 = vshrl.u32 %v6905, 7
        %v6907 = vsub.s32 7, %v6906
        %v6908 = vrot.slane %v6471, %v6907
        %v6909 = vlaneseq
        %v6910 = vshrl.u32 %v6909, 7
        %v6911 = vsub.s32 0, %v6910
        %v6912 = vrot.slane %v6472, %v6911
        %v6913 = vlaneseq
        %v6914 = vshrl.u32 %v6913, 7
        %v6915 = vsub.s32 1, %v6914
        %v6916 = vrot.slane %v6472, %v6915
        %v6917 = vlaneseq
        %v6918 = vshrl.u32 %v6917, 7
        %v6919 = vsub.s32 2, %v6918
        %v6920 = vrot.slane %v6472, %v6919
        %v6921 = vlaneseq
        %v6922 = vshrl.u32 %v6921, 7
        %v6923 = vsub.s32 3, %v6922
        %v6924 = vrot.slane %v6472, %v6923
        %v6925 = vlaneseq
        %v6926 = vshrl.u32 %v6925, 7
        %v6927 = vsub.s32 4, %v6926
        %v6928 = vrot.slane %v6472, %v6927
        %v6929 = vlaneseq
        %v6930 = vshrl.u32 %v6929, 7
        %v6931 = vsub.s32 5, %v6930
        %v6932 = vrot.slane %v6472, %v6931
        %v6933 = vlaneseq
        %v6934 = vshrl.u32 %v6933, 7
        %v6935 = vsub.s32 6, %v6934
        %v6936 = vrot.slane %v6472, %v6935
        %v6937 = vlaneseq
        %v6938 = vshrl.u32 %v6937, 7
        %v6939 = vsub.s32 7, %v6938
        %v6940 = vrot.slane %v6472, %v6939
        %v6941 = vlaneseq
        %v6942 = vshrl.u32 %v6941, 7
        %v6943 = vsub.s32 0, %v6942
        %v6944 = vrot.slane %v6473, %v6943
        %v6945 = vlaneseq
        %v6946 = vshrl.u32 %v6945, 7
        %v6947 = vsub.s32 1, %v6946
        %v6948 = vrot.slane %v6473, %v6947
        %v6949 = vlaneseq
        %v6950 = vshrl.u32 %v6949, 7
        %v6951 = vsub.s32 2, %v6950
        %v6952 = vrot.slane %v6473, %v6951
        %v6953 = vlaneseq
        %v6954 = vshrl.u32 %v6953, 7
        %v6955 = vsub.s32 3, %v6954
        %v6956 = vrot.slane %v6473, %v6955
        %v6957 = vlaneseq
        %v6958 = vshrl.u32 %v6957, 7
        %v6959 = vsub.s32 4, %v6958
        %v6960 = vrot.slane %v6473, %v6959
        %v6961 = vlaneseq
        %v6962 = vshrl.u32 %v6961, 7
        %v6963 = vsub.s32 5, %v6962
        %v6964 = vrot.slane %v6473, %v6963
        %v6965 = vlaneseq
        %v6966 = vshrl.u32 %v6965, 7
        %v6967 = vsub.s32 6, %v6966
        %v6968 = vrot.slane %v6473, %v6967
        %v6969 = vlaneseq
        %v6970 = vshrl.u32 %v6969, 7
        %v6971 = vsub.s32 7, %v6970
        %v6972 = vrot.slane %v6473, %v6971
        %v6973 = vlaneseq
        %v6974 = vshrl.u32 %v6973, 7
        %v6975 = vsub.s32 0, %v6974
        %v6976 = vrot.slane %v6474, %v6975
        %v6977 = vlaneseq
        %v6978 = vshrl.u32 %v6977, 7
        %v6979 = vsub.s32 1, %v6978
        %v6980 = vrot.slane %v6474, %v6979
        %v6981 = vlaneseq
        %v6982 = vshrl.u32 %v6981, 7
        %v6983 = vsub.s32 2, %v6982
        %v6984 = vrot.slane %v6474, %v6983
        %v6985 = vlaneseq
        %v6986 = vshrl.u32 %v6985, 7
        %v6987 = vsub.s32 3, %v6986
        %v6988 = vrot.slane %v6474, %v6987
        %v6989 = vlaneseq
        %v6990 = vshrl.u32 %v6989, 7
        %v6991 = vsub.s32 4, %v6990
        %v6992 = vrot.slane %v6474, %v6991
        %v6993 = vlaneseq
        %v6994 = vshrl.u32 %v6993, 7
        %v6995 = vsub.s32 5, %v6994
        %v6996 = vrot.slane %v6474, %v6995
        %v6997 = vlaneseq
        %v6998 = vshrl.u32 %v6997, 7
        %v6999 = vsub.s32 6, %v6998
        %v7000 = vrot.slane %v6474, %v6999
        %v7001 = vlaneseq
        %v7002 = vshrl.u32 %v7001, 7
        %v7003 = vsub.s32 7, %v7002
        %v7004 = vrot.slane %v6474, %v7003
        %v7005 = vlaneseq
        %v7006 = vshrl.u32 %v7005, 7
        %v7007 = vsub.s32 0, %v7006
        %v7008 = vrot.slane %v6475, %v7007
        %v7009 = vlaneseq
        %v7010 = vshrl.u32 %v7009, 7
        %v7011 = vsub.s32 1, %v7010
        %v7012 = vrot.slane %v6475, %v7011
        %v7013 = vlaneseq
        %v7014 = vshrl.u32 %v7013, 7
        %v7015 = vsub.s32 2, %v7014
        %v7016 = vrot.slane %v6475, %v7015
        %v7148 = vmul.f32 %v3658, %v6496
        %v7149 = vmul.f32 %v3660, %v6500
        %v7150 = vmul.f32 %v3701, %v6504
        %v7151 = vmul.f32 %v3703, %v6508
        %v7152 = vmul.f32 %v3744, %v6512
        %v7153 = vmul.f32 %v3746, %v6516
        %v7154 = vmul.f32 %v3787, %v6520
        %v7155 = vmul.f32 %v3789, %v6524
        %v7156 = vmul.f32 %v3830, %v6528
        %v7157 = vmul.f32 %v3832, %v6532
        %v7158 = vmul.f32 %v3873, %v6536
        %v7159 = vmul.f32 %v3875, %v6540
        %v7160 = vmul.f32 %v3916, %v6544
        %v7161 = vmul.f32 %v3918, %v6548
        %v7162 = vmul.f32 %v3959, %v6552
        %v7163 = vmul.f32 %v3961, %v6556
        %v7164 = vmul.f32 %v4002, %v6560
        %v7165 = vmul.f32 %v4004, %v6564
        %v7166 = vmul.f32 %v4045, %v6568
        %v7167 = vmul.f32 %v4047, %v6572
        %v7168 = vmul.f32 %v4088, %v6576
        %v7169 = vmul.f32 %v4090, %v6580
        %v7170 = vmul.f32 %v4131, %v6584
        %v7171 = vmul.f32 %v4133, %v6588
        %v7172 = vmul.f32 %v4174, %v6592
        %v7173 = vmul.f32 %v4176, %v6596
        %v7174 = vmul.f32 %v4217, %v6600
        %v7175 = vmul.f32 %v4219, %v6604
        %v7176 = vmul.f32 %v4260, %v6608
        %v7177 = vmul.f32 %v4262, %v6612
        %v7178 = vmul.f32 %v4303, %v6616
        %v7179 = vmul.f32 %v4305, %v6620
        %v7180 = vmul.f32 %v4346, %v6624
        %v7181 = vmul.f32 %v4348, %v6628
        %v7182 = vmul.f32 %v4389, %v6632
        %v7183 = vmul.f32 %v4391, %v6636
        %v7184 = vmul.f32 %v4432, %v6640
        %v7185 = vmul.f32 %v4434, %v6644
        %v7186 = vmul.f32 %v4475, %v6648
        %v7187 = vmul.f32 %v4477, %v6652
        %v7188 = vmul.f32 %v4518, %v6656
        %v7189 = vmul.f32 %v4520, %v6660
        %v7190 = vmul.f32 %v4561, %v6664
        %v7191 = vmul.f32 %v4563, %v6668
        %v7192 = vmul.f32 %v4604, %v6672
        %v7193 = vmul.f32 %v4606, %v6676
        %v7194 = vmul.f32 %v4647, %v6680
        %v7195 = vmul.f32 %v4649, %v6684
        %v7196 = vmul.f32 %v4690, %v6688
        %v7197 = vmul.f32 %v4692, %v6692
        %v7198 = vmul.f32 %v4733, %v6696
        %v7199 = vmul.f32 %v4735, %v6700
        %v7200 = vmul.f32 %v4776, %v6704
        %v7201 = vmul.f32 %v4778, %v6708
        %v7202 = vmul.f32 %v4819, %v6712
        %v7203 = vmul.f32 %v4821, %v6716
        %v7204 = vmul.f32 %v4862, %v6720
        %v7205 = vmul.f32 %v4864, %v6724
        %v7206 = vmul.f32 %v4905, %v6728
        %v7207 = vmul.f32 %v4907, %v6732
        %v7208 = vmul.f32 %v4948, %v6736
        %v7209 = vmul.f32 %v4950, %v6740
        %v7210 = vmul.f32 %v4991, %v6744
        %v7211 = vmul.f32 %v4993, %v6748
        %v7212 = vmul.f32 %v5034, %v6752
        %v7213 = vmul.f32 %v5036, %v6756
        %v7214 = vmul.f32 %v5077, %v6760
        %v7215 = vmul.f32 %v5079, %v6764
        %v7216 = vmul.f32 %v5120, %v6768
        %v7217 = vmul.f32 %v5122, %v6772
        %v7218 = vmul.f32 %v5163, %v6776
        %v7219 = vmul.f32 %v5165, %v6780
        %v7220 = vmul.f32 %v5206, %v6784
        %v7221 = vmul.f32 %v5208, %v6788
        %v7222 = vmul.f32 %v5249, %v6792
        %v7223 = vmul.f32 %v5251, %v6796
        %v7224 = vmul.f32 %v5292, %v6800
        %v7225 = vmul.f32 %v5294, %v6804
        %v7226 = vmul.f32 %v5335, %v6808
        %v7227 = vmul.f32 %v5337, %v6812
        %v7228 = vmul.f32 %v5378, %v6816
        %v7229 = vmul.f32 %v5380, %v6820
        %v7230 = vmul.f32 %v5421, %v6824
        %v7231 = vmul.f32 %v5423, %v6828
        %v7232 = vmul.f32 %v5464, %v6832
        %v7233 = vmul.f32 %v5466, %v6836
        %v7234 = vmul.f32 %v5507, %v6840
        %v7235 = vmul.f32 %v5509, %v6844
        %v7236 = vmul.f32 %v5550, %v6848
        %v7237 = vmul.f32 %v5552, %v6852
        %v7238 = vmul.f32 %v5593, %v6856
        %v7239 = vmul.f32 %v5595, %v6860
        %v7240 = vmul.f32 %v5636, %v6864
        %v7241 = vmul.f32 %v5638, %v6868
        %v7242 = vmul.f32 %v5679, %v6872
        %v7243 = vmul.f32 %v5681, %v6876
        %v7244 = vmul.f32 %v5722, %v6880
        %v7245 = vmul.f32 %v5724, %v6884
        %v7246 = vmul.f32 %v5765, %v6888
        %v7247 = vmul.f32 %v5767, %v6892
        %v7248 = vmul.f32 %v5808, %v6896
        %v7249 = vmul.f32 %v5810, %v6900
        %v7250 = vmul.f32 %v5851, %v6904
        %v7251 = vmul.f32 %v5853, %v6908
        %v7252 = vmul.f32 %v5894, %v6912
        %v7253 = vmul.f32 %v5896, %v6916
        %v7254 = vmul.f32 %v5937, %v6920
        %v7255 = vmul.f32 %v5939, %v6924
        %v7256 = vmul.f32 %v5980, %v6928
        %v7257 = vmul.f32 %v5982, %v6932
        %v7258 = vmul.f32 %v6023, %v6936
        %v7259 = vmul.f32 %v6025, %v6940
        %v7260 = vmul.f32 %v6066, %v6944
        %v7261 = vmul.f32 %v6068, %v6948
        %v7262 = vmul.f32 %v6109, %v6952
        %v7263 = vmul.f32 %v6111, %v6956
        %v7264 = vmul.f32 %v6152, %v6960
        %v7265 = vmul.f32 %v6154, %v6964
        %v7266 = vmul.f32 %v6195, %v6968
        %v7267 = vmul.f32 %v6197, %v6972
        %v7268 = vmul.f32 %v6238, %v6976
        %v7269 = vmul.f32 %v6240, %v6980
        %v7270 = vmul.f32 %v6281, %v6984
        %v7271 = vmul.f32 %v6283, %v6988
        %v7272 = vmul.f32 %v6324, %v6992
        %v7273 = vmul.f32 %v6326, %v6996
        %v7274 = vmul.f32 %v6367, %v7000
        %v7275 = vmul.f32 %v6369, %v7004
        %v7276 = vmul.f32 %v6410, %v7008
        %v7277 = vmul.f32 %v6412, %v7012
        %v7278 = vmul.f32 %v6453, %v7016
        %v7279 = vmul.f32 %v3662, %v6496
        %v7280 = vmul.f32 %v3664, %v6500
        %v7281 = vmul.f32 %v3705, %v6504
        %v7282 = vmul.f32 %v3707, %v6508
        %v7283 = vmul.f32 %v3748, %v6512
        %v7284 = vmul.f32 %v3750, %v6516
        %v7285 = vmul.f32 %v3791, %v6520
        %v7286 = vmul.f32 %v3793, %v6524
        %v7287 = vmul.f32 %v3834, %v6528
        %v7288 = vmul.f32 %v3836, %v6532
        %v7289 = vmul.f32 %v3877, %v6536
        %v7290 = vmul.f32 %v3879, %v6540
        %v7291 = vmul.f32 %v3920, %v6544
        %v7292 = vmul.f32 %v3922, %v6548
        %v7293 = vmul.f32 %v3963, %v6552
        %v7294 = vmul.f32 %v3965, %v6556
        %v7295 = vmul.f32 %v4006, %v6560
        %v7296 = vmul.f32 %v4008, %v6564
        %v7297 = vmul.f32 %v4049, %v6568
        %v7298 = vmul.f32 %v4051, %v6572
        %v7299 = vmul.f32 %v4092, %v6576
        %v7300 = vmul.f32 %v4094, %v6580
        %v7301 = vmul.f32 %v4135, %v6584
        %v7302 = vmul.f32 %v4137, %v6588
        %v7303 = vmul.f32 %v4178, %v6592
        %v7304 = vmul.f32 %v4180, %v6596
        %v7305 = vmul.f32 %v4221, %v6600
        %v7306 = vmul.f32 %v4223, %v6604
        %v7307 = vmul.f32 %v4264, %v6608
        %v7308 = vmul.f32 %v4266, %v6612
        %v7309 = vmul.f32 %v4307, %v6616
        %v7310 = vmul.f32 %v4309, %v6620
        %v7311 = vmul.f32 %v4350, %v6624
        %v7312 = vmul.f32 %v4352, %v6628
        %v7313 = vmul.f32 %v4393, %v6632
        %v7314 = vmul.f32 %v4395, %v6636
        %v7315 = vmul.f32 %v4436, %v6640
        %v7316 = vmul.f32 %v4438, %v6644
        %v7317 = vmul.f32 %v4479, %v6648
        %v7318 = vmul.f32 %v4481, %v6652
        %v7319 = vmul.f32 %v4522, %v6656
        %v7320 = vmul.f32 %v4524, %v6660
        %v7321 = vmul.f32 %v4565, %v6664
        %v7322 = vmul.f32 %v4567, %v6668
        %v7323 = vmul.f32 %v4608, %v6672
        %v7324 = vmul.f32 %v4610, %v6676
        %v7325 = vmul.f32 %v4651, %v6680
        %v7326 = vmul.f32 %v4653, %v6684
        %v7327 = vmul.f32 %v4694, %v6688
        %v7328 = vmul.f32 %v4696, %v6692
        %v7329 = vmul.f32 %v4737, %v6696
        %v7330 = vmul.f32 %v4739, %v6700
        %v7331 = vmul.f32 %v4780, %v6704
        %v7332 = vmul.f32 %v4782, %v6708
        %v7333 = vmul.f32 %v4823, %v6712
        %v7334 = vmul.f32 %v4825, %v6716
        %v7335 = vmul.f32 %v4866, %v6720
        %v7336 = vmul.f32 %v4868, %v6724
        %v7337 = vmul.f32 %v4909, %v6728
        %v7338 = vmul.f32 %v4911, %v6732
        %v7339 = vmul.f32 %v4952, %v6736
        %v7340 = vmul.f32 %v4954, %v6740
        %v7341 = vmul.f32 %v4995, %v6744
        %v7342 = vmul.f32 %v4997, %v6748
        %v7343 = vmul.f32 %v5038, %v6752
        %v7344 = vmul.f32 %v5040, %v6756
        %v7345 = vmul.f32 %v5081, %v6760
        %v7346 = vmul.f32 %v5083, %v6764
        %v7347 = vmul.f32 %v5124, %v6768
        %v7348 = vmul.f32 %v5126, %v6772
        %v7349 = vmul.f32 %v5167, %v6776
        %v7350 = vmul.f32 %v5169, %v6780
        %v7351 = vmul.f32 %v5210, %v6784
        %v7352 = vmul.f32 %v5212, %v6788
        %v7353 = vmul.f32 %v5253, %v6792
        %v7354 = vmul.f32 %v5255, %v6796
        %v7355 = vmul.f32 %v5296, %v6800
        %v7356 = vmul.f32 %v5298, %v6804
        %v7357 = vmul.f32 %v5339, %v6808
        %v7358 = vmul.f32 %v5341, %v6812
        %v7359 = vmul.f32 %v5382, %v6816
        %v7360 = vmul.f32 %v5384, %v6820
        %v7361 = vmul.f32 %v5425, %v6824
        %v7362 = vmul.f32 %v5427, %v6828
        %v7363 = vmul.f32 %v5468, %v6832
        %v7364 = vmul.f32 %v5470, %v6836
        %v7365 = vmul.f32 %v5511, %v6840
        %v7366 = vmul.f32 %v5513, %v6844
        %v7367 = vmul.f32 %v5554, %v6848
        %v7368 = vmul.f32 %v5556, %v6852
        %v7369 = vmul.f32 %v5597, %v6856
        %v7370 = vmul.f32 %v5599, %v6860
        %v7371 = vmul.f32 %v5640, %v6864
        %v7372 = vmul.f32 %v5642, %v6868
        %v7373 = vmul.f32 %v5683, %v6872
        %v7374 = vmul.f32 %v5685, %v6876
        %v7375 = vmul.f32 %v5726, %v6880
        %v7376 = vmul.f32 %v5728, %v6884
        %v7377 = vmul.f32 %v5769, %v6888
        %v7378 = vmul.f32 %v5771, %v6892
        %v7379 = vmul.f32 %v5812, %v6896
        %v7380 = vmul.f32 %v5814, %v6900
        %v7381 = vmul.f32 %v5855, %v6904
        %v7382 = vmul.f32 %v5857, %v6908
        %v7383 = vmul.f32 %v5898, %v6912
        %v7384 = vmul.f32 %v5900, %v6916
        %v7385 = vmul.f32 %v5941, %v6920
        %v7386 = vmul.f32 %v5943, %v6924
        %v7387 = vmul.f32 %v5984, %v6928
        %v7388 = vmul.f32 %v5986, %v6932
        %v7389 = vmul.f32 %v6027, %v6936
        %v7390 = vmul.f32 %v6029, %v6940
        %v7391 = vmul.f32 %v6070, %v6944
        %v7392 = vmul.f32 %v6072, %v6948
        %v7393 = vmul.f32 %v6113, %v6952
        %v7394 = vmul.f32 %v6115, %v6956
        %v7395 = vmul.f32 %v6156, %v6960
        %v7396 = vmul.f32 %v6158, %v6964
        %v7397 = vmul.f32 %v6199, %v6968
        %v7398 = vmul.f32 %v6201, %v6972
        %v7399 = vmul.f32 %v6242, %v6976
        %v7400 = vmul.f32 %v6244, %v6980
        %v7401 = vmul.f32 %v6285, %v6984
        %v7402 = vmul.f32 %v6287, %v6988
        %v7403 = vmul.f32 %v6328, %v6992
        %v7404 = vmul.f32 %v6330, %v6996
        %v7405 = vmul.f32 %v6371, %v7000
        %v7406 = vmul.f32 %v6373, %v7004
        %v7407 = vmul.f32 %v6414, %v7008
        %v7408 = vmul.f32 %v6416, %v7012
        %v7409 = vmul.f32 %v6456, %v7016
        %v7410 = vld [vmem:[%s856] sm:$0xff]
        %v7411 = vld [vmem:[%s856 + $0x8] sm:$0xff]
        %v7412 = vld [vmem:[%s856 + $0x10] sm:$0xff]
        %v7413 = vld [vmem:[%s856 + $0x18] sm:$0xff]
        %v7414 = vld [vmem:[%s856 + $0x20] sm:$0xff]
        %v7415 = vld [vmem:[%s856 + $0x28] sm:$0xff]
        %v7416 = vld [vmem:[%s856 + $0x30] sm:$0xff]
        %v7417 = vld [vmem:[%s856 + $0x38] sm:$0xff]
        %v7418 = vld [vmem:[%s856 + $0x40] sm:$0xff]
        %v7419 = vld [vmem:[%s856 + $0x48] sm:$0xff]
        %v7420 = vld [vmem:[%s856 + $0x50] sm:$0xff]
        %v7421 = vld [vmem:[%s856 + $0x58] sm:$0xff]
        %v7422 = vld [vmem:[%s856 + $0x60] sm:$0xff]
        %v7423 = vld [vmem:[%s856 + $0x68] sm:$0xff]
        %v7424 = vld [vmem:[%s856 + $0x70] sm:$0xff]
        %v7425 = vld [vmem:[%s856 + $0x78] sm:$0xff]
        %v7426 = vld [vmem:[%s856 + $0x80] sm:$0x7]
        %v7444 = vlaneseq
        %v7445 = vshrl.u32 %v7444, 7
        %v7446 = vsub.s32 0, %v7445
        %v7447 = vrot.slane %v7410, %v7446
        %v7448 = vlaneseq
        %v7449 = vshrl.u32 %v7448, 7
        %v7450 = vsub.s32 1, %v7449
        %v7451 = vrot.slane %v7410, %v7450
        %v7452 = vlaneseq
        %v7453 = vshrl.u32 %v7452, 7
        %v7454 = vsub.s32 2, %v7453
        %v7455 = vrot.slane %v7410, %v7454
        %v7456 = vlaneseq
        %v7457 = vshrl.u32 %v7456, 7
        %v7458 = vsub.s32 3, %v7457
        %v7459 = vrot.slane %v7410, %v7458
        %v7460 = vlaneseq
        %v7461 = vshrl.u32 %v7460, 7
        %v7462 = vsub.s32 4, %v7461
        %v7463 = vrot.slane %v7410, %v7462
        %v7464 = vlaneseq
        %v7465 = vshrl.u32 %v7464, 7
        %v7466 = vsub.s32 5, %v7465
        %v7467 = vrot.slane %v7410, %v7466
        %v7468 = vlaneseq
        %v7469 = vshrl.u32 %v7468, 7
        %v7470 = vsub.s32 6, %v7469
        %v7471 = vrot.slane %v7410, %v7470
        %v7472 = vlaneseq
        %v7473 = vshrl.u32 %v7472, 7
        %v7474 = vsub.s32 7, %v7473
        %v7475 = vrot.slane %v7410, %v7474
        %v7476 = vlaneseq
        %v7477 = vshrl.u32 %v7476, 7
        %v7478 = vsub.s32 0, %v7477
        %v7479 = vrot.slane %v7411, %v7478
        %v7480 = vlaneseq
        %v7481 = vshrl.u32 %v7480, 7
        %v7482 = vsub.s32 1, %v7481
        %v7483 = vrot.slane %v7411, %v7482
        %v7484 = vlaneseq
        %v7485 = vshrl.u32 %v7484, 7
        %v7486 = vsub.s32 2, %v7485
        %v7487 = vrot.slane %v7411, %v7486
        %v7488 = vlaneseq
        %v7489 = vshrl.u32 %v7488, 7
        %v7490 = vsub.s32 3, %v7489
        %v7491 = vrot.slane %v7411, %v7490
        %v7492 = vlaneseq
        %v7493 = vshrl.u32 %v7492, 7
        %v7494 = vsub.s32 4, %v7493
        %v7495 = vrot.slane %v7411, %v7494
        %v7496 = vlaneseq
        %v7497 = vshrl.u32 %v7496, 7
        %v7498 = vsub.s32 5, %v7497
        %v7499 = vrot.slane %v7411, %v7498
        %v7500 = vlaneseq
        %v7501 = vshrl.u32 %v7500, 7
        %v7502 = vsub.s32 6, %v7501
        %v7503 = vrot.slane %v7411, %v7502
        %v7504 = vlaneseq
        %v7505 = vshrl.u32 %v7504, 7
        %v7506 = vsub.s32 7, %v7505
        %v7507 = vrot.slane %v7411, %v7506
        %v7508 = vlaneseq
        %v7509 = vshrl.u32 %v7508, 7
        %v7510 = vsub.s32 0, %v7509
        %v7511 = vrot.slane %v7412, %v7510
        %v7512 = vlaneseq
        %v7513 = vshrl.u32 %v7512, 7
        %v7514 = vsub.s32 1, %v7513
        %v7515 = vrot.slane %v7412, %v7514
        %v7516 = vlaneseq
        %v7517 = vshrl.u32 %v7516, 7
        %v7518 = vsub.s32 2, %v7517
        %v7519 = vrot.slane %v7412, %v7518
        %v7520 = vlaneseq
        %v7521 = vshrl.u32 %v7520, 7
        %v7522 = vsub.s32 3, %v7521
        %v7523 = vrot.slane %v7412, %v7522
        %v7524 = vlaneseq
        %v7525 = vshrl.u32 %v7524, 7
        %v7526 = vsub.s32 4, %v7525
        %v7527 = vrot.slane %v7412, %v7526
        %v7528 = vlaneseq
        %v7529 = vshrl.u32 %v7528, 7
        %v7530 = vsub.s32 5, %v7529
        %v7531 = vrot.slane %v7412, %v7530
        %v7532 = vlaneseq
        %v7533 = vshrl.u32 %v7532, 7
        %v7534 = vsub.s32 6, %v7533
        %v7535 = vrot.slane %v7412, %v7534
        %v7536 = vlaneseq
        %v7537 = vshrl.u32 %v7536, 7
        %v7538 = vsub.s32 7, %v7537
        %v7539 = vrot.slane %v7412, %v7538
        %v7540 = vlaneseq
        %v7541 = vshrl.u32 %v7540, 7
        %v7542 = vsub.s32 0, %v7541
        %v7543 = vrot.slane %v7413, %v7542
        %v7544 = vlaneseq
        %v7545 = vshrl.u32 %v7544, 7
        %v7546 = vsub.s32 1, %v7545
        %v7547 = vrot.slane %v7413, %v7546
        %v7548 = vlaneseq
        %v7549 = vshrl.u32 %v7548, 7
        %v7550 = vsub.s32 2, %v7549
        %v7551 = vrot.slane %v7413, %v7550
        %v7552 = vlaneseq
        %v7553 = vshrl.u32 %v7552, 7
        %v7554 = vsub.s32 3, %v7553
        %v7555 = vrot.slane %v7413, %v7554
        %v7556 = vlaneseq
        %v7557 = vshrl.u32 %v7556, 7
        %v7558 = vsub.s32 4, %v7557
        %v7559 = vrot.slane %v7413, %v7558
        %v7560 = vlaneseq
        %v7561 = vshrl.u32 %v7560, 7
        %v7562 = vsub.s32 5, %v7561
        %v7563 = vrot.slane %v7413, %v7562
        %v7564 = vlaneseq
        %v7565 = vshrl.u32 %v7564, 7
        %v7566 = vsub.s32 6, %v7565
        %v7567 = vrot.slane %v7413, %v7566
        %v7568 = vlaneseq
        %v7569 = vshrl.u32 %v7568, 7
        %v7570 = vsub.s32 7, %v7569
        %v7571 = vrot.slane %v7413, %v7570
        %v7572 = vlaneseq
        %v7573 = vshrl.u32 %v7572, 7
        %v7574 = vsub.s32 0, %v7573
        %v7575 = vrot.slane %v7414, %v7574
        %v7576 = vlaneseq
        %v7577 = vshrl.u32 %v7576, 7
        %v7578 = vsub.s32 1, %v7577
        %v7579 = vrot.slane %v7414, %v7578
        %v7580 = vlaneseq
        %v7581 = vshrl.u32 %v7580, 7
        %v7582 = vsub.s32 2, %v7581
        %v7583 = vrot.slane %v7414, %v7582
        %v7584 = vlaneseq
        %v7585 = vshrl.u32 %v7584, 7
        %v7586 = vsub.s32 3, %v7585
        %v7587 = vrot.slane %v7414, %v7586
        %v7588 = vlaneseq
        %v7589 = vshrl.u32 %v7588, 7
        %v7590 = vsub.s32 4, %v7589
        %v7591 = vrot.slane %v7414, %v7590
        %v7592 = vlaneseq
        %v7593 = vshrl.u32 %v7592, 7
        %v7594 = vsub.s32 5, %v7593
        %v7595 = vrot.slane %v7414, %v7594
        %v7596 = vlaneseq
        %v7597 = vshrl.u32 %v7596, 7
        %v7598 = vsub.s32 6, %v7597
        %v7599 = vrot.slane %v7414, %v7598
        %v7600 = vlaneseq
        %v7601 = vshrl.u32 %v7600, 7
        %v7602 = vsub.s32 7, %v7601
        %v7603 = vrot.slane %v7414, %v7602
        %v7604 = vlaneseq
        %v7605 = vshrl.u32 %v7604, 7
        %v7606 = vsub.s32 0, %v7605
        %v7607 = vrot.slane %v7415, %v7606
        %v7608 = vlaneseq
        %v7609 = vshrl.u32 %v7608, 7
        %v7610 = vsub.s32 1, %v7609
        %v7611 = vrot.slane %v7415, %v7610
        %v7612 = vlaneseq
        %v7613 = vshrl.u32 %v7612, 7
        %v7614 = vsub.s32 2, %v7613
        %v7615 = vrot.slane %v7415, %v7614
        %v7616 = vlaneseq
        %v7617 = vshrl.u32 %v7616, 7
        %v7618 = vsub.s32 3, %v7617
        %v7619 = vrot.slane %v7415, %v7618
        %v7620 = vlaneseq
        %v7621 = vshrl.u32 %v7620, 7
        %v7622 = vsub.s32 4, %v7621
        %v7623 = vrot.slane %v7415, %v7622
        %v7624 = vlaneseq
        %v7625 = vshrl.u32 %v7624, 7
        %v7626 = vsub.s32 5, %v7625
        %v7627 = vrot.slane %v7415, %v7626
        %v7628 = vlaneseq
        %v7629 = vshrl.u32 %v7628, 7
        %v7630 = vsub.s32 6, %v7629
        %v7631 = vrot.slane %v7415, %v7630
        %v7632 = vlaneseq
        %v7633 = vshrl.u32 %v7632, 7
        %v7634 = vsub.s32 7, %v7633
        %v7635 = vrot.slane %v7415, %v7634
        %v7636 = vlaneseq
        %v7637 = vshrl.u32 %v7636, 7
        %v7638 = vsub.s32 0, %v7637
        %v7639 = vrot.slane %v7416, %v7638
        %v7640 = vlaneseq
        %v7641 = vshrl.u32 %v7640, 7
        %v7642 = vsub.s32 1, %v7641
        %v7643 = vrot.slane %v7416, %v7642
        %v7644 = vlaneseq
        %v7645 = vshrl.u32 %v7644, 7
        %v7646 = vsub.s32 2, %v7645
        %v7647 = vrot.slane %v7416, %v7646
        %v7648 = vlaneseq
        %v7649 = vshrl.u32 %v7648, 7
        %v7650 = vsub.s32 3, %v7649
        %v7651 = vrot.slane %v7416, %v7650
        %v7652 = vlaneseq
        %v7653 = vshrl.u32 %v7652, 7
        %v7654 = vsub.s32 4, %v7653
        %v7655 = vrot.slane %v7416, %v7654
        %v7656 = vlaneseq
        %v7657 = vshrl.u32 %v7656, 7
        %v7658 = vsub.s32 5, %v7657
        %v7659 = vrot.slane %v7416, %v7658
        %v7660 = vlaneseq
        %v7661 = vshrl.u32 %v7660, 7
        %v7662 = vsub.s32 6, %v7661
        %v7663 = vrot.slane %v7416, %v7662
        %v7664 = vlaneseq
        %v7665 = vshrl.u32 %v7664, 7
        %v7666 = vsub.s32 7, %v7665
        %v7667 = vrot.slane %v7416, %v7666
        %v7668 = vlaneseq
        %v7669 = vshrl.u32 %v7668, 7
        %v7670 = vsub.s32 0, %v7669
        %v7671 = vrot.slane %v7417, %v7670
        %v7672 = vlaneseq
        %v7673 = vshrl.u32 %v7672, 7
        %v7674 = vsub.s32 1, %v7673
        %v7675 = vrot.slane %v7417, %v7674
        %v7676 = vlaneseq
        %v7677 = vshrl.u32 %v7676, 7
        %v7678 = vsub.s32 2, %v7677
        %v7679 = vrot.slane %v7417, %v7678
        %v7680 = vlaneseq
        %v7681 = vshrl.u32 %v7680, 7
        %v7682 = vsub.s32 3, %v7681
        %v7683 = vrot.slane %v7417, %v7682
        %v7684 = vlaneseq
        %v7685 = vshrl.u32 %v7684, 7
        %v7686 = vsub.s32 4, %v7685
        %v7687 = vrot.slane %v7417, %v7686
        %v7688 = vlaneseq
        %v7689 = vshrl.u32 %v7688, 7
        %v7690 = vsub.s32 5, %v7689
        %v7691 = vrot.slane %v7417, %v7690
        %v7692 = vlaneseq
        %v7693 = vshrl.u32 %v7692, 7
        %v7694 = vsub.s32 6, %v7693
        %v7695 = vrot.slane %v7417, %v7694
        %v7696 = vlaneseq
        %v7697 = vshrl.u32 %v7696, 7
        %v7698 = vsub.s32 7, %v7697
        %v7699 = vrot.slane %v7417, %v7698
        %v7700 = vlaneseq
        %v7701 = vshrl.u32 %v7700, 7
        %v7702 = vsub.s32 0, %v7701
        %v7703 = vrot.slane %v7418, %v7702
        %v7704 = vlaneseq
        %v7705 = vshrl.u32 %v7704, 7
        %v7706 = vsub.s32 1, %v7705
        %v7707 = vrot.slane %v7418, %v7706
        %v7708 = vlaneseq
        %v7709 = vshrl.u32 %v7708, 7
        %v7710 = vsub.s32 2, %v7709
        %v7711 = vrot.slane %v7418, %v7710
        %v7712 = vlaneseq
        %v7713 = vshrl.u32 %v7712, 7
        %v7714 = vsub.s32 3, %v7713
        %v7715 = vrot.slane %v7418, %v7714
        %v7716 = vlaneseq
        %v7717 = vshrl.u32 %v7716, 7
        %v7718 = vsub.s32 4, %v7717
        %v7719 = vrot.slane %v7418, %v7718
        %v7720 = vlaneseq
        %v7721 = vshrl.u32 %v7720, 7
        %v7722 = vsub.s32 5, %v7721
        %v7723 = vrot.slane %v7418, %v7722
        %v7724 = vlaneseq
        %v7725 = vshrl.u32 %v7724, 7
        %v7726 = vsub.s32 6, %v7725
        %v7727 = vrot.slane %v7418, %v7726
        %v7728 = vlaneseq
        %v7729 = vshrl.u32 %v7728, 7
        %v7730 = vsub.s32 7, %v7729
        %v7731 = vrot.slane %v7418, %v7730
        %v7732 = vlaneseq
        %v7733 = vshrl.u32 %v7732, 7
        %v7734 = vsub.s32 0, %v7733
        %v7735 = vrot.slane %v7419, %v7734
        %v7736 = vlaneseq
        %v7737 = vshrl.u32 %v7736, 7
        %v7738 = vsub.s32 1, %v7737
        %v7739 = vrot.slane %v7419, %v7738
        %v7740 = vlaneseq
        %v7741 = vshrl.u32 %v7740, 7
        %v7742 = vsub.s32 2, %v7741
        %v7743 = vrot.slane %v7419, %v7742
        %v7744 = vlaneseq
        %v7745 = vshrl.u32 %v7744, 7
        %v7746 = vsub.s32 3, %v7745
        %v7747 = vrot.slane %v7419, %v7746
        %v7748 = vlaneseq
        %v7749 = vshrl.u32 %v7748, 7
        %v7750 = vsub.s32 4, %v7749
        %v7751 = vrot.slane %v7419, %v7750
        %v7752 = vlaneseq
        %v7753 = vshrl.u32 %v7752, 7
        %v7754 = vsub.s32 5, %v7753
        %v7755 = vrot.slane %v7419, %v7754
        %v7756 = vlaneseq
        %v7757 = vshrl.u32 %v7756, 7
        %v7758 = vsub.s32 6, %v7757
        %v7759 = vrot.slane %v7419, %v7758
        %v7760 = vlaneseq
        %v7761 = vshrl.u32 %v7760, 7
        %v7762 = vsub.s32 7, %v7761
        %v7763 = vrot.slane %v7419, %v7762
        %v7764 = vlaneseq
        %v7765 = vshrl.u32 %v7764, 7
        %v7766 = vsub.s32 0, %v7765
        %v7767 = vrot.slane %v7420, %v7766
        %v7768 = vlaneseq
        %v7769 = vshrl.u32 %v7768, 7
        %v7770 = vsub.s32 1, %v7769
        %v7771 = vrot.slane %v7420, %v7770
        %v7772 = vlaneseq
        %v7773 = vshrl.u32 %v7772, 7
        %v7774 = vsub.s32 2, %v7773
        %v7775 = vrot.slane %v7420, %v7774
        %v7776 = vlaneseq
        %v7777 = vshrl.u32 %v7776, 7
        %v7778 = vsub.s32 3, %v7777
        %v7779 = vrot.slane %v7420, %v7778
        %v7780 = vlaneseq
        %v7781 = vshrl.u32 %v7780, 7
        %v7782 = vsub.s32 4, %v7781
        %v7783 = vrot.slane %v7420, %v7782
        %v7784 = vlaneseq
        %v7785 = vshrl.u32 %v7784, 7
        %v7786 = vsub.s32 5, %v7785
        %v7787 = vrot.slane %v7420, %v7786
        %v7788 = vlaneseq
        %v7789 = vshrl.u32 %v7788, 7
        %v7790 = vsub.s32 6, %v7789
        %v7791 = vrot.slane %v7420, %v7790
        %v7792 = vlaneseq
        %v7793 = vshrl.u32 %v7792, 7
        %v7794 = vsub.s32 7, %v7793
        %v7795 = vrot.slane %v7420, %v7794
        %v7796 = vlaneseq
        %v7797 = vshrl.u32 %v7796, 7
        %v7798 = vsub.s32 0, %v7797
        %v7799 = vrot.slane %v7421, %v7798
        %v7800 = vlaneseq
        %v7801 = vshrl.u32 %v7800, 7
        %v7802 = vsub.s32 1, %v7801
        %v7803 = vrot.slane %v7421, %v7802
        %v7804 = vlaneseq
        %v7805 = vshrl.u32 %v7804, 7
        %v7806 = vsub.s32 2, %v7805
        %v7807 = vrot.slane %v7421, %v7806
        %v7808 = vlaneseq
        %v7809 = vshrl.u32 %v7808, 7
        %v7810 = vsub.s32 3, %v7809
        %v7811 = vrot.slane %v7421, %v7810
        %v7812 = vlaneseq
        %v7813 = vshrl.u32 %v7812, 7
        %v7814 = vsub.s32 4, %v7813
        %v7815 = vrot.slane %v7421, %v7814
        %v7816 = vlaneseq
        %v7817 = vshrl.u32 %v7816, 7
        %v7818 = vsub.s32 5, %v7817
        %v7819 = vrot.slane %v7421, %v7818
        %v7820 = vlaneseq
        %v7821 = vshrl.u32 %v7820, 7
        %v7822 = vsub.s32 6, %v7821
        %v7823 = vrot.slane %v7421, %v7822
        %v7824 = vlaneseq
        %v7825 = vshrl.u32 %v7824, 7
        %v7826 = vsub.s32 7, %v7825
        %v7827 = vrot.slane %v7421, %v7826
        %v7828 = vlaneseq
        %v7829 = vshrl.u32 %v7828, 7
        %v7830 = vsub.s32 0, %v7829
        %v7831 = vrot.slane %v7422, %v7830
        %v7832 = vlaneseq
        %v7833 = vshrl.u32 %v7832, 7
        %v7834 = vsub.s32 1, %v7833
        %v7835 = vrot.slane %v7422, %v7834
        %v7836 = vlaneseq
        %v7837 = vshrl.u32 %v7836, 7
        %v7838 = vsub.s32 2, %v7837
        %v7839 = vrot.slane %v7422, %v7838
        %v7840 = vlaneseq
        %v7841 = vshrl.u32 %v7840, 7
        %v7842 = vsub.s32 3, %v7841
        %v7843 = vrot.slane %v7422, %v7842
        %v7844 = vlaneseq
        %v7845 = vshrl.u32 %v7844, 7
        %v7846 = vsub.s32 4, %v7845
        %v7847 = vrot.slane %v7422, %v7846
        %v7848 = vlaneseq
        %v7849 = vshrl.u32 %v7848, 7
        %v7850 = vsub.s32 5, %v7849
        %v7851 = vrot.slane %v7422, %v7850
        %v7852 = vlaneseq
        %v7853 = vshrl.u32 %v7852, 7
        %v7854 = vsub.s32 6, %v7853
        %v7855 = vrot.slane %v7422, %v7854
        %v7856 = vlaneseq
        %v7857 = vshrl.u32 %v7856, 7
        %v7858 = vsub.s32 7, %v7857
        %v7859 = vrot.slane %v7422, %v7858
        %v7860 = vlaneseq
        %v7861 = vshrl.u32 %v7860, 7
        %v7862 = vsub.s32 0, %v7861
        %v7863 = vrot.slane %v7423, %v7862
        %v7864 = vlaneseq
        %v7865 = vshrl.u32 %v7864, 7
        %v7866 = vsub.s32 1, %v7865
        %v7867 = vrot.slane %v7423, %v7866
        %v7868 = vlaneseq
        %v7869 = vshrl.u32 %v7868, 7
        %v7870 = vsub.s32 2, %v7869
        %v7871 = vrot.slane %v7423, %v7870
        %v7872 = vlaneseq
        %v7873 = vshrl.u32 %v7872, 7
        %v7874 = vsub.s32 3, %v7873
        %v7875 = vrot.slane %v7423, %v7874
        %v7876 = vlaneseq
        %v7877 = vshrl.u32 %v7876, 7
        %v7878 = vsub.s32 4, %v7877
        %v7879 = vrot.slane %v7423, %v7878
        %v7880 = vlaneseq
        %v7881 = vshrl.u32 %v7880, 7
        %v7882 = vsub.s32 5, %v7881
        %v7883 = vrot.slane %v7423, %v7882
        %v7884 = vlaneseq
        %v7885 = vshrl.u32 %v7884, 7
        %v7886 = vsub.s32 6, %v7885
        %v7887 = vrot.slane %v7423, %v7886
        %v7888 = vlaneseq
        %v7889 = vshrl.u32 %v7888, 7
        %v7890 = vsub.s32 7, %v7889
        %v7891 = vrot.slane %v7423, %v7890
        %v7892 = vlaneseq
        %v7893 = vshrl.u32 %v7892, 7
        %v7894 = vsub.s32 0, %v7893
        %v7895 = vrot.slane %v7424, %v7894
        %v7896 = vlaneseq
        %v7897 = vshrl.u32 %v7896, 7
        %v7898 = vsub.s32 1, %v7897
        %v7899 = vrot.slane %v7424, %v7898
        %v7900 = vlaneseq
        %v7901 = vshrl.u32 %v7900, 7
        %v7902 = vsub.s32 2, %v7901
        %v7903 = vrot.slane %v7424, %v7902
        %v7904 = vlaneseq
        %v7905 = vshrl.u32 %v7904, 7
        %v7906 = vsub.s32 3, %v7905
        %v7907 = vrot.slane %v7424, %v7906
        %v7908 = vlaneseq
        %v7909 = vshrl.u32 %v7908, 7
        %v7910 = vsub.s32 4, %v7909
        %v7911 = vrot.slane %v7424, %v7910
        %v7912 = vlaneseq
        %v7913 = vshrl.u32 %v7912, 7
        %v7914 = vsub.s32 5, %v7913
        %v7915 = vrot.slane %v7424, %v7914
        %v7916 = vlaneseq
        %v7917 = vshrl.u32 %v7916, 7
        %v7918 = vsub.s32 6, %v7917
        %v7919 = vrot.slane %v7424, %v7918
        %v7920 = vlaneseq
        %v7921 = vshrl.u32 %v7920, 7
        %v7922 = vsub.s32 7, %v7921
        %v7923 = vrot.slane %v7424, %v7922
        %v7924 = vlaneseq
        %v7925 = vshrl.u32 %v7924, 7
        %v7926 = vsub.s32 0, %v7925
        %v7927 = vrot.slane %v7425, %v7926
        %v7928 = vlaneseq
        %v7929 = vshrl.u32 %v7928, 7
        %v7930 = vsub.s32 1, %v7929
        %v7931 = vrot.slane %v7425, %v7930
        %v7932 = vlaneseq
        %v7933 = vshrl.u32 %v7932, 7
        %v7934 = vsub.s32 2, %v7933
        %v7935 = vrot.slane %v7425, %v7934
        %v7936 = vlaneseq
        %v7937 = vshrl.u32 %v7936, 7
        %v7938 = vsub.s32 3, %v7937
        %v7939 = vrot.slane %v7425, %v7938
        %v7940 = vlaneseq
        %v7941 = vshrl.u32 %v7940, 7
        %v7942 = vsub.s32 4, %v7941
        %v7943 = vrot.slane %v7425, %v7942
        %v7944 = vlaneseq
        %v7945 = vshrl.u32 %v7944, 7
        %v7946 = vsub.s32 5, %v7945
        %v7947 = vrot.slane %v7425, %v7946
        %v7948 = vlaneseq
        %v7949 = vshrl.u32 %v7948, 7
        %v7950 = vsub.s32 6, %v7949
        %v7951 = vrot.slane %v7425, %v7950
        %v7952 = vlaneseq
        %v7953 = vshrl.u32 %v7952, 7
        %v7954 = vsub.s32 7, %v7953
        %v7955 = vrot.slane %v7425, %v7954
        %v7956 = vlaneseq
        %v7957 = vshrl.u32 %v7956, 7
        %v7958 = vsub.s32 0, %v7957
        %v7959 = vrot.slane %v7426, %v7958
        %v7960 = vlaneseq
        %v7961 = vshrl.u32 %v7960, 7
        %v7962 = vsub.s32 1, %v7961
        %v7963 = vrot.slane %v7426, %v7962
        %v7964 = vlaneseq
        %v7965 = vshrl.u32 %v7964, 7
        %v7966 = vsub.s32 2, %v7965
        %v7967 = vrot.slane %v7426, %v7966
        %v8099 = vadd.f32 %v7148, %v7447
        %v8100 = vadd.f32 %v7149, %v7451
        %v8101 = vadd.f32 %v7150, %v7455
        %v8102 = vadd.f32 %v7151, %v7459
        %v8103 = vadd.f32 %v7152, %v7463
        %v8104 = vadd.f32 %v7153, %v7467
        %v8105 = vadd.f32 %v7154, %v7471
        %v8106 = vadd.f32 %v7155, %v7475
        %v8107 = vadd.f32 %v7156, %v7479
        %v8108 = vadd.f32 %v7157, %v7483
        %v8109 = vadd.f32 %v7158, %v7487
        %v8110 = vadd.f32 %v7159, %v7491
        %v8111 = vadd.f32 %v7160, %v7495
        %v8112 = vadd.f32 %v7161, %v7499
        %v8113 = vadd.f32 %v7162, %v7503
        %v8114 = vadd.f32 %v7163, %v7507
        %v8115 = vadd.f32 %v7164, %v7511
        %v8116 = vadd.f32 %v7165, %v7515
        %v8117 = vadd.f32 %v7166, %v7519
        %v8118 = vadd.f32 %v7167, %v7523
        %v8119 = vadd.f32 %v7168, %v7527
        %v8120 = vadd.f32 %v7169, %v7531
        %v8121 = vadd.f32 %v7170, %v7535
        %v8122 = vadd.f32 %v7171, %v7539
        %v8123 = vadd.f32 %v7172, %v7543
        %v8124 = vadd.f32 %v7173, %v7547
        %v8125 = vadd.f32 %v7174, %v7551
        %v8126 = vadd.f32 %v7175, %v7555
        %v8127 = vadd.f32 %v7176, %v7559
        %v8128 = vadd.f32 %v7177, %v7563
        %v8129 = vadd.f32 %v7178, %v7567
        %v8130 = vadd.f32 %v7179, %v7571
        %v8131 = vadd.f32 %v7180, %v7575
        %v8132 = vadd.f32 %v7181, %v7579
        %v8133 = vadd.f32 %v7182, %v7583
        %v8134 = vadd.f32 %v7183, %v7587
        %v8135 = vadd.f32 %v7184, %v7591
        %v8136 = vadd.f32 %v7185, %v7595
        %v8137 = vadd.f32 %v7186, %v7599
        %v8138 = vadd.f32 %v7187, %v7603
        %v8139 = vadd.f32 %v7188, %v7607
        %v8140 = vadd.f32 %v7189, %v7611
        %v8141 = vadd.f32 %v7190, %v7615
        %v8142 = vadd.f32 %v7191, %v7619
        %v8143 = vadd.f32 %v7192, %v7623
        %v8144 = vadd.f32 %v7193, %v7627
        %v8145 = vadd.f32 %v7194, %v7631
        %v8146 = vadd.f32 %v7195, %v7635
        %v8147 = vadd.f32 %v7196, %v7639
        %v8148 = vadd.f32 %v7197, %v7643
        %v8149 = vadd.f32 %v7198, %v7647
        %v8150 = vadd.f32 %v7199, %v7651
        %v8151 = vadd.f32 %v7200, %v7655
        %v8152 = vadd.f32 %v7201, %v7659
        %v8153 = vadd.f32 %v7202, %v7663
        %v8154 = vadd.f32 %v7203, %v7667
        %v8155 = vadd.f32 %v7204, %v7671
        %v8156 = vadd.f32 %v7205, %v7675
        %v8157 = vadd.f32 %v7206, %v7679
        %v8158 = vadd.f32 %v7207, %v7683
        %v8159 = vadd.f32 %v7208, %v7687
        %v8160 = vadd.f32 %v7209, %v7691
        %v8161 = vadd.f32 %v7210, %v7695
        %v8162 = vadd.f32 %v7211, %v7699
        %v8163 = vadd.f32 %v7212, %v7703
        %v8164 = vadd.f32 %v7213, %v7707
        %v8165 = vadd.f32 %v7214, %v7711
        %v8166 = vadd.f32 %v7215, %v7715
        %v8167 = vadd.f32 %v7216, %v7719
        %v8168 = vadd.f32 %v7217, %v7723
        %v8169 = vadd.f32 %v7218, %v7727
        %v8170 = vadd.f32 %v7219, %v7731
        %v8171 = vadd.f32 %v7220, %v7735
        %v8172 = vadd.f32 %v7221, %v7739
        %v8173 = vadd.f32 %v7222, %v7743
        %v8174 = vadd.f32 %v7223, %v7747
        %v8175 = vadd.f32 %v7224, %v7751
        %v8176 = vadd.f32 %v7225, %v7755
        %v8177 = vadd.f32 %v7226, %v7759
        %v8178 = vadd.f32 %v7227, %v7763
        %v8179 = vadd.f32 %v7228, %v7767
        %v8180 = vadd.f32 %v7229, %v7771
        %v8181 = vadd.f32 %v7230, %v7775
        %v8182 = vadd.f32 %v7231, %v7779
        %v8183 = vadd.f32 %v7232, %v7783
        %v8184 = vadd.f32 %v7233, %v7787
        %v8185 = vadd.f32 %v7234, %v7791
        %v8186 = vadd.f32 %v7235, %v7795
        %v8187 = vadd.f32 %v7236, %v7799
        %v8188 = vadd.f32 %v7237, %v7803
        %v8189 = vadd.f32 %v7238, %v7807
        %v8190 = vadd.f32 %v7239, %v7811
        %v8191 = vadd.f32 %v7240, %v7815
        %v8192 = vadd.f32 %v7241, %v7819
        %v8193 = vadd.f32 %v7242, %v7823
        %v8194 = vadd.f32 %v7243, %v7827
        %v8195 = vadd.f32 %v7244, %v7831
        %v8196 = vadd.f32 %v7245, %v7835
        %v8197 = vadd.f32 %v7246, %v7839
        %v8198 = vadd.f32 %v7247, %v7843
        %v8199 = vadd.f32 %v7248, %v7847
        %v8200 = vadd.f32 %v7249, %v7851
        %v8201 = vadd.f32 %v7250, %v7855
        %v8202 = vadd.f32 %v7251, %v7859
        %v8203 = vadd.f32 %v7252, %v7863
        %v8204 = vadd.f32 %v7253, %v7867
        %v8205 = vadd.f32 %v7254, %v7871
        %v8206 = vadd.f32 %v7255, %v7875
        %v8207 = vadd.f32 %v7256, %v7879
        %v8208 = vadd.f32 %v7257, %v7883
        %v8209 = vadd.f32 %v7258, %v7887
        %v8210 = vadd.f32 %v7259, %v7891
        %v8211 = vadd.f32 %v7260, %v7895
        %v8212 = vadd.f32 %v7261, %v7899
        %v8213 = vadd.f32 %v7262, %v7903
        %v8214 = vadd.f32 %v7263, %v7907
        %v8215 = vadd.f32 %v7264, %v7911
        %v8216 = vadd.f32 %v7265, %v7915
        %v8217 = vadd.f32 %v7266, %v7919
        %v8218 = vadd.f32 %v7267, %v7923
        %v8219 = vadd.f32 %v7268, %v7927
        %v8220 = vadd.f32 %v7269, %v7931
        %v8221 = vadd.f32 %v7270, %v7935
        %v8222 = vadd.f32 %v7271, %v7939
        %v8223 = vadd.f32 %v7272, %v7943
        %v8224 = vadd.f32 %v7273, %v7947
        %v8225 = vadd.f32 %v7274, %v7951
        %v8226 = vadd.f32 %v7275, %v7955
        %v8227 = vadd.f32 %v7276, %v7959
        %v8228 = vadd.f32 %v7277, %v7963
        %v8229 = vadd.f32 %v7278, %v7967
        %v8230 = vadd.f32 %v7279, %v7447
        %v8231 = vadd.f32 %v7280, %v7451
        %v8232 = vadd.f32 %v7281, %v7455
        %v8233 = vadd.f32 %v7282, %v7459
        %v8234 = vadd.f32 %v7283, %v7463
        %v8235 = vadd.f32 %v7284, %v7467
        %v8236 = vadd.f32 %v7285, %v7471
        %v8237 = vadd.f32 %v7286, %v7475
        %v8238 = vadd.f32 %v7287, %v7479
        %v8239 = vadd.f32 %v7288, %v7483
        %v8240 = vadd.f32 %v7289, %v7487
        %v8241 = vadd.f32 %v7290, %v7491
        %v8242 = vadd.f32 %v7291, %v7495
        %v8243 = vadd.f32 %v7292, %v7499
        %v8244 = vadd.f32 %v7293, %v7503
        %v8245 = vadd.f32 %v7294, %v7507
        %v8246 = vadd.f32 %v7295, %v7511
        %v8247 = vadd.f32 %v7296, %v7515
        %v8248 = vadd.f32 %v7297, %v7519
        %v8249 = vadd.f32 %v7298, %v7523
        %v8250 = vadd.f32 %v7299, %v7527
        %v8251 = vadd.f32 %v7300, %v7531
        %v8252 = vadd.f32 %v7301, %v7535
        %v8253 = vadd.f32 %v7302, %v7539
        %v8254 = vadd.f32 %v7303, %v7543
        %v8255 = vadd.f32 %v7304, %v7547
        %v8256 = vadd.f32 %v7305, %v7551
        %v8257 = vadd.f32 %v7306, %v7555
        %v8258 = vadd.f32 %v7307, %v7559
        %v8259 = vadd.f32 %v7308, %v7563
        %v8260 = vadd.f32 %v7309, %v7567
        %v8261 = vadd.f32 %v7310, %v7571
        %v8262 = vadd.f32 %v7311, %v7575
        %v8263 = vadd.f32 %v7312, %v7579
        %v8264 = vadd.f32 %v7313, %v7583
        %v8265 = vadd.f32 %v7314, %v7587
        %v8266 = vadd.f32 %v7315, %v7591
        %v8267 = vadd.f32 %v7316, %v7595
        %v8268 = vadd.f32 %v7317, %v7599
        %v8269 = vadd.f32 %v7318, %v7603
        %v8270 = vadd.f32 %v7319, %v7607
        %v8271 = vadd.f32 %v7320, %v7611
        %v8272 = vadd.f32 %v7321, %v7615
        %v8273 = vadd.f32 %v7322, %v7619
        %v8274 = vadd.f32 %v7323, %v7623
        %v8275 = vadd.f32 %v7324, %v7627
        %v8276 = vadd.f32 %v7325, %v7631
        %v8277 = vadd.f32 %v7326, %v7635
        %v8278 = vadd.f32 %v7327, %v7639
        %v8279 = vadd.f32 %v7328, %v7643
        %v8280 = vadd.f32 %v7329, %v7647
        %v8281 = vadd.f32 %v7330, %v7651
        %v8282 = vadd.f32 %v7331, %v7655
        %v8283 = vadd.f32 %v7332, %v7659
        %v8284 = vadd.f32 %v7333, %v7663
        %v8285 = vadd.f32 %v7334, %v7667
        %v8286 = vadd.f32 %v7335, %v7671
        %v8287 = vadd.f32 %v7336, %v7675
        %v8288 = vadd.f32 %v7337, %v7679
        %v8289 = vadd.f32 %v7338, %v7683
        %v8290 = vadd.f32 %v7339, %v7687
        %v8291 = vadd.f32 %v7340, %v7691
        %v8292 = vadd.f32 %v7341, %v7695
        %v8293 = vadd.f32 %v7342, %v7699
        %v8294 = vadd.f32 %v7343, %v7703
        %v8295 = vadd.f32 %v7344, %v7707
        %v8296 = vadd.f32 %v7345, %v7711
        %v8297 = vadd.f32 %v7346, %v7715
        %v8298 = vadd.f32 %v7347, %v7719
        %v8299 = vadd.f32 %v7348, %v7723
        %v8300 = vadd.f32 %v7349, %v7727
        %v8301 = vadd.f32 %v7350, %v7731
        %v8302 = vadd.f32 %v7351, %v7735
        %v8303 = vadd.f32 %v7352, %v7739
        %v8304 = vadd.f32 %v7353, %v7743
        %v8305 = vadd.f32 %v7354, %v7747
        %v8306 = vadd.f32 %v7355, %v7751
        %v8307 = vadd.f32 %v7356, %v7755
        %v8308 = vadd.f32 %v7357, %v7759
        %v8309 = vadd.f32 %v7358, %v7763
        %v8310 = vadd.f32 %v7359, %v7767
        %v8311 = vadd.f32 %v7360, %v7771
        %v8312 = vadd.f32 %v7361, %v7775
        %v8313 = vadd.f32 %v7362, %v7779
        %v8314 = vadd.f32 %v7363, %v7783
        %v8315 = vadd.f32 %v7364, %v7787
        %v8316 = vadd.f32 %v7365, %v7791
        %v8317 = vadd.f32 %v7366, %v7795
        %v8318 = vadd.f32 %v7367, %v7799
        %v8319 = vadd.f32 %v7368, %v7803
        %v8320 = vadd.f32 %v7369, %v7807
        %v8321 = vadd.f32 %v7370, %v7811
        %v8322 = vadd.f32 %v7371, %v7815
        %v8323 = vadd.f32 %v7372, %v7819
        %v8324 = vadd.f32 %v7373, %v7823
        %v8325 = vadd.f32 %v7374, %v7827
        %v8326 = vadd.f32 %v7375, %v7831
        %v8327 = vadd.f32 %v7376, %v7835
        %v8328 = vadd.f32 %v7377, %v7839
        %v8329 = vadd.f32 %v7378, %v7843
        %v8330 = vadd.f32 %v7379, %v7847
        %v8331 = vadd.f32 %v7380, %v7851
        %v8332 = vadd.f32 %v7381, %v7855
        %v8333 = vadd.f32 %v7382, %v7859
        %v8334 = vadd.f32 %v7383, %v7863
        %v8335 = vadd.f32 %v7384, %v7867
        %v8336 = vadd.f32 %v7385, %v7871
        %v8337 = vadd.f32 %v7386, %v7875
        %v8338 = vadd.f32 %v7387, %v7879
        %v8339 = vadd.f32 %v7388, %v7883
        %v8340 = vadd.f32 %v7389, %v7887
        %v8341 = vadd.f32 %v7390, %v7891
        %v8342 = vadd.f32 %v7391, %v7895
        %v8343 = vadd.f32 %v7392, %v7899
        %v8344 = vadd.f32 %v7393, %v7903
        %v8345 = vadd.f32 %v7394, %v7907
        %v8346 = vadd.f32 %v7395, %v7911
        %v8347 = vadd.f32 %v7396, %v7915
        %v8348 = vadd.f32 %v7397, %v7919
        %v8349 = vadd.f32 %v7398, %v7923
        %v8350 = vadd.f32 %v7399, %v7927
        %v8351 = vadd.f32 %v7400, %v7931
        %v8352 = vadd.f32 %v7401, %v7935
        %v8353 = vadd.f32 %v7402, %v7939
        %v8354 = vadd.f32 %v7403, %v7943
        %v8355 = vadd.f32 %v7404, %v7947
        %v8356 = vadd.f32 %v7405, %v7951
        %v8357 = vadd.f32 %v7406, %v7955
        %v8358 = vadd.f32 %v7407, %v7959
        %v8359 = vadd.f32 %v7408, %v7963
        %v8360 = vadd.f32 %v7409, %v7967
        %v8361 = vpack.c.bf16 %v8230, %v8099
        %v8362 = vpack.c.bf16 %v8231, %v8100
        %v8363 = vpack.c.bf16 %v8232, %v8101
        %v8364 = vpack.c.bf16 %v8233, %v8102
        %v8365 = vpack.c.bf16 %v8234, %v8103
        %v8366 = vpack.c.bf16 %v8235, %v8104
        %v8367 = vpack.c.bf16 %v8236, %v8105
        %v8368 = vpack.c.bf16 %v8237, %v8106
        %v8369 = vpack.c.bf16 %v8238, %v8107
        %v8370 = vpack.c.bf16 %v8239, %v8108
        %v8371 = vpack.c.bf16 %v8240, %v8109
        %v8372 = vpack.c.bf16 %v8241, %v8110
        %v8373 = vpack.c.bf16 %v8242, %v8111
        %v8374 = vpack.c.bf16 %v8243, %v8112
        %v8375 = vpack.c.bf16 %v8244, %v8113
        %v8376 = vpack.c.bf16 %v8245, %v8114
        %v8377 = vpack.c.bf16 %v8246, %v8115
        %v8378 = vpack.c.bf16 %v8247, %v8116
        %v8379 = vpack.c.bf16 %v8248, %v8117
        %v8380 = vpack.c.bf16 %v8249, %v8118
        %v8381 = vpack.c.bf16 %v8250, %v8119
        %v8382 = vpack.c.bf16 %v8251, %v8120
        %v8383 = vpack.c.bf16 %v8252, %v8121
        %v8384 = vpack.c.bf16 %v8253, %v8122
        %v8385 = vpack.c.bf16 %v8254, %v8123
        %v8386 = vpack.c.bf16 %v8255, %v8124
        %v8387 = vpack.c.bf16 %v8256, %v8125
        %v8388 = vpack.c.bf16 %v8257, %v8126
        %v8389 = vpack.c.bf16 %v8258, %v8127
        %v8390 = vpack.c.bf16 %v8259, %v8128
        %v8391 = vpack.c.bf16 %v8260, %v8129
        %v8392 = vpack.c.bf16 %v8261, %v8130
        %v8393 = vpack.c.bf16 %v8262, %v8131
        %v8394 = vpack.c.bf16 %v8263, %v8132
        %v8395 = vpack.c.bf16 %v8264, %v8133
        %v8396 = vpack.c.bf16 %v8265, %v8134
        %v8397 = vpack.c.bf16 %v8266, %v8135
        %v8398 = vpack.c.bf16 %v8267, %v8136
        %v8399 = vpack.c.bf16 %v8268, %v8137
        %v8400 = vpack.c.bf16 %v8269, %v8138
        %v8401 = vpack.c.bf16 %v8270, %v8139
        %v8402 = vpack.c.bf16 %v8271, %v8140
        %v8403 = vpack.c.bf16 %v8272, %v8141
        %v8404 = vpack.c.bf16 %v8273, %v8142
        %v8405 = vpack.c.bf16 %v8274, %v8143
        %v8406 = vpack.c.bf16 %v8275, %v8144
        %v8407 = vpack.c.bf16 %v8276, %v8145
        %v8408 = vpack.c.bf16 %v8277, %v8146
        %v8409 = vpack.c.bf16 %v8278, %v8147
        %v8410 = vpack.c.bf16 %v8279, %v8148
        %v8411 = vpack.c.bf16 %v8280, %v8149
        %v8412 = vpack.c.bf16 %v8281, %v8150
        %v8413 = vpack.c.bf16 %v8282, %v8151
        %v8414 = vpack.c.bf16 %v8283, %v8152
        %v8415 = vpack.c.bf16 %v8284, %v8153
        %v8416 = vpack.c.bf16 %v8285, %v8154
        %v8417 = vpack.c.bf16 %v8286, %v8155
        %v8418 = vpack.c.bf16 %v8287, %v8156
        %v8419 = vpack.c.bf16 %v8288, %v8157
        %v8420 = vpack.c.bf16 %v8289, %v8158
        %v8421 = vpack.c.bf16 %v8290, %v8159
        %v8422 = vpack.c.bf16 %v8291, %v8160
        %v8423 = vpack.c.bf16 %v8292, %v8161
        %v8424 = vpack.c.bf16 %v8293, %v8162
        %v8425 = vpack.c.bf16 %v8294, %v8163
        %v8426 = vpack.c.bf16 %v8295, %v8164
        %v8427 = vpack.c.bf16 %v8296, %v8165
        %v8428 = vpack.c.bf16 %v8297, %v8166
        %v8429 = vpack.c.bf16 %v8298, %v8167
        %v8430 = vpack.c.bf16 %v8299, %v8168
        %v8431 = vpack.c.bf16 %v8300, %v8169
        %v8432 = vpack.c.bf16 %v8301, %v8170
        %v8433 = vpack.c.bf16 %v8302, %v8171
        %v8434 = vpack.c.bf16 %v8303, %v8172
        %v8435 = vpack.c.bf16 %v8304, %v8173
        %v8436 = vpack.c.bf16 %v8305, %v8174
        %v8437 = vpack.c.bf16 %v8306, %v8175
        %v8438 = vpack.c.bf16 %v8307, %v8176
        %v8439 = vpack.c.bf16 %v8308, %v8177
        %v8440 = vpack.c.bf16 %v8309, %v8178
        %v8441 = vpack.c.bf16 %v8310, %v8179
        %v8442 = vpack.c.bf16 %v8311, %v8180
        %v8443 = vpack.c.bf16 %v8312, %v8181
        %v8444 = vpack.c.bf16 %v8313, %v8182
        %v8445 = vpack.c.bf16 %v8314, %v8183
        %v8446 = vpack.c.bf16 %v8315, %v8184
        %v8447 = vpack.c.bf16 %v8316, %v8185
        %v8448 = vpack.c.bf16 %v8317, %v8186
        %v8449 = vpack.c.bf16 %v8318, %v8187
        %v8450 = vpack.c.bf16 %v8319, %v8188
        %v8451 = vpack.c.bf16 %v8320, %v8189
        %v8452 = vpack.c.bf16 %v8321, %v8190
        %v8453 = vpack.c.bf16 %v8322, %v8191
        %v8454 = vpack.c.bf16 %v8323, %v8192
        %v8455 = vpack.c.bf16 %v8324, %v8193
        %v8456 = vpack.c.bf16 %v8325, %v8194
        %v8457 = vpack.c.bf16 %v8326, %v8195
        %v8458 = vpack.c.bf16 %v8327, %v8196
        %v8459 = vpack.c.bf16 %v8328, %v8197
        %v8460 = vpack.c.bf16 %v8329, %v8198
        %v8461 = vpack.c.bf16 %v8330, %v8199
        %v8462 = vpack.c.bf16 %v8331, %v8200
        %v8463 = vpack.c.bf16 %v8332, %v8201
        %v8464 = vpack.c.bf16 %v8333, %v8202
        %v8465 = vpack.c.bf16 %v8334, %v8203
        %v8466 = vpack.c.bf16 %v8335, %v8204
        %v8467 = vpack.c.bf16 %v8336, %v8205
        %v8468 = vpack.c.bf16 %v8337, %v8206
        %v8469 = vpack.c.bf16 %v8338, %v8207
        %v8470 = vpack.c.bf16 %v8339, %v8208
        %v8471 = vpack.c.bf16 %v8340, %v8209
        %v8472 = vpack.c.bf16 %v8341, %v8210
        %v8473 = vpack.c.bf16 %v8342, %v8211
        %v8474 = vpack.c.bf16 %v8343, %v8212
        %v8475 = vpack.c.bf16 %v8344, %v8213
        %v8476 = vpack.c.bf16 %v8345, %v8214
        %v8477 = vpack.c.bf16 %v8346, %v8215
        %v8478 = vpack.c.bf16 %v8347, %v8216
        %v8479 = vpack.c.bf16 %v8348, %v8217
        %v8480 = vpack.c.bf16 %v8349, %v8218
        %v8481 = vpack.c.bf16 %v8350, %v8219
        %v8482 = vpack.c.bf16 %v8351, %v8220
        %v8483 = vpack.c.bf16 %v8352, %v8221
        %v8484 = vpack.c.bf16 %v8353, %v8222
        %v8485 = vpack.c.bf16 %v8354, %v8223
        %v8486 = vpack.c.bf16 %v8355, %v8224
        %v8487 = vpack.c.bf16 %v8356, %v8225
        %v8488 = vpack.c.bf16 %v8357, %v8226
        %v8489 = vpack.c.bf16 %v8358, %v8227
        %v8490 = vpack.c.bf16 %v8359, %v8228
        %v8491 = vpack.c.bf16 %v8360, %v8229
        %v8623 = vunpack.c.l.b16 %v8361
        %v8624 = vunpack.c.l.b16 %v8362
        %v8625 = vunpack.c.l.b16 %v8363
        %v8626 = vunpack.c.l.b16 %v8364
        %v8627 = vunpack.c.l.b16 %v8365
        %v8628 = vunpack.c.l.b16 %v8366
        %v8629 = vunpack.c.l.b16 %v8367
        %v8630 = vunpack.c.l.b16 %v8368
        %v8631 = vunpack.c.l.b16 %v8369
        %v8632 = vunpack.c.l.b16 %v8370
        %v8633 = vunpack.c.l.b16 %v8371
        %v8634 = vunpack.c.l.b16 %v8372
        %v8635 = vunpack.c.l.b16 %v8373
        %v8636 = vunpack.c.l.b16 %v8374
        %v8637 = vunpack.c.l.b16 %v8375
        %v8638 = vunpack.c.l.b16 %v8376
        %v8639 = vunpack.c.l.b16 %v8377
        %v8640 = vunpack.c.l.b16 %v8378
        %v8641 = vunpack.c.l.b16 %v8379
        %v8642 = vunpack.c.l.b16 %v8380
        %v8643 = vunpack.c.l.b16 %v8381
        %v8644 = vunpack.c.l.b16 %v8382
        %v8645 = vunpack.c.l.b16 %v8383
        %v8646 = vunpack.c.l.b16 %v8384
        %v8647 = vunpack.c.l.b16 %v8385
        %v8648 = vunpack.c.l.b16 %v8386
        %v8649 = vunpack.c.l.b16 %v8387
        %v8650 = vunpack.c.l.b16 %v8388
        %v8651 = vunpack.c.l.b16 %v8389
        %v8652 = vunpack.c.l.b16 %v8390
        %v8653 = vunpack.c.l.b16 %v8391
        %v8654 = vunpack.c.l.b16 %v8392
        %v8655 = vunpack.c.l.b16 %v8393
        %v8656 = vunpack.c.l.b16 %v8394
        %v8657 = vunpack.c.l.b16 %v8395
        %v8658 = vunpack.c.l.b16 %v8396
        %v8659 = vunpack.c.l.b16 %v8397
        %v8660 = vunpack.c.l.b16 %v8398
        %v8661 = vunpack.c.l.b16 %v8399
        %v8662 = vunpack.c.l.b16 %v8400
        %v8663 = vunpack.c.l.b16 %v8401
        %v8664 = vunpack.c.l.b16 %v8402
        %v8665 = vunpack.c.l.b16 %v8403
        %v8666 = vunpack.c.l.b16 %v8404
        %v8667 = vunpack.c.l.b16 %v8405
        %v8668 = vunpack.c.l.b16 %v8406
        %v8669 = vunpack.c.l.b16 %v8407
        %v8670 = vunpack.c.l.b16 %v8408
        %v8671 = vunpack.c.l.b16 %v8409
        %v8672 = vunpack.c.l.b16 %v8410
        %v8673 = vunpack.c.l.b16 %v8411
        %v8674 = vunpack.c.l.b16 %v8412
        %v8675 = vunpack.c.l.b16 %v8413
        %v8676 = vunpack.c.l.b16 %v8414
        %v8677 = vunpack.c.l.b16 %v8415
        %v8678 = vunpack.c.l.b16 %v8416
        %v8679 = vunpack.c.l.b16 %v8417
        %v8680 = vunpack.c.l.b16 %v8418
        %v8681 = vunpack.c.l.b16 %v8419
        %v8682 = vunpack.c.l.b16 %v8420
        %v8683 = vunpack.c.l.b16 %v8421
        %v8684 = vunpack.c.l.b16 %v8422
        %v8685 = vunpack.c.l.b16 %v8423
        %v8686 = vunpack.c.l.b16 %v8424
        %v8687 = vunpack.c.l.b16 %v8425
        %v8688 = vunpack.c.l.b16 %v8426
        %v8689 = vunpack.c.l.b16 %v8427
        %v8690 = vunpack.c.l.b16 %v8428
        %v8691 = vunpack.c.l.b16 %v8429
        %v8692 = vunpack.c.l.b16 %v8430
        %v8693 = vunpack.c.l.b16 %v8431
        %v8694 = vunpack.c.l.b16 %v8432
        %v8695 = vunpack.c.l.b16 %v8433
        %v8696 = vunpack.c.l.b16 %v8434
        %v8697 = vunpack.c.l.b16 %v8435
        %v8698 = vunpack.c.l.b16 %v8436
        %v8699 = vunpack.c.l.b16 %v8437
        %v8700 = vunpack.c.l.b16 %v8438
        %v8701 = vunpack.c.l.b16 %v8439
        %v8702 = vunpack.c.l.b16 %v8440
        %v8703 = vunpack.c.l.b16 %v8441
        %v8704 = vunpack.c.l.b16 %v8442
        %v8705 = vunpack.c.l.b16 %v8443
        %v8706 = vunpack.c.l.b16 %v8444
        %v8707 = vunpack.c.l.b16 %v8445
        %v8708 = vunpack.c.l.b16 %v8446
        %v8709 = vunpack.c.l.b16 %v8447
        %v8710 = vunpack.c.l.b16 %v8448
        %v8711 = vunpack.c.l.b16 %v8449
        %v8712 = vunpack.c.l.b16 %v8450
        %v8713 = vunpack.c.l.b16 %v8451
        %v8714 = vunpack.c.l.b16 %v8452
        %v8715 = vunpack.c.l.b16 %v8453
        %v8716 = vunpack.c.l.b16 %v8454
        %v8717 = vunpack.c.l.b16 %v8455
        %v8718 = vunpack.c.l.b16 %v8456
        %v8719 = vunpack.c.l.b16 %v8457
        %v8720 = vunpack.c.l.b16 %v8458
        %v8721 = vunpack.c.l.b16 %v8459
        %v8722 = vunpack.c.l.b16 %v8460
        %v8723 = vunpack.c.l.b16 %v8461
        %v8724 = vunpack.c.l.b16 %v8462
        %v8725 = vunpack.c.l.b16 %v8463
        %v8726 = vunpack.c.l.b16 %v8464
        %v8727 = vunpack.c.l.b16 %v8465
        %v8728 = vunpack.c.l.b16 %v8466
        %v8729 = vunpack.c.l.b16 %v8467
        %v8730 = vunpack.c.l.b16 %v8468
        %v8731 = vunpack.c.l.b16 %v8469
        %v8732 = vunpack.c.l.b16 %v8470
        %v8733 = vunpack.c.l.b16 %v8471
        %v8734 = vunpack.c.l.b16 %v8472
        %v8735 = vunpack.c.l.b16 %v8473
        %v8736 = vunpack.c.l.b16 %v8474
        %v8737 = vunpack.c.l.b16 %v8475
        %v8738 = vunpack.c.l.b16 %v8476
        %v8739 = vunpack.c.l.b16 %v8477
        %v8740 = vunpack.c.l.b16 %v8478
        %v8741 = vunpack.c.l.b16 %v8479
        %v8742 = vunpack.c.l.b16 %v8480
        %v8743 = vunpack.c.l.b16 %v8481
        %v8744 = vunpack.c.l.b16 %v8482
        %v8745 = vunpack.c.l.b16 %v8483
        %v8746 = vunpack.c.l.b16 %v8484
        %v8747 = vunpack.c.l.b16 %v8485
        %v8748 = vunpack.c.l.b16 %v8486
        %v8749 = vunpack.c.l.b16 %v8487
        %v8750 = vunpack.c.l.b16 %v8488
        %v8751 = vunpack.c.l.b16 %v8489
        %v8752 = vunpack.c.l.b16 %v8490
        %v8753 = vunpack.c.l.b16 %v8491
        %v8754 = vunpack.c.h.b16 %v8361
        %v8755 = vunpack.c.h.b16 %v8362
        %v8756 = vunpack.c.h.b16 %v8363
        %v8757 = vunpack.c.h.b16 %v8364
        %v8758 = vunpack.c.h.b16 %v8365
        %v8759 = vunpack.c.h.b16 %v8366
        %v8760 = vunpack.c.h.b16 %v8367
        %v8761 = vunpack.c.h.b16 %v8368
        %v8762 = vunpack.c.h.b16 %v8369
        %v8763 = vunpack.c.h.b16 %v8370
        %v8764 = vunpack.c.h.b16 %v8371
        %v8765 = vunpack.c.h.b16 %v8372
        %v8766 = vunpack.c.h.b16 %v8373
        %v8767 = vunpack.c.h.b16 %v8374
        %v8768 = vunpack.c.h.b16 %v8375
        %v8769 = vunpack.c.h.b16 %v8376
        %v8770 = vunpack.c.h.b16 %v8377
        %v8771 = vunpack.c.h.b16 %v8378
        %v8772 = vunpack.c.h.b16 %v8379
        %v8773 = vunpack.c.h.b16 %v8380
        %v8774 = vunpack.c.h.b16 %v8381
        %v8775 = vunpack.c.h.b16 %v8382
        %v8776 = vunpack.c.h.b16 %v8383
        %v8777 = vunpack.c.h.b16 %v8384
        %v8778 = vunpack.c.h.b16 %v8385
        %v8779 = vunpack.c.h.b16 %v8386
        %v8780 = vunpack.c.h.b16 %v8387
        %v8781 = vunpack.c.h.b16 %v8388
        %v8782 = vunpack.c.h.b16 %v8389
        %v8783 = vunpack.c.h.b16 %v8390
        %v8784 = vunpack.c.h.b16 %v8391
        %v8785 = vunpack.c.h.b16 %v8392
        %v8786 = vunpack.c.h.b16 %v8393
        %v8787 = vunpack.c.h.b16 %v8394
        %v8788 = vunpack.c.h.b16 %v8395
        %v8789 = vunpack.c.h.b16 %v8396
        %v8790 = vunpack.c.h.b16 %v8397
        %v8791 = vunpack.c.h.b16 %v8398
        %v8792 = vunpack.c.h.b16 %v8399
        %v8793 = vunpack.c.h.b16 %v8400
        %v8794 = vunpack.c.h.b16 %v8401
        %v8795 = vunpack.c.h.b16 %v8402
        %v8796 = vunpack.c.h.b16 %v8403
        %v8797 = vunpack.c.h.b16 %v8404
        %v8798 = vunpack.c.h.b16 %v8405
        %v8799 = vunpack.c.h.b16 %v8406
        %v8800 = vunpack.c.h.b16 %v8407
        %v8801 = vunpack.c.h.b16 %v8408
        %v8802 = vunpack.c.h.b16 %v8409
        %v8803 = vunpack.c.h.b16 %v8410
        %v8804 = vunpack.c.h.b16 %v8411
        %v8805 = vunpack.c.h.b16 %v8412
        %v8806 = vunpack.c.h.b16 %v8413
        %v8807 = vunpack.c.h.b16 %v8414
        %v8808 = vunpack.c.h.b16 %v8415
        %v8809 = vunpack.c.h.b16 %v8416
        %v8810 = vunpack.c.h.b16 %v8417
        %v8811 = vunpack.c.h.b16 %v8418
        %v8812 = vunpack.c.h.b16 %v8419
        %v8813 = vunpack.c.h.b16 %v8420
        %v8814 = vunpack.c.h.b16 %v8421
        %v8815 = vunpack.c.h.b16 %v8422
        %v8816 = vunpack.c.h.b16 %v8423
        %v8817 = vunpack.c.h.b16 %v8424
        %v8818 = vunpack.c.h.b16 %v8425
        %v8819 = vunpack.c.h.b16 %v8426
        %v8820 = vunpack.c.h.b16 %v8427
        %v8821 = vunpack.c.h.b16 %v8428
        %v8822 = vunpack.c.h.b16 %v8429
        %v8823 = vunpack.c.h.b16 %v8430
        %v8824 = vunpack.c.h.b16 %v8431
        %v8825 = vunpack.c.h.b16 %v8432
        %v8826 = vunpack.c.h.b16 %v8433
        %v8827 = vunpack.c.h.b16 %v8434
        %v8828 = vunpack.c.h.b16 %v8435
        %v8829 = vunpack.c.h.b16 %v8436
        %v8830 = vunpack.c.h.b16 %v8437
        %v8831 = vunpack.c.h.b16 %v8438
        %v8832 = vunpack.c.h.b16 %v8439
        %v8833 = vunpack.c.h.b16 %v8440
        %v8834 = vunpack.c.h.b16 %v8441
        %v8835 = vunpack.c.h.b16 %v8442
        %v8836 = vunpack.c.h.b16 %v8443
        %v8837 = vunpack.c.h.b16 %v8444
        %v8838 = vunpack.c.h.b16 %v8445
        %v8839 = vunpack.c.h.b16 %v8446
        %v8840 = vunpack.c.h.b16 %v8447
        %v8841 = vunpack.c.h.b16 %v8448
        %v8842 = vunpack.c.h.b16 %v8449
        %v8843 = vunpack.c.h.b16 %v8450
        %v8844 = vunpack.c.h.b16 %v8451
        %v8845 = vunpack.c.h.b16 %v8452
        %v8846 = vunpack.c.h.b16 %v8453
        %v8847 = vunpack.c.h.b16 %v8454
        %v8848 = vunpack.c.h.b16 %v8455
        %v8849 = vunpack.c.h.b16 %v8456
        %v8850 = vunpack.c.h.b16 %v8457
        %v8851 = vunpack.c.h.b16 %v8458
        %v8852 = vunpack.c.h.b16 %v8459
        %v8853 = vunpack.c.h.b16 %v8460
        %v8854 = vunpack.c.h.b16 %v8461
        %v8855 = vunpack.c.h.b16 %v8462
        %v8856 = vunpack.c.h.b16 %v8463
        %v8857 = vunpack.c.h.b16 %v8464
        %v8858 = vunpack.c.h.b16 %v8465
        %v8859 = vunpack.c.h.b16 %v8466
        %v8860 = vunpack.c.h.b16 %v8467
        %v8861 = vunpack.c.h.b16 %v8468
        %v8862 = vunpack.c.h.b16 %v8469
        %v8863 = vunpack.c.h.b16 %v8470
        %v8864 = vunpack.c.h.b16 %v8471
        %v8865 = vunpack.c.h.b16 %v8472
        %v8866 = vunpack.c.h.b16 %v8473
        %v8867 = vunpack.c.h.b16 %v8474
        %v8868 = vunpack.c.h.b16 %v8475
        %v8869 = vunpack.c.h.b16 %v8476
        %v8870 = vunpack.c.h.b16 %v8477
        %v8871 = vunpack.c.h.b16 %v8478
        %v8872 = vunpack.c.h.b16 %v8479
        %v8873 = vunpack.c.h.b16 %v8480
        %v8874 = vunpack.c.h.b16 %v8481
        %v8875 = vunpack.c.h.b16 %v8482
        %v8876 = vunpack.c.h.b16 %v8483
        %v8877 = vunpack.c.h.b16 %v8484
        %v8878 = vunpack.c.h.b16 %v8485
        %v8879 = vunpack.c.h.b16 %v8486
        %v8880 = vunpack.c.h.b16 %v8487
        %v8881 = vunpack.c.h.b16 %v8488
        %v8882 = vunpack.c.h.b16 %v8489
        %v8883 = vunpack.c.h.b16 %v8490
        %v8884 = vunpack.c.h.b16 %v8491
        %v8885 = vpack.c.b16 %v8624, %v8623
        %v8886 = vpack.c.b16 %v8626, %v8625
        %v8887 = vpack.c.b16 %v8628, %v8627
        %v8888 = vpack.c.b16 %v8630, %v8629
        %v8889 = vpack.c.b16 %v8632, %v8631
        %v8890 = vpack.c.b16 %v8634, %v8633
        %v8891 = vpack.c.b16 %v8636, %v8635
        %v8892 = vpack.c.b16 %v8638, %v8637
        %v8893 = vpack.c.b16 %v8640, %v8639
        %v8894 = vpack.c.b16 %v8642, %v8641
        %v8895 = vpack.c.b16 %v8644, %v8643
        %v8896 = vpack.c.b16 %v8646, %v8645
        %v8897 = vpack.c.b16 %v8648, %v8647
        %v8898 = vpack.c.b16 %v8650, %v8649
        %v8899 = vpack.c.b16 %v8652, %v8651
        %v8900 = vpack.c.b16 %v8654, %v8653
        %v8901 = vpack.c.b16 %v8656, %v8655
        %v8902 = vpack.c.b16 %v8658, %v8657
        %v8903 = vpack.c.b16 %v8660, %v8659
        %v8904 = vpack.c.b16 %v8662, %v8661
        %v8905 = vpack.c.b16 %v8664, %v8663
        %v8906 = vpack.c.b16 %v8666, %v8665
        %v8907 = vpack.c.b16 %v8668, %v8667
        %v8908 = vpack.c.b16 %v8670, %v8669
        %v8909 = vpack.c.b16 %v8672, %v8671
        %v8910 = vpack.c.b16 %v8674, %v8673
        %v8911 = vpack.c.b16 %v8676, %v8675
        %v8912 = vpack.c.b16 %v8678, %v8677
        %v8913 = vpack.c.b16 %v8680, %v8679
        %v8914 = vpack.c.b16 %v8682, %v8681
        %v8915 = vpack.c.b16 %v8684, %v8683
        %v8916 = vpack.c.b16 %v8686, %v8685
        %v8917 = vpack.c.b16 %v8688, %v8687
        %v8918 = vpack.c.b16 %v8690, %v8689
        %v8919 = vpack.c.b16 %v8692, %v8691
        %v8920 = vpack.c.b16 %v8694, %v8693
        %v8921 = vpack.c.b16 %v8696, %v8695
        %v8922 = vpack.c.b16 %v8698, %v8697
        %v8923 = vpack.c.b16 %v8700, %v8699
        %v8924 = vpack.c.b16 %v8702, %v8701
        %v8925 = vpack.c.b16 %v8704, %v8703
        %v8926 = vpack.c.b16 %v8706, %v8705
        %v8927 = vpack.c.b16 %v8708, %v8707
        %v8928 = vpack.c.b16 %v8710, %v8709
        %v8929 = vpack.c.b16 %v8712, %v8711
        %v8930 = vpack.c.b16 %v8714, %v8713
        %v8931 = vpack.c.b16 %v8716, %v8715
        %v8932 = vpack.c.b16 %v8718, %v8717
        %v8933 = vpack.c.b16 %v8720, %v8719
        %v8934 = vpack.c.b16 %v8722, %v8721
        %v8935 = vpack.c.b16 %v8724, %v8723
        %v8936 = vpack.c.b16 %v8726, %v8725
        %v8937 = vpack.c.b16 %v8728, %v8727
        %v8938 = vpack.c.b16 %v8730, %v8729
        %v8939 = vpack.c.b16 %v8732, %v8731
        %v8940 = vpack.c.b16 %v8734, %v8733
        %v8941 = vpack.c.b16 %v8736, %v8735
        %v8942 = vpack.c.b16 %v8738, %v8737
        %v8943 = vpack.c.b16 %v8740, %v8739
        %v8944 = vpack.c.b16 %v8742, %v8741
        %v8945 = vpack.c.b16 %v8744, %v8743
        %v8946 = vpack.c.b16 %v8746, %v8745
        %v8947 = vpack.c.b16 %v8748, %v8747
        %v8948 = vpack.c.b16 %v8750, %v8749
        %v8949 = vpack.c.b16 %v8752, %v8751
        %v8950 = vpack.c.b16 %v8753, %v8753
        %v8951 = vpack.c.b16 %v8755, %v8754
        %v8952 = vpack.c.b16 %v8757, %v8756
        %v8953 = vpack.c.b16 %v8759, %v8758
        %v8954 = vpack.c.b16 %v8761, %v8760
        %v8955 = vpack.c.b16 %v8763, %v8762
        %v8956 = vpack.c.b16 %v8765, %v8764
        %v8957 = vpack.c.b16 %v8767, %v8766
        %v8958 = vpack.c.b16 %v8769, %v8768
        %v8959 = vpack.c.b16 %v8771, %v8770
        %v8960 = vpack.c.b16 %v8773, %v8772
        %v8961 = vpack.c.b16 %v8775, %v8774
        %v8962 = vpack.c.b16 %v8777, %v8776
        %v8963 = vpack.c.b16 %v8779, %v8778
        %v8964 = vpack.c.b16 %v8781, %v8780
        %v8965 = vpack.c.b16 %v8783, %v8782
        %v8966 = vpack.c.b16 %v8785, %v8784
        %v8967 = vpack.c.b16 %v8787, %v8786
        %v8968 = vpack.c.b16 %v8789, %v8788
        %v8969 = vpack.c.b16 %v8791, %v8790
        %v8970 = vpack.c.b16 %v8793, %v8792
        %v8971 = vpack.c.b16 %v8795, %v8794
        %v8972 = vpack.c.b16 %v8797, %v8796
        %v8973 = vpack.c.b16 %v8799, %v8798
        %v8974 = vpack.c.b16 %v8801, %v8800
        %v8975 = vpack.c.b16 %v8803, %v8802
        %v8976 = vpack.c.b16 %v8805, %v8804
        %v8977 = vpack.c.b16 %v8807, %v8806
        %v8978 = vpack.c.b16 %v8809, %v8808
        %v8979 = vpack.c.b16 %v8811, %v8810
        %v8980 = vpack.c.b16 %v8813, %v8812
        %v8981 = vpack.c.b16 %v8815, %v8814
        %v8982 = vpack.c.b16 %v8817, %v8816
        %v8983 = vpack.c.b16 %v8819, %v8818
        %v8984 = vpack.c.b16 %v8821, %v8820
        %v8985 = vpack.c.b16 %v8823, %v8822
        %v8986 = vpack.c.b16 %v8825, %v8824
        %v8987 = vpack.c.b16 %v8827, %v8826
        %v8988 = vpack.c.b16 %v8829, %v8828
        %v8989 = vpack.c.b16 %v8831, %v8830
        %v8990 = vpack.c.b16 %v8833, %v8832
        %v8991 = vpack.c.b16 %v8835, %v8834
        %v8992 = vpack.c.b16 %v8837, %v8836
        %v8993 = vpack.c.b16 %v8839, %v8838
        %v8994 = vpack.c.b16 %v8841, %v8840
        %v8995 = vpack.c.b16 %v8843, %v8842
        %v8996 = vpack.c.b16 %v8845, %v8844
        %v8997 = vpack.c.b16 %v8847, %v8846
        %v8998 = vpack.c.b16 %v8849, %v8848
        %v8999 = vpack.c.b16 %v8851, %v8850
        %v9000 = vpack.c.b16 %v8853, %v8852
        %v9001 = vpack.c.b16 %v8855, %v8854
        %v9002 = vpack.c.b16 %v8857, %v8856
        %v9003 = vpack.c.b16 %v8859, %v8858
        %v9004 = vpack.c.b16 %v8861, %v8860
        %v9005 = vpack.c.b16 %v8863, %v8862
        %v9006 = vpack.c.b16 %v8865, %v8864
        %v9007 = vpack.c.b16 %v8867, %v8866
        %v9008 = vpack.c.b16 %v8869, %v8868
        %v9009 = vpack.c.b16 %v8871, %v8870
        %v9010 = vpack.c.b16 %v8873, %v8872
        %v9011 = vpack.c.b16 %v8875, %v8874
        %v9012 = vpack.c.b16 %v8877, %v8876
        %v9013 = vpack.c.b16 %v8879, %v8878
        %v9014 = vpack.c.b16 %v8881, %v8880
        %v9015 = vpack.c.b16 %v8883, %v8882
        %v9016 = vpack.c.b16 %v8884, %v8884
        %9149 = vst [vmem:[%s846] sm:$0xff] %v8885
        %9150 = vst [vmem:[%s846 + $0x8] sm:$0xff] %v8886
        %9151 = vst [vmem:[%s846 + $0x10] sm:$0xff] %v8887
        %9152 = vst [vmem:[%s846 + $0x18] sm:$0xff] %v8888
        %9153 = vst [vmem:[%s846 + $0x20] sm:$0xff] %v8889
        %9154 = vst [vmem:[%s846 + $0x28] sm:$0xff] %v8890
        %9155 = vst [vmem:[%s846 + $0x30] sm:$0xff] %v8891
        %9156 = vst [vmem:[%s846 + $0x38] sm:$0xff] %v8892
        %9157 = vst [vmem:[%s846 + $0x40] sm:$0xff] %v8893
        %9158 = vst [vmem:[%s846 + $0x48] sm:$0xff] %v8894
        %9159 = vst [vmem:[%s846 + $0x50] sm:$0xff] %v8895
        %9160 = vst [vmem:[%s846 + $0x58] sm:$0xff] %v8896
        %9161 = vst [vmem:[%s846 + $0x60] sm:$0xff] %v8897
        %9162 = vst [vmem:[%s846 + $0x68] sm:$0xff] %v8898
        %9163 = vst [vmem:[%s846 + $0x70] sm:$0xff] %v8899
        %9164 = vst [vmem:[%s846 + $0x78] sm:$0xff] %v8900
        %9165 = vst [vmem:[%s846 + $0x80] sm:$0xff] %v8901
        %9166 = vst [vmem:[%s846 + $0x88] sm:$0xff] %v8902
        %9167 = vst [vmem:[%s846 + $0x90] sm:$0xff] %v8903
        %9168 = vst [vmem:[%s846 + $0x98] sm:$0xff] %v8904
        %9169 = vst [vmem:[%s846 + $0xa0] sm:$0xff] %v8905
        %9170 = vst [vmem:[%s846 + $0xa8] sm:$0xff] %v8906
        %9171 = vst [vmem:[%s846 + $0xb0] sm:$0xff] %v8907
        %9172 = vst [vmem:[%s846 + $0xb8] sm:$0xff] %v8908
        %9173 = vst [vmem:[%s846 + $0xc0] sm:$0xff] %v8909
        %9174 = vst [vmem:[%s846 + $0xc8] sm:$0xff] %v8910
        %9175 = vst [vmem:[%s846 + $0xd0] sm:$0xff] %v8911
        %9176 = vst [vmem:[%s846 + $0xd8] sm:$0xff] %v8912
        %9177 = vst [vmem:[%s846 + $0xe0] sm:$0xff] %v8913
        %9178 = vst [vmem:[%s846 + $0xe8] sm:$0xff] %v8914
        %9179 = vst [vmem:[%s846 + $0xf0] sm:$0xff] %v8915
        %9180 = vst [vmem:[%s846 + $0xf8] sm:$0xff] %v8916
        %9181 = vst [vmem:[%s846 + $0x100] sm:$0xff] %v8917
        %9182 = vst [vmem:[%s846 + $0x108] sm:$0xff] %v8918
        %9183 = vst [vmem:[%s846 + $0x110] sm:$0xff] %v8919
        %9184 = vst [vmem:[%s846 + $0x118] sm:$0xff] %v8920
        %9185 = vst [vmem:[%s846 + $0x120] sm:$0xff] %v8921
        %9186 = vst [vmem:[%s846 + $0x128] sm:$0xff] %v8922
        %9187 = vst [vmem:[%s846 + $0x130] sm:$0xff] %v8923
        %9188 = vst [vmem:[%s846 + $0x138] sm:$0xff] %v8924
        %9189 = vst [vmem:[%s846 + $0x140] sm:$0xff] %v8925
        %9190 = vst [vmem:[%s846 + $0x148] sm:$0xff] %v8926
        %9191 = vst [vmem:[%s846 + $0x150] sm:$0xff] %v8927
        %9192 = vst [vmem:[%s846 + $0x158] sm:$0xff] %v8928
        %9193 = vst [vmem:[%s846 + $0x160] sm:$0xff] %v8929
        %9194 = vst [vmem:[%s846 + $0x168] sm:$0xff] %v8930
        %9195 = vst [vmem:[%s846 + $0x170] sm:$0xff] %v8931
        %9196 = vst [vmem:[%s846 + $0x178] sm:$0xff] %v8932
        %9197 = vst [vmem:[%s846 + $0x180] sm:$0xff] %v8933
        %9198 = vst [vmem:[%s846 + $0x188] sm:$0xff] %v8934
        %9199 = vst [vmem:[%s846 + $0x190] sm:$0xff] %v8935
        %9200 = vst [vmem:[%s846 + $0x198] sm:$0xff] %v8936
        %9201 = vst [vmem:[%s846 + $0x1a0] sm:$0xff] %v8937
        %9202 = vst [vmem:[%s846 + $0x1a8] sm:$0xff] %v8938
        %9203 = vst [vmem:[%s846 + $0x1b0] sm:$0xff] %v8939
        %9204 = vst [vmem:[%s846 + $0x1b8] sm:$0xff] %v8940
        %9205 = vst [vmem:[%s846 + $0x1c0] sm:$0xff] %v8941
        %9206 = vst [vmem:[%s846 + $0x1c8] sm:$0xff] %v8942
        %9207 = vst [vmem:[%s846 + $0x1d0] sm:$0xff] %v8943
        %9208 = vst [vmem:[%s846 + $0x1d8] sm:$0xff] %v8944
        %9209 = vst [vmem:[%s846 + $0x1e0] sm:$0xff] %v8945
        %9210 = vst [vmem:[%s846 + $0x1e8] sm:$0xff] %v8946
        %9211 = vst [vmem:[%s846 + $0x1f0] sm:$0xff] %v8947
        %9212 = vst [vmem:[%s846 + $0x1f8] sm:$0xff] %v8948
        %9213 = vst [vmem:[%s846 + $0x200] sm:$0xff] %v8949
        %9214 = vst [vmem:[%s846 + $0x208] sm:$0xf] %v8950
        %9215 = vst [vmem:[%s846 + $0x20c] sm:$0xff] %v8951
        %9216 = vst [vmem:[%s846 + $0x214] sm:$0xff] %v8952
        %9217 = vst [vmem:[%s846 + $0x21c] sm:$0xff] %v8953
        %9218 = vst [vmem:[%s846 + $0x224] sm:$0xff] %v8954
        %9219 = vst [vmem:[%s846 + $0x22c] sm:$0xff] %v8955
        %9220 = vst [vmem:[%s846 + $0x234] sm:$0xff] %v8956
        %9221 = vst [vmem:[%s846 + $0x23c] sm:$0xff] %v8957
        %9222 = vst [vmem:[%s846 + $0x244] sm:$0xff] %v8958
        %9223 = vst [vmem:[%s846 + $0x24c] sm:$0xff] %v8959
        %9224 = vst [vmem:[%s846 + $0x254] sm:$0xff] %v8960
        %9225 = vst [vmem:[%s846 + $0x25c] sm:$0xff] %v8961
        %9226 = vst [vmem:[%s846 + $0x264] sm:$0xff] %v8962
        %9227 = vst [vmem:[%s846 + $0x26c] sm:$0xff] %v8963
        %9228 = vst [vmem:[%s846 + $0x274] sm:$0xff] %v8964
        %9229 = vst [vmem:[%s846 + $0x27c] sm:$0xff] %v8965
        %9230 = vst [vmem:[%s846 + $0x284] sm:$0xff] %v8966
        %9231 = vst [vmem:[%s846 + $0x28c] sm:$0xff] %v8967
        %9232 = vst [vmem:[%s846 + $0x294] sm:$0xff] %v8968
        %9233 = vst [vmem:[%s846 + $0x29c] sm:$0xff] %v8969
        %9234 = vst [vmem:[%s846 + $0x2a4] sm:$0xff] %v8970
        %9235 = vst [vmem:[%s846 + $0x2ac] sm:$0xff] %v8971
        %9236 = vst [vmem:[%s846 + $0x2b4] sm:$0xff] %v8972
        %9237 = vst [vmem:[%s846 + $0x2bc] sm:$0xff] %v8973
        %9238 = vst [vmem:[%s846 + $0x2c4] sm:$0xff] %v8974
        %9239 = vst [vmem:[%s846 + $0x2cc] sm:$0xff] %v8975
        %9240 = vst [vmem:[%s846 + $0x2d4] sm:$0xff] %v8976
        %9241 = vst [vmem:[%s846 + $0x2dc] sm:$0xff] %v8977
        %9242 = vst [vmem:[%s846 + $0x2e4] sm:$0xff] %v8978
        %9243 = vst [vmem:[%s846 + $0x2ec] sm:$0xff] %v8979
        %9244 = vst [vmem:[%s846 + $0x2f4] sm:$0xff] %v8980
        %9245 = vst [vmem:[%s846 + $0x2fc] sm:$0xff] %v8981
        %9246 = vst [vmem:[%s846 + $0x304] sm:$0xff] %v8982
        %9247 = vst [vmem:[%s846 + $0x30c] sm:$0xff] %v8983
        %9248 = vst [vmem:[%s846 + $0x314] sm:$0xff] %v8984
        %9249 = vst [vmem:[%s846 + $0x31c] sm:$0xff] %v8985
        %9250 = vst [vmem:[%s846 + $0x324] sm:$0xff] %v8986
        %9251 = vst [vmem:[%s846 + $0x32c] sm:$0xff] %v8987
        %9252 = vst [vmem:[%s846 + $0x334] sm:$0xff] %v8988
        %9253 = vst [vmem:[%s846 + $0x33c] sm:$0xff] %v8989
        %9254 = vst [vmem:[%s846 + $0x344] sm:$0xff] %v8990
        %9255 = vst [vmem:[%s846 + $0x34c] sm:$0xff] %v8991
        %9256 = vst [vmem:[%s846 + $0x354] sm:$0xff] %v8992
        %9257 = vst [vmem:[%s846 + $0x35c] sm:$0xff] %v8993
        %9258 = vst [vmem:[%s846 + $0x364] sm:$0xff] %v8994
        %9259 = vst [vmem:[%s846 + $0x36c] sm:$0xff] %v8995
        %9260 = vst [vmem:[%s846 + $0x374] sm:$0xff] %v8996
        %9261 = vst [vmem:[%s846 + $0x37c] sm:$0xff] %v8997
        %9262 = vst [vmem:[%s846 + $0x384] sm:$0xff] %v8998
        %9263 = vst [vmem:[%s846 + $0x38c] sm:$0xff] %v8999
        %9264 = vst [vmem:[%s846 + $0x394] sm:$0xff] %v9000
        %9265 = vst [vmem:[%s846 + $0x39c] sm:$0xff] %v9001
        %9266 = vst [vmem:[%s846 + $0x3a4] sm:$0xff] %v9002
        %9267 = vst [vmem:[%s846 + $0x3ac] sm:$0xff] %v9003
        %9268 = vst [vmem:[%s846 + $0x3b4] sm:$0xff] %v9004
        %9269 = vst [vmem:[%s846 + $0x3bc] sm:$0xff] %v9005
        %9270 = vst [vmem:[%s846 + $0x3c4] sm:$0xff] %v9006
        %9271 = vst [vmem:[%s846 + $0x3cc] sm:$0xff] %v9007
        %9272 = vst [vmem:[%s846 + $0x3d4] sm:$0xff] %v9008
        %9273 = vst [vmem:[%s846 + $0x3dc] sm:$0xff] %v9009
        %9274 = vst [vmem:[%s846 + $0x3e4] sm:$0xff] %v9010
        %9275 = vst [vmem:[%s846 + $0x3ec] sm:$0xff] %v9011
        %9276 = vst [vmem:[%s846 + $0x3f4] sm:$0xff] %v9012
        %9277 = vst [vmem:[%s846 + $0x3fc] sm:$0xff] %v9013
        %9278 = vst [vmem:[%s846 + $0x404] sm:$0xff] %v9014
        %9279 = vst [vmem:[%s846 + $0x40c] sm:$0xff] %v9015
        %9280 = vst [vmem:[%s846 + $0x414] sm:$0xf] %v9016
        %s9281 = sand.u32 %s191, 1
        %s9282 = scalar_lea.sflag [#allocation5], %s9281
        %s9283 = sand.u32 %s191, 1
        %s9284 = smul.addr %s9283, 1048
        %s9285 = scalar_lea.vmem [#allocation4], %s9284
        // Predicated region
        $region76: #{decoder_only_forward.1} parent=66 // pred_check
          %p9286 = pneg %p201
        $region77: #{decoder_only_forward.1} parent=66 // pred_check_branch
          %9288 = sbr.rel (%p9286) target = $region79
        $region78: #{decoder_only_forward.1} parent=66 // pred_region
          %s9289 = smul.u32 131, %s21
          %s9291 = ssub.s32 16768, 16768
          %9292 = vsyncadd %s9282, %s9291
          %s9293 = smul.addr %s9289, 64
          %s9294 = scalar_lea.hbm %s7, %s9293
          %s9295 = sshll.u32 %s9285, 4
          %s9296 = int_to_ptr.vmem [resolvable:$true] %s9295
          %9301 = dma.vmem_to_hbm [thread:$0]  %s9296, 16768, %s9294, %s9282, 8384, 25152, 524
        $region79: #{decoder_only_forward.1} parent=66 // pred_fallthru
          _
      $region67: #{decoder_only_forward.1} parent=5 // pred_fallthru
        _
      %p9302 = scmp.le.s32.totalorder 2, %s16
      // Predicated region
      $region80: #{decoder_only_forward.1} parent=5 // pred_check
        %p9303 = pneg %p9302
      $region81: #{decoder_only_forward.1} parent=5 // pred_check_branch
        %9305 = sbr.rel (%p9303) target = $region83
      $region82: #{decoder_only_forward.1} parent=5 // pred_region
        %s9306 = ssub.s32 %s16, 2
        // Predicated region
        $region84: #{decoder_only_forward.1} parent=82 // pred_check
          %p9307 = pneg %p207
        $region85: #{decoder_only_forward.1} parent=82 // pred_check_branch
          %9309 = sbr.rel (%p9307) target = $region87
        $region86: #{decoder_only_forward.1} parent=82 // pred_region
          %s9310 = sand.u32 %s192, 1
          %s9311 = scalar_lea.sflag [#allocation5], %s9310
          %s9312 = sand.u32 %s192, 1
          %s9313 = smul.addr %s9312, 1048
          %s9314 = scalar_lea.vmem [#allocation4], %s9313
          %9315 = dma.done %s9311, 16768
        $region87: #{decoder_only_forward.1} parent=82 // pred_fallthru
          _
      $region83: #{decoder_only_forward.1} parent=5 // pred_fallthru
        _
    $region6: #{decoder_only_forward.1} parent=1 // loop_footer
      %s20 = sadd.s32 1, %s16
    $region7: #{decoder_only_forward.1} parent=1 // loop_footer_branch
      %15 = sbr.rel target = $region3
    $region8: #{decoder_only_forward.1} parent=1 // loop_exit
      _
    %9316 = vsyncpa [#allocation5], 1
    %s9317 = scalar_lea.sflag [#allocation5], 1
    %9318 = vsyncpa %s9317, 1

</llo_original>
